<compile_context>
chip_gen: v5e
topology: v5e:2x2
jax: 0.10.0
libtpu: 0.0.40
codegen_flags: <defaults>
</compile_context>

<pallas_src>
import functools

import jax
import jax.numpy as jnp
from jax import lax
from jax.experimental import pallas as pl
from jax.experimental.pallas import tpu as pltpu


# ---------------------------------------------------------------------------
# Pallas kernels
# ---------------------------------------------------------------------------

def _matmul_bias_act_kernel(x_ref, w_ref, shift_ref, o_ref, *, relu):
    """(tm, K) @ (K, Cpad) on the MXU + per-channel shift (+ ReLU).

    Conv (im2col), folded BN and conv-bias all reduce to this one matmul and
    one VPU add; the output last dim Cpad is a multiple of 128 (unmasked vst).
    """
    acc = jnp.dot(x_ref[...], w_ref[...], preferred_element_type=jnp.float32)
    y = acc + shift_ref[...]
    if relu:
        y = jnp.maximum(y, 0.0)
    o_ref[...] = y.astype(o_ref.dtype)


def _upsample_add_kernel(b_ref, x_ref, lat_ref, o_ref):
    """Bilinear (align_corners=True) 2x upsample as one matmul, fused with +lateral.

    b_ref:   (Hout*Wout, Hin*Win)  interpolation matrix (kron of 1-D maps)
    x_ref:   (1, Hin*Win, C)       one batch element, spatially flattened
    lat_ref: (1, Hout*Wout, C)     lateral (1x1-conv) feature to add
    o_ref:   (1, Hout*Wout, C)
    """
    up = jnp.dot(b_ref[...], x_ref[0], preferred_element_type=jnp.float32)
    o_ref[0] = (up + lat_ref[0]).astype(o_ref.dtype)


# ---------------------------------------------------------------------------
# Wrappers (plain-JAX glue: layout, im2col, parameter folding)
# ---------------------------------------------------------------------------

def _round_up(x, m):
    return (x + m - 1) // m * m


def _fold_conv_params(p, eps=1e-5):
    """Fold conv weight + (inference BN | bias) into (w_oihw_f32, shift)."""
    w = p["w"].astype(jnp.float32)
    c_out = w.shape[0]
    if "bn" in p:
        gamma, beta, mean, var = p["bn"]
        scale = gamma / jnp.sqrt(var + eps)
        w = w * scale[:, None, None, None]       # fold BN scale into weights
        shift = beta - mean * scale
    elif "bias" in p:
        shift = p["bias"].astype(jnp.float32)
    else:
        shift = jnp.zeros((c_out,), jnp.float32)
    return w, shift


def _im2col(x_nhwc, kh, kw, stride, padding):
    """(N,H,W,Cin) -> (N*Hout*Wout, KH*KW*Cin) patches, tap-major/channel-minor."""
    n, h, w, c = x_nhwc.shape
    x_pad = jnp.pad(x_nhwc, ((0, 0), (padding, padding), (padding, padding), (0, 0)))
    hp, wp = h + 2 * padding, w + 2 * padding
    h_out = (hp - kh) // stride + 1
    w_out = (wp - kw) // stride + 1
    taps = []
    for i in range(kh):
        for j in range(kw):
            taps.append(lax.slice(
                x_pad,
                (0, i, j, 0),
                (n, i + (h_out - 1) * stride + 1, j + (w_out - 1) * stride + 1, c),
                (1, stride, stride, 1)))
    patches = jnp.concatenate(taps, axis=-1)     # (n, h_out, w_out, kh*kw*c)
    return patches.reshape(n * h_out * w_out, kh * kw * c), h_out, w_out


def conv_block_pallas(x_nhwc, params, *, stride, padding, relu):
    """Conv2d (+bias | inference BN, folded) (+ReLU), NHWC in / NHWC out."""
    n, h, w, c_in = x_nhwc.shape
    w_oihw, shift = _fold_conv_params(params)
    c_out, c_in_w, kh, kw = w_oihw.shape
    assert c_in_w == c_in

    # im2col in the wrapper -> one lane-dense matmul in the kernel.
    patches, h_out, w_out = _im2col(x_nhwc, kh, kw, stride, padding)
    m = n * h_out * w_out
    k = kh * kw * c_in

    # OIHW -> (KH*KW*Cin, Cout); pad Cout to a multiple of 128 (lane-dense out).
    w_mat = jnp.transpose(w_oihw, (2, 3, 1, 0)).reshape(k, c_out)
    c_pad = _round_up(c_out, 128)
    w_mat = jnp.pad(w_mat, ((0, 0), (0, c_pad - c_out))).astype(jnp.bfloat16)
    shift_row = jnp.pad(shift, (0, c_pad - c_out)).reshape(1, c_pad)

    # Batch folded into M; one grid step per M-tile (tile divisible by 8).
    tm = _round_up(m, 8) if m <= 512 else 256
    m_pad = _round_up(m, tm)
    patches = jnp.pad(patches, ((0, m_pad - m), (0, 0))).astype(jnp.bfloat16)

    kernel = functools.partial(_matmul_bias_act_kernel, relu=relu)
    out = pl.pallas_call(
        kernel,
        out_shape=jax.ShapeDtypeStruct((m_pad, c_pad), jnp.float32),
        grid_spec=pltpu.PrefetchScalarGridSpec(
            num_scalar_prefetch=0,
            grid=(m_pad // tm,),
            in_specs=[
                pl.BlockSpec((tm, k), lambda i: (i, 0)),
                pl.BlockSpec((k, c_pad), lambda i: (0, 0)),
                pl.BlockSpec((1, c_pad), lambda i: (0, 0)),
            ],
            out_specs=pl.BlockSpec((tm, c_pad), lambda i: (i, 0)),
        ),
        compiler_params=pltpu.CompilerParams(
            dimension_semantics=("parallel",)),
    )(patches, w_mat, shift_row)

    return out[:m, :c_out].reshape(n, h_out, w_out, c_out)


def _interp_matrix_1d(n_in, n_out):
    """align_corners=True linear interpolation matrix of shape (n_out, n_in)."""
    if n_in == 1:
        return jnp.ones((n_out, 1), jnp.float32)
    src = jnp.arange(n_out, dtype=jnp.float32) * (n_in - 1) / (n_out - 1)
    i0 = jnp.clip(jnp.floor(src).astype(jnp.int32), 0, n_in - 2)
    frac = src - i0.astype(jnp.float32)
    rows = jnp.arange(n_out)
    mat = jnp.zeros((n_out, n_in), jnp.float32)
    mat = mat.at[rows, i0].add(1.0 - frac)
    mat = mat.at[rows, i0 + 1].add(frac)
    return mat


def upsample2x_add_pallas(x_nhwc, lateral_nhwc):
    """F.interpolate(scale_factor=2, bilinear, align_corners=True)(x) + lateral."""
    n, h, w, c = x_nhwc.shape
    ho, wo = 2 * h, 2 * w
    assert lateral_nhwc.shape == (n, ho, wo, c)
    b_mat = jnp.kron(_interp_matrix_1d(h, ho), _interp_matrix_1d(w, wo))
    x_flat = x_nhwc.reshape(n, h * w, c).astype(jnp.float32)
    lat_flat = lateral_nhwc.reshape(n, ho * wo, c).astype(jnp.float32)
    out = pl.pallas_call(
        _upsample_add_kernel,
        out_shape=jax.ShapeDtypeStruct((n, ho * wo, c), jnp.float32),
        grid_spec=pltpu.PrefetchScalarGridSpec(
            num_scalar_prefetch=0,
            grid=(n,),
            in_specs=[
                pl.BlockSpec((ho * wo, h * w), lambda b: (0, 0)),
                pl.BlockSpec((1, h * w, c), lambda b: (b, 0, 0)),
                pl.BlockSpec((1, ho * wo, c), lambda b: (b, 0, 0)),
            ],
            out_specs=pl.BlockSpec((1, ho * wo, c), lambda b: (b, 0, 0)),
        ),
    )(b_mat, x_flat, lat_flat)
    return out.reshape(n, ho, wo, c)


# ---------------------------------------------------------------------------
# FPN3cas forward (shared body used by both the Pallas path and the reference)
# ---------------------------------------------------------------------------

def _fpn3cas_body(x_nhwc, params, cb, up_add):
    c0 = cb(x_nhwc, params["conv0_0"], stride=1, padding=1, relu=True)
    c0 = cb(c0, params["conv0_1"], stride=1, padding=1, relu=True)
    c1 = cb(c0, params["conv1_0"], stride=2, padding=2, relu=True)
    c1 = cb(c1, params["conv1_1"], stride=1, padding=1, relu=True)
    c1 = cb(c1, params["conv1_2"], stride=1, padding=1, relu=True)
    c2 = cb(c1, params["conv2_0"], stride=2, padding=2, relu=True)
    c2 = cb(c2, params["conv2_1"], stride=1, padding=1, relu=True)
    c2 = cb(c2, params["conv2_2"], stride=1, padding=1, relu=True)
    c3 = cb(c2, params["conv3_0"], stride=2, padding=2, relu=True)
    c3 = cb(c3, params["conv3_1"], stride=1, padding=1, relu=True)
    c3 = cb(c3, params["conv3_2"], stride=1, padding=1, relu=True)

    intra = c3
    intra = up_add(intra, cb(c2, params["inner1"], stride=1, padding=0, relu=False))
    o1 = cb(intra, params["out1"], stride=1, padding=1, relu=False)
    intra = up_add(intra, cb(c1, params["inner2"], stride=1, padding=0, relu=False))
    o2 = cb(intra, params["out2"], stride=1, padding=1, relu=False)
    intra = up_add(intra, cb(c0, params["inner3"], stride=1, padding=0, relu=False))
    o3 = cb(intra, params["out3"], stride=1, padding=1, relu=False)
    return o1, o2, o3


def fpn3cas_forward(x_nchw, params):
    """Pallas forward. NCHW in, [out1, out2, out3] in NCHW (matches PyTorch)."""
    x_nhwc = jnp.transpose(x_nchw, (0, 2, 3, 1)).astype(jnp.float32)
    o1, o2, o3 = _fpn3cas_body(x_nhwc, params, conv_block_pallas, upsample2x_add_pallas)
    return [jnp.transpose(o, (0, 3, 1, 2)) for o in (o1, o2, o3)]


# ---------------------------------------------------------------------------
# Pure-JAX reference (same precision policy: bf16 operands, f32 accumulation)
# ---------------------------------------------------------------------------

def _ref_conv_block(x_nhwc, params, *, stride, padding, relu):
    w_oihw, shift = _fold_conv_params(params)
    xq = x_nhwc.astype(jnp.bfloat16).astype(jnp.float32)
    wq = w_oihw.astype(jnp.bfloat16).astype(jnp.float32)
    y = lax.conv_general_dilated(
        xq, wq, (stride, stride), ((padding, padding), (padding, padding)),
        dimension_numbers=("NHWC", "OIHW", "NHWC"),
        precision=lax.Precision.HIGHEST)
    y = y + shift
    if relu:
        y = jnp.maximum(y, 0.0)
    return y


def _ref_upsample2x(x_nhwc):
    n, h, w, c = x_nhwc.shape

    def idx(n_in, n_out):
        if n_in == 1:
            z = jnp.zeros((n_out,), jnp.int32)
            return z, z, jnp.zeros((n_out,), jnp.float32)
        src = jnp.arange(n_out, dtype=jnp.float32) * (n_in - 1) / (n_out - 1)
        i0 = jnp.clip(jnp.floor(src).astype(jnp.int32), 0, n_in - 2)
        return i0, i0 + 1, src - i0.astype(jnp.float32)

    h0, h1, hf = idx(h, 2 * h)
    w0, w1, wf = idx(w, 2 * w)
    xh = (x_nhwc[:, h0] * (1.0 - hf)[None, :, None, None]
          + x_nhwc[:, h1] * hf[None, :, None, None])
    return (xh[:, :, w0] * (1.0 - wf)[None, None, :, None]
            + xh[:, :, w1] * wf[None, None, :, None])


def fpn3cas_reference(x_nchw, params):
    x_nhwc = jnp.transpose(x_nchw, (0, 2, 3, 1)).astype(jnp.float32)
    o1, o2, o3 = _fpn3cas_body(x_nhwc, params, _ref_conv_block,
                               lambda xs, lat: _ref_upsample2x(xs) + lat)
    return [jnp.transpose(o, (0, 3, 1, 2)) for o in (o1, o2, o3)]


# ---------------------------------------------------------------------------
# Parameter construction (deterministic)
# ---------------------------------------------------------------------------

def _xavier_uniform(key, c_out, c_in, kh, kw):
    fan_in = c_in * kh * kw
    fan_out = c_out * kh * kw
    bound = (6.0 / (fan_in + fan_out)) ** 0.5
    return jax.random.uniform(key, (c_out, c_in, kh, kw), jnp.float32, -bound, bound)


def init_fpn3cas_params(key, base_channels):
    bc = base_channels
    keys = iter(jax.random.split(key, 20))

    def conv_bn(c_in, c_out, k):
        kw_, kg, kb, km, kv = jax.random.split(next(keys), 5)
        return {
            "w": _xavier_uniform(kw_, c_out, c_in, k, k),
            # (gamma, beta, running_mean, running_var): non-trivial values so the
            # folded inference-BN path is actually exercised.
            "bn": (jax.random.uniform(kg, (c_out,), jnp.float32, 0.5, 1.5),
                   0.1 * jax.random.normal(kb, (c_out,), jnp.float32),
                   0.1 * jax.random.normal(km, (c_out,), jnp.float32),
                   jax.random.uniform(kv, (c_out,), jnp.float32, 0.5, 1.5)),
        }

    def conv_bias(c_in, c_out, k):
        kw_, kb_ = jax.random.split(next(keys))
        return {"w": _xavier_uniform(kw_, c_out, c_in, k, k),
                "bias": 0.1 * jax.random.normal(kb_, (c_out,), jnp.float32)}

    def conv_plain(c_in, c_out, k):
        return {"w": _xavier_uniform(next(keys), c_out, c_in, k, k)}

    final = 8 * bc
    return {
        "conv0_0": conv_bn(3, bc, 3), "conv0_1": conv_bn(bc, bc, 3),
        "conv1_0": conv_bn(bc, 2 * bc, 5), "conv1_1": conv_bn(2 * bc, 2 * bc, 3),
        "conv1_2": conv_bn(2 * bc, 2 * bc, 3),
        "conv2_0": conv_bn(2 * bc, 4 * bc, 5), "conv2_1": conv_bn(4 * bc, 4 * bc, 3),
        "conv2_2": conv_bn(4 * bc, 4 * bc, 3),
        "conv3_0": conv_bn(4 * bc, 8 * bc, 5), "conv3_1": conv_bn(8 * bc, 8 * bc, 3),
        "conv3_2": conv_bn(8 * bc, 8 * bc, 3),
        "inner1": conv_bias(4 * bc, final, 1),
        "inner2": conv_bias(2 * bc, final, 1),
        "inner3": conv_bias(bc, final, 1),
        "out1": conv_plain(final, 4 * bc, 3),
        "out2": conv_plain(final, 2 * bc, 3),
        "out3": conv_plain(final, bc, 3),
    }


if __name__ == "__main__":
    base_channels = 4
    N, H, W = 2, 16, 16

    key = jax.random.PRNGKey(0)
    k_x, k_p = jax.random.split(key)
    x = jax.random.normal(k_x, (N, 3, H, W), jnp.float32)
    params = init_fpn3cas_params(k_p, base_channels)

    fwd = jax.jit(lambda inp: fpn3cas_forward(inp, params))
    outs = jax.block_until_ready(fwd(x))

    # Shapes must match the PyTorch FPN3cas outputs.
    assert outs[0].shape == (N, 4 * base_channels, H // 4, W // 4)
    assert outs[1].shape == (N, 2 * base_channels, H // 2, W // 2)
    assert outs[2].shape == (N, base_channels, H, W)

    # Numerical check against a pure-JAX reference with matching precision.
    refs = fpn3cas_reference(x, params)
    for o, r in zip(outs, refs):
        err = float(jnp.max(jnp.abs(o - r)))
        denom = float(jnp.max(jnp.abs(r))) + 1e-6
        assert err / denom < 2e-2, (err, denom)

    print("KERNEL_OK")
</pallas_src>

<mosaic_0001>
module attributes {stable_mosaic.version = 11 : i64} {
  func.func @_matmul_bias_act_kernel(%arg0: i32, %arg1: memref<512x27xbf16, #tpu.memory_space<vmem>>, %arg2: memref<27x128xbf16, #tpu.memory_space<vmem>>, %arg3: memref<1x128xf32, #tpu.memory_space<vmem>>, %arg4: memref<512x128xf32, #tpu.memory_space<vmem>>) attributes {dimension_semantics = [#tpu.dimension_semantics<parallel>], iteration_bounds = array<i64: 1>, scalar_prefetch = 0 : i64, scratch_operands = 0 : i64, tpu.core_type = #tpu.core_type<tc>, window_params = [{transform_indices = @transform_0, window_bounds = array<i64: 512, 27>}, {pipeline_mode = #tpu.pipeline_mode<synchronous>, transform_indices = @transform_1, window_bounds = array<i64: 27, 128>}, {pipeline_mode = #tpu.pipeline_mode<synchronous>, transform_indices = @transform_2, window_bounds = array<i64: 1, 128>}, {transform_indices = @transform_3, window_bounds = array<i64: 512, 128>}]} {
    %c0 = arith.constant 0 : index
    %c0_0 = arith.constant 0 : index
    %0 = vector.load %arg1[%c0, %c0_0] : memref<512x27xbf16, #tpu.memory_space<vmem>>, vector<512x27xbf16>
    %c0_1 = arith.constant 0 : index
    %c0_2 = arith.constant 0 : index
    %1 = vector.load %arg2[%c0_1, %c0_2] : memref<27x128xbf16, #tpu.memory_space<vmem>>, vector<27x128xbf16>
    %cst = arith.constant dense<0.000000e+00> : vector<512x128xf32>
    %2 = tpu.matmul %0, %1, %cst {dimension_numbers = #tpu.dot_dimension_numbers<[1], [0], [0], [1], [0, 0, 1, 1], [], []>} : vector<512x27xbf16>, vector<27x128xbf16>, vector<512x128xf32> -> vector<512x128xf32>
    %c0_3 = arith.constant 0 : index
    %c0_4 = arith.constant 0 : index
    %3 = vector.load %arg3[%c0_3, %c0_4] : memref<1x128xf32, #tpu.memory_space<vmem>>, vector<1x128xf32>
    %4 = vector.broadcast %3 : vector<1x128xf32> to vector<512x128xf32>
    %5 = arith.addf %2, %4 : vector<512x128xf32>
    %cst_5 = arith.constant 0.000000e+00 : f32
    %6 = vector.broadcast %cst_5 : f32 to vector<512x128xf32>
    %7 = arith.maximumf %5, %6 : vector<512x128xf32>
    %c0_6 = arith.constant 0 : index
    %c0_7 = arith.constant 0 : index
    %8 = vector.load %arg4[%c0_6, %c0_7] : memref<512x128xf32, #tpu.memory_space<vmem>>, vector<512x128xf32>
    tpu.vector_store %arg4[%c0_6, %c0_7], %7 {strides = array<i32>} : memref<512x128xf32, #tpu.memory_space<vmem>>, vector<512x128xf32>,
    return
  }
  func.func @transform_0(%arg0: i32) -> (i32, i32) {
    %c0_i32 = arith.constant 0 : i32
    %c0_i32_0 = arith.constant 0 : i32
    return %arg0, %c0_i32 : i32, i32
  }
  func.func @transform_1(%arg0: i32) -> (i32, i32) {
    %c0_i32 = arith.constant 0 : i32
    %c0_i32_0 = arith.constant 0 : i32
    %c0_i32_1 = arith.constant 0 : i32
    return %c0_i32, %c0_i32_0 : i32, i32
  }
  func.func @transform_2(%arg0: i32) -> (i32, i32) {
    %c0_i32 = arith.constant 0 : i32
    %c0_i32_0 = arith.constant 0 : i32
    %c0_i32_1 = arith.constant 0 : i32
    return %c0_i32, %c0_i32_0 : i32, i32
  }
  func.func @transform_3(%arg0: i32) -> (i32, i32) {
    %c0_i32 = arith.constant 0 : i32
    %c0_i32_0 = arith.constant 0 : i32
    return %arg0, %c0_i32 : i32, i32
  }
}

module attributes {stable_mosaic.version = 11 : i64} {
  func.func @_matmul_bias_act_kernel(%arg0: i32, %arg1: memref<512x36xbf16, #tpu.memory_space<vmem>>, %arg2: memref<36x128xbf16, #tpu.memory_space<vmem>>, %arg3: memref<1x128xf32, #tpu.memory_space<vmem>>, %arg4: memref<512x128xf32, #tpu.memory_space<vmem>>) attributes {dimension_semantics = [#tpu.dimension_semantics<parallel>], iteration_bounds = array<i64: 1>, scalar_prefetch = 0 : i64, scratch_operands = 0 : i64, tpu.core_type = #tpu.core_type<tc>, window_params = [{transform_indices = @transform_0, window_bounds = array<i64: 512, 36>}, {pipeline_mode = #tpu.pipeline_mode<synchronous>, transform_indices = @transform_1, window_bounds = array<i64: 36, 128>}, {pipeline_mode = #tpu.pipeline_mode<synchronous>, transform_indices = @transform_2, window_bounds = array<i64: 1, 128>}, {transform_indices = @transform_3, window_bounds = array<i64: 512, 128>}]} {
    %c0 = arith.constant 0 : index
    %c0_0 = arith.constant 0 : index
    %0 = vector.load %arg1[%c0, %c0_0] : memref<512x36xbf16, #tpu.memory_space<vmem>>, vector<512x36xbf16>
    %c0_1 = arith.constant 0 : index
    %c0_2 = arith.constant 0 : index
    %1 = vector.load %arg2[%c0_1, %c0_2] : memref<36x128xbf16, #tpu.memory_space<vmem>>, vector<36x128xbf16>
    %cst = arith.constant dense<0.000000e+00> : vector<512x128xf32>
    %2 = tpu.matmul %0, %1, %cst {dimension_numbers = #tpu.dot_dimension_numbers<[1], [0], [0], [1], [0, 0, 1, 1], [], []>} : vector<512x36xbf16>, vector<36x128xbf16>, vector<512x128xf32> -> vector<512x128xf32>
    %c0_3 = arith.constant 0 : index
    %c0_4 = arith.constant 0 : index
    %3 = vector.load %arg3[%c0_3, %c0_4] : memref<1x128xf32, #tpu.memory_space<vmem>>, vector<1x128xf32>
    %4 = vector.broadcast %3 : vector<1x128xf32> to vector<512x128xf32>
    %5 = arith.addf %2, %4 : vector<512x128xf32>
    %cst_5 = arith.constant 0.000000e+00 : f32
    %6 = vector.broadcast %cst_5 : f32 to vector<512x128xf32>
    %7 = arith.maximumf %5, %6 : vector<512x128xf32>
    %c0_6 = arith.constant 0 : index
    %c0_7 = arith.constant 0 : index
    %8 = vector.load %arg4[%c0_6, %c0_7] : memref<512x128xf32, #tpu.memory_space<vmem>>, vector<512x128xf32>
    tpu.vector_store %arg4[%c0_6, %c0_7], %7 {strides = array<i32>} : memref<512x128xf32, #tpu.memory_space<vmem>>, vector<512x128xf32>,
    return
  }
  func.func @transform_0(%arg0: i32) -> (i32, i32) {
    %c0_i32 = arith.constant 0 : i32
    %c0_i32_0 = arith.constant 0 : i32
    return %arg0, %c0_i32 : i32, i32
  }
  func.func @transform_1(%arg0: i32) -> (i32, i32) {
    %c0_i32 = arith.constant 0 : i32
    %c0_i32_0 = arith.constant 0 : i32
    %c0_i32_1 = arith.constant 0 : i32
    return %c0_i32, %c0_i32_0 : i32, i32
  }
  func.func @transform_2(%arg0: i32) -> (i32, i32) {
    %c0_i32 = arith.constant 0 : i32
    %c0_i32_0 = arith.constant 0 : i32
    %c0_i32_1 = arith.constant 0 : i32
    return %c0_i32, %c0_i32_0 : i32, i32
  }
  func.func @transform_3(%arg0: i32) -> (i32, i32) {
    %c0_i32 = arith.constant 0 : i32
    %c0_i32_0 = arith.constant 0 : i32
    return %arg0, %c0_i32 : i32, i32
  }
}

module attributes {stable_mosaic.version = 11 : i64} {
  func.func @_matmul_bias_act_kernel(%arg0: i32, %arg1: memref<128x100xbf16, #tpu.memory_space<vmem>>, %arg2: memref<100x128xbf16, #tpu.memory_space<vmem>>, %arg3: memref<1x128xf32, #tpu.memory_space<vmem>>, %arg4: memref<128x128xf32, #tpu.memory_space<vmem>>) attributes {dimension_semantics = [#tpu.dimension_semantics<parallel>], iteration_bounds = array<i64: 1>, scalar_prefetch = 0 : i64, scratch_operands = 0 : i64, tpu.core_type = #tpu.core_type<tc>, window_params = [{transform_indices = @transform_0, window_bounds = array<i64: 128, 100>}, {pipeline_mode = #tpu.pipeline_mode<synchronous>, transform_indices = @transform_1, window_bounds = array<i64: 100, 128>}, {pipeline_mode = #tpu.pipeline_mode<synchronous>, transform_indices = @transform_2, window_bounds = array<i64: 1, 128>}, {transform_indices = @transform_3, window_bounds = array<i64: 128, 128>}]} {
    %c0 = arith.constant 0 : index
    %c0_0 = arith.constant 0 : index
    %0 = vector.load %arg1[%c0, %c0_0] : memref<128x100xbf16, #tpu.memory_space<vmem>>, vector<128x100xbf16>
    %c0_1 = arith.constant 0 : index
    %c0_2 = arith.constant 0 : index
    %1 = vector.load %arg2[%c0_1, %c0_2] : memref<100x128xbf16, #tpu.memory_space<vmem>>, vector<100x128xbf16>
    %cst = arith.constant dense<0.000000e+00> : vector<128x128xf32>
    %2 = tpu.matmul %0, %1, %cst {dimension_numbers = #tpu.dot_dimension_numbers<[1], [0], [0], [1], [0, 0, 1, 1], [], []>} : vector<128x100xbf16>, vector<100x128xbf16>, vector<128x128xf32> -> vector<128x128xf32>
    %c0_3 = arith.constant 0 : index
    %c0_4 = arith.constant 0 : index
    %3 = vector.load %arg3[%c0_3, %c0_4] : memref<1x128xf32, #tpu.memory_space<vmem>>, vector<1x128xf32>
    %4 = vector.broadcast %3 : vector<1x128xf32> to vector<128x128xf32>
    %5 = arith.addf %2, %4 : vector<128x128xf32>
    %cst_5 = arith.constant 0.000000e+00 : f32
    %6 = vector.broadcast %cst_5 : f32 to vector<128x128xf32>
    %7 = arith.maximumf %5, %6 : vector<128x128xf32>
    %c0_6 = arith.constant 0 : index
    %c0_7 = arith.constant 0 : index
    %8 = vector.load %arg4[%c0_6, %c0_7] : memref<128x128xf32, #tpu.memory_space<vmem>>, vector<128x128xf32>
    tpu.vector_store %arg4[%c0_6, %c0_7], %7 {strides = array<i32>} : memref<128x128xf32, #tpu.memory_space<vmem>>, vector<128x128xf32>,
    return
  }
  func.func @transform_0(%arg0: i32) -> (i32, i32) {
    %c0_i32 = arith.constant 0 : i32
    %c0_i32_0 = arith.constant 0 : i32
    return %arg0, %c0_i32 : i32, i32
  }
  func.func @transform_1(%arg0: i32) -> (i32, i32) {
    %c0_i32 = arith.constant 0 : i32
    %c0_i32_0 = arith.constant 0 : i32
    %c0_i32_1 = arith.constant 0 : i32
    return %c0_i32, %c0_i32_0 : i32, i32
  }
  func.func @transform_2(%arg0: i32) -> (i32, i32) {
    %c0_i32 = arith.constant 0 : i32
    %c0_i32_0 = arith.constant 0 : i32
    %c0_i32_1 = arith.constant 0 : i32
    return %c0_i32, %c0_i32_0 : i32, i32
  }
  func.func @transform_3(%arg0: i32) -> (i32, i32) {
    %c0_i32 = arith.constant 0 : i32
    %c0_i32_0 = arith.constant 0 : i32
    return %arg0, %c0_i32 : i32, i32
  }
}

module attributes {stable_mosaic.version = 11 : i64} {
  func.func @_matmul_bias_act_kernel(%arg0: i32, %arg1: memref<128x72xbf16, #tpu.memory_space<vmem>>, %arg2: memref<72x128xbf16, #tpu.memory_space<vmem>>, %arg3: memref<1x128xf32, #tpu.memory_space<vmem>>, %arg4: memref<128x128xf32, #tpu.memory_space<vmem>>) attributes {dimension_semantics = [#tpu.dimension_semantics<parallel>], iteration_bounds = array<i64: 1>, scalar_prefetch = 0 : i64, scratch_operands = 0 : i64, tpu.core_type = #tpu.core_type<tc>, window_params = [{transform_indices = @transform_0, window_bounds = array<i64: 128, 72>}, {pipeline_mode = #tpu.pipeline_mode<synchronous>, transform_indices = @transform_1, window_bounds = array<i64: 72, 128>}, {pipeline_mode = #tpu.pipeline_mode<synchronous>, transform_indices = @transform_2, window_bounds = array<i64: 1, 128>}, {transform_indices = @transform_3, window_bounds = array<i64: 128, 128>}]} {
    %c0 = arith.constant 0 : index
    %c0_0 = arith.constant 0 : index
    %0 = vector.load %arg1[%c0, %c0_0] : memref<128x72xbf16, #tpu.memory_space<vmem>>, vector<128x72xbf16>
    %c0_1 = arith.constant 0 : index
    %c0_2 = arith.constant 0 : index
    %1 = vector.load %arg2[%c0_1, %c0_2] : memref<72x128xbf16, #tpu.memory_space<vmem>>, vector<72x128xbf16>
    %cst = arith.constant dense<0.000000e+00> : vector<128x128xf32>
    %2 = tpu.matmul %0, %1, %cst {dimension_numbers = #tpu.dot_dimension_numbers<[1], [0], [0], [1], [0, 0, 1, 1], [], []>} : vector<128x72xbf16>, vector<72x128xbf16>, vector<128x128xf32> -> vector<128x128xf32>
    %c0_3 = arith.constant 0 : index
    %c0_4 = arith.constant 0 : index
    %3 = vector.load %arg3[%c0_3, %c0_4] : memref<1x128xf32, #tpu.memory_space<vmem>>, vector<1x128xf32>
    %4 = vector.broadcast %3 : vector<1x128xf32> to vector<128x128xf32>
    %5 = arith.addf %2, %4 : vector<128x128xf32>
    %cst_5 = arith.constant 0.000000e+00 : f32
    %6 = vector.broadcast %cst_5 : f32 to vector<128x128xf32>
    %7 = arith.maximumf %5, %6 : vector<128x128xf32>
    %c0_6 = arith.constant 0 : index
    %c0_7 = arith.constant 0 : index
    %8 = vector.load %arg4[%c0_6, %c0_7] : memref<128x128xf32, #tpu.memory_space<vmem>>, vector<128x128xf32>
    tpu.vector_store %arg4[%c0_6, %c0_7], %7 {strides = array<i32>} : memref<128x128xf32, #tpu.memory_space<vmem>>, vector<128x128xf32>,
    return
  }
  func.func @transform_0(%arg0: i32) -> (i32, i32) {
    %c0_i32 = arith.constant 0 : i32
    %c0_i32_0 = arith.constant 0 : i32
    return %arg0, %c0_i32 : i32, i32
  }
  func.func @transform_1(%arg0: i32) -> (i32, i32) {
    %c0_i32 = arith.constant 0 : i32
    %c0_i32_0 = arith.constant 0 : i32
    %c0_i32_1 = arith.constant 0 : i32
    return %c0_i32, %c0_i32_0 : i32, i32
  }
  func.func @transform_2(%arg0: i32) -> (i32, i32) {
    %c0_i32 = arith.constant 0 : i32
    %c0_i32_0 = arith.constant 0 : i32
    %c0_i32_1 = arith.constant 0 : i32
    return %c0_i32, %c0_i32_0 : i32, i32
  }
  func.func @transform_3(%arg0: i32) -> (i32, i32) {
    %c0_i32 = arith.constant 0 : i32
    %c0_i32_0 = arith.constant 0 : i32
    return %arg0, %c0_i32 : i32, i32
  }
}

module attributes {stable_mosaic.version = 11 : i64} {
  func.func @_matmul_bias_act_kernel(%arg0: i32, %arg1: memref<32x200xbf16, #tpu.memory_space<vmem>>, %arg2: memref<200x128xbf16, #tpu.memory_space<vmem>>, %arg3: memref<1x128xf32, #tpu.memory_space<vmem>>, %arg4: memref<32x128xf32, #tpu.memory_space<vmem>>) attributes {dimension_semantics = [#tpu.dimension_semantics<parallel>], iteration_bounds = array<i64: 1>, scalar_prefetch = 0 : i64, scratch_operands = 0 : i64, tpu.core_type = #tpu.core_type<tc>, window_params = [{transform_indices = @transform_0, window_bounds = array<i64: 32, 200>}, {pipeline_mode = #tpu.pipeline_mode<synchronous>, transform_indices = @transform_1, window_bounds = array<i64: 200, 128>}, {pipeline_mode = #tpu.pipeline_mode<synchronous>, transform_indices = @transform_2, window_bounds = array<i64: 1, 128>}, {transform_indices = @transform_3, window_bounds = array<i64: 32, 128>}]} {
    %c0 = arith.constant 0 : index
    %c0_0 = arith.constant 0 : index
    %0 = vector.load %arg1[%c0, %c0_0] : memref<32x200xbf16, #tpu.memory_space<vmem>>, vector<32x200xbf16>
    %c0_1 = arith.constant 0 : index
    %c0_2 = arith.constant 0 : index
    %1 = vector.load %arg2[%c0_1, %c0_2] : memref<200x128xbf16, #tpu.memory_space<vmem>>, vector<200x128xbf16>
    %cst = arith.constant dense<0.000000e+00> : vector<32x128xf32>
    %2 = tpu.matmul %0, %1, %cst {dimension_numbers = #tpu.dot_dimension_numbers<[1], [0], [0], [1], [0, 0, 1, 1], [], []>} : vector<32x200xbf16>, vector<200x128xbf16>, vector<32x128xf32> -> vector<32x128xf32>
    %c0_3 = arith.constant 0 : index
    %c0_4 = arith.constant 0 : index
    %3 = vector.load %arg3[%c0_3, %c0_4] : memref<1x128xf32, #tpu.memory_space<vmem>>, vector<1x128xf32>
    %4 = vector.broadcast %3 : vector<1x128xf32> to vector<32x128xf32>
    %5 = arith.addf %2, %4 : vector<32x128xf32>
    %cst_5 = arith.constant 0.000000e+00 : f32
    %6 = vector.broadcast %cst_5 : f32 to vector<32x128xf32>
    %7 = arith.maximumf %5, %6 : vector<32x128xf32>
    %c0_6 = arith.constant 0 : index
    %c0_7 = arith.constant 0 : index
    %8 = vector.load %arg4[%c0_6, %c0_7] : memref<32x128xf32, #tpu.memory_space<vmem>>, vector<32x128xf32>
    tpu.vector_store %arg4[%c0_6, %c0_7], %7 {strides = array<i32>} : memref<32x128xf32, #tpu.memory_space<vmem>>, vector<32x128xf32>,
    return
  }
  func.func @transform_0(%arg0: i32) -> (i32, i32) {
    %c0_i32 = arith.constant 0 : i32
    %c0_i32_0 = arith.constant 0 : i32
    return %arg0, %c0_i32 : i32, i32
  }
  func.func @transform_1(%arg0: i32) -> (i32, i32) {
    %c0_i32 = arith.constant 0 : i32
    %c0_i32_0 = arith.constant 0 : i32
    %c0_i32_1 = arith.constant 0 : i32
    return %c0_i32, %c0_i32_0 : i32, i32
  }
  func.func @transform_2(%arg0: i32) -> (i32, i32) {
    %c0_i32 = arith.constant 0 : i32
    %c0_i32_0 = arith.constant 0 : i32
    %c0_i32_1 = arith.constant 0 : i32
    return %c0_i32, %c0_i32_0 : i32, i32
  }
  func.func @transform_3(%arg0: i32) -> (i32, i32) {
    %c0_i32 = arith.constant 0 : i32
    %c0_i32_0 = arith.constant 0 : i32
    return %arg0, %c0_i32 : i32, i32
  }
}

module attributes {stable_mosaic.version = 11 : i64} {
  func.func @_matmul_bias_act_kernel(%arg0: i32, %arg1: memref<32x144xbf16, #tpu.memory_space<vmem>>, %arg2: memref<144x128xbf16, #tpu.memory_space<vmem>>, %arg3: memref<1x128xf32, #tpu.memory_space<vmem>>, %arg4: memref<32x128xf32, #tpu.memory_space<vmem>>) attributes {dimension_semantics = [#tpu.dimension_semantics<parallel>], iteration_bounds = array<i64: 1>, scalar_prefetch = 0 : i64, scratch_operands = 0 : i64, tpu.core_type = #tpu.core_type<tc>, window_params = [{transform_indices = @transform_0, window_bounds = array<i64: 32, 144>}, {pipeline_mode = #tpu.pipeline_mode<synchronous>, transform_indices = @transform_1, window_bounds = array<i64: 144, 128>}, {pipeline_mode = #tpu.pipeline_mode<synchronous>, transform_indices = @transform_2, window_bounds = array<i64: 1, 128>}, {transform_indices = @transform_3, window_bounds = array<i64: 32, 128>}]} {
    %c0 = arith.constant 0 : index
    %c0_0 = arith.constant 0 : index
    %0 = vector.load %arg1[%c0, %c0_0] : memref<32x144xbf16, #tpu.memory_space<vmem>>, vector<32x144xbf16>
    %c0_1 = arith.constant 0 : index
    %c0_2 = arith.constant 0 : index
    %1 = vector.load %arg2[%c0_1, %c0_2] : memref<144x128xbf16, #tpu.memory_space<vmem>>, vector<144x128xbf16>
    %cst = arith.constant dense<0.000000e+00> : vector<32x128xf32>
    %2 = tpu.matmul %0, %1, %cst {dimension_numbers = #tpu.dot_dimension_numbers<[1], [0], [0], [1], [0, 0, 1, 1], [], []>} : vector<32x144xbf16>, vector<144x128xbf16>, vector<32x128xf32> -> vector<32x128xf32>
    %c0_3 = arith.constant 0 : index
    %c0_4 = arith.constant 0 : index
    %3 = vector.load %arg3[%c0_3, %c0_4] : memref<1x128xf32, #tpu.memory_space<vmem>>, vector<1x128xf32>
    %4 = vector.broadcast %3 : vector<1x128xf32> to vector<32x128xf32>
    %5 = arith.addf %2, %4 : vector<32x128xf32>
    %cst_5 = arith.constant 0.000000e+00 : f32
    %6 = vector.broadcast %cst_5 : f32 to vector<32x128xf32>
    %7 = arith.maximumf %5, %6 : vector<32x128xf32>
    %c0_6 = arith.constant 0 : index
    %c0_7 = arith.constant 0 : index
    %8 = vector.load %arg4[%c0_6, %c0_7] : memref<32x128xf32, #tpu.memory_space<vmem>>, vector<32x128xf32>
    tpu.vector_store %arg4[%c0_6, %c0_7], %7 {strides = array<i32>} : memref<32x128xf32, #tpu.memory_space<vmem>>, vector<32x128xf32>,
    return
  }
  func.func @transform_0(%arg0: i32) -> (i32, i32) {
    %c0_i32 = arith.constant 0 : i32
    %c0_i32_0 = arith.constant 0 : i32
    return %arg0, %c0_i32 : i32, i32
  }
  func.func @transform_1(%arg0: i32) -> (i32, i32) {
    %c0_i32 = arith.constant 0 : i32
    %c0_i32_0 = arith.constant 0 : i32
    %c0_i32_1 = arith.constant 0 : i32
    return %c0_i32, %c0_i32_0 : i32, i32
  }
  func.func @transform_2(%arg0: i32) -> (i32, i32) {
    %c0_i32 = arith.constant 0 : i32
    %c0_i32_0 = arith.constant 0 : i32
    %c0_i32_1 = arith.constant 0 : i32
    return %c0_i32, %c0_i32_0 : i32, i32
  }
  func.func @transform_3(%arg0: i32) -> (i32, i32) {
    %c0_i32 = arith.constant 0 : i32
    %c0_i32_0 = arith.constant 0 : i32
    return %arg0, %c0_i32 : i32, i32
  }
}

module attributes {stable_mosaic.version = 11 : i64} {
  func.func @_matmul_bias_act_kernel(%arg0: i32, %arg1: memref<32x16xbf16, #tpu.memory_space<vmem>>, %arg2: memref<16x128xbf16, #tpu.memory_space<vmem>>, %arg3: memref<1x128xf32, #tpu.memory_space<vmem>>, %arg4: memref<32x128xf32, #tpu.memory_space<vmem>>) attributes {dimension_semantics = [#tpu.dimension_semantics<parallel>], iteration_bounds = array<i64: 1>, scalar_prefetch = 0 : i64, scratch_operands = 0 : i64, tpu.core_type = #tpu.core_type<tc>, window_params = [{transform_indices = @transform_0, window_bounds = array<i64: 32, 16>}, {pipeline_mode = #tpu.pipeline_mode<synchronous>, transform_indices = @transform_1, window_bounds = array<i64: 16, 128>}, {pipeline_mode = #tpu.pipeline_mode<synchronous>, transform_indices = @transform_2, window_bounds = array<i64: 1, 128>}, {transform_indices = @transform_3, window_bounds = array<i64: 32, 128>}]} {
    %c0 = arith.constant 0 : index
    %c0_0 = arith.constant 0 : index
    %0 = vector.load %arg1[%c0, %c0_0] : memref<32x16xbf16, #tpu.memory_space<vmem>>, vector<32x16xbf16>
    %c0_1 = arith.constant 0 : index
    %c0_2 = arith.constant 0 : index
    %1 = vector.load %arg2[%c0_1, %c0_2] : memref<16x128xbf16, #tpu.memory_space<vmem>>, vector<16x128xbf16>
    %cst = arith.constant dense<0.000000e+00> : vector<32x128xf32>
    %2 = tpu.matmul %0, %1, %cst {dimension_numbers = #tpu.dot_dimension_numbers<[1], [0], [0], [1], [0, 0, 1, 1], [], []>} : vector<32x16xbf16>, vector<16x128xbf16>, vector<32x128xf32> -> vector<32x128xf32>
    %c0_3 = arith.constant 0 : index
    %c0_4 = arith.constant 0 : index
    %3 = vector.load %arg3[%c0_3, %c0_4] : memref<1x128xf32, #tpu.memory_space<vmem>>, vector<1x128xf32>
    %4 = vector.broadcast %3 : vector<1x128xf32> to vector<32x128xf32>
    %5 = arith.addf %2, %4 : vector<32x128xf32>
    %c0_5 = arith.constant 0 : index
    %c0_6 = arith.constant 0 : index
    %6 = vector.load %arg4[%c0_5, %c0_6] : memref<32x128xf32, #tpu.memory_space<vmem>>, vector<32x128xf32>
    tpu.vector_store %arg4[%c0_5, %c0_6], %5 {strides = array<i32>} : memref<32x128xf32, #tpu.memory_space<vmem>>, vector<32x128xf32>,
    return
  }
  func.func @transform_0(%arg0: i32) -> (i32, i32) {
    %c0_i32 = arith.constant 0 : i32
    %c0_i32_0 = arith.constant 0 : i32
    return %arg0, %c0_i32 : i32, i32
  }
  func.func @transform_1(%arg0: i32) -> (i32, i32) {
    %c0_i32 = arith.constant 0 : i32
    %c0_i32_0 = arith.constant 0 : i32
    %c0_i32_1 = arith.constant 0 : i32
    return %c0_i32, %c0_i32_0 : i32, i32
  }
  func.func @transform_2(%arg0: i32) -> (i32, i32) {
    %c0_i32 = arith.constant 0 : i32
    %c0_i32_0 = arith.constant 0 : i32
    %c0_i32_1 = arith.constant 0 : i32
    return %c0_i32, %c0_i32_0 : i32, i32
  }
  func.func @transform_3(%arg0: i32) -> (i32, i32) {
    %c0_i32 = arith.constant 0 : i32
    %c0_i32_0 = arith.constant 0 : i32
    return %arg0, %c0_i32 : i32, i32
  }
}

module attributes {stable_mosaic.version = 11 : i64} {
  func.func @_matmul_bias_act_kernel(%arg0: i32, %arg1: memref<8x400xbf16, #tpu.memory_space<vmem>>, %arg2: memref<400x128xbf16, #tpu.memory_space<vmem>>, %arg3: memref<1x128xf32, #tpu.memory_space<vmem>>, %arg4: memref<8x128xf32, #tpu.memory_space<vmem>>) attributes {dimension_semantics = [#tpu.dimension_semantics<parallel>], iteration_bounds = array<i64: 1>, scalar_prefetch = 0 : i64, scratch_operands = 0 : i64, tpu.core_type = #tpu.core_type<tc>, window_params = [{transform_indices = @transform_0, window_bounds = array<i64: 8, 400>}, {pipeline_mode = #tpu.pipeline_mode<synchronous>, transform_indices = @transform_1, window_bounds = array<i64: 400, 128>}, {pipeline_mode = #tpu.pipeline_mode<synchronous>, transform_indices = @transform_2, window_bounds = array<i64: 1, 128>}, {transform_indices = @transform_3, window_bounds = array<i64: 8, 128>}]} {
    %c0 = arith.constant 0 : index
    %c0_0 = arith.constant 0 : index
    %0 = vector.load %arg1[%c0, %c0_0] : memref<8x400xbf16, #tpu.memory_space<vmem>>, vector<8x400xbf16>
    %c0_1 = arith.constant 0 : index
    %c0_2 = arith.constant 0 : index
    %1 = vector.load %arg2[%c0_1, %c0_2] : memref<400x128xbf16, #tpu.memory_space<vmem>>, vector<400x128xbf16>
    %cst = arith.constant dense<0.000000e+00> : vector<8x128xf32>
    %2 = tpu.matmul %0, %1, %cst {dimension_numbers = #tpu.dot_dimension_numbers<[1], [0], [0], [1], [0, 0, 1, 1], [], []>} : vector<8x400xbf16>, vector<400x128xbf16>, vector<8x128xf32> -> vector<8x128xf32>
    %c0_3 = arith.constant 0 : index
    %c0_4 = arith.constant 0 : index
    %3 = vector.load %arg3[%c0_3, %c0_4] : memref<1x128xf32, #tpu.memory_space<vmem>>, vector<1x128xf32>
    %4 = vector.broadcast %3 : vector<1x128xf32> to vector<8x128xf32>
    %5 = arith.addf %2, %4 : vector<8x128xf32>
    %cst_5 = arith.constant 0.000000e+00 : f32
    %6 = vector.broadcast %cst_5 : f32 to vector<8x128xf32>
    %7 = arith.maximumf %5, %6 : vector<8x128xf32>
    %c0_6 = arith.constant 0 : index
    %c0_7 = arith.constant 0 : index
    %8 = vector.load %arg4[%c0_6, %c0_7] : memref<8x128xf32, #tpu.memory_space<vmem>>, vector<8x128xf32>
    tpu.vector_store %arg4[%c0_6, %c0_7], %7 {strides = array<i32>} : memref<8x128xf32, #tpu.memory_space<vmem>>, vector<8x128xf32>,
    return
  }
  func.func @transform_0(%arg0: i32) -> (i32, i32) {
    %c0_i32 = arith.constant 0 : i32
    %c0_i32_0 = arith.constant 0 : i32
    return %arg0, %c0_i32 : i32, i32
  }
  func.func @transform_1(%arg0: i32) -> (i32, i32) {
    %c0_i32 = arith.constant 0 : i32
    %c0_i32_0 = arith.constant 0 : i32
    %c0_i32_1 = arith.constant 0 : i32
    return %c0_i32, %c0_i32_0 : i32, i32
  }
  func.func @transform_2(%arg0: i32) -> (i32, i32) {
    %c0_i32 = arith.constant 0 : i32
    %c0_i32_0 = arith.constant 0 : i32
    %c0_i32_1 = arith.constant 0 : i32
    return %c0_i32, %c0_i32_0 : i32, i32
  }
  func.func @transform_3(%arg0: i32) -> (i32, i32) {
    %c0_i32 = arith.constant 0 : i32
    %c0_i32_0 = arith.constant 0 : i32
    return %arg0, %c0_i32 : i32, i32
  }
}

module attributes {stable_mosaic.version = 11 : i64} {
  func.func @_matmul_bias_act_kernel(%arg0: i32, %arg1: memref<8x288xbf16, #tpu.memory_space<vmem>>, %arg2: memref<288x128xbf16, #tpu.memory_space<vmem>>, %arg3: memref<1x128xf32, #tpu.memory_space<vmem>>, %arg4: memref<8x128xf32, #tpu.memory_space<vmem>>) attributes {dimension_semantics = [#tpu.dimension_semantics<parallel>], iteration_bounds = array<i64: 1>, scalar_prefetch = 0 : i64, scratch_operands = 0 : i64, tpu.core_type = #tpu.core_type<tc>, window_params = [{transform_indices = @transform_0, window_bounds = array<i64: 8, 288>}, {pipeline_mode = #tpu.pipeline_mode<synchronous>, transform_indices = @transform_1, window_bounds = array<i64: 288, 128>}, {pipeline_mode = #tpu.pipeline_mode<synchronous>, transform_indices = @transform_2, window_bounds = array<i64: 1, 128>}, {transform_indices = @transform_3, window_bounds = array<i64: 8, 128>}]} {
    %c0 = arith.constant 0 : index
    %c0_0 = arith.constant 0 : index
    %0 = vector.load %arg1[%c0, %c0_0] : memref<8x288xbf16, #tpu.memory_space<vmem>>, vector<8x288xbf16>
    %c0_1 = arith.constant 0 : index
    %c0_2 = arith.constant 0 : index
    %1 = vector.load %arg2[%c0_1, %c0_2] : memref<288x128xbf16, #tpu.memory_space<vmem>>, vector<288x128xbf16>
    %cst = arith.constant dense<0.000000e+00> : vector<8x128xf32>
    %2 = tpu.matmul %0, %1, %cst {dimension_numbers = #tpu.dot_dimension_numbers<[1], [0], [0], [1], [0, 0, 1, 1], [], []>} : vector<8x288xbf16>, vector<288x128xbf16>, vector<8x128xf32> -> vector<8x128xf32>
    %c0_3 = arith.constant 0 : index
    %c0_4 = arith.constant 0 : index
    %3 = vector.load %arg3[%c0_3, %c0_4] : memref<1x128xf32, #tpu.memory_space<vmem>>, vector<1x128xf32>
    %4 = vector.broadcast %3 : vector<1x128xf32> to vector<8x128xf32>
    %5 = arith.addf %2, %4 : vector<8x128xf32>
    %cst_5 = arith.constant 0.000000e+00 : f32
    %6 = vector.broadcast %cst_5 : f32 to vector<8x128xf32>
    %7 = arith.maximumf %5, %6 : vector<8x128xf32>
    %c0_6 = arith.constant 0 : index
    %c0_7 = arith.constant 0 : index
    %8 = vector.load %arg4[%c0_6, %c0_7] : memref<8x128xf32, #tpu.memory_space<vmem>>, vector<8x128xf32>
    tpu.vector_store %arg4[%c0_6, %c0_7], %7 {strides = array<i32>} : memref<8x128xf32, #tpu.memory_space<vmem>>, vector<8x128xf32>,
    return
  }
  func.func @transform_0(%arg0: i32) -> (i32, i32) {
    %c0_i32 = arith.constant 0 : i32
    %c0_i32_0 = arith.constant 0 : i32
    return %arg0, %c0_i32 : i32, i32
  }
  func.func @transform_1(%arg0: i32) -> (i32, i32) {
    %c0_i32 = arith.constant 0 : i32
    %c0_i32_0 = arith.constant 0 : i32
    %c0_i32_1 = arith.constant 0 : i32
    return %c0_i32, %c0_i32_0 : i32, i32
  }
  func.func @transform_2(%arg0: i32) -> (i32, i32) {
    %c0_i32 = arith.constant 0 : i32
    %c0_i32_0 = arith.constant 0 : i32
    %c0_i32_1 = arith.constant 0 : i32
    return %c0_i32, %c0_i32_0 : i32, i32
  }
  func.func @transform_3(%arg0: i32) -> (i32, i32) {
    %c0_i32 = arith.constant 0 : i32
    %c0_i32_0 = arith.constant 0 : i32
    return %arg0, %c0_i32 : i32, i32
  }
}

module attributes {stable_mosaic.version = 11 : i64} {
  func.func @_matmul_bias_act_kernel(%arg0: i32, %arg1: memref<128x8xbf16, #tpu.memory_space<vmem>>, %arg2: memref<8x128xbf16, #tpu.memory_space<vmem>>, %arg3: memref<1x128xf32, #tpu.memory_space<vmem>>, %arg4: memref<128x128xf32, #tpu.memory_space<vmem>>) attributes {dimension_semantics = [#tpu.dimension_semantics<parallel>], iteration_bounds = array<i64: 1>, scalar_prefetch = 0 : i64, scratch_operands = 0 : i64, tpu.core_type = #tpu.core_type<tc>, window_params = [{transform_indices = @transform_0, window_bounds = array<i64: 128, 8>}, {pipeline_mode = #tpu.pipeline_mode<synchronous>, transform_indices = @transform_1, window_bounds = array<i64: 8, 128>}, {pipeline_mode = #tpu.pipeline_mode<synchronous>, transform_indices = @transform_2, window_bounds = array<i64: 1, 128>}, {transform_indices = @transform_3, window_bounds = array<i64: 128, 128>}]} {
    %c0 = arith.constant 0 : index
    %c0_0 = arith.constant 0 : index
    %0 = vector.load %arg1[%c0, %c0_0] : memref<128x8xbf16, #tpu.memory_space<vmem>>, vector<128x8xbf16>
    %c0_1 = arith.constant 0 : index
    %c0_2 = arith.constant 0 : index
    %1 = vector.load %arg2[%c0_1, %c0_2] : memref<8x128xbf16, #tpu.memory_space<vmem>>, vector<8x128xbf16>
    %cst = arith.constant dense<0.000000e+00> : vector<128x128xf32>
    %2 = tpu.matmul %0, %1, %cst {dimension_numbers = #tpu.dot_dimension_numbers<[1], [0], [0], [1], [0, 0, 1, 1], [], []>} : vector<128x8xbf16>, vector<8x128xbf16>, vector<128x128xf32> -> vector<128x128xf32>
    %c0_3 = arith.constant 0 : index
    %c0_4 = arith.constant 0 : index
    %3 = vector.load %arg3[%c0_3, %c0_4] : memref<1x128xf32, #tpu.memory_space<vmem>>, vector<1x128xf32>
    %4 = vector.broadcast %3 : vector<1x128xf32> to vector<128x128xf32>
    %5 = arith.addf %2, %4 : vector<128x128xf32>
    %c0_5 = arith.constant 0 : index
    %c0_6 = arith.constant 0 : index
    %6 = vector.load %arg4[%c0_5, %c0_6] : memref<128x128xf32, #tpu.memory_space<vmem>>, vector<128x128xf32>
    tpu.vector_store %arg4[%c0_5, %c0_6], %5 {strides = array<i32>} : memref<128x128xf32, #tpu.memory_space<vmem>>, vector<128x128xf32>,
    return
  }
  func.func @transform_0(%arg0: i32) -> (i32, i32) {
    %c0_i32 = arith.constant 0 : i32
    %c0_i32_0 = arith.constant 0 : i32
    return %arg0, %c0_i32 : i32, i32
  }
  func.func @transform_1(%arg0: i32) -> (i32, i32) {
    %c0_i32 = arith.constant 0 : i32
    %c0_i32_0 = arith.constant 0 : i32
    %c0_i32_1 = arith.constant 0 : i32
    return %c0_i32, %c0_i32_0 : i32, i32
  }
  func.func @transform_2(%arg0: i32) -> (i32, i32) {
    %c0_i32 = arith.constant 0 : i32
    %c0_i32_0 = arith.constant 0 : i32
    %c0_i32_1 = arith.constant 0 : i32
    return %c0_i32, %c0_i32_0 : i32, i32
  }
  func.func @transform_3(%arg0: i32) -> (i32, i32) {
    %c0_i32 = arith.constant 0 : i32
    %c0_i32_0 = arith.constant 0 : i32
    return %arg0, %c0_i32 : i32, i32
  }
}

module attributes {stable_mosaic.version = 11 : i64} {
  func.func @_upsample_add_kernel(%arg0: i32, %arg1: memref<16x4xf32, #tpu.memory_space<vmem>>, %arg2: memref<1x4x32xf32, #tpu.memory_space<vmem>>, %arg3: memref<1x16x32xf32, #tpu.memory_space<vmem>>, %arg4: memref<1x16x32xf32, #tpu.memory_space<vmem>>) attributes {dimension_semantics = [#tpu.dimension_semantics<arbitrary>], iteration_bounds = array<i64: 2>, scalar_prefetch = 0 : i64, scratch_operands = 0 : i64, tpu.core_type = #tpu.core_type<tc>, window_params = [{pipeline_mode = #tpu.pipeline_mode<synchronous>, transform_indices = @transform_0, window_bounds = array<i64: 16, 4>}, {transform_indices = @transform_1, window_bounds = array<i64: 1, 4, 32>}, {transform_indices = @transform_2, window_bounds = array<i64: 1, 16, 32>}, {transform_indices = @transform_3, window_bounds = array<i64: 1, 16, 32>}]} {
    %c0 = arith.constant 0 : index
    %c0_0 = arith.constant 0 : index
    %0 = vector.load %arg1[%c0, %c0_0] : memref<16x4xf32, #tpu.memory_space<vmem>>, vector<16x4xf32>
    %c0_1 = arith.constant 0 : index
    %c0_2 = arith.constant 0 : index
    %c0_3 = arith.constant 0 : index
    %1 = vector.load %arg2[%c0_1, %c0_2, %c0_3] : memref<1x4x32xf32, #tpu.memory_space<vmem>>, vector<1x4x32xf32>
    %2 = vector.shape_cast %1 : vector<1x4x32xf32> to vector<4x32xf32>
    %cst = arith.constant dense<0.000000e+00> : vector<16x32xf32>
    %3 = tpu.matmul %0, %2, %cst {dimension_numbers = #tpu.dot_dimension_numbers<[1], [0], [0], [1], [0, 0, 1, 1], [], []>} : vector<16x4xf32>, vector<4x32xf32>, vector<16x32xf32> -> vector<16x32xf32>
    %c0_4 = arith.constant 0 : index
    %c0_5 = arith.constant 0 : index
    %c0_6 = arith.constant 0 : index
    %4 = vector.load %arg3[%c0_4, %c0_5, %c0_6] : memref<1x16x32xf32, #tpu.memory_space<vmem>>, vector<1x16x32xf32>
    %5 = vector.shape_cast %4 : vector<1x16x32xf32> to vector<16x32xf32>
    %6 = arith.addf %3, %5 : vector<16x32xf32>
    %c0_7 = arith.constant 0 : index
    %c0_8 = arith.constant 0 : index
    %c0_9 = arith.constant 0 : index
    %7 = vector.load %arg4[%c0_7, %c0_8, %c0_9] : memref<1x16x32xf32, #tpu.memory_space<vmem>>, vector<1x16x32xf32>
    %8 = vector.shape_cast %7 : vector<1x16x32xf32> to vector<16x32xf32>
    %9 = vector.shape_cast %6 : vector<16x32xf32> to vector<1x16x32xf32>
    tpu.vector_store %arg4[%c0_7, %c0_8, %c0_9], %9 {strides = array<i32>} : memref<1x16x32xf32, #tpu.memory_space<vmem>>, vector<1x16x32xf32>,
    return
  }
  func.func @transform_0(%arg0: i32) -> (i32, i32) {
    %c0_i32 = arith.constant 0 : i32
    %c0_i32_0 = arith.constant 0 : i32
    %c0_i32_1 = arith.constant 0 : i32
    return %c0_i32, %c0_i32_0 : i32, i32
  }
  func.func @transform_1(%arg0: i32) -> (i32, i32, i32) {
    %c0_i32 = arith.constant 0 : i32
    %c0_i32_0 = arith.constant 0 : i32
    %c0_i32_1 = arith.constant 0 : i32
    return %arg0, %c0_i32, %c0_i32_0 : i32, i32, i32
  }
  func.func @transform_2(%arg0: i32) -> (i32, i32, i32) {
    %c0_i32 = arith.constant 0 : i32
    %c0_i32_0 = arith.constant 0 : i32
    %c0_i32_1 = arith.constant 0 : i32
    return %arg0, %c0_i32, %c0_i32_0 : i32, i32, i32
  }
  func.func @transform_3(%arg0: i32) -> (i32, i32, i32) {
    %c0_i32 = arith.constant 0 : i32
    %c0_i32_0 = arith.constant 0 : i32
    %c0_i32_1 = arith.constant 0 : i32
    return %arg0, %c0_i32, %c0_i32_0 : i32, i32, i32
  }
}

module attributes {stable_mosaic.version = 11 : i64} {
  func.func @_upsample_add_kernel(%arg0: i32, %arg1: memref<64x16xf32, #tpu.memory_space<vmem>>, %arg2: memref<1x16x32xf32, #tpu.memory_space<vmem>>, %arg3: memref<1x64x32xf32, #tpu.memory_space<vmem>>, %arg4: memref<1x64x32xf32, #tpu.memory_space<vmem>>) attributes {dimension_semantics = [#tpu.dimension_semantics<arbitrary>], iteration_bounds = array<i64: 2>, scalar_prefetch = 0 : i64, scratch_operands = 0 : i64, tpu.core_type = #tpu.core_type<tc>, window_params = [{pipeline_mode = #tpu.pipeline_mode<synchronous>, transform_indices = @transform_0, window_bounds = array<i64: 64, 16>}, {transform_indices = @transform_1, window_bounds = array<i64: 1, 16, 32>}, {transform_indices = @transform_2, window_bounds = array<i64: 1, 64, 32>}, {transform_indices = @transform_3, window_bounds = array<i64: 1, 64, 32>}]} {
    %c0 = arith.constant 0 : index
    %c0_0 = arith.constant 0 : index
    %0 = vector.load %arg1[%c0, %c0_0] : memref<64x16xf32, #tpu.memory_space<vmem>>, vector<64x16xf32>
    %c0_1 = arith.constant 0 : index
    %c0_2 = arith.constant 0 : index
    %c0_3 = arith.constant 0 : index
    %1 = vector.load %arg2[%c0_1, %c0_2, %c0_3] : memref<1x16x32xf32, #tpu.memory_space<vmem>>, vector<1x16x32xf32>
    %2 = vector.shape_cast %1 : vector<1x16x32xf32> to vector<16x32xf32>
    %cst = arith.constant dense<0.000000e+00> : vector<64x32xf32>
    %3 = tpu.matmul %0, %2, %cst {dimension_numbers = #tpu.dot_dimension_numbers<[1], [0], [0], [1], [0, 0, 1, 1], [], []>} : vector<64x16xf32>, vector<16x32xf32>, vector<64x32xf32> -> vector<64x32xf32>
    %c0_4 = arith.constant 0 : index
    %c0_5 = arith.constant 0 : index
    %c0_6 = arith.constant 0 : index
    %4 = vector.load %arg3[%c0_4, %c0_5, %c0_6] : memref<1x64x32xf32, #tpu.memory_space<vmem>>, vector<1x64x32xf32>
    %5 = vector.shape_cast %4 : vector<1x64x32xf32> to vector<64x32xf32>
    %6 = arith.addf %3, %5 : vector<64x32xf32>
    %c0_7 = arith.constant 0 : index
    %c0_8 = arith.constant 0 : index
    %c0_9 = arith.constant 0 : index
    %7 = vector.load %arg4[%c0_7, %c0_8, %c0_9] : memref<1x64x32xf32, #tpu.memory_space<vmem>>, vector<1x64x32xf32>
    %8 = vector.shape_cast %7 : vector<1x64x32xf32> to vector<64x32xf32>
    %9 = vector.shape_cast %6 : vector<64x32xf32> to vector<1x64x32xf32>
    tpu.vector_store %arg4[%c0_7, %c0_8, %c0_9], %9 {strides = array<i32>} : memref<1x64x32xf32, #tpu.memory_space<vmem>>, vector<1x64x32xf32>,
    return
  }
  func.func @transform_0(%arg0: i32) -> (i32, i32) {
    %c0_i32 = arith.constant 0 : i32
    %c0_i32_0 = arith.constant 0 : i32
    %c0_i32_1 = arith.constant 0 : i32
    return %c0_i32, %c0_i32_0 : i32, i32
  }
  func.func @transform_1(%arg0: i32) -> (i32, i32, i32) {
    %c0_i32 = arith.constant 0 : i32
    %c0_i32_0 = arith.constant 0 : i32
    %c0_i32_1 = arith.constant 0 : i32
    return %arg0, %c0_i32, %c0_i32_0 : i32, i32, i32
  }
  func.func @transform_2(%arg0: i32) -> (i32, i32, i32) {
    %c0_i32 = arith.constant 0 : i32
    %c0_i32_0 = arith.constant 0 : i32
    %c0_i32_1 = arith.constant 0 : i32
    return %arg0, %c0_i32, %c0_i32_0 : i32, i32, i32
  }
  func.func @transform_3(%arg0: i32) -> (i32, i32, i32) {
    %c0_i32 = arith.constant 0 : i32
    %c0_i32_0 = arith.constant 0 : i32
    %c0_i32_1 = arith.constant 0 : i32
    return %arg0, %c0_i32, %c0_i32_0 : i32, i32, i32
  }
}

module attributes {stable_mosaic.version = 11 : i64} {
  func.func @_matmul_bias_act_kernel(%arg0: i32, %arg1: memref<512x4xbf16, #tpu.memory_space<vmem>>, %arg2: memref<4x128xbf16, #tpu.memory_space<vmem>>, %arg3: memref<1x128xf32, #tpu.memory_space<vmem>>, %arg4: memref<512x128xf32, #tpu.memory_space<vmem>>) attributes {dimension_semantics = [#tpu.dimension_semantics<parallel>], iteration_bounds = array<i64: 1>, scalar_prefetch = 0 : i64, scratch_operands = 0 : i64, tpu.core_type = #tpu.core_type<tc>, window_params = [{transform_indices = @transform_0, window_bounds = array<i64: 512, 4>}, {pipeline_mode = #tpu.pipeline_mode<synchronous>, transform_indices = @transform_1, window_bounds = array<i64: 4, 128>}, {pipeline_mode = #tpu.pipeline_mode<synchronous>, transform_indices = @transform_2, window_bounds = array<i64: 1, 128>}, {transform_indices = @transform_3, window_bounds = array<i64: 512, 128>}]} {
    %c0 = arith.constant 0 : index
    %c0_0 = arith.constant 0 : index
    %0 = vector.load %arg1[%c0, %c0_0] : memref<512x4xbf16, #tpu.memory_space<vmem>>, vector<512x4xbf16>
    %c0_1 = arith.constant 0 : index
    %c0_2 = arith.constant 0 : index
    %1 = vector.load %arg2[%c0_1, %c0_2] : memref<4x128xbf16, #tpu.memory_space<vmem>>, vector<4x128xbf16>
    %cst = arith.constant dense<0.000000e+00> : vector<512x128xf32>
    %2 = tpu.matmul %0, %1, %cst {dimension_numbers = #tpu.dot_dimension_numbers<[1], [0], [0], [1], [0, 0, 1, 1], [], []>} : vector<512x4xbf16>, vector<4x128xbf16>, vector<512x128xf32> -> vector<512x128xf32>
    %c0_3 = arith.constant 0 : index
    %c0_4 = arith.constant 0 : index
    %3 = vector.load %arg3[%c0_3, %c0_4] : memref<1x128xf32, #tpu.memory_space<vmem>>, vector<1x128xf32>
    %4 = vector.broadcast %3 : vector<1x128xf32> to vector<512x128xf32>
    %5 = arith.addf %2, %4 : vector<512x128xf32>
    %c0_5 = arith.constant 0 : index
    %c0_6 = arith.constant 0 : index
    %6 = vector.load %arg4[%c0_5, %c0_6] : memref<512x128xf32, #tpu.memory_space<vmem>>, vector<512x128xf32>
    tpu.vector_store %arg4[%c0_5, %c0_6], %5 {strides = array<i32>} : memref<512x128xf32, #tpu.memory_space<vmem>>, vector<512x128xf32>,
    return
  }
  func.func @transform_0(%arg0: i32) -> (i32, i32) {
    %c0_i32 = arith.constant 0 : i32
    %c0_i32_0 = arith.constant 0 : i32
    return %arg0, %c0_i32 : i32, i32
  }
  func.func @transform_1(%arg0: i32) -> (i32, i32) {
    %c0_i32 = arith.constant 0 : i32
    %c0_i32_0 = arith.constant 0 : i32
    %c0_i32_1 = arith.constant 0 : i32
    return %c0_i32, %c0_i32_0 : i32, i32
  }
  func.func @transform_2(%arg0: i32) -> (i32, i32) {
    %c0_i32 = arith.constant 0 : i32
    %c0_i32_0 = arith.constant 0 : i32
    %c0_i32_1 = arith.constant 0 : i32
    return %c0_i32, %c0_i32_0 : i32, i32
  }
  func.func @transform_3(%arg0: i32) -> (i32, i32) {
    %c0_i32 = arith.constant 0 : i32
    %c0_i32_0 = arith.constant 0 : i32
    return %arg0, %c0_i32 : i32, i32
  }
}

module attributes {stable_mosaic.version = 11 : i64} {
  func.func @_upsample_add_kernel(%arg0: i32, %arg1: memref<256x64xf32, #tpu.memory_space<vmem>>, %arg2: memref<1x64x32xf32, #tpu.memory_space<vmem>>, %arg3: memref<1x256x32xf32, #tpu.memory_space<vmem>>, %arg4: memref<1x256x32xf32, #tpu.memory_space<vmem>>) attributes {dimension_semantics = [#tpu.dimension_semantics<arbitrary>], iteration_bounds = array<i64: 2>, scalar_prefetch = 0 : i64, scratch_operands = 0 : i64, tpu.core_type = #tpu.core_type<tc>, window_params = [{pipeline_mode = #tpu.pipeline_mode<synchronous>, transform_indices = @transform_0, window_bounds = array<i64: 256, 64>}, {transform_indices = @transform_1, window_bounds = array<i64: 1, 64, 32>}, {transform_indices = @transform_2, window_bounds = array<i64: 1, 256, 32>}, {transform_indices = @transform_3, window_bounds = array<i64: 1, 256, 32>}]} {
    %c0 = arith.constant 0 : index
    %c0_0 = arith.constant 0 : index
    %0 = vector.load %arg1[%c0, %c0_0] : memref<256x64xf32, #tpu.memory_space<vmem>>, vector<256x64xf32>
    %c0_1 = arith.constant 0 : index
    %c0_2 = arith.constant 0 : index
    %c0_3 = arith.constant 0 : index
    %1 = vector.load %arg2[%c0_1, %c0_2, %c0_3] : memref<1x64x32xf32, #tpu.memory_space<vmem>>, vector<1x64x32xf32>
    %2 = vector.shape_cast %1 : vector<1x64x32xf32> to vector<64x32xf32>
    %cst = arith.constant dense<0.000000e+00> : vector<256x32xf32>
    %3 = tpu.matmul %0, %2, %cst {dimension_numbers = #tpu.dot_dimension_numbers<[1], [0], [0], [1], [0, 0, 1, 1], [], []>} : vector<256x64xf32>, vector<64x32xf32>, vector<256x32xf32> -> vector<256x32xf32>
    %c0_4 = arith.constant 0 : index
    %c0_5 = arith.constant 0 : index
    %c0_6 = arith.constant 0 : index
    %4 = vector.load %arg3[%c0_4, %c0_5, %c0_6] : memref<1x256x32xf32, #tpu.memory_space<vmem>>, vector<1x256x32xf32>
    %5 = vector.shape_cast %4 : vector<1x256x32xf32> to vector<256x32xf32>
    %6 = arith.addf %3, %5 : vector<256x32xf32>
    %c0_7 = arith.constant 0 : index
    %c0_8 = arith.constant 0 : index
    %c0_9 = arith.constant 0 : index
    %7 = vector.load %arg4[%c0_7, %c0_8, %c0_9] : memref<1x256x32xf32, #tpu.memory_space<vmem>>, vector<1x256x32xf32>
    %8 = vector.shape_cast %7 : vector<1x256x32xf32> to vector<256x32xf32>
    %9 = vector.shape_cast %6 : vector<256x32xf32> to vector<1x256x32xf32>
    tpu.vector_store %arg4[%c0_7, %c0_8, %c0_9], %9 {strides = array<i32>} : memref<1x256x32xf32, #tpu.memory_space<vmem>>, vector<1x256x32xf32>,
    return
  }
  func.func @transform_0(%arg0: i32) -> (i32, i32) {
    %c0_i32 = arith.constant 0 : i32
    %c0_i32_0 = arith.constant 0 : i32
    %c0_i32_1 = arith.constant 0 : i32
    return %c0_i32, %c0_i32_0 : i32, i32
  }
  func.func @transform_1(%arg0: i32) -> (i32, i32, i32) {
    %c0_i32 = arith.constant 0 : i32
    %c0_i32_0 = arith.constant 0 : i32
    %c0_i32_1 = arith.constant 0 : i32
    return %arg0, %c0_i32, %c0_i32_0 : i32, i32, i32
  }
  func.func @transform_2(%arg0: i32) -> (i32, i32, i32) {
    %c0_i32 = arith.constant 0 : i32
    %c0_i32_0 = arith.constant 0 : i32
    %c0_i32_1 = arith.constant 0 : i32
    return %arg0, %c0_i32, %c0_i32_0 : i32, i32, i32
  }
  func.func @transform_3(%arg0: i32) -> (i32, i32, i32) {
    %c0_i32 = arith.constant 0 : i32
    %c0_i32_0 = arith.constant 0 : i32
    %c0_i32_1 = arith.constant 0 : i32
    return %arg0, %c0_i32, %c0_i32_0 : i32, i32, i32
  }
}

module attributes {stable_mosaic.version = 11 : i64} {
  func.func @_matmul_bias_act_kernel(%arg0: i32, %arg1: memref<512x288xbf16, #tpu.memory_space<vmem>>, %arg2: memref<288x128xbf16, #tpu.memory_space<vmem>>, %arg3: memref<1x128xf32, #tpu.memory_space<vmem>>, %arg4: memref<512x128xf32, #tpu.memory_space<vmem>>) attributes {dimension_semantics = [#tpu.dimension_semantics<parallel>], iteration_bounds = array<i64: 1>, scalar_prefetch = 0 : i64, scratch_operands = 0 : i64, tpu.core_type = #tpu.core_type<tc>, window_params = [{transform_indices = @transform_0, window_bounds = array<i64: 512, 288>}, {pipeline_mode = #tpu.pipeline_mode<synchronous>, transform_indices = @transform_1, window_bounds = array<i64: 288, 128>}, {pipeline_mode = #tpu.pipeline_mode<synchronous>, transform_indices = @transform_2, window_bounds = array<i64: 1, 128>}, {transform_indices = @transform_3, window_bounds = array<i64: 512, 128>}]} {
    %c0 = arith.constant 0 : index
    %c0_0 = arith.constant 0 : index
    %0 = vector.load %arg1[%c0, %c0_0] : memref<512x288xbf16, #tpu.memory_space<vmem>>, vector<512x288xbf16>
    %c0_1 = arith.constant 0 : index
    %c0_2 = arith.constant 0 : index
    %1 = vector.load %arg2[%c0_1, %c0_2] : memref<288x128xbf16, #tpu.memory_space<vmem>>, vector<288x128xbf16>
    %cst = arith.constant dense<0.000000e+00> : vector<512x128xf32>
    %2 = tpu.matmul %0, %1, %cst {dimension_numbers = #tpu.dot_dimension_numbers<[1], [0], [0], [1], [0, 0, 1, 1], [], []>} : vector<512x288xbf16>, vector<288x128xbf16>, vector<512x128xf32> -> vector<512x128xf32>
    %c0_3 = arith.constant 0 : index
    %c0_4 = arith.constant 0 : index
    %3 = vector.load %arg3[%c0_3, %c0_4] : memref<1x128xf32, #tpu.memory_space<vmem>>, vector<1x128xf32>
    %4 = vector.broadcast %3 : vector<1x128xf32> to vector<512x128xf32>
    %5 = arith.addf %2, %4 : vector<512x128xf32>
    %c0_5 = arith.constant 0 : index
    %c0_6 = arith.constant 0 : index
    %6 = vector.load %arg4[%c0_5, %c0_6] : memref<512x128xf32, #tpu.memory_space<vmem>>, vector<512x128xf32>
    tpu.vector_store %arg4[%c0_5, %c0_6], %5 {strides = array<i32>} : memref<512x128xf32, #tpu.memory_space<vmem>>, vector<512x128xf32>,
    return
  }
  func.func @transform_0(%arg0: i32) -> (i32, i32) {
    %c0_i32 = arith.constant 0 : i32
    %c0_i32_0 = arith.constant 0 : i32
    return %arg0, %c0_i32 : i32, i32
  }
  func.func @transform_1(%arg0: i32) -> (i32, i32) {
    %c0_i32 = arith.constant 0 : i32
    %c0_i32_0 = arith.constant 0 : i32
    %c0_i32_1 = arith.constant 0 : i32
    return %c0_i32, %c0_i32_0 : i32, i32
  }
  func.func @transform_2(%arg0: i32) -> (i32, i32) {
    %c0_i32 = arith.constant 0 : i32
    %c0_i32_0 = arith.constant 0 : i32
    %c0_i32_1 = arith.constant 0 : i32
    return %c0_i32, %c0_i32_0 : i32, i32
  }
  func.func @transform_3(%arg0: i32) -> (i32, i32) {
    %c0_i32 = arith.constant 0 : i32
    %c0_i32_0 = arith.constant 0 : i32
    return %arg0, %c0_i32 : i32, i32
  }
}

module attributes {stable_mosaic.version = 11 : i64} {
  func.func @_matmul_bias_act_kernel(%arg0: i32, %arg1: memref<128x288xbf16, #tpu.memory_space<vmem>>, %arg2: memref<288x128xbf16, #tpu.memory_space<vmem>>, %arg3: memref<1x128xf32, #tpu.memory_space<vmem>>, %arg4: memref<128x128xf32, #tpu.memory_space<vmem>>) attributes {dimension_semantics = [#tpu.dimension_semantics<parallel>], iteration_bounds = array<i64: 1>, scalar_prefetch = 0 : i64, scratch_operands = 0 : i64, tpu.core_type = #tpu.core_type<tc>, window_params = [{transform_indices = @transform_0, window_bounds = array<i64: 128, 288>}, {pipeline_mode = #tpu.pipeline_mode<synchronous>, transform_indices = @transform_1, window_bounds = array<i64: 288, 128>}, {pipeline_mode = #tpu.pipeline_mode<synchronous>, transform_indices = @transform_2, window_bounds = array<i64: 1, 128>}, {transform_indices = @transform_3, window_bounds = array<i64: 128, 128>}]} {
    %c0 = arith.constant 0 : index
    %c0_0 = arith.constant 0 : index
    %0 = vector.load %arg1[%c0, %c0_0] : memref<128x288xbf16, #tpu.memory_space<vmem>>, vector<128x288xbf16>
    %c0_1 = arith.constant 0 : index
    %c0_2 = arith.constant 0 : index
    %1 = vector.load %arg2[%c0_1, %c0_2] : memref<288x128xbf16, #tpu.memory_space<vmem>>, vector<288x128xbf16>
    %cst = arith.constant dense<0.000000e+00> : vector<128x128xf32>
    %2 = tpu.matmul %0, %1, %cst {dimension_numbers = #tpu.dot_dimension_numbers<[1], [0], [0], [1], [0, 0, 1, 1], [], []>} : vector<128x288xbf16>, vector<288x128xbf16>, vector<128x128xf32> -> vector<128x128xf32>
    %c0_3 = arith.constant 0 : index
    %c0_4 = arith.constant 0 : index
    %3 = vector.load %arg3[%c0_3, %c0_4] : memref<1x128xf32, #tpu.memory_space<vmem>>, vector<1x128xf32>
    %4 = vector.broadcast %3 : vector<1x128xf32> to vector<128x128xf32>
    %5 = arith.addf %2, %4 : vector<128x128xf32>
    %c0_5 = arith.constant 0 : index
    %c0_6 = arith.constant 0 : index
    %6 = vector.load %arg4[%c0_5, %c0_6] : memref<128x128xf32, #tpu.memory_space<vmem>>, vector<128x128xf32>
    tpu.vector_store %arg4[%c0_5, %c0_6], %5 {strides = array<i32>} : memref<128x128xf32, #tpu.memory_space<vmem>>, vector<128x128xf32>,
    return
  }
  func.func @transform_0(%arg0: i32) -> (i32, i32) {
    %c0_i32 = arith.constant 0 : i32
    %c0_i32_0 = arith.constant 0 : i32
    return %arg0, %c0_i32 : i32, i32
  }
  func.func @transform_1(%arg0: i32) -> (i32, i32) {
    %c0_i32 = arith.constant 0 : i32
    %c0_i32_0 = arith.constant 0 : i32
    %c0_i32_1 = arith.constant 0 : i32
    return %c0_i32, %c0_i32_0 : i32, i32
  }
  func.func @transform_2(%arg0: i32) -> (i32, i32) {
    %c0_i32 = arith.constant 0 : i32
    %c0_i32_0 = arith.constant 0 : i32
    %c0_i32_1 = arith.constant 0 : i32
    return %c0_i32, %c0_i32_0 : i32, i32
  }
  func.func @transform_3(%arg0: i32) -> (i32, i32) {
    %c0_i32 = arith.constant 0 : i32
    %c0_i32_0 = arith.constant 0 : i32
    return %arg0, %c0_i32 : i32, i32
  }
}

module attributes {stable_mosaic.version = 11 : i64} {
  func.func @_matmul_bias_act_kernel(%arg0: i32, %arg1: memref<32x288xbf16, #tpu.memory_space<vmem>>, %arg2: memref<288x128xbf16, #tpu.memory_space<vmem>>, %arg3: memref<1x128xf32, #tpu.memory_space<vmem>>, %arg4: memref<32x128xf32, #tpu.memory_space<vmem>>) attributes {dimension_semantics = [#tpu.dimension_semantics<parallel>], iteration_bounds = array<i64: 1>, scalar_prefetch = 0 : i64, scratch_operands = 0 : i64, tpu.core_type = #tpu.core_type<tc>, window_params = [{transform_indices = @transform_0, window_bounds = array<i64: 32, 288>}, {pipeline_mode = #tpu.pipeline_mode<synchronous>, transform_indices = @transform_1, window_bounds = array<i64: 288, 128>}, {pipeline_mode = #tpu.pipeline_mode<synchronous>, transform_indices = @transform_2, window_bounds = array<i64: 1, 128>}, {transform_indices = @transform_3, window_bounds = array<i64: 32, 128>}]} {
    %c0 = arith.constant 0 : index
    %c0_0 = arith.constant 0 : index
    %0 = vector.load %arg1[%c0, %c0_0] : memref<32x288xbf16, #tpu.memory_space<vmem>>, vector<32x288xbf16>
    %c0_1 = arith.constant 0 : index
    %c0_2 = arith.constant 0 : index
    %1 = vector.load %arg2[%c0_1, %c0_2] : memref<288x128xbf16, #tpu.memory_space<vmem>>, vector<288x128xbf16>
    %cst = arith.constant dense<0.000000e+00> : vector<32x128xf32>
    %2 = tpu.matmul %0, %1, %cst {dimension_numbers = #tpu.dot_dimension_numbers<[1], [0], [0], [1], [0, 0, 1, 1], [], []>} : vector<32x288xbf16>, vector<288x128xbf16>, vector<32x128xf32> -> vector<32x128xf32>
    %c0_3 = arith.constant 0 : index
    %c0_4 = arith.constant 0 : index
    %3 = vector.load %arg3[%c0_3, %c0_4] : memref<1x128xf32, #tpu.memory_space<vmem>>, vector<1x128xf32>
    %4 = vector.broadcast %3 : vector<1x128xf32> to vector<32x128xf32>
    %5 = arith.addf %2, %4 : vector<32x128xf32>
    %c0_5 = arith.constant 0 : index
    %c0_6 = arith.constant 0 : index
    %6 = vector.load %arg4[%c0_5, %c0_6] : memref<32x128xf32, #tpu.memory_space<vmem>>, vector<32x128xf32>
    tpu.vector_store %arg4[%c0_5, %c0_6], %5 {strides = array<i32>} : memref<32x128xf32, #tpu.memory_space<vmem>>, vector<32x128xf32>,
    return
  }
  func.func @transform_0(%arg0: i32) -> (i32, i32) {
    %c0_i32 = arith.constant 0 : i32
    %c0_i32_0 = arith.constant 0 : i32
    return %arg0, %c0_i32 : i32, i32
  }
  func.func @transform_1(%arg0: i32) -> (i32, i32) {
    %c0_i32 = arith.constant 0 : i32
    %c0_i32_0 = arith.constant 0 : i32
    %c0_i32_1 = arith.constant 0 : i32
    return %c0_i32, %c0_i32_0 : i32, i32
  }
  func.func @transform_2(%arg0: i32) -> (i32, i32) {
    %c0_i32 = arith.constant 0 : i32
    %c0_i32_0 = arith.constant 0 : i32
    %c0_i32_1 = arith.constant 0 : i32
    return %c0_i32, %c0_i32_0 : i32, i32
  }
  func.func @transform_3(%arg0: i32) -> (i32, i32) {
    %c0_i32 = arith.constant 0 : i32
    %c0_i32_0 = arith.constant 0 : i32
    return %arg0, %c0_i32 : i32, i32
  }
}

</mosaic_0001>

<llo_original>
// kernel: _lambda_.20
$region0: #{_lambda_.20}
  #allocation0 [shape = 'u32[]', space=smem, size = 0x4, offset = 0x4, fixed_abs, tag = 'smem constant byte address 0x4 - core index']
  #allocation1 [shape = 'u32[72,128]{1,0:T(1,128)}', space=vmem, size = 0x9000, scoped, tag = 'internal scratch']
  %s0 = inlined_call_operand.vmem [shape: bf16[512,27], index: 0, kind: input, shape index: {}]
  %s1 = inlined_call_operand.vmem [shape: bf16[27,128], index: 1, kind: input, shape index: {}]
  %s2 = inlined_call_operand.vmem [shape: f32[1,128], index: 2, kind: input, shape index: {}]
  %s3 = inlined_call_operand.vmem [shape: f32[512,128], index: 3, kind: output, shape index: {}]
  %s4 = sld [smem:[#allocation0]]
  $region22: #{_lambda_.20} parent=0
    _
  %s6 = ssub.s32 1, %s4
  %s7 = scalar_select 0, %s6, %s4
  // Predicated region
  $region2: #{_lambda_.20} parent=0 // pred_check
    _
  $region3: #{_lambda_.20} parent=0 // pred_check_branch
    %9 = sbr.rel (0) target = $region5
  $region4: #{_lambda_.20} parent=0 // pred_region
    _
  $region5: #{_lambda_.20} parent=0 // pred_fallthru
    _
  // Predicated region
  $region6: #{_lambda_.20} parent=0 // pred_check
    _
  $region7: #{_lambda_.20} parent=0 // pred_check_branch
    %11 = sbr.rel (0) target = $region9
  $region8: #{_lambda_.20} parent=0 // pred_region
    _
  $region9: #{_lambda_.20} parent=0 // pred_fallthru
    _
  // Predicated region
  $region10: #{_lambda_.20} parent=0 // pred_check
    _
  $region11: #{_lambda_.20} parent=0 // pred_check_branch
    %13 = sbr.rel (0) target = $region13
  $region12: #{_lambda_.20} parent=0 // pred_region
    _
  $region13: #{_lambda_.20} parent=0 // pred_fallthru
    _
  %v15 = vld [vmem:[%s0] sm:$0xf]
  %v16 = vld [vmem:[%s0 + $0x4] sm:$0xf]
  %v17 = vld [vmem:[%s0 + $0x8] sm:$0xf]
  %v18 = vld [vmem:[%s0 + $0xc] sm:$0xf]
  %v19 = vld [vmem:[%s0 + $0x10] sm:$0xf]
  %v20 = vld [vmem:[%s0 + $0x14] sm:$0xf]
  %v21 = vld [vmem:[%s0 + $0x18] sm:$0xf]
  %v22 = vld [vmem:[%s0 + $0x1c] sm:$0xf]
  %v23 = vld [vmem:[%s0 + $0x20] sm:$0xf]
  %v24 = vld [vmem:[%s0 + $0x24] sm:$0xf]
  %v25 = vld [vmem:[%s0 + $0x28] sm:$0xf]
  %v26 = vld [vmem:[%s0 + $0x2c] sm:$0xf]
  %v27 = vld [vmem:[%s0 + $0x30] sm:$0xf]
  %v28 = vld [vmem:[%s0 + $0x34] sm:$0xf]
  %v29 = vld [vmem:[%s0 + $0x38] sm:$0xf]
  %v30 = vld [vmem:[%s0 + $0x3c] sm:$0xf]
  %v31 = vld [vmem:[%s0 + $0x40] sm:$0xf]
  %v32 = vld [vmem:[%s0 + $0x44] sm:$0xf]
  %v33 = vld [vmem:[%s0 + $0x48] sm:$0xf]
  %v34 = vld [vmem:[%s0 + $0x4c] sm:$0xf]
  %v35 = vld [vmem:[%s0 + $0x50] sm:$0xf]
  %v36 = vld [vmem:[%s0 + $0x54] sm:$0xf]
  %v37 = vld [vmem:[%s0 + $0x58] sm:$0xf]
  %v38 = vld [vmem:[%s0 + $0x5c] sm:$0xf]
  %v39 = vld [vmem:[%s0 + $0x60] sm:$0xf]
  %v40 = vld [vmem:[%s0 + $0x64] sm:$0xf]
  %v41 = vld [vmem:[%s0 + $0x68] sm:$0xf]
  %v42 = vld [vmem:[%s0 + $0x6c] sm:$0xf]
  %v43 = vld [vmem:[%s0 + $0x70] sm:$0xf]
  %v44 = vld [vmem:[%s0 + $0x74] sm:$0xf]
  %v45 = vld [vmem:[%s0 + $0x78] sm:$0xf]
  %v46 = vld [vmem:[%s0 + $0x7c] sm:$0xf]
  %v47 = vld [vmem:[%s0 + $0x80] sm:$0xf]
  %v48 = vld [vmem:[%s0 + $0x84] sm:$0xf]
  %v49 = vld [vmem:[%s0 + $0x88] sm:$0xf]
  %v50 = vld [vmem:[%s0 + $0x8c] sm:$0xf]
  %v51 = vld [vmem:[%s0 + $0x90] sm:$0xf]
  %v52 = vld [vmem:[%s0 + $0x94] sm:$0xf]
  %v53 = vld [vmem:[%s0 + $0x98] sm:$0xf]
  %v54 = vld [vmem:[%s0 + $0x9c] sm:$0xf]
  %v55 = vld [vmem:[%s0 + $0xa0] sm:$0xf]
  %v56 = vld [vmem:[%s0 + $0xa4] sm:$0xf]
  %v57 = vld [vmem:[%s0 + $0xa8] sm:$0xf]
  %v58 = vld [vmem:[%s0 + $0xac] sm:$0xf]
  %v59 = vld [vmem:[%s0 + $0xb0] sm:$0xf]
  %v60 = vld [vmem:[%s0 + $0xb4] sm:$0xf]
  %v61 = vld [vmem:[%s0 + $0xb8] sm:$0xf]
  %v62 = vld [vmem:[%s0 + $0xbc] sm:$0xf]
  %v63 = vld [vmem:[%s0 + $0xc0] sm:$0xf]
  %v64 = vld [vmem:[%s0 + $0xc4] sm:$0xf]
  %v65 = vld [vmem:[%s0 + $0xc8] sm:$0xf]
  %v66 = vld [vmem:[%s0 + $0xcc] sm:$0xf]
  %v67 = vld [vmem:[%s0 + $0xd0] sm:$0xf]
  %v68 = vld [vmem:[%s0 + $0xd4] sm:$0xf]
  %v69 = vld [vmem:[%s0 + $0xd8] sm:$0xf]
  %v70 = vld [vmem:[%s0 + $0xdc] sm:$0xf]
  %v71 = vld [vmem:[%s0 + $0xe0] sm:$0xf]
  %v72 = vld [vmem:[%s0 + $0xe4] sm:$0xf]
  %v73 = vld [vmem:[%s0 + $0xe8] sm:$0xf]
  %v74 = vld [vmem:[%s0 + $0xec] sm:$0xf]
  %v75 = vld [vmem:[%s0 + $0xf0] sm:$0xf]
  %v76 = vld [vmem:[%s0 + $0xf4] sm:$0xf]
  %v77 = vld [vmem:[%s0 + $0xf8] sm:$0xf]
  %v78 = vld [vmem:[%s0 + $0xfc] sm:$0xf]
  %v79 = vld [vmem:[%s1] sm:$0xf]
  %v80 = vld [vmem:[%s1 + $0x4] sm:$0xf]
  %v81 = vld [vmem:[%s1 + $0x8] sm:$0xf]
  %v82 = vld [vmem:[%s1 + $0xc] sm:$0x3]
  %v83 = vld [vmem:[%s2] sm:$0x1]
  %v85 = vperm.slane %v83, 0
  %v151 = vunpack.c.l.b16 %v15
  %v152 = vunpack.c.l.b16 %v16
  %v153 = vunpack.c.l.b16 %v17
  %v154 = vunpack.c.l.b16 %v18
  %v155 = vunpack.c.l.b16 %v19
  %v156 = vunpack.c.l.b16 %v20
  %v157 = vunpack.c.l.b16 %v21
  %v158 = vunpack.c.l.b16 %v22
  %v159 = vunpack.c.l.b16 %v23
  %v160 = vunpack.c.l.b16 %v24
  %v161 = vunpack.c.l.b16 %v25
  %v162 = vunpack.c.l.b16 %v26
  %v163 = vunpack.c.l.b16 %v27
  %v164 = vunpack.c.l.b16 %v28
  %v165 = vunpack.c.l.b16 %v29
  %v166 = vunpack.c.l.b16 %v30
  %v167 = vunpack.c.l.b16 %v31
  %v168 = vunpack.c.l.b16 %v32
  %v169 = vunpack.c.l.b16 %v33
  %v170 = vunpack.c.l.b16 %v34
  %v171 = vunpack.c.l.b16 %v35
  %v172 = vunpack.c.l.b16 %v36
  %v173 = vunpack.c.l.b16 %v37
  %v174 = vunpack.c.l.b16 %v38
  %v175 = vunpack.c.l.b16 %v39
  %v176 = vunpack.c.l.b16 %v40
  %v177 = vunpack.c.l.b16 %v41
  %v178 = vunpack.c.l.b16 %v42
  %v179 = vunpack.c.l.b16 %v43
  %v180 = vunpack.c.l.b16 %v44
  %v181 = vunpack.c.l.b16 %v45
  %v182 = vunpack.c.l.b16 %v46
  %v183 = vunpack.c.l.b16 %v47
  %v184 = vunpack.c.l.b16 %v48
  %v185 = vunpack.c.l.b16 %v49
  %v186 = vunpack.c.l.b16 %v50
  %v187 = vunpack.c.l.b16 %v51
  %v188 = vunpack.c.l.b16 %v52
  %v189 = vunpack.c.l.b16 %v53
  %v190 = vunpack.c.l.b16 %v54
  %v191 = vunpack.c.l.b16 %v55
  %v192 = vunpack.c.l.b16 %v56
  %v193 = vunpack.c.l.b16 %v57
  %v194 = vunpack.c.l.b16 %v58
  %v195 = vunpack.c.l.b16 %v59
  %v196 = vunpack.c.l.b16 %v60
  %v197 = vunpack.c.l.b16 %v61
  %v198 = vunpack.c.l.b16 %v62
  %v199 = vunpack.c.l.b16 %v63
  %v200 = vunpack.c.l.b16 %v64
  %v201 = vunpack.c.l.b16 %v65
  %v202 = vunpack.c.l.b16 %v66
  %v203 = vunpack.c.l.b16 %v67
  %v204 = vunpack.c.l.b16 %v68
  %v205 = vunpack.c.l.b16 %v69
  %v206 = vunpack.c.l.b16 %v70
  %v207 = vunpack.c.l.b16 %v71
  %v208 = vunpack.c.l.b16 %v72
  %v209 = vunpack.c.l.b16 %v73
  %v210 = vunpack.c.l.b16 %v74
  %v211 = vunpack.c.l.b16 %v75
  %v212 = vunpack.c.l.b16 %v76
  %v213 = vunpack.c.l.b16 %v77
  %v214 = vunpack.c.l.b16 %v78
  %v215 = vpack.c.b16 %v152, %v151
  %v216 = vpack.c.b16 %v154, %v153
  %v217 = vpack.c.b16 %v156, %v155
  %v218 = vpack.c.b16 %v158, %v157
  %v219 = vpack.c.b16 %v160, %v159
  %v220 = vpack.c.b16 %v162, %v161
  %v221 = vpack.c.b16 %v164, %v163
  %v222 = vpack.c.b16 %v166, %v165
  %v223 = vpack.c.b16 %v168, %v167
  %v224 = vpack.c.b16 %v170, %v169
  %v225 = vpack.c.b16 %v172, %v171
  %v226 = vpack.c.b16 %v174, %v173
  %v227 = vpack.c.b16 %v176, %v175
  %v228 = vpack.c.b16 %v178, %v177
  %v229 = vpack.c.b16 %v180, %v179
  %v230 = vpack.c.b16 %v182, %v181
  %v231 = vpack.c.b16 %v184, %v183
  %v232 = vpack.c.b16 %v186, %v185
  %v233 = vpack.c.b16 %v188, %v187
  %v234 = vpack.c.b16 %v190, %v189
  %v235 = vpack.c.b16 %v192, %v191
  %v236 = vpack.c.b16 %v194, %v193
  %v237 = vpack.c.b16 %v196, %v195
  %v238 = vpack.c.b16 %v198, %v197
  %v239 = vpack.c.b16 %v200, %v199
  %v240 = vpack.c.b16 %v202, %v201
  %v241 = vpack.c.b16 %v204, %v203
  %v242 = vpack.c.b16 %v206, %v205
  %v243 = vpack.c.b16 %v208, %v207
  %v244 = vpack.c.b16 %v210, %v209
  %v245 = vpack.c.b16 %v212, %v211
  %v246 = vpack.c.b16 %v214, %v213
  %v251 = vunpack.c.l.b16 %v79
  %v252 = vunpack.c.l.b16 %v80
  %v253 = vunpack.c.l.b16 %v81
  %v254 = vunpack.c.l.b16 %v82
  %v255 = vpack.c.b16 %v252, %v251
  %v256 = vpack.c.b16 %v254, %v253
  %vm258 = vcmask 220160
  %v260 = vsel %vm258, %v215, 0
  %v263 = vsel %vm258, %v216, 0
  %v266 = vsel %vm258, %v217, 0
  %v269 = vsel %vm258, %v218, 0
  %v272 = vsel %vm258, %v219, 0
  %v275 = vsel %vm258, %v220, 0
  %v278 = vsel %vm258, %v221, 0
  %v281 = vsel %vm258, %v222, 0
  %v284 = vsel %vm258, %v223, 0
  %v287 = vsel %vm258, %v224, 0
  %v290 = vsel %vm258, %v225, 0
  %v293 = vsel %vm258, %v226, 0
  %v296 = vsel %vm258, %v227, 0
  %v299 = vsel %vm258, %v228, 0
  %v302 = vsel %vm258, %v229, 0
  %v305 = vsel %vm258, %v230, 0
  %v308 = vsel %vm258, %v231, 0
  %v311 = vsel %vm258, %v232, 0
  %v314 = vsel %vm258, %v233, 0
  %v317 = vsel %vm258, %v234, 0
  %v320 = vsel %vm258, %v235, 0
  %v323 = vsel %vm258, %v236, 0
  %v326 = vsel %vm258, %v237, 0
  %v329 = vsel %vm258, %v238, 0
  %v332 = vsel %vm258, %v239, 0
  %v335 = vsel %vm258, %v240, 0
  %v338 = vsel %vm258, %v241, 0
  %v341 = vsel %vm258, %v242, 0
  %v344 = vsel %vm258, %v243, 0
  %v347 = vsel %vm258, %v244, 0
  %v350 = vsel %vm258, %v245, 0
  %v353 = vsel %vm258, %v246, 0
  %vm355 = vcmask 1044480
  %vm356 = vcmask 1045504
  %v357 = vsel %vm355, 4294967295, 65535
  %v358 = vsel %vm356, %v357, 0
  %v360 = vand.u32 %v256, %v358
  %362 = vmatpush.bf16.msra.mxu0 0
  %363 = vmatpush.bf16.msra.mxu0 0
  %364 = vmatpush.bf16.msra.mxu0 0
  %365 = vmatpush.bf16.msra.mxu0 0
  %366 = vmatpush.bf16.msra.mxu0 0
  %367 = vmatpush.bf16.msra.mxu0 0
  %368 = vmatpush.bf16.msra.mxu0 %v360
  %369 = vmatpush.bf16.msra.mxu0 %v255
  %370 = vmatmul.bf16.gmra.mxu0 %v260
  %v371 = vpop.f32.mrf.mxu0
  %v372 = vadd.f32 %v85, %v371
  %v373 = vpop.f32.mrf.mxu0
  %v374 = vadd.f32 %v85, %v373
  %375 = vmatmul.bf16.gmra.mxu0 %v263
  %v376 = vpop.f32.mrf.mxu0
  %v377 = vadd.f32 %v85, %v376
  %v378 = vpop.f32.mrf.mxu0
  %v379 = vadd.f32 %v85, %v378
  %380 = vmatmul.bf16.gmra.mxu0 %v266
  %v381 = vpop.f32.mrf.mxu0
  %v382 = vadd.f32 %v85, %v381
  %v383 = vpop.f32.mrf.mxu0
  %v384 = vadd.f32 %v85, %v383
  %385 = vmatmul.bf16.gmra.mxu0 %v269
  %v386 = vpop.f32.mrf.mxu0
  %v387 = vadd.f32 %v85, %v386
  %v388 = vpop.f32.mrf.mxu0
  %v389 = vadd.f32 %v85, %v388
  %390 = vmatmul.bf16.gmra.mxu0 %v272
  %v391 = vpop.f32.mrf.mxu0
  %v392 = vadd.f32 %v85, %v391
  %v393 = vpop.f32.mrf.mxu0
  %v394 = vadd.f32 %v85, %v393
  %395 = vmatmul.bf16.gmra.mxu0 %v275
  %v396 = vpop.f32.mrf.mxu0
  %v397 = vadd.f32 %v85, %v396
  %v398 = vpop.f32.mrf.mxu0
  %v399 = vadd.f32 %v85, %v398
  %400 = vmatmul.bf16.gmra.mxu0 %v278
  %v401 = vpop.f32.mrf.mxu0
  %v402 = vadd.f32 %v85, %v401
  %v403 = vpop.f32.mrf.mxu0
  %v404 = vadd.f32 %v85, %v403
  %405 = vmatmul.bf16.gmra.mxu0 %v281
  %v406 = vpop.f32.mrf.mxu0
  %v407 = vadd.f32 %v85, %v406
  %v408 = vpop.f32.mrf.mxu0
  %v409 = vadd.f32 %v85, %v408
  %410 = vmatmul.bf16.gmra.mxu0 %v284
  %v411 = vpop.f32.mrf.mxu0
  %v412 = vadd.f32 %v85, %v411
  %v413 = vpop.f32.mrf.mxu0
  %v414 = vadd.f32 %v85, %v413
  %415 = vmatmul.bf16.gmra.mxu0 %v287
  %v416 = vpop.f32.mrf.mxu0
  %v417 = vadd.f32 %v85, %v416
  %v418 = vpop.f32.mrf.mxu0
  %v419 = vadd.f32 %v85, %v418
  %420 = vmatmul.bf16.gmra.mxu0 %v290
  %v421 = vpop.f32.mrf.mxu0
  %v422 = vadd.f32 %v85, %v421
  %v423 = vpop.f32.mrf.mxu0
  %v424 = vadd.f32 %v85, %v423
  %425 = vmatmul.bf16.gmra.mxu0 %v293
  %v426 = vpop.f32.mrf.mxu0
  %v427 = vadd.f32 %v85, %v426
  %v428 = vpop.f32.mrf.mxu0
  %v429 = vadd.f32 %v85, %v428
  %430 = vmatmul.bf16.gmra.mxu0 %v296
  %v431 = vpop.f32.mrf.mxu0
  %v432 = vadd.f32 %v85, %v431
  %v433 = vpop.f32.mrf.mxu0
  %v434 = vadd.f32 %v85, %v433
  %435 = vmatmul.bf16.gmra.mxu0 %v299
  %v436 = vpop.f32.mrf.mxu0
  %v437 = vadd.f32 %v85, %v436
  %v438 = vpop.f32.mrf.mxu0
  %v439 = vadd.f32 %v85, %v438
  %440 = vmatmul.bf16.gmra.mxu0 %v302
  %v441 = vpop.f32.mrf.mxu0
  %v442 = vadd.f32 %v85, %v441
  %v443 = vpop.f32.mrf.mxu0
  %v444 = vadd.f32 %v85, %v443
  %445 = vmatmul.bf16.gmra.mxu0 %v305
  %v446 = vpop.f32.mrf.mxu0
  %v447 = vadd.f32 %v85, %v446
  %v448 = vpop.f32.mrf.mxu0
  %v449 = vadd.f32 %v85, %v448
  %450 = vmatmul.bf16.gmra.mxu0 %v308
  %v451 = vpop.f32.mrf.mxu0
  %v452 = vadd.f32 %v85, %v451
  %v453 = vpop.f32.mrf.mxu0
  %v454 = vadd.f32 %v85, %v453
  %455 = vmatmul.bf16.gmra.mxu0 %v311
  %v456 = vpop.f32.mrf.mxu0
  %v457 = vadd.f32 %v85, %v456
  %v458 = vpop.f32.mrf.mxu0
  %v459 = vadd.f32 %v85, %v458
  %460 = vmatmul.bf16.gmra.mxu0 %v314
  %v461 = vpop.f32.mrf.mxu0
  %v462 = vadd.f32 %v85, %v461
  %v463 = vpop.f32.mrf.mxu0
  %v464 = vadd.f32 %v85, %v463
  %465 = vmatmul.bf16.gmra.mxu0 %v317
  %v466 = vpop.f32.mrf.mxu0
  %v467 = vadd.f32 %v85, %v466
  %v468 = vpop.f32.mrf.mxu0
  %v469 = vadd.f32 %v85, %v468
  %470 = vmatmul.bf16.gmra.mxu0 %v320
  %v471 = vpop.f32.mrf.mxu0
  %v472 = vadd.f32 %v85, %v471
  %v473 = vpop.f32.mrf.mxu0
  %v474 = vadd.f32 %v85, %v473
  %475 = vmatmul.bf16.gmra.mxu0 %v323
  %v476 = vpop.f32.mrf.mxu0
  %v477 = vadd.f32 %v85, %v476
  %v478 = vpop.f32.mrf.mxu0
  %v479 = vadd.f32 %v85, %v478
  %480 = vmatmul.bf16.gmra.mxu0 %v326
  %v481 = vpop.f32.mrf.mxu0
  %v482 = vadd.f32 %v85, %v481
  %v483 = vpop.f32.mrf.mxu0
  %v484 = vadd.f32 %v85, %v483
  %485 = vmatmul.bf16.gmra.mxu0 %v329
  %v486 = vpop.f32.mrf.mxu0
  %v487 = vadd.f32 %v85, %v486
  %v488 = vpop.f32.mrf.mxu0
  %v489 = vadd.f32 %v85, %v488
  %490 = vmatmul.bf16.gmra.mxu0 %v332
  %v491 = vpop.f32.mrf.mxu0
  %v492 = vadd.f32 %v85, %v491
  %v493 = vpop.f32.mrf.mxu0
  %v494 = vadd.f32 %v85, %v493
  %495 = vmatmul.bf16.gmra.mxu0 %v335
  %v496 = vpop.f32.mrf.mxu0
  %v497 = vadd.f32 %v85, %v496
  %v498 = vpop.f32.mrf.mxu0
  %v499 = vadd.f32 %v85, %v498
  %500 = vmatmul.bf16.gmra.mxu0 %v338
  %v501 = vpop.f32.mrf.mxu0
  %v502 = vadd.f32 %v85, %v501
  %v503 = vpop.f32.mrf.mxu0
  %v504 = vadd.f32 %v85, %v503
  %505 = vmatmul.bf16.gmra.mxu0 %v341
  %v506 = vpop.f32.mrf.mxu0
  %v507 = vadd.f32 %v85, %v506
  %v508 = vpop.f32.mrf.mxu0
  %v509 = vadd.f32 %v85, %v508
  %510 = vmatmul.bf16.gmra.mxu0 %v344
  %v511 = vpop.f32.mrf.mxu0
  %v512 = vadd.f32 %v85, %v511
  %v513 = vpop.f32.mrf.mxu0
  %v514 = vadd.f32 %v85, %v513
  %515 = vmatmul.bf16.gmra.mxu0 %v347
  %v516 = vpop.f32.mrf.mxu0
  %v517 = vadd.f32 %v85, %v516
  %v518 = vpop.f32.mrf.mxu0
  %v519 = vadd.f32 %v85, %v518
  %520 = vmatmul.bf16.gmra.mxu0 %v350
  %v521 = vpop.f32.mrf.mxu0
  %v522 = vadd.f32 %v85, %v521
  %v523 = vpop.f32.mrf.mxu0
  %v524 = vadd.f32 %v85, %v523
  %525 = vmatmul.bf16.gmra.mxu0 %v353
  %v526 = vpop.f32.mrf.mxu0
  %v527 = vadd.f32 %v85, %v526
  %v528 = vpop.f32.mrf.mxu0
  %v529 = vadd.f32 %v85, %v528
  %530 = vdwg.mxu0
  %v531 = vmax.f32 %v372, 0.0
  %v532 = vmax.f32 %v374, 0.0
  %v533 = vmax.f32 %v377, 0.0
  %v534 = vmax.f32 %v379, 0.0
  %v535 = vmax.f32 %v382, 0.0
  %v536 = vmax.f32 %v384, 0.0
  %v537 = vmax.f32 %v387, 0.0
  %v538 = vmax.f32 %v389, 0.0
  %v539 = vmax.f32 %v392, 0.0
  %v540 = vmax.f32 %v394, 0.0
  %v541 = vmax.f32 %v397, 0.0
  %v542 = vmax.f32 %v399, 0.0
  %v543 = vmax.f32 %v402, 0.0
  %v544 = vmax.f32 %v404, 0.0
  %v545 = vmax.f32 %v407, 0.0
  %v546 = vmax.f32 %v409, 0.0
  %v547 = vmax.f32 %v412, 0.0
  %v548 = vmax.f32 %v414, 0.0
  %v549 = vmax.f32 %v417, 0.0
  %v550 = vmax.f32 %v419, 0.0
  %v551 = vmax.f32 %v422, 0.0
  %v552 = vmax.f32 %v424, 0.0
  %v553 = vmax.f32 %v427, 0.0
  %v554 = vmax.f32 %v429, 0.0
  %v555 = vmax.f32 %v432, 0.0
  %v556 = vmax.f32 %v434, 0.0
  %v557 = vmax.f32 %v437, 0.0
  %v558 = vmax.f32 %v439, 0.0
  %v559 = vmax.f32 %v442, 0.0
  %v560 = vmax.f32 %v444, 0.0
  %v561 = vmax.f32 %v447, 0.0
  %v562 = vmax.f32 %v449, 0.0
  %v563 = vmax.f32 %v452, 0.0
  %v564 = vmax.f32 %v454, 0.0
  %v565 = vmax.f32 %v457, 0.0
  %v566 = vmax.f32 %v459, 0.0
  %v567 = vmax.f32 %v462, 0.0
  %v568 = vmax.f32 %v464, 0.0
  %v569 = vmax.f32 %v467, 0.0
  %v570 = vmax.f32 %v469, 0.0
  %v571 = vmax.f32 %v472, 0.0
  %v572 = vmax.f32 %v474, 0.0
  %v573 = vmax.f32 %v477, 0.0
  %v574 = vmax.f32 %v479, 0.0
  %v575 = vmax.f32 %v482, 0.0
  %v576 = vmax.f32 %v484, 0.0
  %v577 = vmax.f32 %v487, 0.0
  %v578 = vmax.f32 %v489, 0.0
  %v579 = vmax.f32 %v492, 0.0
  %v580 = vmax.f32 %v494, 0.0
  %v581 = vmax.f32 %v497, 0.0
  %v582 = vmax.f32 %v499, 0.0
  %v583 = vmax.f32 %v502, 0.0
  %v584 = vmax.f32 %v504, 0.0
  %v585 = vmax.f32 %v507, 0.0
  %v586 = vmax.f32 %v509, 0.0
  %v587 = vmax.f32 %v512, 0.0
  %v588 = vmax.f32 %v514, 0.0
  %v589 = vmax.f32 %v517, 0.0
  %v590 = vmax.f32 %v519, 0.0
  %v591 = vmax.f32 %v522, 0.0
  %v592 = vmax.f32 %v524, 0.0
  %v593 = vmax.f32 %v527, 0.0
  %v594 = vmax.f32 %v529, 0.0
  %595 = vst [vmem:[%s3] sm:$0xff] %v531
  %596 = vst [vmem:[%s3 + $0x8] sm:$0xff] %v532
  %597 = vst [vmem:[%s3 + $0x10] sm:$0xff] %v533
  %598 = vst [vmem:[%s3 + $0x18] sm:$0xff] %v534
  %599 = vst [vmem:[%s3 + $0x20] sm:$0xff] %v535
  %600 = vst [vmem:[%s3 + $0x28] sm:$0xff] %v536
  %601 = vst [vmem:[%s3 + $0x30] sm:$0xff] %v537
  %602 = vst [vmem:[%s3 + $0x38] sm:$0xff] %v538
  %603 = vst [vmem:[%s3 + $0x40] sm:$0xff] %v539
  %604 = vst [vmem:[%s3 + $0x48] sm:$0xff] %v540
  %605 = vst [vmem:[%s3 + $0x50] sm:$0xff] %v541
  %606 = vst [vmem:[%s3 + $0x58] sm:$0xff] %v542
  %607 = vst [vmem:[%s3 + $0x60] sm:$0xff] %v543
  %608 = vst [vmem:[%s3 + $0x68] sm:$0xff] %v544
  %609 = vst [vmem:[%s3 + $0x70] sm:$0xff] %v545
  %610 = vst [vmem:[%s3 + $0x78] sm:$0xff] %v546
  %611 = vst [vmem:[%s3 + $0x80] sm:$0xff] %v547
  %612 = vst [vmem:[%s3 + $0x88] sm:$0xff] %v548
  %613 = vst [vmem:[%s3 + $0x90] sm:$0xff] %v549
  %614 = vst [vmem:[%s3 + $0x98] sm:$0xff] %v550
  %615 = vst [vmem:[%s3 + $0xa0] sm:$0xff] %v551
  %616 = vst [vmem:[%s3 + $0xa8] sm:$0xff] %v552
  %617 = vst [vmem:[%s3 + $0xb0] sm:$0xff] %v553
  %618 = vst [vmem:[%s3 + $0xb8] sm:$0xff] %v554
  %619 = vst [vmem:[%s3 + $0xc0] sm:$0xff] %v555
  %620 = vst [vmem:[%s3 + $0xc8] sm:$0xff] %v556
  %621 = vst [vmem:[%s3 + $0xd0] sm:$0xff] %v557
  %622 = vst [vmem:[%s3 + $0xd8] sm:$0xff] %v558
  %623 = vst [vmem:[%s3 + $0xe0] sm:$0xff] %v559
  %624 = vst [vmem:[%s3 + $0xe8] sm:$0xff] %v560
  %625 = vst [vmem:[%s3 + $0xf0] sm:$0xff] %v561
  %626 = vst [vmem:[%s3 + $0xf8] sm:$0xff] %v562
  %627 = vst [vmem:[%s3 + $0x100] sm:$0xff] %v563
  %628 = vst [vmem:[%s3 + $0x108] sm:$0xff] %v564
  %629 = vst [vmem:[%s3 + $0x110] sm:$0xff] %v565
  %630 = vst [vmem:[%s3 + $0x118] sm:$0xff] %v566
  %631 = vst [vmem:[%s3 + $0x120] sm:$0xff] %v567
  %632 = vst [vmem:[%s3 + $0x128] sm:$0xff] %v568
  %633 = vst [vmem:[%s3 + $0x130] sm:$0xff] %v569
  %634 = vst [vmem:[%s3 + $0x138] sm:$0xff] %v570
  %635 = vst [vmem:[%s3 + $0x140] sm:$0xff] %v571
  %636 = vst [vmem:[%s3 + $0x148] sm:$0xff] %v572
  %637 = vst [vmem:[%s3 + $0x150] sm:$0xff] %v573
  %638 = vst [vmem:[%s3 + $0x158] sm:$0xff] %v574
  %639 = vst [vmem:[%s3 + $0x160] sm:$0xff] %v575
  %640 = vst [vmem:[%s3 + $0x168] sm:$0xff] %v576
  %641 = vst [vmem:[%s3 + $0x170] sm:$0xff] %v577
  %642 = vst [vmem:[%s3 + $0x178] sm:$0xff] %v578
  %643 = vst [vmem:[%s3 + $0x180] sm:$0xff] %v579
  %644 = vst [vmem:[%s3 + $0x188] sm:$0xff] %v580
  %645 = vst [vmem:[%s3 + $0x190] sm:$0xff] %v581
  %646 = vst [vmem:[%s3 + $0x198] sm:$0xff] %v582
  %647 = vst [vmem:[%s3 + $0x1a0] sm:$0xff] %v583
  %648 = vst [vmem:[%s3 + $0x1a8] sm:$0xff] %v584
  %649 = vst [vmem:[%s3 + $0x1b0] sm:$0xff] %v585
  %650 = vst [vmem:[%s3 + $0x1b8] sm:$0xff] %v586
  %651 = vst [vmem:[%s3 + $0x1c0] sm:$0xff] %v587
  %652 = vst [vmem:[%s3 + $0x1c8] sm:$0xff] %v588
  %653 = vst [vmem:[%s3 + $0x1d0] sm:$0xff] %v589
  %654 = vst [vmem:[%s3 + $0x1d8] sm:$0xff] %v590
  %655 = vst [vmem:[%s3 + $0x1e0] sm:$0xff] %v591
  %656 = vst [vmem:[%s3 + $0x1e8] sm:$0xff] %v592
  %657 = vst [vmem:[%s3 + $0x1f0] sm:$0xff] %v593
  %658 = vst [vmem:[%s3 + $0x1f8] sm:$0xff] %v594
  // Predicated region
  $region14: #{_lambda_.20} parent=0 // pred_check
    _
  $region15: #{_lambda_.20} parent=0 // pred_check_branch
    %660 = sbr.rel (0) target = $region17
  $region16: #{_lambda_.20} parent=0 // pred_region
    _
  $region17: #{_lambda_.20} parent=0 // pred_fallthru
    _
  // Predicated region
  $region18: #{_lambda_.20} parent=0 // pred_check
    _
  $region19: #{_lambda_.20} parent=0 // pred_check_branch
    %662 = sbr.rel (0) target = $region21
  $region20: #{_lambda_.20} parent=0 // pred_region
    _
  $region21: #{_lambda_.20} parent=0 // pred_fallthru
    _

// kernel: _lambda_.21
$region0: #{_lambda_.21}
  #allocation0 [shape = 'u32[]', space=smem, size = 0x4, offset = 0x4, fixed_abs, tag = 'smem constant byte address 0x4 - core index']
  #allocation1 [shape = 'u32[72,128]{1,0:T(1,128)}', space=vmem, size = 0x9000, scoped, tag = 'internal scratch']
  %s0 = inlined_call_operand.vmem [shape: bf16[512,36], index: 0, kind: input, shape index: {}]
  %s1 = inlined_call_operand.vmem [shape: bf16[36,128], index: 1, kind: input, shape index: {}]
  %s2 = inlined_call_operand.vmem [shape: f32[1,128], index: 2, kind: input, shape index: {}]
  %s3 = inlined_call_operand.vmem [shape: f32[512,128], index: 3, kind: output, shape index: {}]
  %s4 = sld [smem:[#allocation0]]
  $region22: #{_lambda_.21} parent=0
    _
  %s6 = ssub.s32 1, %s4
  %s7 = scalar_select 0, %s6, %s4
  // Predicated region
  $region2: #{_lambda_.21} parent=0 // pred_check
    _
  $region3: #{_lambda_.21} parent=0 // pred_check_branch
    %9 = sbr.rel (0) target = $region5
  $region4: #{_lambda_.21} parent=0 // pred_region
    _
  $region5: #{_lambda_.21} parent=0 // pred_fallthru
    _
  // Predicated region
  $region6: #{_lambda_.21} parent=0 // pred_check
    _
  $region7: #{_lambda_.21} parent=0 // pred_check_branch
    %11 = sbr.rel (0) target = $region9
  $region8: #{_lambda_.21} parent=0 // pred_region
    _
  $region9: #{_lambda_.21} parent=0 // pred_fallthru
    _
  // Predicated region
  $region10: #{_lambda_.21} parent=0 // pred_check
    _
  $region11: #{_lambda_.21} parent=0 // pred_check_branch
    %13 = sbr.rel (0) target = $region13
  $region12: #{_lambda_.21} parent=0 // pred_region
    _
  $region13: #{_lambda_.21} parent=0 // pred_fallthru
    _
  %v15 = vld [vmem:[%s0] sm:$0xf]
  %v16 = vld [vmem:[%s0 + $0x4] sm:$0xf]
  %v17 = vld [vmem:[%s0 + $0x8] sm:$0xf]
  %v18 = vld [vmem:[%s0 + $0xc] sm:$0xf]
  %v19 = vld [vmem:[%s0 + $0x10] sm:$0xf]
  %v20 = vld [vmem:[%s0 + $0x14] sm:$0xf]
  %v21 = vld [vmem:[%s0 + $0x18] sm:$0xf]
  %v22 = vld [vmem:[%s0 + $0x1c] sm:$0xf]
  %v23 = vld [vmem:[%s0 + $0x20] sm:$0xf]
  %v24 = vld [vmem:[%s0 + $0x24] sm:$0xf]
  %v25 = vld [vmem:[%s0 + $0x28] sm:$0xf]
  %v26 = vld [vmem:[%s0 + $0x2c] sm:$0xf]
  %v27 = vld [vmem:[%s0 + $0x30] sm:$0xf]
  %v28 = vld [vmem:[%s0 + $0x34] sm:$0xf]
  %v29 = vld [vmem:[%s0 + $0x38] sm:$0xf]
  %v30 = vld [vmem:[%s0 + $0x3c] sm:$0xf]
  %v31 = vld [vmem:[%s0 + $0x40] sm:$0xf]
  %v32 = vld [vmem:[%s0 + $0x44] sm:$0xf]
  %v33 = vld [vmem:[%s0 + $0x48] sm:$0xf]
  %v34 = vld [vmem:[%s0 + $0x4c] sm:$0xf]
  %v35 = vld [vmem:[%s0 + $0x50] sm:$0xf]
  %v36 = vld [vmem:[%s0 + $0x54] sm:$0xf]
  %v37 = vld [vmem:[%s0 + $0x58] sm:$0xf]
  %v38 = vld [vmem:[%s0 + $0x5c] sm:$0xf]
  %v39 = vld [vmem:[%s0 + $0x60] sm:$0xf]
  %v40 = vld [vmem:[%s0 + $0x64] sm:$0xf]
  %v41 = vld [vmem:[%s0 + $0x68] sm:$0xf]
  %v42 = vld [vmem:[%s0 + $0x6c] sm:$0xf]
  %v43 = vld [vmem:[%s0 + $0x70] sm:$0xf]
  %v44 = vld [vmem:[%s0 + $0x74] sm:$0xf]
  %v45 = vld [vmem:[%s0 + $0x78] sm:$0xf]
  %v46 = vld [vmem:[%s0 + $0x7c] sm:$0xf]
  %v47 = vld [vmem:[%s0 + $0x80] sm:$0xf]
  %v48 = vld [vmem:[%s0 + $0x84] sm:$0xf]
  %v49 = vld [vmem:[%s0 + $0x88] sm:$0xf]
  %v50 = vld [vmem:[%s0 + $0x8c] sm:$0xf]
  %v51 = vld [vmem:[%s0 + $0x90] sm:$0xf]
  %v52 = vld [vmem:[%s0 + $0x94] sm:$0xf]
  %v53 = vld [vmem:[%s0 + $0x98] sm:$0xf]
  %v54 = vld [vmem:[%s0 + $0x9c] sm:$0xf]
  %v55 = vld [vmem:[%s0 + $0xa0] sm:$0xf]
  %v56 = vld [vmem:[%s0 + $0xa4] sm:$0xf]
  %v57 = vld [vmem:[%s0 + $0xa8] sm:$0xf]
  %v58 = vld [vmem:[%s0 + $0xac] sm:$0xf]
  %v59 = vld [vmem:[%s0 + $0xb0] sm:$0xf]
  %v60 = vld [vmem:[%s0 + $0xb4] sm:$0xf]
  %v61 = vld [vmem:[%s0 + $0xb8] sm:$0xf]
  %v62 = vld [vmem:[%s0 + $0xbc] sm:$0xf]
  %v63 = vld [vmem:[%s0 + $0xc0] sm:$0xf]
  %v64 = vld [vmem:[%s0 + $0xc4] sm:$0xf]
  %v65 = vld [vmem:[%s0 + $0xc8] sm:$0xf]
  %v66 = vld [vmem:[%s0 + $0xcc] sm:$0xf]
  %v67 = vld [vmem:[%s0 + $0xd0] sm:$0xf]
  %v68 = vld [vmem:[%s0 + $0xd4] sm:$0xf]
  %v69 = vld [vmem:[%s0 + $0xd8] sm:$0xf]
  %v70 = vld [vmem:[%s0 + $0xdc] sm:$0xf]
  %v71 = vld [vmem:[%s0 + $0xe0] sm:$0xf]
  %v72 = vld [vmem:[%s0 + $0xe4] sm:$0xf]
  %v73 = vld [vmem:[%s0 + $0xe8] sm:$0xf]
  %v74 = vld [vmem:[%s0 + $0xec] sm:$0xf]
  %v75 = vld [vmem:[%s0 + $0xf0] sm:$0xf]
  %v76 = vld [vmem:[%s0 + $0xf4] sm:$0xf]
  %v77 = vld [vmem:[%s0 + $0xf8] sm:$0xf]
  %v78 = vld [vmem:[%s0 + $0xfc] sm:$0xf]
  %v79 = vld [vmem:[%s1] sm:$0xf]
  %v80 = vld [vmem:[%s1 + $0x4] sm:$0xf]
  %v81 = vld [vmem:[%s1 + $0x8] sm:$0xf]
  %v82 = vld [vmem:[%s1 + $0xc] sm:$0xf]
  %v83 = vld [vmem:[%s1 + $0x10] sm:$0x3]
  %v84 = vld [vmem:[%s2] sm:$0x1]
  %v86 = vperm.slane %v84, 0
  %v152 = vunpack.c.l.b16 %v15
  %v153 = vunpack.c.l.b16 %v16
  %v154 = vunpack.c.l.b16 %v17
  %v155 = vunpack.c.l.b16 %v18
  %v156 = vunpack.c.l.b16 %v19
  %v157 = vunpack.c.l.b16 %v20
  %v158 = vunpack.c.l.b16 %v21
  %v159 = vunpack.c.l.b16 %v22
  %v160 = vunpack.c.l.b16 %v23
  %v161 = vunpack.c.l.b16 %v24
  %v162 = vunpack.c.l.b16 %v25
  %v163 = vunpack.c.l.b16 %v26
  %v164 = vunpack.c.l.b16 %v27
  %v165 = vunpack.c.l.b16 %v28
  %v166 = vunpack.c.l.b16 %v29
  %v167 = vunpack.c.l.b16 %v30
  %v168 = vunpack.c.l.b16 %v31
  %v169 = vunpack.c.l.b16 %v32
  %v170 = vunpack.c.l.b16 %v33
  %v171 = vunpack.c.l.b16 %v34
  %v172 = vunpack.c.l.b16 %v35
  %v173 = vunpack.c.l.b16 %v36
  %v174 = vunpack.c.l.b16 %v37
  %v175 = vunpack.c.l.b16 %v38
  %v176 = vunpack.c.l.b16 %v39
  %v177 = vunpack.c.l.b16 %v40
  %v178 = vunpack.c.l.b16 %v41
  %v179 = vunpack.c.l.b16 %v42
  %v180 = vunpack.c.l.b16 %v43
  %v181 = vunpack.c.l.b16 %v44
  %v182 = vunpack.c.l.b16 %v45
  %v183 = vunpack.c.l.b16 %v46
  %v184 = vunpack.c.l.b16 %v47
  %v185 = vunpack.c.l.b16 %v48
  %v186 = vunpack.c.l.b16 %v49
  %v187 = vunpack.c.l.b16 %v50
  %v188 = vunpack.c.l.b16 %v51
  %v189 = vunpack.c.l.b16 %v52
  %v190 = vunpack.c.l.b16 %v53
  %v191 = vunpack.c.l.b16 %v54
  %v192 = vunpack.c.l.b16 %v55
  %v193 = vunpack.c.l.b16 %v56
  %v194 = vunpack.c.l.b16 %v57
  %v195 = vunpack.c.l.b16 %v58
  %v196 = vunpack.c.l.b16 %v59
  %v197 = vunpack.c.l.b16 %v60
  %v198 = vunpack.c.l.b16 %v61
  %v199 = vunpack.c.l.b16 %v62
  %v200 = vunpack.c.l.b16 %v63
  %v201 = vunpack.c.l.b16 %v64
  %v202 = vunpack.c.l.b16 %v65
  %v203 = vunpack.c.l.b16 %v66
  %v204 = vunpack.c.l.b16 %v67
  %v205 = vunpack.c.l.b16 %v68
  %v206 = vunpack.c.l.b16 %v69
  %v207 = vunpack.c.l.b16 %v70
  %v208 = vunpack.c.l.b16 %v71
  %v209 = vunpack.c.l.b16 %v72
  %v210 = vunpack.c.l.b16 %v73
  %v211 = vunpack.c.l.b16 %v74
  %v212 = vunpack.c.l.b16 %v75
  %v213 = vunpack.c.l.b16 %v76
  %v214 = vunpack.c.l.b16 %v77
  %v215 = vunpack.c.l.b16 %v78
  %v216 = vpack.c.b16 %v153, %v152
  %v217 = vpack.c.b16 %v155, %v154
  %v218 = vpack.c.b16 %v157, %v156
  %v219 = vpack.c.b16 %v159, %v158
  %v220 = vpack.c.b16 %v161, %v160
  %v221 = vpack.c.b16 %v163, %v162
  %v222 = vpack.c.b16 %v165, %v164
  %v223 = vpack.c.b16 %v167, %v166
  %v224 = vpack.c.b16 %v169, %v168
  %v225 = vpack.c.b16 %v171, %v170
  %v226 = vpack.c.b16 %v173, %v172
  %v227 = vpack.c.b16 %v175, %v174
  %v228 = vpack.c.b16 %v177, %v176
  %v229 = vpack.c.b16 %v179, %v178
  %v230 = vpack.c.b16 %v181, %v180
  %v231 = vpack.c.b16 %v183, %v182
  %v232 = vpack.c.b16 %v185, %v184
  %v233 = vpack.c.b16 %v187, %v186
  %v234 = vpack.c.b16 %v189, %v188
  %v235 = vpack.c.b16 %v191, %v190
  %v236 = vpack.c.b16 %v193, %v192
  %v237 = vpack.c.b16 %v195, %v194
  %v238 = vpack.c.b16 %v197, %v196
  %v239 = vpack.c.b16 %v199, %v198
  %v240 = vpack.c.b16 %v201, %v200
  %v241 = vpack.c.b16 %v203, %v202
  %v242 = vpack.c.b16 %v205, %v204
  %v243 = vpack.c.b16 %v207, %v206
  %v244 = vpack.c.b16 %v209, %v208
  %v245 = vpack.c.b16 %v211, %v210
  %v246 = vpack.c.b16 %v213, %v212
  %v247 = vpack.c.b16 %v215, %v214
  %v253 = vunpack.c.l.b16 %v79
  %v254 = vunpack.c.l.b16 %v80
  %v255 = vunpack.c.l.b16 %v81
  %v256 = vunpack.c.l.b16 %v82
  %v257 = vunpack.c.l.b16 %v83
  %v258 = vpack.c.b16 %v254, %v253
  %v259 = vpack.c.b16 %v256, %v255
  %v260 = vpack.c.b16 %v257, %v257
  %vm263 = vcmask 293888
  %v265 = vsel %vm263, %v216, 0
  %v268 = vsel %vm263, %v217, 0
  %v271 = vsel %vm263, %v218, 0
  %v274 = vsel %vm263, %v219, 0
  %v277 = vsel %vm263, %v220, 0
  %v280 = vsel %vm263, %v221, 0
  %v283 = vsel %vm263, %v222, 0
  %v286 = vsel %vm263, %v223, 0
  %v289 = vsel %vm263, %v224, 0
  %v292 = vsel %vm263, %v225, 0
  %v295 = vsel %vm263, %v226, 0
  %v298 = vsel %vm263, %v227, 0
  %v301 = vsel %vm263, %v228, 0
  %v304 = vsel %vm263, %v229, 0
  %v307 = vsel %vm263, %v230, 0
  %v310 = vsel %vm263, %v231, 0
  %v313 = vsel %vm263, %v232, 0
  %v316 = vsel %vm263, %v233, 0
  %v319 = vsel %vm263, %v234, 0
  %v322 = vsel %vm263, %v235, 0
  %v325 = vsel %vm263, %v236, 0
  %v328 = vsel %vm263, %v237, 0
  %v331 = vsel %vm263, %v238, 0
  %v334 = vsel %vm263, %v239, 0
  %v337 = vsel %vm263, %v240, 0
  %v340 = vsel %vm263, %v241, 0
  %v343 = vsel %vm263, %v242, 0
  %v346 = vsel %vm263, %v243, 0
  %v349 = vsel %vm263, %v244, 0
  %v352 = vsel %vm263, %v245, 0
  %v355 = vsel %vm263, %v246, 0
  %v358 = vsel %vm263, %v247, 0
  %vm360 = vcmask 1041408
  %v362 = vsel %vm360, %v260, 0
  %364 = vmatpush.bf16.msra.mxu0 0
  %365 = vmatpush.bf16.msra.mxu0 0
  %366 = vmatpush.bf16.msra.mxu0 0
  %367 = vmatpush.bf16.msra.mxu0 0
  %368 = vmatpush.bf16.msra.mxu0 0
  %369 = vmatpush.bf16.msra.mxu0 %v362
  %370 = vmatpush.bf16.msra.mxu0 %v259
  %371 = vmatpush.bf16.msra.mxu0 %v258
  %372 = vmatmul.bf16.gmra.mxu0 %v265
  %v373 = vpop.f32.mrf.mxu0
  %v374 = vadd.f32 %v86, %v373
  %v375 = vpop.f32.mrf.mxu0
  %v376 = vadd.f32 %v86, %v375
  %377 = vmatmul.bf16.gmra.mxu0 %v268
  %v378 = vpop.f32.mrf.mxu0
  %v379 = vadd.f32 %v86, %v378
  %v380 = vpop.f32.mrf.mxu0
  %v381 = vadd.f32 %v86, %v380
  %382 = vmatmul.bf16.gmra.mxu0 %v271
  %v383 = vpop.f32.mrf.mxu0
  %v384 = vadd.f32 %v86, %v383
  %v385 = vpop.f32.mrf.mxu0
  %v386 = vadd.f32 %v86, %v385
  %387 = vmatmul.bf16.gmra.mxu0 %v274
  %v388 = vpop.f32.mrf.mxu0
  %v389 = vadd.f32 %v86, %v388
  %v390 = vpop.f32.mrf.mxu0
  %v391 = vadd.f32 %v86, %v390
  %392 = vmatmul.bf16.gmra.mxu0 %v277
  %v393 = vpop.f32.mrf.mxu0
  %v394 = vadd.f32 %v86, %v393
  %v395 = vpop.f32.mrf.mxu0
  %v396 = vadd.f32 %v86, %v395
  %397 = vmatmul.bf16.gmra.mxu0 %v280
  %v398 = vpop.f32.mrf.mxu0
  %v399 = vadd.f32 %v86, %v398
  %v400 = vpop.f32.mrf.mxu0
  %v401 = vadd.f32 %v86, %v400
  %402 = vmatmul.bf16.gmra.mxu0 %v283
  %v403 = vpop.f32.mrf.mxu0
  %v404 = vadd.f32 %v86, %v403
  %v405 = vpop.f32.mrf.mxu0
  %v406 = vadd.f32 %v86, %v405
  %407 = vmatmul.bf16.gmra.mxu0 %v286
  %v408 = vpop.f32.mrf.mxu0
  %v409 = vadd.f32 %v86, %v408
  %v410 = vpop.f32.mrf.mxu0
  %v411 = vadd.f32 %v86, %v410
  %412 = vmatmul.bf16.gmra.mxu0 %v289
  %v413 = vpop.f32.mrf.mxu0
  %v414 = vadd.f32 %v86, %v413
  %v415 = vpop.f32.mrf.mxu0
  %v416 = vadd.f32 %v86, %v415
  %417 = vmatmul.bf16.gmra.mxu0 %v292
  %v418 = vpop.f32.mrf.mxu0
  %v419 = vadd.f32 %v86, %v418
  %v420 = vpop.f32.mrf.mxu0
  %v421 = vadd.f32 %v86, %v420
  %422 = vmatmul.bf16.gmra.mxu0 %v295
  %v423 = vpop.f32.mrf.mxu0
  %v424 = vadd.f32 %v86, %v423
  %v425 = vpop.f32.mrf.mxu0
  %v426 = vadd.f32 %v86, %v425
  %427 = vmatmul.bf16.gmra.mxu0 %v298
  %v428 = vpop.f32.mrf.mxu0
  %v429 = vadd.f32 %v86, %v428
  %v430 = vpop.f32.mrf.mxu0
  %v431 = vadd.f32 %v86, %v430
  %432 = vmatmul.bf16.gmra.mxu0 %v301
  %v433 = vpop.f32.mrf.mxu0
  %v434 = vadd.f32 %v86, %v433
  %v435 = vpop.f32.mrf.mxu0
  %v436 = vadd.f32 %v86, %v435
  %437 = vmatmul.bf16.gmra.mxu0 %v304
  %v438 = vpop.f32.mrf.mxu0
  %v439 = vadd.f32 %v86, %v438
  %v440 = vpop.f32.mrf.mxu0
  %v441 = vadd.f32 %v86, %v440
  %442 = vmatmul.bf16.gmra.mxu0 %v307
  %v443 = vpop.f32.mrf.mxu0
  %v444 = vadd.f32 %v86, %v443
  %v445 = vpop.f32.mrf.mxu0
  %v446 = vadd.f32 %v86, %v445
  %447 = vmatmul.bf16.gmra.mxu0 %v310
  %v448 = vpop.f32.mrf.mxu0
  %v449 = vadd.f32 %v86, %v448
  %v450 = vpop.f32.mrf.mxu0
  %v451 = vadd.f32 %v86, %v450
  %452 = vmatmul.bf16.gmra.mxu0 %v313
  %v453 = vpop.f32.mrf.mxu0
  %v454 = vadd.f32 %v86, %v453
  %v455 = vpop.f32.mrf.mxu0
  %v456 = vadd.f32 %v86, %v455
  %457 = vmatmul.bf16.gmra.mxu0 %v316
  %v458 = vpop.f32.mrf.mxu0
  %v459 = vadd.f32 %v86, %v458
  %v460 = vpop.f32.mrf.mxu0
  %v461 = vadd.f32 %v86, %v460
  %462 = vmatmul.bf16.gmra.mxu0 %v319
  %v463 = vpop.f32.mrf.mxu0
  %v464 = vadd.f32 %v86, %v463
  %v465 = vpop.f32.mrf.mxu0
  %v466 = vadd.f32 %v86, %v465
  %467 = vmatmul.bf16.gmra.mxu0 %v322
  %v468 = vpop.f32.mrf.mxu0
  %v469 = vadd.f32 %v86, %v468
  %v470 = vpop.f32.mrf.mxu0
  %v471 = vadd.f32 %v86, %v470
  %472 = vmatmul.bf16.gmra.mxu0 %v325
  %v473 = vpop.f32.mrf.mxu0
  %v474 = vadd.f32 %v86, %v473
  %v475 = vpop.f32.mrf.mxu0
  %v476 = vadd.f32 %v86, %v475
  %477 = vmatmul.bf16.gmra.mxu0 %v328
  %v478 = vpop.f32.mrf.mxu0
  %v479 = vadd.f32 %v86, %v478
  %v480 = vpop.f32.mrf.mxu0
  %v481 = vadd.f32 %v86, %v480
  %482 = vmatmul.bf16.gmra.mxu0 %v331
  %v483 = vpop.f32.mrf.mxu0
  %v484 = vadd.f32 %v86, %v483
  %v485 = vpop.f32.mrf.mxu0
  %v486 = vadd.f32 %v86, %v485
  %487 = vmatmul.bf16.gmra.mxu0 %v334
  %v488 = vpop.f32.mrf.mxu0
  %v489 = vadd.f32 %v86, %v488
  %v490 = vpop.f32.mrf.mxu0
  %v491 = vadd.f32 %v86, %v490
  %492 = vmatmul.bf16.gmra.mxu0 %v337
  %v493 = vpop.f32.mrf.mxu0
  %v494 = vadd.f32 %v86, %v493
  %v495 = vpop.f32.mrf.mxu0
  %v496 = vadd.f32 %v86, %v495
  %497 = vmatmul.bf16.gmra.mxu0 %v340
  %v498 = vpop.f32.mrf.mxu0
  %v499 = vadd.f32 %v86, %v498
  %v500 = vpop.f32.mrf.mxu0
  %v501 = vadd.f32 %v86, %v500
  %502 = vmatmul.bf16.gmra.mxu0 %v343
  %v503 = vpop.f32.mrf.mxu0
  %v504 = vadd.f32 %v86, %v503
  %v505 = vpop.f32.mrf.mxu0
  %v506 = vadd.f32 %v86, %v505
  %507 = vmatmul.bf16.gmra.mxu0 %v346
  %v508 = vpop.f32.mrf.mxu0
  %v509 = vadd.f32 %v86, %v508
  %v510 = vpop.f32.mrf.mxu0
  %v511 = vadd.f32 %v86, %v510
  %512 = vmatmul.bf16.gmra.mxu0 %v349
  %v513 = vpop.f32.mrf.mxu0
  %v514 = vadd.f32 %v86, %v513
  %v515 = vpop.f32.mrf.mxu0
  %v516 = vadd.f32 %v86, %v515
  %517 = vmatmul.bf16.gmra.mxu0 %v352
  %v518 = vpop.f32.mrf.mxu0
  %v519 = vadd.f32 %v86, %v518
  %v520 = vpop.f32.mrf.mxu0
  %v521 = vadd.f32 %v86, %v520
  %522 = vmatmul.bf16.gmra.mxu0 %v355
  %v523 = vpop.f32.mrf.mxu0
  %v524 = vadd.f32 %v86, %v523
  %v525 = vpop.f32.mrf.mxu0
  %v526 = vadd.f32 %v86, %v525
  %527 = vmatmul.bf16.gmra.mxu0 %v358
  %v528 = vpop.f32.mrf.mxu0
  %v529 = vadd.f32 %v86, %v528
  %v530 = vpop.f32.mrf.mxu0
  %v531 = vadd.f32 %v86, %v530
  %532 = vdwg.mxu0
  %v533 = vmax.f32 %v374, 0.0
  %v534 = vmax.f32 %v376, 0.0
  %v535 = vmax.f32 %v379, 0.0
  %v536 = vmax.f32 %v381, 0.0
  %v537 = vmax.f32 %v384, 0.0
  %v538 = vmax.f32 %v386, 0.0
  %v539 = vmax.f32 %v389, 0.0
  %v540 = vmax.f32 %v391, 0.0
  %v541 = vmax.f32 %v394, 0.0
  %v542 = vmax.f32 %v396, 0.0
  %v543 = vmax.f32 %v399, 0.0
  %v544 = vmax.f32 %v401, 0.0
  %v545 = vmax.f32 %v404, 0.0
  %v546 = vmax.f32 %v406, 0.0
  %v547 = vmax.f32 %v409, 0.0
  %v548 = vmax.f32 %v411, 0.0
  %v549 = vmax.f32 %v414, 0.0
  %v550 = vmax.f32 %v416, 0.0
  %v551 = vmax.f32 %v419, 0.0
  %v552 = vmax.f32 %v421, 0.0
  %v553 = vmax.f32 %v424, 0.0
  %v554 = vmax.f32 %v426, 0.0
  %v555 = vmax.f32 %v429, 0.0
  %v556 = vmax.f32 %v431, 0.0
  %v557 = vmax.f32 %v434, 0.0
  %v558 = vmax.f32 %v436, 0.0
  %v559 = vmax.f32 %v439, 0.0
  %v560 = vmax.f32 %v441, 0.0
  %v561 = vmax.f32 %v444, 0.0
  %v562 = vmax.f32 %v446, 0.0
  %v563 = vmax.f32 %v449, 0.0
  %v564 = vmax.f32 %v451, 0.0
  %v565 = vmax.f32 %v454, 0.0
  %v566 = vmax.f32 %v456, 0.0
  %v567 = vmax.f32 %v459, 0.0
  %v568 = vmax.f32 %v461, 0.0
  %v569 = vmax.f32 %v464, 0.0
  %v570 = vmax.f32 %v466, 0.0
  %v571 = vmax.f32 %v469, 0.0
  %v572 = vmax.f32 %v471, 0.0
  %v573 = vmax.f32 %v474, 0.0
  %v574 = vmax.f32 %v476, 0.0
  %v575 = vmax.f32 %v479, 0.0
  %v576 = vmax.f32 %v481, 0.0
  %v577 = vmax.f32 %v484, 0.0
  %v578 = vmax.f32 %v486, 0.0
  %v579 = vmax.f32 %v489, 0.0
  %v580 = vmax.f32 %v491, 0.0
  %v581 = vmax.f32 %v494, 0.0
  %v582 = vmax.f32 %v496, 0.0
  %v583 = vmax.f32 %v499, 0.0
  %v584 = vmax.f32 %v501, 0.0
  %v585 = vmax.f32 %v504, 0.0
  %v586 = vmax.f32 %v506, 0.0
  %v587 = vmax.f32 %v509, 0.0
  %v588 = vmax.f32 %v511, 0.0
  %v589 = vmax.f32 %v514, 0.0
  %v590 = vmax.f32 %v516, 0.0
  %v591 = vmax.f32 %v519, 0.0
  %v592 = vmax.f32 %v521, 0.0
  %v593 = vmax.f32 %v524, 0.0
  %v594 = vmax.f32 %v526, 0.0
  %v595 = vmax.f32 %v529, 0.0
  %v596 = vmax.f32 %v531, 0.0
  %597 = vst [vmem:[%s3] sm:$0xff] %v533
  %598 = vst [vmem:[%s3 + $0x8] sm:$0xff] %v534
  %599 = vst [vmem:[%s3 + $0x10] sm:$0xff] %v535
  %600 = vst [vmem:[%s3 + $0x18] sm:$0xff] %v536
  %601 = vst [vmem:[%s3 + $0x20] sm:$0xff] %v537
  %602 = vst [vmem:[%s3 + $0x28] sm:$0xff] %v538
  %603 = vst [vmem:[%s3 + $0x30] sm:$0xff] %v539
  %604 = vst [vmem:[%s3 + $0x38] sm:$0xff] %v540
  %605 = vst [vmem:[%s3 + $0x40] sm:$0xff] %v541
  %606 = vst [vmem:[%s3 + $0x48] sm:$0xff] %v542
  %607 = vst [vmem:[%s3 + $0x50] sm:$0xff] %v543
  %608 = vst [vmem:[%s3 + $0x58] sm:$0xff] %v544
  %609 = vst [vmem:[%s3 + $0x60] sm:$0xff] %v545
  %610 = vst [vmem:[%s3 + $0x68] sm:$0xff] %v546
  %611 = vst [vmem:[%s3 + $0x70] sm:$0xff] %v547
  %612 = vst [vmem:[%s3 + $0x78] sm:$0xff] %v548
  %613 = vst [vmem:[%s3 + $0x80] sm:$0xff] %v549
  %614 = vst [vmem:[%s3 + $0x88] sm:$0xff] %v550
  %615 = vst [vmem:[%s3 + $0x90] sm:$0xff] %v551
  %616 = vst [vmem:[%s3 + $0x98] sm:$0xff] %v552
  %617 = vst [vmem:[%s3 + $0xa0] sm:$0xff] %v553
  %618 = vst [vmem:[%s3 + $0xa8] sm:$0xff] %v554
  %619 = vst [vmem:[%s3 + $0xb0] sm:$0xff] %v555
  %620 = vst [vmem:[%s3 + $0xb8] sm:$0xff] %v556
  %621 = vst [vmem:[%s3 + $0xc0] sm:$0xff] %v557
  %622 = vst [vmem:[%s3 + $0xc8] sm:$0xff] %v558
  %623 = vst [vmem:[%s3 + $0xd0] sm:$0xff] %v559
  %624 = vst [vmem:[%s3 + $0xd8] sm:$0xff] %v560
  %625 = vst [vmem:[%s3 + $0xe0] sm:$0xff] %v561
  %626 = vst [vmem:[%s3 + $0xe8] sm:$0xff] %v562
  %627 = vst [vmem:[%s3 + $0xf0] sm:$0xff] %v563
  %628 = vst [vmem:[%s3 + $0xf8] sm:$0xff] %v564
  %629 = vst [vmem:[%s3 + $0x100] sm:$0xff] %v565
  %630 = vst [vmem:[%s3 + $0x108] sm:$0xff] %v566
  %631 = vst [vmem:[%s3 + $0x110] sm:$0xff] %v567
  %632 = vst [vmem:[%s3 + $0x118] sm:$0xff] %v568
  %633 = vst [vmem:[%s3 + $0x120] sm:$0xff] %v569
  %634 = vst [vmem:[%s3 + $0x128] sm:$0xff] %v570
  %635 = vst [vmem:[%s3 + $0x130] sm:$0xff] %v571
  %636 = vst [vmem:[%s3 + $0x138] sm:$0xff] %v572
  %637 = vst [vmem:[%s3 + $0x140] sm:$0xff] %v573
  %638 = vst [vmem:[%s3 + $0x148] sm:$0xff] %v574
  %639 = vst [vmem:[%s3 + $0x150] sm:$0xff] %v575
  %640 = vst [vmem:[%s3 + $0x158] sm:$0xff] %v576
  %641 = vst [vmem:[%s3 + $0x160] sm:$0xff] %v577
  %642 = vst [vmem:[%s3 + $0x168] sm:$0xff] %v578
  %643 = vst [vmem:[%s3 + $0x170] sm:$0xff] %v579
  %644 = vst [vmem:[%s3 + $0x178] sm:$0xff] %v580
  %645 = vst [vmem:[%s3 + $0x180] sm:$0xff] %v581
  %646 = vst [vmem:[%s3 + $0x188] sm:$0xff] %v582
  %647 = vst [vmem:[%s3 + $0x190] sm:$0xff] %v583
  %648 = vst [vmem:[%s3 + $0x198] sm:$0xff] %v584
  %649 = vst [vmem:[%s3 + $0x1a0] sm:$0xff] %v585
  %650 = vst [vmem:[%s3 + $0x1a8] sm:$0xff] %v586
  %651 = vst [vmem:[%s3 + $0x1b0] sm:$0xff] %v587
  %652 = vst [vmem:[%s3 + $0x1b8] sm:$0xff] %v588
  %653 = vst [vmem:[%s3 + $0x1c0] sm:$0xff] %v589
  %654 = vst [vmem:[%s3 + $0x1c8] sm:$0xff] %v590
  %655 = vst [vmem:[%s3 + $0x1d0] sm:$0xff] %v591
  %656 = vst [vmem:[%s3 + $0x1d8] sm:$0xff] %v592
  %657 = vst [vmem:[%s3 + $0x1e0] sm:$0xff] %v593
  %658 = vst [vmem:[%s3 + $0x1e8] sm:$0xff] %v594
  %659 = vst [vmem:[%s3 + $0x1f0] sm:$0xff] %v595
  %660 = vst [vmem:[%s3 + $0x1f8] sm:$0xff] %v596
  // Predicated region
  $region14: #{_lambda_.21} parent=0 // pred_check
    _
  $region15: #{_lambda_.21} parent=0 // pred_check_branch
    %662 = sbr.rel (0) target = $region17
  $region16: #{_lambda_.21} parent=0 // pred_region
    _
  $region17: #{_lambda_.21} parent=0 // pred_fallthru
    _
  // Predicated region
  $region18: #{_lambda_.21} parent=0 // pred_check
    _
  $region19: #{_lambda_.21} parent=0 // pred_check_branch
    %664 = sbr.rel (0) target = $region21
  $region20: #{_lambda_.21} parent=0 // pred_region
    _
  $region21: #{_lambda_.21} parent=0 // pred_fallthru
    _

// kernel: _lambda_.22
$region0: #{_lambda_.22}
  #allocation0 [shape = 'u32[]', space=smem, size = 0x4, offset = 0x4, fixed_abs, tag = 'smem constant byte address 0x4 - core index']
  #allocation1 [shape = 'u32[72,128]{1,0:T(1,128)}', space=vmem, size = 0x9000, scoped, tag = 'internal scratch']
  %s0 = inlined_call_operand.vmem [shape: bf16[128,100], index: 0, kind: input, shape index: {}]
  %s1 = inlined_call_operand.vmem [shape: bf16[100,128], index: 1, kind: input, shape index: {}]
  %s2 = inlined_call_operand.vmem [shape: f32[1,128], index: 2, kind: input, shape index: {}]
  %s3 = inlined_call_operand.vmem [shape: f32[128,128], index: 3, kind: output, shape index: {}]
  %s4 = sld [smem:[#allocation0]]
  $region22: #{_lambda_.22} parent=0
    _
  %s6 = ssub.s32 1, %s4
  %s7 = scalar_select 0, %s6, %s4
  // Predicated region
  $region2: #{_lambda_.22} parent=0 // pred_check
    _
  $region3: #{_lambda_.22} parent=0 // pred_check_branch
    %9 = sbr.rel (0) target = $region5
  $region4: #{_lambda_.22} parent=0 // pred_region
    _
  $region5: #{_lambda_.22} parent=0 // pred_fallthru
    _
  // Predicated region
  $region6: #{_lambda_.22} parent=0 // pred_check
    _
  $region7: #{_lambda_.22} parent=0 // pred_check_branch
    %11 = sbr.rel (0) target = $region9
  $region8: #{_lambda_.22} parent=0 // pred_region
    _
  $region9: #{_lambda_.22} parent=0 // pred_fallthru
    _
  // Predicated region
  $region10: #{_lambda_.22} parent=0 // pred_check
    _
  $region11: #{_lambda_.22} parent=0 // pred_check_branch
    %13 = sbr.rel (0) target = $region13
  $region12: #{_lambda_.22} parent=0 // pred_region
    _
  $region13: #{_lambda_.22} parent=0 // pred_fallthru
    _
  %v15 = vld [vmem:[%s0] sm:$0xf]
  %v16 = vld [vmem:[%s0 + $0x4] sm:$0xf]
  %v17 = vld [vmem:[%s0 + $0x8] sm:$0xf]
  %v18 = vld [vmem:[%s0 + $0xc] sm:$0xf]
  %v19 = vld [vmem:[%s0 + $0x10] sm:$0xf]
  %v20 = vld [vmem:[%s0 + $0x14] sm:$0xf]
  %v21 = vld [vmem:[%s0 + $0x18] sm:$0xf]
  %v22 = vld [vmem:[%s0 + $0x1c] sm:$0xf]
  %v23 = vld [vmem:[%s0 + $0x20] sm:$0xf]
  %v24 = vld [vmem:[%s0 + $0x24] sm:$0xf]
  %v25 = vld [vmem:[%s0 + $0x28] sm:$0xf]
  %v26 = vld [vmem:[%s0 + $0x2c] sm:$0xf]
  %v27 = vld [vmem:[%s0 + $0x30] sm:$0xf]
  %v28 = vld [vmem:[%s0 + $0x34] sm:$0xf]
  %v29 = vld [vmem:[%s0 + $0x38] sm:$0xf]
  %v30 = vld [vmem:[%s0 + $0x3c] sm:$0xf]
  %v31 = vld [vmem:[%s1] sm:$0xf]
  %v32 = vld [vmem:[%s1 + $0x4] sm:$0xf]
  %v33 = vld [vmem:[%s1 + $0x8] sm:$0xf]
  %v34 = vld [vmem:[%s1 + $0xc] sm:$0xf]
  %v35 = vld [vmem:[%s1 + $0x10] sm:$0xf]
  %v36 = vld [vmem:[%s1 + $0x14] sm:$0xf]
  %v37 = vld [vmem:[%s1 + $0x18] sm:$0xf]
  %v38 = vld [vmem:[%s1 + $0x1c] sm:$0xf]
  %v39 = vld [vmem:[%s1 + $0x20] sm:$0xf]
  %v40 = vld [vmem:[%s1 + $0x24] sm:$0xf]
  %v41 = vld [vmem:[%s1 + $0x28] sm:$0xf]
  %v42 = vld [vmem:[%s1 + $0x2c] sm:$0xf]
  %v43 = vld [vmem:[%s1 + $0x30] sm:$0x3]
  %v44 = vld [vmem:[%s2] sm:$0x1]
  %v46 = vperm.slane %v44, 0
  %v64 = vunpack.c.l.b16 %v15
  %v65 = vunpack.c.l.b16 %v16
  %v66 = vunpack.c.l.b16 %v17
  %v67 = vunpack.c.l.b16 %v18
  %v68 = vunpack.c.l.b16 %v19
  %v69 = vunpack.c.l.b16 %v20
  %v70 = vunpack.c.l.b16 %v21
  %v71 = vunpack.c.l.b16 %v22
  %v72 = vunpack.c.l.b16 %v23
  %v73 = vunpack.c.l.b16 %v24
  %v74 = vunpack.c.l.b16 %v25
  %v75 = vunpack.c.l.b16 %v26
  %v76 = vunpack.c.l.b16 %v27
  %v77 = vunpack.c.l.b16 %v28
  %v78 = vunpack.c.l.b16 %v29
  %v79 = vunpack.c.l.b16 %v30
  %v80 = vpack.c.b16 %v65, %v64
  %v81 = vpack.c.b16 %v67, %v66
  %v82 = vpack.c.b16 %v69, %v68
  %v83 = vpack.c.b16 %v71, %v70
  %v84 = vpack.c.b16 %v73, %v72
  %v85 = vpack.c.b16 %v75, %v74
  %v86 = vpack.c.b16 %v77, %v76
  %v87 = vpack.c.b16 %v79, %v78
  %v101 = vunpack.c.l.b16 %v31
  %v102 = vunpack.c.l.b16 %v32
  %v103 = vunpack.c.l.b16 %v33
  %v104 = vunpack.c.l.b16 %v34
  %v105 = vunpack.c.l.b16 %v35
  %v106 = vunpack.c.l.b16 %v36
  %v107 = vunpack.c.l.b16 %v37
  %v108 = vunpack.c.l.b16 %v38
  %v109 = vunpack.c.l.b16 %v39
  %v110 = vunpack.c.l.b16 %v40
  %v111 = vunpack.c.l.b16 %v41
  %v112 = vunpack.c.l.b16 %v42
  %v113 = vunpack.c.l.b16 %v43
  %v114 = vpack.c.b16 %v102, %v101
  %v115 = vpack.c.b16 %v104, %v103
  %v116 = vpack.c.b16 %v106, %v105
  %v117 = vpack.c.b16 %v108, %v107
  %v118 = vpack.c.b16 %v110, %v109
  %v119 = vpack.c.b16 %v112, %v111
  %v120 = vpack.c.b16 %v113, %v113
  %vm127 = vcmask 818176
  %v129 = vsel %vm127, %v80, 0
  %v132 = vsel %vm127, %v81, 0
  %v135 = vsel %vm127, %v82, 0
  %v138 = vsel %vm127, %v83, 0
  %v141 = vsel %vm127, %v84, 0
  %v144 = vsel %vm127, %v85, 0
  %v147 = vsel %vm127, %v86, 0
  %v150 = vsel %vm127, %v87, 0
  %vm152 = vcmask 1041408
  %v154 = vsel %vm152, %v120, 0
  %156 = vmatpush.bf16.msra.mxu0 0
  %157 = vmatpush.bf16.msra.mxu0 %v154
  %158 = vmatpush.bf16.msra.mxu0 %v119
  %159 = vmatpush.bf16.msra.mxu0 %v118
  %160 = vmatpush.bf16.msra.mxu0 %v117
  %161 = vmatpush.bf16.msra.mxu0 %v116
  %162 = vmatpush.bf16.msra.mxu0 %v115
  %163 = vmatpush.bf16.msra.mxu0 %v114
  %164 = vmatmul.bf16.gmra.mxu0 %v129
  %v165 = vpop.f32.mrf.mxu0
  %v166 = vadd.f32 %v46, %v165
  %v167 = vpop.f32.mrf.mxu0
  %v168 = vadd.f32 %v46, %v167
  %169 = vmatmul.bf16.gmra.mxu0 %v132
  %v170 = vpop.f32.mrf.mxu0
  %v171 = vadd.f32 %v46, %v170
  %v172 = vpop.f32.mrf.mxu0
  %v173 = vadd.f32 %v46, %v172
  %174 = vmatmul.bf16.gmra.mxu0 %v135
  %v175 = vpop.f32.mrf.mxu0
  %v176 = vadd.f32 %v46, %v175
  %v177 = vpop.f32.mrf.mxu0
  %v178 = vadd.f32 %v46, %v177
  %179 = vmatmul.bf16.gmra.mxu0 %v138
  %v180 = vpop.f32.mrf.mxu0
  %v181 = vadd.f32 %v46, %v180
  %v182 = vpop.f32.mrf.mxu0
  %v183 = vadd.f32 %v46, %v182
  %184 = vmatmul.bf16.gmra.mxu0 %v141
  %v185 = vpop.f32.mrf.mxu0
  %v186 = vadd.f32 %v46, %v185
  %v187 = vpop.f32.mrf.mxu0
  %v188 = vadd.f32 %v46, %v187
  %189 = vmatmul.bf16.gmra.mxu0 %v144
  %v190 = vpop.f32.mrf.mxu0
  %v191 = vadd.f32 %v46, %v190
  %v192 = vpop.f32.mrf.mxu0
  %v193 = vadd.f32 %v46, %v192
  %194 = vmatmul.bf16.gmra.mxu0 %v147
  %v195 = vpop.f32.mrf.mxu0
  %v196 = vadd.f32 %v46, %v195
  %v197 = vpop.f32.mrf.mxu0
  %v198 = vadd.f32 %v46, %v197
  %199 = vmatmul.bf16.gmra.mxu0 %v150
  %v200 = vpop.f32.mrf.mxu0
  %v201 = vadd.f32 %v46, %v200
  %v202 = vpop.f32.mrf.mxu0
  %v203 = vadd.f32 %v46, %v202
  %204 = vdwg.mxu0
  %v205 = vmax.f32 %v166, 0.0
  %v206 = vmax.f32 %v168, 0.0
  %v207 = vmax.f32 %v171, 0.0
  %v208 = vmax.f32 %v173, 0.0
  %v209 = vmax.f32 %v176, 0.0
  %v210 = vmax.f32 %v178, 0.0
  %v211 = vmax.f32 %v181, 0.0
  %v212 = vmax.f32 %v183, 0.0
  %v213 = vmax.f32 %v186, 0.0
  %v214 = vmax.f32 %v188, 0.0
  %v215 = vmax.f32 %v191, 0.0
  %v216 = vmax.f32 %v193, 0.0
  %v217 = vmax.f32 %v196, 0.0
  %v218 = vmax.f32 %v198, 0.0
  %v219 = vmax.f32 %v201, 0.0
  %v220 = vmax.f32 %v203, 0.0
  %221 = vst [vmem:[%s3] sm:$0xff] %v205
  %222 = vst [vmem:[%s3 + $0x8] sm:$0xff] %v206
  %223 = vst [vmem:[%s3 + $0x10] sm:$0xff] %v207
  %224 = vst [vmem:[%s3 + $0x18] sm:$0xff] %v208
  %225 = vst [vmem:[%s3 + $0x20] sm:$0xff] %v209
  %226 = vst [vmem:[%s3 + $0x28] sm:$0xff] %v210
  %227 = vst [vmem:[%s3 + $0x30] sm:$0xff] %v211
  %228 = vst [vmem:[%s3 + $0x38] sm:$0xff] %v212
  %229 = vst [vmem:[%s3 + $0x40] sm:$0xff] %v213
  %230 = vst [vmem:[%s3 + $0x48] sm:$0xff] %v214
  %231 = vst [vmem:[%s3 + $0x50] sm:$0xff] %v215
  %232 = vst [vmem:[%s3 + $0x58] sm:$0xff] %v216
  %233 = vst [vmem:[%s3 + $0x60] sm:$0xff] %v217
  %234 = vst [vmem:[%s3 + $0x68] sm:$0xff] %v218
  %235 = vst [vmem:[%s3 + $0x70] sm:$0xff] %v219
  %236 = vst [vmem:[%s3 + $0x78] sm:$0xff] %v220
  // Predicated region
  $region14: #{_lambda_.22} parent=0 // pred_check
    _
  $region15: #{_lambda_.22} parent=0 // pred_check_branch
    %238 = sbr.rel (0) target = $region17
  $region16: #{_lambda_.22} parent=0 // pred_region
    _
  $region17: #{_lambda_.22} parent=0 // pred_fallthru
    _
  // Predicated region
  $region18: #{_lambda_.22} parent=0 // pred_check
    _
  $region19: #{_lambda_.22} parent=0 // pred_check_branch
    %240 = sbr.rel (0) target = $region21
  $region20: #{_lambda_.22} parent=0 // pred_region
    _
  $region21: #{_lambda_.22} parent=0 // pred_fallthru
    _

// kernel: _lambda_.23
$region0: #{_lambda_.23}
  #allocation0 [shape = 'u32[]', space=smem, size = 0x4, offset = 0x4, fixed_abs, tag = 'smem constant byte address 0x4 - core index']
  #allocation1 [shape = 'u32[72,128]{1,0:T(1,128)}', space=vmem, size = 0x9000, scoped, tag = 'internal scratch']
  %s0 = inlined_call_operand.vmem [shape: bf16[128,72], index: 0, kind: input, shape index: {}]
  %s1 = inlined_call_operand.vmem [shape: bf16[72,128], index: 1, kind: input, shape index: {}]
  %s2 = inlined_call_operand.vmem [shape: f32[1,128], index: 2, kind: input, shape index: {}]
  %s3 = inlined_call_operand.vmem [shape: f32[128,128], index: 3, kind: output, shape index: {}]
  %s4 = sld [smem:[#allocation0]]
  $region22: #{_lambda_.23} parent=0
    _
  %s6 = ssub.s32 1, %s4
  %s7 = scalar_select 0, %s6, %s4
  // Predicated region
  $region2: #{_lambda_.23} parent=0 // pred_check
    _
  $region3: #{_lambda_.23} parent=0 // pred_check_branch
    %9 = sbr.rel (0) target = $region5
  $region4: #{_lambda_.23} parent=0 // pred_region
    _
  $region5: #{_lambda_.23} parent=0 // pred_fallthru
    _
  // Predicated region
  $region6: #{_lambda_.23} parent=0 // pred_check
    _
  $region7: #{_lambda_.23} parent=0 // pred_check_branch
    %11 = sbr.rel (0) target = $region9
  $region8: #{_lambda_.23} parent=0 // pred_region
    _
  $region9: #{_lambda_.23} parent=0 // pred_fallthru
    _
  // Predicated region
  $region10: #{_lambda_.23} parent=0 // pred_check
    _
  $region11: #{_lambda_.23} parent=0 // pred_check_branch
    %13 = sbr.rel (0) target = $region13
  $region12: #{_lambda_.23} parent=0 // pred_region
    _
  $region13: #{_lambda_.23} parent=0 // pred_fallthru
    _
  %v15 = vld [vmem:[%s0] sm:$0xf]
  %v16 = vld [vmem:[%s0 + $0x4] sm:$0xf]
  %v17 = vld [vmem:[%s0 + $0x8] sm:$0xf]
  %v18 = vld [vmem:[%s0 + $0xc] sm:$0xf]
  %v19 = vld [vmem:[%s0 + $0x10] sm:$0xf]
  %v20 = vld [vmem:[%s0 + $0x14] sm:$0xf]
  %v21 = vld [vmem:[%s0 + $0x18] sm:$0xf]
  %v22 = vld [vmem:[%s0 + $0x1c] sm:$0xf]
  %v23 = vld [vmem:[%s0 + $0x20] sm:$0xf]
  %v24 = vld [vmem:[%s0 + $0x24] sm:$0xf]
  %v25 = vld [vmem:[%s0 + $0x28] sm:$0xf]
  %v26 = vld [vmem:[%s0 + $0x2c] sm:$0xf]
  %v27 = vld [vmem:[%s0 + $0x30] sm:$0xf]
  %v28 = vld [vmem:[%s0 + $0x34] sm:$0xf]
  %v29 = vld [vmem:[%s0 + $0x38] sm:$0xf]
  %v30 = vld [vmem:[%s0 + $0x3c] sm:$0xf]
  %v31 = vld [vmem:[%s1] sm:$0xf]
  %v32 = vld [vmem:[%s1 + $0x4] sm:$0xf]
  %v33 = vld [vmem:[%s1 + $0x8] sm:$0xf]
  %v34 = vld [vmem:[%s1 + $0xc] sm:$0xf]
  %v35 = vld [vmem:[%s1 + $0x10] sm:$0xf]
  %v36 = vld [vmem:[%s1 + $0x14] sm:$0xf]
  %v37 = vld [vmem:[%s1 + $0x18] sm:$0xf]
  %v38 = vld [vmem:[%s1 + $0x1c] sm:$0xf]
  %v39 = vld [vmem:[%s1 + $0x20] sm:$0xf]
  %v40 = vld [vmem:[%s2] sm:$0x1]
  %v42 = vperm.slane %v40, 0
  %v60 = vunpack.c.l.b16 %v15
  %v61 = vunpack.c.l.b16 %v16
  %v62 = vunpack.c.l.b16 %v17
  %v63 = vunpack.c.l.b16 %v18
  %v64 = vunpack.c.l.b16 %v19
  %v65 = vunpack.c.l.b16 %v20
  %v66 = vunpack.c.l.b16 %v21
  %v67 = vunpack.c.l.b16 %v22
  %v68 = vunpack.c.l.b16 %v23
  %v69 = vunpack.c.l.b16 %v24
  %v70 = vunpack.c.l.b16 %v25
  %v71 = vunpack.c.l.b16 %v26
  %v72 = vunpack.c.l.b16 %v27
  %v73 = vunpack.c.l.b16 %v28
  %v74 = vunpack.c.l.b16 %v29
  %v75 = vunpack.c.l.b16 %v30
  %v76 = vpack.c.b16 %v61, %v60
  %v77 = vpack.c.b16 %v63, %v62
  %v78 = vpack.c.b16 %v65, %v64
  %v79 = vpack.c.b16 %v67, %v66
  %v80 = vpack.c.b16 %v69, %v68
  %v81 = vpack.c.b16 %v71, %v70
  %v82 = vpack.c.b16 %v73, %v72
  %v83 = vpack.c.b16 %v75, %v74
  %v93 = vunpack.c.l.b16 %v31
  %v94 = vunpack.c.l.b16 %v32
  %v95 = vunpack.c.l.b16 %v33
  %v96 = vunpack.c.l.b16 %v34
  %v97 = vunpack.c.l.b16 %v35
  %v98 = vunpack.c.l.b16 %v36
  %v99 = vunpack.c.l.b16 %v37
  %v100 = vunpack.c.l.b16 %v38
  %v101 = vunpack.c.l.b16 %v39
  %v102 = vpack.c.b16 %v94, %v93
  %v103 = vpack.c.b16 %v96, %v95
  %v104 = vpack.c.b16 %v98, %v97
  %v105 = vpack.c.b16 %v100, %v99
  %v106 = vpack.c.b16 %v101, %v101
  %vm111 = vcmask 588800
  %v113 = vsel %vm111, %v76, 0
  %v116 = vsel %vm111, %v77, 0
  %v119 = vsel %vm111, %v78, 0
  %v122 = vsel %vm111, %v79, 0
  %v125 = vsel %vm111, %v80, 0
  %v128 = vsel %vm111, %v81, 0
  %v131 = vsel %vm111, %v82, 0
  %v134 = vsel %vm111, %v83, 0
  %vm136 = vcmask 1043456
  %v138 = vsel %vm136, %v106, 0
  %140 = vmatpush.bf16.msra.mxu0 0
  %141 = vmatpush.bf16.msra.mxu0 0
  %142 = vmatpush.bf16.msra.mxu0 0
  %143 = vmatpush.bf16.msra.mxu0 %v138
  %144 = vmatpush.bf16.msra.mxu0 %v105
  %145 = vmatpush.bf16.msra.mxu0 %v104
  %146 = vmatpush.bf16.msra.mxu0 %v103
  %147 = vmatpush.bf16.msra.mxu0 %v102
  %148 = vmatmul.bf16.gmra.mxu0 %v113
  %v149 = vpop.f32.mrf.mxu0
  %v150 = vadd.f32 %v42, %v149
  %v151 = vpop.f32.mrf.mxu0
  %v152 = vadd.f32 %v42, %v151
  %153 = vmatmul.bf16.gmra.mxu0 %v116
  %v154 = vpop.f32.mrf.mxu0
  %v155 = vadd.f32 %v42, %v154
  %v156 = vpop.f32.mrf.mxu0
  %v157 = vadd.f32 %v42, %v156
  %158 = vmatmul.bf16.gmra.mxu0 %v119
  %v159 = vpop.f32.mrf.mxu0
  %v160 = vadd.f32 %v42, %v159
  %v161 = vpop.f32.mrf.mxu0
  %v162 = vadd.f32 %v42, %v161
  %163 = vmatmul.bf16.gmra.mxu0 %v122
  %v164 = vpop.f32.mrf.mxu0
  %v165 = vadd.f32 %v42, %v164
  %v166 = vpop.f32.mrf.mxu0
  %v167 = vadd.f32 %v42, %v166
  %168 = vmatmul.bf16.gmra.mxu0 %v125
  %v169 = vpop.f32.mrf.mxu0
  %v170 = vadd.f32 %v42, %v169
  %v171 = vpop.f32.mrf.mxu0
  %v172 = vadd.f32 %v42, %v171
  %173 = vmatmul.bf16.gmra.mxu0 %v128
  %v174 = vpop.f32.mrf.mxu0
  %v175 = vadd.f32 %v42, %v174
  %v176 = vpop.f32.mrf.mxu0
  %v177 = vadd.f32 %v42, %v176
  %178 = vmatmul.bf16.gmra.mxu0 %v131
  %v179 = vpop.f32.mrf.mxu0
  %v180 = vadd.f32 %v42, %v179
  %v181 = vpop.f32.mrf.mxu0
  %v182 = vadd.f32 %v42, %v181
  %183 = vmatmul.bf16.gmra.mxu0 %v134
  %v184 = vpop.f32.mrf.mxu0
  %v185 = vadd.f32 %v42, %v184
  %v186 = vpop.f32.mrf.mxu0
  %v187 = vadd.f32 %v42, %v186
  %188 = vdwg.mxu0
  %v189 = vmax.f32 %v150, 0.0
  %v190 = vmax.f32 %v152, 0.0
  %v191 = vmax.f32 %v155, 0.0
  %v192 = vmax.f32 %v157, 0.0
  %v193 = vmax.f32 %v160, 0.0
  %v194 = vmax.f32 %v162, 0.0
  %v195 = vmax.f32 %v165, 0.0
  %v196 = vmax.f32 %v167, 0.0
  %v197 = vmax.f32 %v170, 0.0
  %v198 = vmax.f32 %v172, 0.0
  %v199 = vmax.f32 %v175, 0.0
  %v200 = vmax.f32 %v177, 0.0
  %v201 = vmax.f32 %v180, 0.0
  %v202 = vmax.f32 %v182, 0.0
  %v203 = vmax.f32 %v185, 0.0
  %v204 = vmax.f32 %v187, 0.0
  %205 = vst [vmem:[%s3] sm:$0xff] %v189
  %206 = vst [vmem:[%s3 + $0x8] sm:$0xff] %v190
  %207 = vst [vmem:[%s3 + $0x10] sm:$0xff] %v191
  %208 = vst [vmem:[%s3 + $0x18] sm:$0xff] %v192
  %209 = vst [vmem:[%s3 + $0x20] sm:$0xff] %v193
  %210 = vst [vmem:[%s3 + $0x28] sm:$0xff] %v194
  %211 = vst [vmem:[%s3 + $0x30] sm:$0xff] %v195
  %212 = vst [vmem:[%s3 + $0x38] sm:$0xff] %v196
  %213 = vst [vmem:[%s3 + $0x40] sm:$0xff] %v197
  %214 = vst [vmem:[%s3 + $0x48] sm:$0xff] %v198
  %215 = vst [vmem:[%s3 + $0x50] sm:$0xff] %v199
  %216 = vst [vmem:[%s3 + $0x58] sm:$0xff] %v200
  %217 = vst [vmem:[%s3 + $0x60] sm:$0xff] %v201
  %218 = vst [vmem:[%s3 + $0x68] sm:$0xff] %v202
  %219 = vst [vmem:[%s3 + $0x70] sm:$0xff] %v203
  %220 = vst [vmem:[%s3 + $0x78] sm:$0xff] %v204
  // Predicated region
  $region14: #{_lambda_.23} parent=0 // pred_check
    _
  $region15: #{_lambda_.23} parent=0 // pred_check_branch
    %222 = sbr.rel (0) target = $region17
  $region16: #{_lambda_.23} parent=0 // pred_region
    _
  $region17: #{_lambda_.23} parent=0 // pred_fallthru
    _
  // Predicated region
  $region18: #{_lambda_.23} parent=0 // pred_check
    _
  $region19: #{_lambda_.23} parent=0 // pred_check_branch
    %224 = sbr.rel (0) target = $region21
  $region20: #{_lambda_.23} parent=0 // pred_region
    _
  $region21: #{_lambda_.23} parent=0 // pred_fallthru
    _

// kernel: _lambda_.25
$region0: #{_lambda_.25}
  #allocation0 [shape = 'u32[]', space=smem, size = 0x4, offset = 0x4, fixed_abs, tag = 'smem constant byte address 0x4 - core index']
  #allocation1 [shape = 'u32[72,128]{1,0:T(1,128)}', space=vmem, size = 0x9000, scoped, tag = 'internal scratch']
  %s0 = inlined_call_operand.vmem [shape: bf16[32,200], index: 0, kind: input, shape index: {}]
  %s1 = inlined_call_operand.vmem [shape: bf16[200,128], index: 1, kind: input, shape index: {}]
  %s2 = inlined_call_operand.vmem [shape: f32[1,128], index: 2, kind: input, shape index: {}]
  %s3 = inlined_call_operand.vmem [shape: f32[32,128], index: 3, kind: output, shape index: {}]
  %s4 = sld [smem:[#allocation0]]
  $region22: #{_lambda_.25} parent=0
    _
  %s6 = ssub.s32 1, %s4
  %s7 = scalar_select 0, %s6, %s4
  // Predicated region
  $region2: #{_lambda_.25} parent=0 // pred_check
    _
  $region3: #{_lambda_.25} parent=0 // pred_check_branch
    %9 = sbr.rel (0) target = $region5
  $region4: #{_lambda_.25} parent=0 // pred_region
    _
  $region5: #{_lambda_.25} parent=0 // pred_fallthru
    _
  // Predicated region
  $region6: #{_lambda_.25} parent=0 // pred_check
    _
  $region7: #{_lambda_.25} parent=0 // pred_check_branch
    %11 = sbr.rel (0) target = $region9
  $region8: #{_lambda_.25} parent=0 // pred_region
    _
  $region9: #{_lambda_.25} parent=0 // pred_fallthru
    _
  // Predicated region
  $region10: #{_lambda_.25} parent=0 // pred_check
    _
  $region11: #{_lambda_.25} parent=0 // pred_check_branch
    %13 = sbr.rel (0) target = $region13
  $region12: #{_lambda_.25} parent=0 // pred_region
    _
  $region13: #{_lambda_.25} parent=0 // pred_fallthru
    _
  %v15 = vld [vmem:[%s0] sm:$0xff]
  %v16 = vld [vmem:[%s0 + $0x8] sm:$0xff]
  %v17 = vld [vmem:[%s0 + $0x10] sm:$0xff]
  %v18 = vld [vmem:[%s0 + $0x18] sm:$0xff]
  %v19 = vld [vmem:[%s1] sm:$0xf]
  %v20 = vld [vmem:[%s1 + $0x4] sm:$0xf]
  %v21 = vld [vmem:[%s1 + $0x8] sm:$0xf]
  %v22 = vld [vmem:[%s1 + $0xc] sm:$0xf]
  %v23 = vld [vmem:[%s1 + $0x10] sm:$0xf]
  %v24 = vld [vmem:[%s1 + $0x14] sm:$0xf]
  %v25 = vld [vmem:[%s1 + $0x18] sm:$0xf]
  %v26 = vld [vmem:[%s1 + $0x1c] sm:$0xf]
  %v27 = vld [vmem:[%s1 + $0x20] sm:$0xf]
  %v28 = vld [vmem:[%s1 + $0x24] sm:$0xf]
  %v29 = vld [vmem:[%s1 + $0x28] sm:$0xf]
  %v30 = vld [vmem:[%s1 + $0x2c] sm:$0xf]
  %v31 = vld [vmem:[%s1 + $0x30] sm:$0xf]
  %v32 = vld [vmem:[%s1 + $0x34] sm:$0xf]
  %v33 = vld [vmem:[%s1 + $0x38] sm:$0xf]
  %v34 = vld [vmem:[%s1 + $0x3c] sm:$0xf]
  %v35 = vld [vmem:[%s1 + $0x40] sm:$0xf]
  %v36 = vld [vmem:[%s1 + $0x44] sm:$0xf]
  %v37 = vld [vmem:[%s1 + $0x48] sm:$0xf]
  %v38 = vld [vmem:[%s1 + $0x4c] sm:$0xf]
  %v39 = vld [vmem:[%s1 + $0x50] sm:$0xf]
  %v40 = vld [vmem:[%s1 + $0x54] sm:$0xf]
  %v41 = vld [vmem:[%s1 + $0x58] sm:$0xf]
  %v42 = vld [vmem:[%s1 + $0x5c] sm:$0xf]
  %v43 = vld [vmem:[%s1 + $0x60] sm:$0xf]
  %v44 = vld [vmem:[%s2] sm:$0x1]
  %v46 = vperm.slane %v44, 0
  %v52 = vunpack.c.l.b16 %v15
  %v53 = vunpack.c.h.b16 %v15
  %v54 = vunpack.c.l.b16 %v16
  %v55 = vunpack.c.h.b16 %v16
  %v56 = vunpack.c.l.b16 %v17
  %v57 = vunpack.c.h.b16 %v17
  %v58 = vunpack.c.l.b16 %v18
  %v59 = vunpack.c.h.b16 %v18
  %v60 = vpack.c.b16 %v54, %v52
  %v61 = vpack.c.b16 %v55, %v53
  %v62 = vpack.c.b16 %v58, %v56
  %v63 = vpack.c.b16 %v59, %v57
  %v91 = vunpack.c.l.b16 %v19
  %v92 = vunpack.c.l.b16 %v20
  %v93 = vunpack.c.l.b16 %v21
  %v94 = vunpack.c.l.b16 %v22
  %v95 = vunpack.c.l.b16 %v23
  %v96 = vunpack.c.l.b16 %v24
  %v97 = vunpack.c.l.b16 %v25
  %v98 = vunpack.c.l.b16 %v26
  %v99 = vunpack.c.l.b16 %v27
  %v100 = vunpack.c.l.b16 %v28
  %v101 = vunpack.c.l.b16 %v29
  %v102 = vunpack.c.l.b16 %v30
  %v103 = vunpack.c.l.b16 %v31
  %v104 = vunpack.c.l.b16 %v32
  %v105 = vunpack.c.l.b16 %v33
  %v106 = vunpack.c.l.b16 %v34
  %v107 = vunpack.c.l.b16 %v35
  %v108 = vunpack.c.l.b16 %v36
  %v109 = vunpack.c.l.b16 %v37
  %v110 = vunpack.c.l.b16 %v38
  %v111 = vunpack.c.l.b16 %v39
  %v112 = vunpack.c.l.b16 %v40
  %v113 = vunpack.c.l.b16 %v41
  %v114 = vunpack.c.l.b16 %v42
  %v115 = vunpack.c.l.b16 %v43
  %v116 = vpack.c.b16 %v92, %v91
  %v117 = vpack.c.b16 %v94, %v93
  %v118 = vpack.c.b16 %v96, %v95
  %v119 = vpack.c.b16 %v98, %v97
  %v120 = vpack.c.b16 %v100, %v99
  %v121 = vpack.c.b16 %v102, %v101
  %v122 = vpack.c.b16 %v104, %v103
  %v123 = vpack.c.b16 %v106, %v105
  %v124 = vpack.c.b16 %v108, %v107
  %v125 = vpack.c.b16 %v110, %v109
  %v126 = vpack.c.b16 %v112, %v111
  %v127 = vpack.c.b16 %v114, %v113
  %v128 = vpack.c.b16 %v115, %v115
  %vm141 = vcmask 588800
  %v143 = vsel %vm141, %v61, 0
  %v146 = vsel %vm141, %v63, 0
  %vm148 = vcmask 1043456
  %v150 = vsel %vm148, %v128, 0
  %152 = vmatpush.bf16.msra.mxu0 %v123
  %153 = vmatpush.bf16.msra.mxu0 %v122
  %154 = vmatpush.bf16.msra.mxu0 %v121
  %155 = vmatpush.bf16.msra.mxu0 %v120
  %156 = vmatpush.bf16.msra.mxu0 %v119
  %157 = vmatpush.bf16.msra.mxu0 %v118
  %158 = vmatpush.bf16.msra.mxu0 %v117
  %159 = vmatpush.bf16.msra.mxu0 %v116
  %160 = vmatmul.bf16.gmra.mxu0 %v60
  %v161 = vpop.f32.mrf.mxu0
  %v162 = vadd.f32 %v46, %v161
  %v163 = vpop.f32.mrf.mxu0
  %v164 = vadd.f32 %v46, %v163
  %165 = vmatmul.bf16.gmra.mxu0 %v62
  %v166 = vpop.f32.mrf.mxu0
  %v167 = vadd.f32 %v46, %v166
  %v168 = vpop.f32.mrf.mxu0
  %v169 = vadd.f32 %v46, %v168
  %170 = vdwg.mxu0
  %171 = vmatpush.bf16.msra.mxu0 0
  %172 = vmatpush.bf16.msra.mxu0 0
  %173 = vmatpush.bf16.msra.mxu0 0
  %174 = vmatpush.bf16.msra.mxu0 %v150
  %175 = vmatpush.bf16.msra.mxu0 %v127
  %176 = vmatpush.bf16.msra.mxu0 %v126
  %177 = vmatpush.bf16.msra.mxu0 %v125
  %178 = vmatpush.bf16.msra.mxu0 %v124
  %179 = vmatmul.bf16.gmra.mxu0 %v143
  %v180 = vpop.f32.mrf.mxu0
  %v181 = vadd.f32 %v162, %v180
  %v182 = vpop.f32.mrf.mxu0
  %v183 = vadd.f32 %v164, %v182
  %184 = vmatmul.bf16.gmra.mxu0 %v146
  %v185 = vpop.f32.mrf.mxu0
  %v186 = vadd.f32 %v167, %v185
  %v187 = vpop.f32.mrf.mxu0
  %v188 = vadd.f32 %v169, %v187
  %189 = vdwg.mxu0
  %v190 = vmax.f32 %v181, 0.0
  %v191 = vmax.f32 %v183, 0.0
  %v192 = vmax.f32 %v186, 0.0
  %v193 = vmax.f32 %v188, 0.0
  %194 = vst [vmem:[%s3] sm:$0xff] %v190
  %195 = vst [vmem:[%s3 + $0x8] sm:$0xff] %v191
  %196 = vst [vmem:[%s3 + $0x10] sm:$0xff] %v192
  %197 = vst [vmem:[%s3 + $0x18] sm:$0xff] %v193
  // Predicated region
  $region14: #{_lambda_.25} parent=0 // pred_check
    _
  $region15: #{_lambda_.25} parent=0 // pred_check_branch
    %199 = sbr.rel (0) target = $region17
  $region16: #{_lambda_.25} parent=0 // pred_region
    _
  $region17: #{_lambda_.25} parent=0 // pred_fallthru
    _
  // Predicated region
  $region18: #{_lambda_.25} parent=0 // pred_check
    _
  $region19: #{_lambda_.25} parent=0 // pred_check_branch
    %201 = sbr.rel (0) target = $region21
  $region20: #{_lambda_.25} parent=0 // pred_region
    _
  $region21: #{_lambda_.25} parent=0 // pred_fallthru
    _

// kernel: _lambda_.26
$region0: #{_lambda_.26}
  #allocation0 [shape = 'u32[]', space=smem, size = 0x4, offset = 0x4, fixed_abs, tag = 'smem constant byte address 0x4 - core index']
  #allocation1 [shape = 'u32[72,128]{1,0:T(1,128)}', space=vmem, size = 0x9000, scoped, tag = 'internal scratch']
  %s0 = inlined_call_operand.vmem [shape: bf16[32,144], index: 0, kind: input, shape index: {}]
  %s1 = inlined_call_operand.vmem [shape: bf16[144,128], index: 1, kind: input, shape index: {}]
  %s2 = inlined_call_operand.vmem [shape: f32[1,128], index: 2, kind: input, shape index: {}]
  %s3 = inlined_call_operand.vmem [shape: f32[32,128], index: 3, kind: output, shape index: {}]
  %s4 = sld [smem:[#allocation0]]
  $region22: #{_lambda_.26} parent=0
    _
  %s6 = ssub.s32 1, %s4
  %s7 = scalar_select 0, %s6, %s4
  // Predicated region
  $region2: #{_lambda_.26} parent=0 // pred_check
    _
  $region3: #{_lambda_.26} parent=0 // pred_check_branch
    %9 = sbr.rel (0) target = $region5
  $region4: #{_lambda_.26} parent=0 // pred_region
    _
  $region5: #{_lambda_.26} parent=0 // pred_fallthru
    _
  // Predicated region
  $region6: #{_lambda_.26} parent=0 // pred_check
    _
  $region7: #{_lambda_.26} parent=0 // pred_check_branch
    %11 = sbr.rel (0) target = $region9
  $region8: #{_lambda_.26} parent=0 // pred_region
    _
  $region9: #{_lambda_.26} parent=0 // pred_fallthru
    _
  // Predicated region
  $region10: #{_lambda_.26} parent=0 // pred_check
    _
  $region11: #{_lambda_.26} parent=0 // pred_check_branch
    %13 = sbr.rel (0) target = $region13
  $region12: #{_lambda_.26} parent=0 // pred_region
    _
  $region13: #{_lambda_.26} parent=0 // pred_fallthru
    _
  %v15 = vld [vmem:[%s0] sm:$0xff]
  %v16 = vld [vmem:[%s0 + $0x8] sm:$0xff]
  %v17 = vld [vmem:[%s0 + $0x10] sm:$0xff]
  %v18 = vld [vmem:[%s0 + $0x18] sm:$0xff]
  %v19 = vld [vmem:[%s1] sm:$0xf]
  %v20 = vld [vmem:[%s1 + $0x4] sm:$0xf]
  %v21 = vld [vmem:[%s1 + $0x8] sm:$0xf]
  %v22 = vld [vmem:[%s1 + $0xc] sm:$0xf]
  %v23 = vld [vmem:[%s1 + $0x10] sm:$0xf]
  %v24 = vld [vmem:[%s1 + $0x14] sm:$0xf]
  %v25 = vld [vmem:[%s1 + $0x18] sm:$0xf]
  %v26 = vld [vmem:[%s1 + $0x1c] sm:$0xf]
  %v27 = vld [vmem:[%s1 + $0x20] sm:$0xf]
  %v28 = vld [vmem:[%s1 + $0x24] sm:$0xf]
  %v29 = vld [vmem:[%s1 + $0x28] sm:$0xf]
  %v30 = vld [vmem:[%s1 + $0x2c] sm:$0xf]
  %v31 = vld [vmem:[%s1 + $0x30] sm:$0xf]
  %v32 = vld [vmem:[%s1 + $0x34] sm:$0xf]
  %v33 = vld [vmem:[%s1 + $0x38] sm:$0xf]
  %v34 = vld [vmem:[%s1 + $0x3c] sm:$0xf]
  %v35 = vld [vmem:[%s1 + $0x40] sm:$0xf]
  %v36 = vld [vmem:[%s1 + $0x44] sm:$0xf]
  %v37 = vld [vmem:[%s2] sm:$0x1]
  %v39 = vperm.slane %v37, 0
  %v45 = vunpack.c.l.b16 %v15
  %v46 = vunpack.c.h.b16 %v15
  %v47 = vunpack.c.l.b16 %v16
  %v48 = vunpack.c.h.b16 %v16
  %v49 = vunpack.c.l.b16 %v17
  %v50 = vunpack.c.h.b16 %v17
  %v51 = vunpack.c.l.b16 %v18
  %v52 = vunpack.c.h.b16 %v18
  %v53 = vpack.c.b16 %v47, %v45
  %v54 = vpack.c.b16 %v48, %v46
  %v55 = vpack.c.b16 %v51, %v49
  %v56 = vpack.c.b16 %v52, %v50
  %v77 = vunpack.c.l.b16 %v19
  %v78 = vunpack.c.l.b16 %v20
  %v79 = vunpack.c.l.b16 %v21
  %v80 = vunpack.c.l.b16 %v22
  %v81 = vunpack.c.l.b16 %v23
  %v82 = vunpack.c.l.b16 %v24
  %v83 = vunpack.c.l.b16 %v25
  %v84 = vunpack.c.l.b16 %v26
  %v85 = vunpack.c.l.b16 %v27
  %v86 = vunpack.c.l.b16 %v28
  %v87 = vunpack.c.l.b16 %v29
  %v88 = vunpack.c.l.b16 %v30
  %v89 = vunpack.c.l.b16 %v31
  %v90 = vunpack.c.l.b16 %v32
  %v91 = vunpack.c.l.b16 %v33
  %v92 = vunpack.c.l.b16 %v34
  %v93 = vunpack.c.l.b16 %v35
  %v94 = vunpack.c.l.b16 %v36
  %v95 = vpack.c.b16 %v78, %v77
  %v96 = vpack.c.b16 %v80, %v79
  %v97 = vpack.c.b16 %v82, %v81
  %v98 = vpack.c.b16 %v84, %v83
  %v99 = vpack.c.b16 %v86, %v85
  %v100 = vpack.c.b16 %v88, %v87
  %v101 = vpack.c.b16 %v90, %v89
  %v102 = vpack.c.b16 %v92, %v91
  %v103 = vpack.c.b16 %v94, %v93
  %vm113 = vcmask 130048
  %v115 = vsel %vm113, %v54, 0
  %v118 = vsel %vm113, %v56, 0
  %120 = vmatpush.bf16.msra.mxu0 %v102
  %121 = vmatpush.bf16.msra.mxu0 %v101
  %122 = vmatpush.bf16.msra.mxu0 %v100
  %123 = vmatpush.bf16.msra.mxu0 %v99
  %124 = vmatpush.bf16.msra.mxu0 %v98
  %125 = vmatpush.bf16.msra.mxu0 %v97
  %126 = vmatpush.bf16.msra.mxu0 %v96
  %127 = vmatpush.bf16.msra.mxu0 %v95
  %128 = vmatmul.bf16.gmra.mxu0 %v53
  %v129 = vpop.f32.mrf.mxu0
  %v130 = vadd.f32 %v39, %v129
  %v131 = vpop.f32.mrf.mxu0
  %v132 = vadd.f32 %v39, %v131
  %133 = vmatmul.bf16.gmra.mxu0 %v55
  %v134 = vpop.f32.mrf.mxu0
  %v135 = vadd.f32 %v39, %v134
  %v136 = vpop.f32.mrf.mxu0
  %v137 = vadd.f32 %v39, %v136
  %138 = vdwg.mxu0
  %139 = vmatpush.bf16.msra.mxu0 0
  %140 = vmatpush.bf16.msra.mxu0 0
  %141 = vmatpush.bf16.msra.mxu0 0
  %142 = vmatpush.bf16.msra.mxu0 0
  %143 = vmatpush.bf16.msra.mxu0 0
  %144 = vmatpush.bf16.msra.mxu0 0
  %145 = vmatpush.bf16.msra.mxu0 0
  %146 = vmatpush.bf16.msra.mxu0 %v103
  %147 = vmatmul.bf16.gmra.mxu0 %v115
  %v148 = vpop.f32.mrf.mxu0
  %v149 = vadd.f32 %v130, %v148
  %v150 = vpop.f32.mrf.mxu0
  %v151 = vadd.f32 %v132, %v150
  %152 = vmatmul.bf16.gmra.mxu0 %v118
  %v153 = vpop.f32.mrf.mxu0
  %v154 = vadd.f32 %v135, %v153
  %v155 = vpop.f32.mrf.mxu0
  %v156 = vadd.f32 %v137, %v155
  %157 = vdwg.mxu0
  %v158 = vmax.f32 %v149, 0.0
  %v159 = vmax.f32 %v151, 0.0
  %v160 = vmax.f32 %v154, 0.0
  %v161 = vmax.f32 %v156, 0.0
  %162 = vst [vmem:[%s3] sm:$0xff] %v158
  %163 = vst [vmem:[%s3 + $0x8] sm:$0xff] %v159
  %164 = vst [vmem:[%s3 + $0x10] sm:$0xff] %v160
  %165 = vst [vmem:[%s3 + $0x18] sm:$0xff] %v161
  // Predicated region
  $region14: #{_lambda_.26} parent=0 // pred_check
    _
  $region15: #{_lambda_.26} parent=0 // pred_check_branch
    %167 = sbr.rel (0) target = $region17
  $region16: #{_lambda_.26} parent=0 // pred_region
    _
  $region17: #{_lambda_.26} parent=0 // pred_fallthru
    _
  // Predicated region
  $region18: #{_lambda_.26} parent=0 // pred_check
    _
  $region19: #{_lambda_.26} parent=0 // pred_check_branch
    %169 = sbr.rel (0) target = $region21
  $region20: #{_lambda_.26} parent=0 // pred_region
    _
  $region21: #{_lambda_.26} parent=0 // pred_fallthru
    _

// kernel: _lambda_.31
$region0: #{_lambda_.31}
  #allocation0 [shape = 'u32[]', space=smem, size = 0x4, offset = 0x4, fixed_abs, tag = 'smem constant byte address 0x4 - core index']
  #allocation1 [shape = 'u32[72,128]{1,0:T(1,128)}', space=vmem, size = 0x9000, scoped, tag = 'internal scratch']
  %s0 = inlined_call_operand.vmem [shape: bf16[32,16], index: 0, kind: input, shape index: {}]
  %s1 = inlined_call_operand.vmem [shape: bf16[16,128], index: 1, kind: input, shape index: {}]
  %s2 = inlined_call_operand.vmem [shape: f32[1,128], index: 2, kind: input, shape index: {}]
  %s3 = inlined_call_operand.vmem [shape: f32[32,128], index: 3, kind: output, shape index: {}]
  %s4 = sld [smem:[#allocation0]]
  $region22: #{_lambda_.31} parent=0
    _
  %s6 = ssub.s32 1, %s4
  %s7 = scalar_select 0, %s6, %s4
  // Predicated region
  $region2: #{_lambda_.31} parent=0 // pred_check
    _
  $region3: #{_lambda_.31} parent=0 // pred_check_branch
    %9 = sbr.rel (0) target = $region5
  $region4: #{_lambda_.31} parent=0 // pred_region
    _
  $region5: #{_lambda_.31} parent=0 // pred_fallthru
    _
  // Predicated region
  $region6: #{_lambda_.31} parent=0 // pred_check
    _
  $region7: #{_lambda_.31} parent=0 // pred_check_branch
    %11 = sbr.rel (0) target = $region9
  $region8: #{_lambda_.31} parent=0 // pred_region
    _
  $region9: #{_lambda_.31} parent=0 // pred_fallthru
    _
  // Predicated region
  $region10: #{_lambda_.31} parent=0 // pred_check
    _
  $region11: #{_lambda_.31} parent=0 // pred_check_branch
    %13 = sbr.rel (0) target = $region13
  $region12: #{_lambda_.31} parent=0 // pred_region
    _
  $region13: #{_lambda_.31} parent=0 // pred_fallthru
    _
  %v15 = vld [vmem:[%s0] sm:$0xf]
  %v16 = vld [vmem:[%s0 + $0x4] sm:$0xf]
  %v17 = vld [vmem:[%s0 + $0x8] sm:$0xf]
  %v18 = vld [vmem:[%s0 + $0xc] sm:$0xf]
  %v19 = vld [vmem:[%s1] sm:$0xf]
  %v20 = vld [vmem:[%s1 + $0x4] sm:$0xf]
  %v21 = vld [vmem:[%s2] sm:$0x1]
  %v23 = vperm.slane %v21, 0
  %v29 = vunpack.c.l.b16 %v15
  %v30 = vunpack.c.l.b16 %v16
  %v31 = vunpack.c.l.b16 %v17
  %v32 = vunpack.c.l.b16 %v18
  %v33 = vpack.c.b16 %v30, %v29
  %v34 = vpack.c.b16 %v32, %v31
  %v37 = vunpack.c.l.b16 %v19
  %v38 = vunpack.c.l.b16 %v20
  %v39 = vpack.c.b16 %v38, %v37
  %vm41 = vcmask 130048
  %v43 = vsel %vm41, %v33, 0
  %v46 = vsel %vm41, %v34, 0
  %48 = vmatpush.bf16.msra.mxu0 0
  %49 = vmatpush.bf16.msra.mxu0 0
  %50 = vmatpush.bf16.msra.mxu0 0
  %51 = vmatpush.bf16.msra.mxu0 0
  %52 = vmatpush.bf16.msra.mxu0 0
  %53 = vmatpush.bf16.msra.mxu0 0
  %54 = vmatpush.bf16.msra.mxu0 0
  %55 = vmatpush.bf16.msra.mxu0 %v39
  %56 = vmatmul.bf16.gmra.mxu0 %v43
  %v57 = vpop.f32.mrf.mxu0
  %v58 = vadd.f32 %v23, %v57
  %v59 = vpop.f32.mrf.mxu0
  %v60 = vadd.f32 %v23, %v59
  %61 = vmatmul.bf16.gmra.mxu0 %v46
  %v62 = vpop.f32.mrf.mxu0
  %v63 = vadd.f32 %v23, %v62
  %v64 = vpop.f32.mrf.mxu0
  %v65 = vadd.f32 %v23, %v64
  %66 = vdwg.mxu0
  %67 = vst [vmem:[%s3] sm:$0xff] %v58
  %68 = vst [vmem:[%s3 + $0x8] sm:$0xff] %v60
  %69 = vst [vmem:[%s3 + $0x10] sm:$0xff] %v63
  %70 = vst [vmem:[%s3 + $0x18] sm:$0xff] %v65
  // Predicated region
  $region14: #{_lambda_.31} parent=0 // pred_check
    _
  $region15: #{_lambda_.31} parent=0 // pred_check_branch
    %72 = sbr.rel (0) target = $region17
  $region16: #{_lambda_.31} parent=0 // pred_region
    _
  $region17: #{_lambda_.31} parent=0 // pred_fallthru
    _
  // Predicated region
  $region18: #{_lambda_.31} parent=0 // pred_check
    _
  $region19: #{_lambda_.31} parent=0 // pred_check_branch
    %74 = sbr.rel (0) target = $region21
  $region20: #{_lambda_.31} parent=0 // pred_region
    _
  $region21: #{_lambda_.31} parent=0 // pred_fallthru
    _

// kernel: _lambda_.28
$region0: #{_lambda_.28}
  #allocation0 [shape = 'u32[]', space=smem, size = 0x4, offset = 0x4, fixed_abs, tag = 'smem constant byte address 0x4 - core index']
  #allocation1 [shape = 'u32[72,128]{1,0:T(1,128)}', space=vmem, size = 0x9000, scoped, tag = 'internal scratch']
  %s0 = inlined_call_operand.vmem [shape: bf16[8,400], index: 0, kind: input, shape index: {}]
  %s1 = inlined_call_operand.vmem [shape: bf16[400,128], index: 1, kind: input, shape index: {}]
  %s2 = inlined_call_operand.vmem [shape: f32[1,128], index: 2, kind: input, shape index: {}]
  %s3 = inlined_call_operand.vmem [shape: f32[8,128], index: 3, kind: output, shape index: {}]
  %s4 = sld [smem:[#allocation0]]
  $region22: #{_lambda_.28} parent=0
    _
  %s6 = ssub.s32 1, %s4
  %s7 = scalar_select 0, %s6, %s4
  // Predicated region
  $region2: #{_lambda_.28} parent=0 // pred_check
    _
  $region3: #{_lambda_.28} parent=0 // pred_check_branch
    %9 = sbr.rel (0) target = $region5
  $region4: #{_lambda_.28} parent=0 // pred_region
    _
  $region5: #{_lambda_.28} parent=0 // pred_fallthru
    _
  // Predicated region
  $region6: #{_lambda_.28} parent=0 // pred_check
    _
  $region7: #{_lambda_.28} parent=0 // pred_check_branch
    %11 = sbr.rel (0) target = $region9
  $region8: #{_lambda_.28} parent=0 // pred_region
    _
  $region9: #{_lambda_.28} parent=0 // pred_fallthru
    _
  // Predicated region
  $region10: #{_lambda_.28} parent=0 // pred_check
    _
  $region11: #{_lambda_.28} parent=0 // pred_check_branch
    %13 = sbr.rel (0) target = $region13
  $region12: #{_lambda_.28} parent=0 // pred_region
    _
  $region13: #{_lambda_.28} parent=0 // pred_fallthru
    _
  %v15 = vld [vmem:[%s0] sm:$0xff]
  %v16 = vld [vmem:[%s0 + $0x8] sm:$0xff]
  %v17 = vld [vmem:[%s1] sm:$0xf]
  %v18 = vld [vmem:[%s1 + $0x4] sm:$0xf]
  %v19 = vld [vmem:[%s1 + $0x8] sm:$0xf]
  %v20 = vld [vmem:[%s1 + $0xc] sm:$0xf]
  %v21 = vld [vmem:[%s1 + $0x10] sm:$0xf]
  %v22 = vld [vmem:[%s1 + $0x14] sm:$0xf]
  %v23 = vld [vmem:[%s1 + $0x18] sm:$0xf]
  %v24 = vld [vmem:[%s1 + $0x1c] sm:$0xf]
  %v25 = vld [vmem:[%s1 + $0x20] sm:$0xf]
  %v26 = vld [vmem:[%s1 + $0x24] sm:$0xf]
  %v27 = vld [vmem:[%s1 + $0x28] sm:$0xf]
  %v28 = vld [vmem:[%s1 + $0x2c] sm:$0xf]
  %v29 = vld [vmem:[%s1 + $0x30] sm:$0xf]
  %v30 = vld [vmem:[%s1 + $0x34] sm:$0xf]
  %v31 = vld [vmem:[%s1 + $0x38] sm:$0xf]
  %v32 = vld [vmem:[%s1 + $0x3c] sm:$0xf]
  %v33 = vld [vmem:[%s1 + $0x40] sm:$0xf]
  %v34 = vld [vmem:[%s1 + $0x44] sm:$0xf]
  %v35 = vld [vmem:[%s1 + $0x48] sm:$0xf]
  %v36 = vld [vmem:[%s1 + $0x4c] sm:$0xf]
  %v37 = vld [vmem:[%s1 + $0x50] sm:$0xf]
  %v38 = vld [vmem:[%s1 + $0x54] sm:$0xf]
  %v39 = vld [vmem:[%s1 + $0x58] sm:$0xf]
  %v40 = vld [vmem:[%s1 + $0x5c] sm:$0xf]
  %v41 = vld [vmem:[%s1 + $0x60] sm:$0xf]
  %v42 = vld [vmem:[%s1 + $0x64] sm:$0xf]
  %v43 = vld [vmem:[%s1 + $0x68] sm:$0xf]
  %v44 = vld [vmem:[%s1 + $0x6c] sm:$0xf]
  %v45 = vld [vmem:[%s1 + $0x70] sm:$0xf]
  %v46 = vld [vmem:[%s1 + $0x74] sm:$0xf]
  %v47 = vld [vmem:[%s1 + $0x78] sm:$0xf]
  %v48 = vld [vmem:[%s1 + $0x7c] sm:$0xf]
  %v49 = vld [vmem:[%s1 + $0x80] sm:$0xf]
  %v50 = vld [vmem:[%s1 + $0x84] sm:$0xf]
  %v51 = vld [vmem:[%s1 + $0x88] sm:$0xf]
  %v52 = vld [vmem:[%s1 + $0x8c] sm:$0xf]
  %v53 = vld [vmem:[%s1 + $0x90] sm:$0xf]
  %v54 = vld [vmem:[%s1 + $0x94] sm:$0xf]
  %v55 = vld [vmem:[%s1 + $0x98] sm:$0xf]
  %v56 = vld [vmem:[%s1 + $0x9c] sm:$0xf]
  %v57 = vld [vmem:[%s1 + $0xa0] sm:$0xf]
  %v58 = vld [vmem:[%s1 + $0xa4] sm:$0xf]
  %v59 = vld [vmem:[%s1 + $0xa8] sm:$0xf]
  %v60 = vld [vmem:[%s1 + $0xac] sm:$0xf]
  %v61 = vld [vmem:[%s1 + $0xb0] sm:$0xf]
  %v62 = vld [vmem:[%s1 + $0xb4] sm:$0xf]
  %v63 = vld [vmem:[%s1 + $0xb8] sm:$0xf]
  %v64 = vld [vmem:[%s1 + $0xbc] sm:$0xf]
  %v65 = vld [vmem:[%s1 + $0xc0] sm:$0xf]
  %v66 = vld [vmem:[%s1 + $0xc4] sm:$0xf]
  %v67 = vld [vmem:[%s2] sm:$0x1]
  %v69 = vperm.slane %v67, 0
  %v73 = vunpack.c.l.b16 %v15
  %v74 = vunpack.c.h.b16 %v15
  %v75 = vunpack.c.l.b16 %v16
  %v76 = vunpack.c.h.b16 %v16
  %v77 = vpack.c.b16 %v73, %v73
  %v78 = vpack.c.b16 %v74, %v74
  %v79 = vpack.c.b16 %v75, %v75
  %v80 = vpack.c.b16 %v76, %v76
  %v134 = vunpack.c.l.b16 %v17
  %v135 = vunpack.c.l.b16 %v18
  %v136 = vunpack.c.l.b16 %v19
  %v137 = vunpack.c.l.b16 %v20
  %v138 = vunpack.c.l.b16 %v21
  %v139 = vunpack.c.l.b16 %v22
  %v140 = vunpack.c.l.b16 %v23
  %v141 = vunpack.c.l.b16 %v24
  %v142 = vunpack.c.l.b16 %v25
  %v143 = vunpack.c.l.b16 %v26
  %v144 = vunpack.c.l.b16 %v27
  %v145 = vunpack.c.l.b16 %v28
  %v146 = vunpack.c.l.b16 %v29
  %v147 = vunpack.c.l.b16 %v30
  %v148 = vunpack.c.l.b16 %v31
  %v149 = vunpack.c.l.b16 %v32
  %v150 = vunpack.c.l.b16 %v33
  %v151 = vunpack.c.l.b16 %v34
  %v152 = vunpack.c.l.b16 %v35
  %v153 = vunpack.c.l.b16 %v36
  %v154 = vunpack.c.l.b16 %v37
  %v155 = vunpack.c.l.b16 %v38
  %v156 = vunpack.c.l.b16 %v39
  %v157 = vunpack.c.l.b16 %v40
  %v158 = vunpack.c.l.b16 %v41
  %v159 = vunpack.c.l.b16 %v42
  %v160 = vunpack.c.l.b16 %v43
  %v161 = vunpack.c.l.b16 %v44
  %v162 = vunpack.c.l.b16 %v45
  %v163 = vunpack.c.l.b16 %v46
  %v164 = vunpack.c.l.b16 %v47
  %v165 = vunpack.c.l.b16 %v48
  %v166 = vunpack.c.l.b16 %v49
  %v167 = vunpack.c.l.b16 %v50
  %v168 = vunpack.c.l.b16 %v51
  %v169 = vunpack.c.l.b16 %v52
  %v170 = vunpack.c.l.b16 %v53
  %v171 = vunpack.c.l.b16 %v54
  %v172 = vunpack.c.l.b16 %v55
  %v173 = vunpack.c.l.b16 %v56
  %v174 = vunpack.c.l.b16 %v57
  %v175 = vunpack.c.l.b16 %v58
  %v176 = vunpack.c.l.b16 %v59
  %v177 = vunpack.c.l.b16 %v60
  %v178 = vunpack.c.l.b16 %v61
  %v179 = vunpack.c.l.b16 %v62
  %v180 = vunpack.c.l.b16 %v63
  %v181 = vunpack.c.l.b16 %v64
  %v182 = vunpack.c.l.b16 %v65
  %v183 = vunpack.c.l.b16 %v66
  %v184 = vpack.c.b16 %v135, %v134
  %v185 = vpack.c.b16 %v137, %v136
  %v186 = vpack.c.b16 %v139, %v138
  %v187 = vpack.c.b16 %v141, %v140
  %v188 = vpack.c.b16 %v143, %v142
  %v189 = vpack.c.b16 %v145, %v144
  %v190 = vpack.c.b16 %v147, %v146
  %v191 = vpack.c.b16 %v149, %v148
  %v192 = vpack.c.b16 %v151, %v150
  %v193 = vpack.c.b16 %v153, %v152
  %v194 = vpack.c.b16 %v155, %v154
  %v195 = vpack.c.b16 %v157, %v156
  %v196 = vpack.c.b16 %v159, %v158
  %v197 = vpack.c.b16 %v161, %v160
  %v198 = vpack.c.b16 %v163, %v162
  %v199 = vpack.c.b16 %v165, %v164
  %v200 = vpack.c.b16 %v167, %v166
  %v201 = vpack.c.b16 %v169, %v168
  %v202 = vpack.c.b16 %v171, %v170
  %v203 = vpack.c.b16 %v173, %v172
  %v204 = vpack.c.b16 %v175, %v174
  %v205 = vpack.c.b16 %v177, %v176
  %v206 = vpack.c.b16 %v179, %v178
  %v207 = vpack.c.b16 %v181, %v180
  %v208 = vpack.c.b16 %v183, %v182
  %vm234 = vcmask 130048
  %v236 = vsel %vm234, %v80, 0
  %238 = vmatpush.bf16.msra.mxu0 %v191
  %239 = vmatpush.bf16.msra.mxu0 %v190
  %240 = vmatpush.bf16.msra.mxu0 %v189
  %241 = vmatpush.bf16.msra.mxu0 %v188
  %242 = vmatpush.bf16.msra.mxu0 %v187
  %243 = vmatpush.bf16.msra.mxu0 %v186
  %244 = vmatpush.bf16.msra.mxu0 %v185
  %245 = vmatpush.bf16.msra.mxu0 %v184
  %246 = vmatmul.bf16.gmra.mxu0 %v77
  %v247 = vpop.f32.mrf.mxu0
  %v248 = vadd.f32 %v69, %v247
  %v249 = vpop.f32.mrf.mxu0
  %250 = vdwg.mxu0
  %251 = vmatpush.bf16.msra.mxu0 %v199
  %252 = vmatpush.bf16.msra.mxu0 %v198
  %253 = vmatpush.bf16.msra.mxu0 %v197
  %254 = vmatpush.bf16.msra.mxu0 %v196
  %255 = vmatpush.bf16.msra.mxu0 %v195
  %256 = vmatpush.bf16.msra.mxu0 %v194
  %257 = vmatpush.bf16.msra.mxu0 %v193
  %258 = vmatpush.bf16.msra.mxu0 %v192
  %259 = vmatmul.bf16.gmra.mxu0 %v78
  %v260 = vpop.f32.mrf.mxu0
  %v261 = vadd.f32 %v248, %v260
  %v262 = vpop.f32.mrf.mxu0
  %263 = vdwg.mxu0
  %264 = vmatpush.bf16.msra.mxu0 %v207
  %265 = vmatpush.bf16.msra.mxu0 %v206
  %266 = vmatpush.bf16.msra.mxu0 %v205
  %267 = vmatpush.bf16.msra.mxu0 %v204
  %268 = vmatpush.bf16.msra.mxu0 %v203
  %269 = vmatpush.bf16.msra.mxu0 %v202
  %270 = vmatpush.bf16.msra.mxu0 %v201
  %271 = vmatpush.bf16.msra.mxu0 %v200
  %272 = vmatmul.bf16.gmra.mxu0 %v79
  %v273 = vpop.f32.mrf.mxu0
  %v274 = vadd.f32 %v261, %v273
  %v275 = vpop.f32.mrf.mxu0
  %276 = vdwg.mxu0
  %277 = vmatpush.bf16.msra.mxu0 0
  %278 = vmatpush.bf16.msra.mxu0 0
  %279 = vmatpush.bf16.msra.mxu0 0
  %280 = vmatpush.bf16.msra.mxu0 0
  %281 = vmatpush.bf16.msra.mxu0 0
  %282 = vmatpush.bf16.msra.mxu0 0
  %283 = vmatpush.bf16.msra.mxu0 0
  %284 = vmatpush.bf16.msra.mxu0 %v208
  %285 = vmatmul.bf16.gmra.mxu0 %v236
  %v286 = vpop.f32.mrf.mxu0
  %v287 = vadd.f32 %v274, %v286
  %v288 = vpop.f32.mrf.mxu0
  %289 = vdwg.mxu0
  %v290 = vmax.f32 %v287, 0.0
  %291 = vst [vmem:[%s3] sm:$0xff] %v290
  // Predicated region
  $region14: #{_lambda_.28} parent=0 // pred_check
    _
  $region15: #{_lambda_.28} parent=0 // pred_check_branch
    %293 = sbr.rel (0) target = $region17
  $region16: #{_lambda_.28} parent=0 // pred_region
    _
  $region17: #{_lambda_.28} parent=0 // pred_fallthru
    _
  // Predicated region
  $region18: #{_lambda_.28} parent=0 // pred_check
    _
  $region19: #{_lambda_.28} parent=0 // pred_check_branch
    %295 = sbr.rel (0) target = $region21
  $region20: #{_lambda_.28} parent=0 // pred_region
    _
  $region21: #{_lambda_.28} parent=0 // pred_fallthru
    _

// kernel: _lambda_.29
$region0: #{_lambda_.29}
  #allocation0 [shape = 'u32[]', space=smem, size = 0x4, offset = 0x4, fixed_abs, tag = 'smem constant byte address 0x4 - core index']
  #allocation1 [shape = 'u32[72,128]{1,0:T(1,128)}', space=vmem, size = 0x9000, scoped, tag = 'internal scratch']
  %s0 = inlined_call_operand.vmem [shape: bf16[8,288], index: 0, kind: input, shape index: {}]
  %s1 = inlined_call_operand.vmem [shape: bf16[288,128], index: 1, kind: input, shape index: {}]
  %s2 = inlined_call_operand.vmem [shape: f32[1,128], index: 2, kind: input, shape index: {}]
  %s3 = inlined_call_operand.vmem [shape: f32[8,128], index: 3, kind: output, shape index: {}]
  %s4 = sld [smem:[#allocation0]]
  $region22: #{_lambda_.29} parent=0
    _
  %s6 = ssub.s32 1, %s4
  %s7 = scalar_select 0, %s6, %s4
  // Predicated region
  $region2: #{_lambda_.29} parent=0 // pred_check
    _
  $region3: #{_lambda_.29} parent=0 // pred_check_branch
    %9 = sbr.rel (0) target = $region5
  $region4: #{_lambda_.29} parent=0 // pred_region
    _
  $region5: #{_lambda_.29} parent=0 // pred_fallthru
    _
  // Predicated region
  $region6: #{_lambda_.29} parent=0 // pred_check
    _
  $region7: #{_lambda_.29} parent=0 // pred_check_branch
    %11 = sbr.rel (0) target = $region9
  $region8: #{_lambda_.29} parent=0 // pred_region
    _
  $region9: #{_lambda_.29} parent=0 // pred_fallthru
    _
  // Predicated region
  $region10: #{_lambda_.29} parent=0 // pred_check
    _
  $region11: #{_lambda_.29} parent=0 // pred_check_branch
    %13 = sbr.rel (0) target = $region13
  $region12: #{_lambda_.29} parent=0 // pred_region
    _
  $region13: #{_lambda_.29} parent=0 // pred_fallthru
    _
  %v15 = vld [vmem:[%s0] sm:$0xff]
  %v16 = vld [vmem:[%s0 + $0x8] sm:$0xf]
  %v17 = vld [vmem:[%s1] sm:$0xf]
  %v18 = vld [vmem:[%s1 + $0x4] sm:$0xf]
  %v19 = vld [vmem:[%s1 + $0x8] sm:$0xf]
  %v20 = vld [vmem:[%s1 + $0xc] sm:$0xf]
  %v21 = vld [vmem:[%s1 + $0x10] sm:$0xf]
  %v22 = vld [vmem:[%s1 + $0x14] sm:$0xf]
  %v23 = vld [vmem:[%s1 + $0x18] sm:$0xf]
  %v24 = vld [vmem:[%s1 + $0x1c] sm:$0xf]
  %v25 = vld [vmem:[%s1 + $0x20] sm:$0xf]
  %v26 = vld [vmem:[%s1 + $0x24] sm:$0xf]
  %v27 = vld [vmem:[%s1 + $0x28] sm:$0xf]
  %v28 = vld [vmem:[%s1 + $0x2c] sm:$0xf]
  %v29 = vld [vmem:[%s1 + $0x30] sm:$0xf]
  %v30 = vld [vmem:[%s1 + $0x34] sm:$0xf]
  %v31 = vld [vmem:[%s1 + $0x38] sm:$0xf]
  %v32 = vld [vmem:[%s1 + $0x3c] sm:$0xf]
  %v33 = vld [vmem:[%s1 + $0x40] sm:$0xf]
  %v34 = vld [vmem:[%s1 + $0x44] sm:$0xf]
  %v35 = vld [vmem:[%s1 + $0x48] sm:$0xf]
  %v36 = vld [vmem:[%s1 + $0x4c] sm:$0xf]
  %v37 = vld [vmem:[%s1 + $0x50] sm:$0xf]
  %v38 = vld [vmem:[%s1 + $0x54] sm:$0xf]
  %v39 = vld [vmem:[%s1 + $0x58] sm:$0xf]
  %v40 = vld [vmem:[%s1 + $0x5c] sm:$0xf]
  %v41 = vld [vmem:[%s1 + $0x60] sm:$0xf]
  %v42 = vld [vmem:[%s1 + $0x64] sm:$0xf]
  %v43 = vld [vmem:[%s1 + $0x68] sm:$0xf]
  %v44 = vld [vmem:[%s1 + $0x6c] sm:$0xf]
  %v45 = vld [vmem:[%s1 + $0x70] sm:$0xf]
  %v46 = vld [vmem:[%s1 + $0x74] sm:$0xf]
  %v47 = vld [vmem:[%s1 + $0x78] sm:$0xf]
  %v48 = vld [vmem:[%s1 + $0x7c] sm:$0xf]
  %v49 = vld [vmem:[%s1 + $0x80] sm:$0xf]
  %v50 = vld [vmem:[%s1 + $0x84] sm:$0xf]
  %v51 = vld [vmem:[%s1 + $0x88] sm:$0xf]
  %v52 = vld [vmem:[%s1 + $0x8c] sm:$0xf]
  %v53 = vld [vmem:[%s2] sm:$0x1]
  %v55 = vperm.slane %v53, 0
  %v59 = vunpack.c.l.b16 %v15
  %v60 = vunpack.c.h.b16 %v15
  %v61 = vunpack.c.l.b16 %v16
  %v62 = vpack.c.b16 %v59, %v59
  %v63 = vpack.c.b16 %v60, %v60
  %v64 = vpack.c.b16 %v61, %v61
  %v103 = vunpack.c.l.b16 %v17
  %v104 = vunpack.c.l.b16 %v18
  %v105 = vunpack.c.l.b16 %v19
  %v106 = vunpack.c.l.b16 %v20
  %v107 = vunpack.c.l.b16 %v21
  %v108 = vunpack.c.l.b16 %v22
  %v109 = vunpack.c.l.b16 %v23
  %v110 = vunpack.c.l.b16 %v24
  %v111 = vunpack.c.l.b16 %v25
  %v112 = vunpack.c.l.b16 %v26
  %v113 = vunpack.c.l.b16 %v27
  %v114 = vunpack.c.l.b16 %v28
  %v115 = vunpack.c.l.b16 %v29
  %v116 = vunpack.c.l.b16 %v30
  %v117 = vunpack.c.l.b16 %v31
  %v118 = vunpack.c.l.b16 %v32
  %v119 = vunpack.c.l.b16 %v33
  %v120 = vunpack.c.l.b16 %v34
  %v121 = vunpack.c.l.b16 %v35
  %v122 = vunpack.c.l.b16 %v36
  %v123 = vunpack.c.l.b16 %v37
  %v124 = vunpack.c.l.b16 %v38
  %v125 = vunpack.c.l.b16 %v39
  %v126 = vunpack.c.l.b16 %v40
  %v127 = vunpack.c.l.b16 %v41
  %v128 = vunpack.c.l.b16 %v42
  %v129 = vunpack.c.l.b16 %v43
  %v130 = vunpack.c.l.b16 %v44
  %v131 = vunpack.c.l.b16 %v45
  %v132 = vunpack.c.l.b16 %v46
  %v133 = vunpack.c.l.b16 %v47
  %v134 = vunpack.c.l.b16 %v48
  %v135 = vunpack.c.l.b16 %v49
  %v136 = vunpack.c.l.b16 %v50
  %v137 = vunpack.c.l.b16 %v51
  %v138 = vunpack.c.l.b16 %v52
  %v139 = vpack.c.b16 %v104, %v103
  %v140 = vpack.c.b16 %v106, %v105
  %v141 = vpack.c.b16 %v108, %v107
  %v142 = vpack.c.b16 %v110, %v109
  %v143 = vpack.c.b16 %v112, %v111
  %v144 = vpack.c.b16 %v114, %v113
  %v145 = vpack.c.b16 %v116, %v115
  %v146 = vpack.c.b16 %v118, %v117
  %v147 = vpack.c.b16 %v120, %v119
  %v148 = vpack.c.b16 %v122, %v121
  %v149 = vpack.c.b16 %v124, %v123
  %v150 = vpack.c.b16 %v126, %v125
  %v151 = vpack.c.b16 %v128, %v127
  %v152 = vpack.c.b16 %v130, %v129
  %v153 = vpack.c.b16 %v132, %v131
  %v154 = vpack.c.b16 %v134, %v133
  %v155 = vpack.c.b16 %v136, %v135
  %v156 = vpack.c.b16 %v138, %v137
  %vm175 = vcmask 261120
  %v177 = vsel %vm175, %v64, 0
  %179 = vmatpush.bf16.msra.mxu0 %v146
  %180 = vmatpush.bf16.msra.mxu0 %v145
  %181 = vmatpush.bf16.msra.mxu0 %v144
  %182 = vmatpush.bf16.msra.mxu0 %v143
  %183 = vmatpush.bf16.msra.mxu0 %v142
  %184 = vmatpush.bf16.msra.mxu0 %v141
  %185 = vmatpush.bf16.msra.mxu0 %v140
  %186 = vmatpush.bf16.msra.mxu0 %v139
  %187 = vmatmul.bf16.gmra.mxu0 %v62
  %v188 = vpop.f32.mrf.mxu0
  %v189 = vadd.f32 %v55, %v188
  %v190 = vpop.f32.mrf.mxu0
  %191 = vdwg.mxu0
  %192 = vmatpush.bf16.msra.mxu0 %v154
  %193 = vmatpush.bf16.msra.mxu0 %v153
  %194 = vmatpush.bf16.msra.mxu0 %v152
  %195 = vmatpush.bf16.msra.mxu0 %v151
  %196 = vmatpush.bf16.msra.mxu0 %v150
  %197 = vmatpush.bf16.msra.mxu0 %v149
  %198 = vmatpush.bf16.msra.mxu0 %v148
  %199 = vmatpush.bf16.msra.mxu0 %v147
  %200 = vmatmul.bf16.gmra.mxu0 %v63
  %v201 = vpop.f32.mrf.mxu0
  %v202 = vadd.f32 %v189, %v201
  %v203 = vpop.f32.mrf.mxu0
  %204 = vdwg.mxu0
  %205 = vmatpush.bf16.msra.mxu0 0
  %206 = vmatpush.bf16.msra.mxu0 0
  %207 = vmatpush.bf16.msra.mxu0 0
  %208 = vmatpush.bf16.msra.mxu0 0
  %209 = vmatpush.bf16.msra.mxu0 0
  %210 = vmatpush.bf16.msra.mxu0 0
  %211 = vmatpush.bf16.msra.mxu0 %v156
  %212 = vmatpush.bf16.msra.mxu0 %v155
  %213 = vmatmul.bf16.gmra.mxu0 %v177
  %v214 = vpop.f32.mrf.mxu0
  %v215 = vadd.f32 %v202, %v214
  %v216 = vpop.f32.mrf.mxu0
  %217 = vdwg.mxu0
  %v218 = vmax.f32 %v215, 0.0
  %219 = vst [vmem:[%s3] sm:$0xff] %v218
  // Predicated region
  $region14: #{_lambda_.29} parent=0 // pred_check
    _
  $region15: #{_lambda_.29} parent=0 // pred_check_branch
    %221 = sbr.rel (0) target = $region17
  $region16: #{_lambda_.29} parent=0 // pred_region
    _
  $region17: #{_lambda_.29} parent=0 // pred_fallthru
    _
  // Predicated region
  $region18: #{_lambda_.29} parent=0 // pred_check
    _
  $region19: #{_lambda_.29} parent=0 // pred_check_branch
    %223 = sbr.rel (0) target = $region21
  $region20: #{_lambda_.29} parent=0 // pred_region
    _
  $region21: #{_lambda_.29} parent=0 // pred_fallthru
    _

// kernel: _lambda_.34
$region0: #{_lambda_.34}
  #allocation0 [shape = 'u32[]', space=smem, size = 0x4, offset = 0x4, fixed_abs, tag = 'smem constant byte address 0x4 - core index']
  #allocation1 [shape = 'u32[72,128]{1,0:T(1,128)}', space=vmem, size = 0x9000, scoped, tag = 'internal scratch']
  %s0 = inlined_call_operand.vmem [shape: bf16[128,8], index: 0, kind: input, shape index: {}]
  %s1 = inlined_call_operand.vmem [shape: bf16[8,128], index: 1, kind: input, shape index: {}]
  %s2 = inlined_call_operand.vmem [shape: f32[1,128], index: 2, kind: input, shape index: {}]
  %s3 = inlined_call_operand.vmem [shape: f32[128,128], index: 3, kind: output, shape index: {}]
  %s4 = sld [smem:[#allocation0]]
  $region22: #{_lambda_.34} parent=0
    _
  %s6 = ssub.s32 1, %s4
  %s7 = scalar_select 0, %s6, %s4
  // Predicated region
  $region2: #{_lambda_.34} parent=0 // pred_check
    _
  $region3: #{_lambda_.34} parent=0 // pred_check_branch
    %9 = sbr.rel (0) target = $region5
  $region4: #{_lambda_.34} parent=0 // pred_region
    _
  $region5: #{_lambda_.34} parent=0 // pred_fallthru
    _
  // Predicated region
  $region6: #{_lambda_.34} parent=0 // pred_check
    _
  $region7: #{_lambda_.34} parent=0 // pred_check_branch
    %11 = sbr.rel (0) target = $region9
  $region8: #{_lambda_.34} parent=0 // pred_region
    _
  $region9: #{_lambda_.34} parent=0 // pred_fallthru
    _
  // Predicated region
  $region10: #{_lambda_.34} parent=0 // pred_check
    _
  $region11: #{_lambda_.34} parent=0 // pred_check_branch
    %13 = sbr.rel (0) target = $region13
  $region12: #{_lambda_.34} parent=0 // pred_region
    _
  $region13: #{_lambda_.34} parent=0 // pred_fallthru
    _
  %v15 = vld [vmem:[%s0] sm:$0xf]
  %v16 = vld [vmem:[%s0 + $0x4] sm:$0xf]
  %v17 = vld [vmem:[%s0 + $0x8] sm:$0xf]
  %v18 = vld [vmem:[%s0 + $0xc] sm:$0xf]
  %v19 = vld [vmem:[%s0 + $0x10] sm:$0xf]
  %v20 = vld [vmem:[%s0 + $0x14] sm:$0xf]
  %v21 = vld [vmem:[%s0 + $0x18] sm:$0xf]
  %v22 = vld [vmem:[%s0 + $0x1c] sm:$0xf]
  %v23 = vld [vmem:[%s0 + $0x20] sm:$0xf]
  %v24 = vld [vmem:[%s0 + $0x24] sm:$0xf]
  %v25 = vld [vmem:[%s0 + $0x28] sm:$0xf]
  %v26 = vld [vmem:[%s0 + $0x2c] sm:$0xf]
  %v27 = vld [vmem:[%s0 + $0x30] sm:$0xf]
  %v28 = vld [vmem:[%s0 + $0x34] sm:$0xf]
  %v29 = vld [vmem:[%s0 + $0x38] sm:$0xf]
  %v30 = vld [vmem:[%s0 + $0x3c] sm:$0xf]
  %v31 = vld [vmem:[%s1] sm:$0xf]
  %v32 = vld [vmem:[%s2] sm:$0x1]
  %v34 = vperm.slane %v32, 0
  %v52 = vunpack.c.l.b16 %v15
  %v53 = vunpack.c.l.b16 %v16
  %v54 = vunpack.c.l.b16 %v17
  %v55 = vunpack.c.l.b16 %v18
  %v56 = vunpack.c.l.b16 %v19
  %v57 = vunpack.c.l.b16 %v20
  %v58 = vunpack.c.l.b16 %v21
  %v59 = vunpack.c.l.b16 %v22
  %v60 = vunpack.c.l.b16 %v23
  %v61 = vunpack.c.l.b16 %v24
  %v62 = vunpack.c.l.b16 %v25
  %v63 = vunpack.c.l.b16 %v26
  %v64 = vunpack.c.l.b16 %v27
  %v65 = vunpack.c.l.b16 %v28
  %v66 = vunpack.c.l.b16 %v29
  %v67 = vunpack.c.l.b16 %v30
  %v68 = vpack.c.b16 %v53, %v52
  %v69 = vpack.c.b16 %v55, %v54
  %v70 = vpack.c.b16 %v57, %v56
  %v71 = vpack.c.b16 %v59, %v58
  %v72 = vpack.c.b16 %v61, %v60
  %v73 = vpack.c.b16 %v63, %v62
  %v74 = vpack.c.b16 %v65, %v64
  %v75 = vpack.c.b16 %v67, %v66
  %vm76 = vcmask 64512
  %v78 = vsel %vm76, %v68, 0
  %v81 = vsel %vm76, %v69, 0
  %v84 = vsel %vm76, %v70, 0
  %v87 = vsel %vm76, %v71, 0
  %v90 = vsel %vm76, %v72, 0
  %v93 = vsel %vm76, %v73, 0
  %v96 = vsel %vm76, %v74, 0
  %v99 = vsel %vm76, %v75, 0
  %vm101 = vcmask 1043456
  %v103 = vsel %vm101, %v31, 0
  %105 = vmatpush.bf16.msra.mxu0 0
  %106 = vmatpush.bf16.msra.mxu0 0
  %107 = vmatpush.bf16.msra.mxu0 0
  %108 = vmatpush.bf16.msra.mxu0 0
  %109 = vmatpush.bf16.msra.mxu0 0
  %110 = vmatpush.bf16.msra.mxu0 0
  %111 = vmatpush.bf16.msra.mxu0 0
  %112 = vmatpush.bf16.msra.mxu0 %v103
  %113 = vmatmul.bf16.gmra.mxu0 %v78
  %v114 = vpop.f32.mrf.mxu0
  %v115 = vadd.f32 %v34, %v114
  %v116 = vpop.f32.mrf.mxu0
  %v117 = vadd.f32 %v34, %v116
  %118 = vmatmul.bf16.gmra.mxu0 %v81
  %v119 = vpop.f32.mrf.mxu0
  %v120 = vadd.f32 %v34, %v119
  %v121 = vpop.f32.mrf.mxu0
  %v122 = vadd.f32 %v34, %v121
  %123 = vmatmul.bf16.gmra.mxu0 %v84
  %v124 = vpop.f32.mrf.mxu0
  %v125 = vadd.f32 %v34, %v124
  %v126 = vpop.f32.mrf.mxu0
  %v127 = vadd.f32 %v34, %v126
  %128 = vmatmul.bf16.gmra.mxu0 %v87
  %v129 = vpop.f32.mrf.mxu0
  %v130 = vadd.f32 %v34, %v129
  %v131 = vpop.f32.mrf.mxu0
  %v132 = vadd.f32 %v34, %v131
  %133 = vmatmul.bf16.gmra.mxu0 %v90
  %v134 = vpop.f32.mrf.mxu0
  %v135 = vadd.f32 %v34, %v134
  %v136 = vpop.f32.mrf.mxu0
  %v137 = vadd.f32 %v34, %v136
  %138 = vmatmul.bf16.gmra.mxu0 %v93
  %v139 = vpop.f32.mrf.mxu0
  %v140 = vadd.f32 %v34, %v139
  %v141 = vpop.f32.mrf.mxu0
  %v142 = vadd.f32 %v34, %v141
  %143 = vmatmul.bf16.gmra.mxu0 %v96
  %v144 = vpop.f32.mrf.mxu0
  %v145 = vadd.f32 %v34, %v144
  %v146 = vpop.f32.mrf.mxu0
  %v147 = vadd.f32 %v34, %v146
  %148 = vmatmul.bf16.gmra.mxu0 %v99
  %v149 = vpop.f32.mrf.mxu0
  %v150 = vadd.f32 %v34, %v149
  %v151 = vpop.f32.mrf.mxu0
  %v152 = vadd.f32 %v34, %v151
  %153 = vdwg.mxu0
  %154 = vst [vmem:[%s3] sm:$0xff] %v115
  %155 = vst [vmem:[%s3 + $0x8] sm:$0xff] %v117
  %156 = vst [vmem:[%s3 + $0x10] sm:$0xff] %v120
  %157 = vst [vmem:[%s3 + $0x18] sm:$0xff] %v122
  %158 = vst [vmem:[%s3 + $0x20] sm:$0xff] %v125
  %159 = vst [vmem:[%s3 + $0x28] sm:$0xff] %v127
  %160 = vst [vmem:[%s3 + $0x30] sm:$0xff] %v130
  %161 = vst [vmem:[%s3 + $0x38] sm:$0xff] %v132
  %162 = vst [vmem:[%s3 + $0x40] sm:$0xff] %v135
  %163 = vst [vmem:[%s3 + $0x48] sm:$0xff] %v137
  %164 = vst [vmem:[%s3 + $0x50] sm:$0xff] %v140
  %165 = vst [vmem:[%s3 + $0x58] sm:$0xff] %v142
  %166 = vst [vmem:[%s3 + $0x60] sm:$0xff] %v145
  %167 = vst [vmem:[%s3 + $0x68] sm:$0xff] %v147
  %168 = vst [vmem:[%s3 + $0x70] sm:$0xff] %v150
  %169 = vst [vmem:[%s3 + $0x78] sm:$0xff] %v152
  // Predicated region
  $region14: #{_lambda_.34} parent=0 // pred_check
    _
  $region15: #{_lambda_.34} parent=0 // pred_check_branch
    %171 = sbr.rel (0) target = $region17
  $region16: #{_lambda_.34} parent=0 // pred_region
    _
  $region17: #{_lambda_.34} parent=0 // pred_fallthru
    _
  // Predicated region
  $region18: #{_lambda_.34} parent=0 // pred_check
    _
  $region19: #{_lambda_.34} parent=0 // pred_check_branch
    %173 = sbr.rel (0) target = $region21
  $region20: #{_lambda_.34} parent=0 // pred_region
    _
  $region21: #{_lambda_.34} parent=0 // pred_fallthru
    _

// kernel: _lambda_.32
$region0: #{_lambda_.32}
  #allocation0 [shape = 'u32[]', space=smem, size = 0x4, offset = 0x4, fixed_abs, tag = 'smem constant byte address 0x4 - core index']
  #allocation1 [shape = 'u32[72,128]{1,0:T(1,128)}', space=vmem, size = 0x9000, scoped, tag = 'internal scratch']
  %s0 = inlined_call_operand.vmem [shape: f32[16,4], index: 0, kind: input, shape index: {}]
  %s1 = inlined_call_operand.vmem [shape: f32[2,4,32], index: 1, kind: input, shape index: {}]
  %s2 = inlined_call_operand.vmem [shape: f32[2,16,32], index: 2, kind: input, shape index: {}]
  %s3 = inlined_call_operand.vmem [shape: f32[2,16,32], index: 3, kind: output, shape index: {}]
  %s4 = sld [smem:[#allocation0]]
  $region45: #{_lambda_.32} parent=0
    _
  %s6 = ssub.s32 1, %s4
  %s7 = scalar_select 0, %s6, %s4
  loop: start=0, step=1, limit=4
  $region2: #{_lambda_.32} parent=0 // loop_pre_header
    _
  $region3: #{_lambda_.32} parent=0 // loop_header
    %s9 = sphi 0, %s13
    %p10 = scmp.ge.s32.totalorder %s9, 4
    %s17 = sphi 0, %s17
    %s19 = sphi 0, %s17
    %s20 = sphi 0, %s19
    %s34 = sphi 0, %s20
    %s40 = sphi 0, %s42
    %s43 = sphi 0, %s40
    %s44 = sphi 0, %s43
    %s60 = sphi 0, %s44
    %s66 = sphi 0, %s68
    %s69 = sphi 0, %s66
    %s70 = sphi 0, %s69
    %s86 = sphi 0, %s70
    %s92 = sphi 0, %s94
    %s95 = sphi 0, %s92
    %s96 = sphi 0, %s95
    %s112 = sphi 0, %s96
  $region4: #{_lambda_.32} parent=0 // loop_header_branch
    %12 = sbr.rel (%p10) target = $region8
  $region5: #{_lambda_.32} parent=0 // loop_body
    %s14 = ssub.s32 %s9, 1
    %s15 = ssub.s32 %s9, 2
    %s16 = sadd.s32 %s9, 1
    %s18 = sadd.s32 %s17, 1
    %p21 = scmp.eq.s32.totalorder %s9, 1
    %p22 = scmp.ne.s32.totalorder %s17, %s19
    %p23 = scmp.eq.s32.totalorder %s9, 0
    %p24 = por %p22, %p23
    %p25 = scmp.ne.s32.totalorder %s17, %s19
    %p26 = scmp.eq.s32.totalorder %s14, 1
    %p27 = por %p25, %p26
    %p28 = scmp.ne.s32.totalorder %s19, %s20
    %p29 = scmp.eq.s32.totalorder %s14, 0
    %p30 = por %p28, %p29
    %p31 = scmp.ne.s32.totalorder %s19, %s20
    %p32 = scmp.eq.s32.totalorder %s15, 1
    %p33 = por %p31, %p32
    %p35 = scmp.ne.s32.totalorder %s20, %s34
    %p36 = scmp.eq.s32.totalorder %s15, 0
    %p37 = por %p35, %p36
    %s38 = ssub.s32 %s9, %s16
    %p39 = scmp.eq.s32.totalorder %s38, 0
    %s41 = sadd.s32 %s40, 1
    %s42 = scalar_select %p39, %s40, %s41
    %p45 = pneg %p39
    %p46 = scmp.eq.s32.totalorder %s9, 1
    %p47 = por %p45, %p46
    %p48 = scmp.ne.s32.totalorder %s40, %s43
    %p49 = scmp.eq.s32.totalorder %s9, 0
    %p50 = por %p48, %p49
    %p51 = scmp.ne.s32.totalorder %s40, %s43
    %p52 = scmp.eq.s32.totalorder %s14, 1
    %p53 = por %p51, %p52
    %p54 = scmp.ne.s32.totalorder %s43, %s44
    %p55 = scmp.eq.s32.totalorder %s14, 0
    %p56 = por %p54, %p55
    %p57 = scmp.ne.s32.totalorder %s43, %s44
    %p58 = scmp.eq.s32.totalorder %s15, 1
    %p59 = por %p57, %p58
    %p61 = scmp.ne.s32.totalorder %s44, %s60
    %p62 = scmp.eq.s32.totalorder %s15, 0
    %p63 = por %p61, %p62
    %s64 = ssub.s32 %s9, %s16
    %p65 = scmp.eq.s32.totalorder %s64, 0
    %s67 = sadd.s32 %s66, 1
    %s68 = scalar_select %p65, %s66, %s67
    %p71 = pneg %p65
    %p72 = scmp.eq.s32.totalorder %s9, 1
    %p73 = por %p71, %p72
    %p74 = scmp.ne.s32.totalorder %s66, %s69
    %p75 = scmp.eq.s32.totalorder %s9, 0
    %p76 = por %p74, %p75
    %p77 = scmp.ne.s32.totalorder %s66, %s69
    %p78 = scmp.eq.s32.totalorder %s14, 1
    %p79 = por %p77, %p78
    %p80 = scmp.ne.s32.totalorder %s69, %s70
    %p81 = scmp.eq.s32.totalorder %s14, 0
    %p82 = por %p80, %p81
    %p83 = scmp.ne.s32.totalorder %s69, %s70
    %p84 = scmp.eq.s32.totalorder %s15, 1
    %p85 = por %p83, %p84
    %p87 = scmp.ne.s32.totalorder %s70, %s86
    %p88 = scmp.eq.s32.totalorder %s15, 0
    %p89 = por %p87, %p88
    %s90 = ssub.s32 %s9, %s16
    %p91 = scmp.eq.s32.totalorder %s90, 0
    %s93 = sadd.s32 %s92, 1
    %s94 = scalar_select %p91, %s92, %s93
    %p97 = pneg %p91
    %p98 = scmp.eq.s32.totalorder %s9, 1
    %p99 = por %p97, %p98
    %p100 = scmp.ne.s32.totalorder %s92, %s95
    %p101 = scmp.eq.s32.totalorder %s9, 0
    %p102 = por %p100, %p101
    %p103 = scmp.ne.s32.totalorder %s92, %s95
    %p104 = scmp.eq.s32.totalorder %s14, 1
    %p105 = por %p103, %p104
    %p106 = scmp.ne.s32.totalorder %s95, %s96
    %p107 = scmp.eq.s32.totalorder %s14, 0
    %p108 = por %p106, %p107
    %p109 = scmp.ne.s32.totalorder %s95, %s96
    %p110 = scmp.eq.s32.totalorder %s15, 1
    %p111 = por %p109, %p110
    %p113 = scmp.ne.s32.totalorder %s96, %s112
    %p114 = scmp.eq.s32.totalorder %s15, 0
    %p115 = por %p113, %p114
    %p116 = scmp.le.s32.totalorder 1, %s9
    %p117 = scmp.lt.s32.totalorder %s9, 3
    %p118 = pnand %p116, %p117
    %p119 = pneg %p118
    // Predicated region
    $region9: #{_lambda_.32} parent=5 // pred_check
      _
    $region10: #{_lambda_.32} parent=5 // pred_check_branch
      %121 = sbr.rel (%p118) target = $region12
    $region11: #{_lambda_.32} parent=5 // pred_region
      %s122 = ssub.s32 %s9, 1
      // Predicated region
      $region13: #{_lambda_.32} parent=11 // pred_check
        %p123 = pneg %p30
      $region14: #{_lambda_.32} parent=11 // pred_check_branch
        %125 = sbr.rel (%p123) target = $region16
      $region15: #{_lambda_.32} parent=11 // pred_region
        _
      $region16: #{_lambda_.32} parent=11 // pred_fallthru
        _
    $region12: #{_lambda_.32} parent=5 // pred_fallthru
      _
    %p126 = scmp.lt.s32.totalorder %s9, 2
    // Predicated region
    $region17: #{_lambda_.32} parent=5 // pred_check
      %p127 = pneg %p126
    $region18: #{_lambda_.32} parent=5 // pred_check_branch
      %129 = sbr.rel (%p127) target = $region20
    $region19: #{_lambda_.32} parent=5 // pred_region
      // Predicated region
      $region21: #{_lambda_.32} parent=19 // pred_check
        %p130 = pneg %p50
      $region22: #{_lambda_.32} parent=19 // pred_check_branch
        %132 = sbr.rel (%p130) target = $region24
      $region23: #{_lambda_.32} parent=19 // pred_region
        %p133 = scmp.lt.s32.totalorder %s9, 1
        %s134 = scalar_select %p133, %s9, 1
        %s135 = smul.addr %s134, 4
        %s136 = scalar_lea.vmem %s1, %s135
      $region24: #{_lambda_.32} parent=19 // pred_fallthru
        _
      // Predicated region
      $region25: #{_lambda_.32} parent=19 // pred_check
        %p137 = pneg %p76
      $region26: #{_lambda_.32} parent=19 // pred_check_branch
        %139 = sbr.rel (%p137) target = $region28
      $region27: #{_lambda_.32} parent=19 // pred_region
        %p140 = scmp.lt.s32.totalorder %s9, 1
        %s141 = scalar_select %p140, %s9, 1
        %s142 = smul.addr %s141, 2
        %s143 = smul.addr %s142, 8
        %s144 = scalar_lea.vmem %s2, %s143
      $region28: #{_lambda_.32} parent=19 // pred_fallthru
        _
    $region20: #{_lambda_.32} parent=5 // pred_fallthru
      _
    %p145 = scmp.le.s32.totalorder 1, %s9
    %p146 = scmp.lt.s32.totalorder %s9, 3
    %p147 = pnand %p145, %p146
    %p148 = pneg %p147
    // Predicated region
    $region29: #{_lambda_.32} parent=5 // pred_check
      _
    $region30: #{_lambda_.32} parent=5 // pred_check_branch
      %150 = sbr.rel (%p147) target = $region32
    $region31: #{_lambda_.32} parent=5 // pred_region
      %s151 = ssub.s32 %s9, 1
      %p152 = pneg %p30
      %p153 = pneg %p27
      %p154 = scmp.lt.s32.totalorder %s14, 1
      %s155 = scalar_select %p154, %s14, 1
      %s156 = smul.addr %s155, 4
      %s157 = scalar_lea.vmem %s1, %s156
      %p158 = pneg %p56
      %p159 = pneg %p53
      %p160 = scmp.lt.s32.totalorder %s14, 1
      %s161 = scalar_select %p160, %s14, 1
      %s162 = smul.addr %s161, 2
      %s163 = smul.addr %s162, 8
      %s164 = scalar_lea.vmem %s2, %s163
      %p165 = pneg %p82
      %p166 = pneg %p79
      %p167 = pneg %p108
      %p168 = pneg %p105
      %p169 = scmp.lt.s32.totalorder %s14, 1
      %s170 = scalar_select %p169, %s14, 1
      %s171 = smul.addr %s170, 2
      %s172 = smul.addr %s171, 8
      %s173 = scalar_lea.vmem %s3, %s172
      %p174 = scmp.lt.s32.totalorder %s14, 1
      %s175 = scalar_select %p174, %s14, 1
      %s176 = smul.addr %s175, 4
      %s177 = scalar_lea.vmem %s1, %s176
      %p178 = scmp.lt.s32.totalorder %s14, 1
      %s179 = scalar_select %p178, %s14, 1
      %s180 = smul.addr %s179, 2
      %s181 = smul.addr %s180, 8
      %s182 = scalar_lea.vmem %s2, %s181
      %p183 = scmp.lt.s32.totalorder %s14, 1
      %s184 = scalar_select %p183, %s14, 1
      %s185 = smul.addr %s184, 2
      %s186 = smul.addr %s185, 8
      %s187 = scalar_lea.vmem %s3, %s186
      %v188 = vld [vmem:[%s0] sm:$0xff]
      %v189 = vld [vmem:[%s0 + $0x8] sm:$0xff]
      %v190 = vld [vmem:[%s177] sm:$0xf]
      %v191 = vld [vmem:[%s182] sm:$0xff]
      %v192 = vld [vmem:[%s182 + $0x8] sm:$0xff]
      %vm193 = vcmask 31744
      %v195 = vsel %vm193, %v188, 0
      %v198 = vsel %vm193, %v189, 0
      %vm200 = vcmask 1043456
      %v202 = vsel %vm200, %v190, 0
      %204 = vmatpush.msra.mxu0 0.0
      %205 = vmatpush.msra.mxu0 0.0
      %206 = vmatpush.msra.mxu0 0.0
      %207 = vmatpush.msra.mxu0 0.0
      %208 = vmatpush.msra.mxu0 0.0
      %209 = vmatpush.msra.mxu0 0.0
      %210 = vmatpush.msra.mxu0 0.0
      %211 = vmatpush.msra.mxu0 0.0
      %212 = vmatpush.msra.mxu0 0.0
      %213 = vmatpush.msra.mxu0 0.0
      %214 = vmatpush.msra.mxu0 0.0
      %215 = vmatpush.msra.mxu0 0.0
      %216 = vmatpush.msra.mxu0 0.0
      %217 = vmatpush.msra.mxu0 0.0
      %218 = vmatpush.msra.mxu0 0.0
      %219 = vmatpush.msra.mxu0 %v202
      %220 = vmatmul.f32.gmra.mxu0 %v195
      %v221 = vpop.f32.mrf.mxu0
      %v222 = vadd.f32 %v191, %v221
      %223 = vmatmul.f32.gmra.mxu0 %v198
      %v224 = vpop.f32.mrf.mxu0
      %v225 = vadd.f32 %v192, %v224
      %226 = vdwg.mxu0
      %vm227 = vcmask 261120
      %228 = vst.msk [vmem:[%s187] sm:$0xff] %vm227, %v222
      %229 = vst.msk [vmem:[%s187 + $0x8] sm:$0xff] %vm227, %v225
      %p230 = scmp.lt.s32.totalorder %s14, 1
      %s231 = scalar_select %p230, %s14, 1
      %s232 = smul.addr %s231, 2
      %s233 = smul.addr %s232, 8
      %s234 = scalar_lea.vmem %s3, %s233
      // Predicated region
      $region33: #{_lambda_.32} parent=31 // pred_check
        %p235 = pneg %p105
      $region34: #{_lambda_.32} parent=31 // pred_check_branch
        %237 = sbr.rel (%p235) target = $region36
      $region35: #{_lambda_.32} parent=31 // pred_region
        _
      $region36: #{_lambda_.32} parent=31 // pred_fallthru
        _
    $region32: #{_lambda_.32} parent=5 // pred_fallthru
      _
    %p238 = scmp.le.s32.totalorder 2, %s9
    // Predicated region
    $region37: #{_lambda_.32} parent=5 // pred_check
      %p239 = pneg %p238
    $region38: #{_lambda_.32} parent=5 // pred_check_branch
      %241 = sbr.rel (%p239) target = $region40
    $region39: #{_lambda_.32} parent=5 // pred_region
      %s242 = ssub.s32 %s9, 2
      // Predicated region
      $region41: #{_lambda_.32} parent=39 // pred_check
        %p243 = pneg %p111
      $region42: #{_lambda_.32} parent=39 // pred_check_branch
        %245 = sbr.rel (%p243) target = $region44
      $region43: #{_lambda_.32} parent=39 // pred_region
        %p246 = scmp.lt.s32.totalorder %s15, 1
        %s247 = scalar_select %p246, %s15, 1
        %s248 = smul.addr %s247, 2
        %s249 = smul.addr %s248, 8
        %s250 = scalar_lea.vmem %s3, %s249
      $region44: #{_lambda_.32} parent=39 // pred_fallthru
        _
    $region40: #{_lambda_.32} parent=5 // pred_fallthru
      _
  $region6: #{_lambda_.32} parent=0 // loop_footer
    %s13 = sadd.s32 1, %s9
  $region7: #{_lambda_.32} parent=0 // loop_footer_branch
    %8 = sbr.rel target = $region3
  $region8: #{_lambda_.32} parent=0 // loop_exit
    _

// kernel: _lambda_.35
$region0: #{_lambda_.35}
  #allocation0 [shape = 'u32[]', space=smem, size = 0x4, offset = 0x4, fixed_abs, tag = 'smem constant byte address 0x4 - core index']
  #allocation1 [shape = 'u32[72,128]{1,0:T(1,128)}', space=vmem, size = 0x9000, scoped, tag = 'internal scratch']
  %s0 = inlined_call_operand.vmem [shape: f32[64,16], index: 0, kind: input, shape index: {}]
  %s1 = inlined_call_operand.vmem [shape: f32[2,16,32], index: 1, kind: input, shape index: {}]
  %s2 = inlined_call_operand.vmem [shape: f32[2,64,32], index: 2, kind: input, shape index: {}]
  %s3 = inlined_call_operand.vmem [shape: f32[2,64,32], index: 3, kind: output, shape index: {}]
  %s4 = sld [smem:[#allocation0]]
  $region45: #{_lambda_.35} parent=0
    _
  %s6 = ssub.s32 1, %s4
  %s7 = scalar_select 0, %s6, %s4
  loop: start=0, step=1, limit=4
  $region2: #{_lambda_.35} parent=0 // loop_pre_header
    _
  $region3: #{_lambda_.35} parent=0 // loop_header
    %s9 = sphi 0, %s13
    %p10 = scmp.ge.s32.totalorder %s9, 4
    %s17 = sphi 0, %s17
    %s19 = sphi 0, %s17
    %s20 = sphi 0, %s19
    %s34 = sphi 0, %s20
    %s40 = sphi 0, %s42
    %s43 = sphi 0, %s40
    %s44 = sphi 0, %s43
    %s60 = sphi 0, %s44
    %s66 = sphi 0, %s68
    %s69 = sphi 0, %s66
    %s70 = sphi 0, %s69
    %s86 = sphi 0, %s70
    %s92 = sphi 0, %s94
    %s95 = sphi 0, %s92
    %s96 = sphi 0, %s95
    %s112 = sphi 0, %s96
  $region4: #{_lambda_.35} parent=0 // loop_header_branch
    %12 = sbr.rel (%p10) target = $region8
  $region5: #{_lambda_.35} parent=0 // loop_body
    %s14 = ssub.s32 %s9, 1
    %s15 = ssub.s32 %s9, 2
    %s16 = sadd.s32 %s9, 1
    %s18 = sadd.s32 %s17, 1
    %p21 = scmp.eq.s32.totalorder %s9, 1
    %p22 = scmp.ne.s32.totalorder %s17, %s19
    %p23 = scmp.eq.s32.totalorder %s9, 0
    %p24 = por %p22, %p23
    %p25 = scmp.ne.s32.totalorder %s17, %s19
    %p26 = scmp.eq.s32.totalorder %s14, 1
    %p27 = por %p25, %p26
    %p28 = scmp.ne.s32.totalorder %s19, %s20
    %p29 = scmp.eq.s32.totalorder %s14, 0
    %p30 = por %p28, %p29
    %p31 = scmp.ne.s32.totalorder %s19, %s20
    %p32 = scmp.eq.s32.totalorder %s15, 1
    %p33 = por %p31, %p32
    %p35 = scmp.ne.s32.totalorder %s20, %s34
    %p36 = scmp.eq.s32.totalorder %s15, 0
    %p37 = por %p35, %p36
    %s38 = ssub.s32 %s9, %s16
    %p39 = scmp.eq.s32.totalorder %s38, 0
    %s41 = sadd.s32 %s40, 1
    %s42 = scalar_select %p39, %s40, %s41
    %p45 = pneg %p39
    %p46 = scmp.eq.s32.totalorder %s9, 1
    %p47 = por %p45, %p46
    %p48 = scmp.ne.s32.totalorder %s40, %s43
    %p49 = scmp.eq.s32.totalorder %s9, 0
    %p50 = por %p48, %p49
    %p51 = scmp.ne.s32.totalorder %s40, %s43
    %p52 = scmp.eq.s32.totalorder %s14, 1
    %p53 = por %p51, %p52
    %p54 = scmp.ne.s32.totalorder %s43, %s44
    %p55 = scmp.eq.s32.totalorder %s14, 0
    %p56 = por %p54, %p55
    %p57 = scmp.ne.s32.totalorder %s43, %s44
    %p58 = scmp.eq.s32.totalorder %s15, 1
    %p59 = por %p57, %p58
    %p61 = scmp.ne.s32.totalorder %s44, %s60
    %p62 = scmp.eq.s32.totalorder %s15, 0
    %p63 = por %p61, %p62
    %s64 = ssub.s32 %s9, %s16
    %p65 = scmp.eq.s32.totalorder %s64, 0
    %s67 = sadd.s32 %s66, 1
    %s68 = scalar_select %p65, %s66, %s67
    %p71 = pneg %p65
    %p72 = scmp.eq.s32.totalorder %s9, 1
    %p73 = por %p71, %p72
    %p74 = scmp.ne.s32.totalorder %s66, %s69
    %p75 = scmp.eq.s32.totalorder %s9, 0
    %p76 = por %p74, %p75
    %p77 = scmp.ne.s32.totalorder %s66, %s69
    %p78 = scmp.eq.s32.totalorder %s14, 1
    %p79 = por %p77, %p78
    %p80 = scmp.ne.s32.totalorder %s69, %s70
    %p81 = scmp.eq.s32.totalorder %s14, 0
    %p82 = por %p80, %p81
    %p83 = scmp.ne.s32.totalorder %s69, %s70
    %p84 = scmp.eq.s32.totalorder %s15, 1
    %p85 = por %p83, %p84
    %p87 = scmp.ne.s32.totalorder %s70, %s86
    %p88 = scmp.eq.s32.totalorder %s15, 0
    %p89 = por %p87, %p88
    %s90 = ssub.s32 %s9, %s16
    %p91 = scmp.eq.s32.totalorder %s90, 0
    %s93 = sadd.s32 %s92, 1
    %s94 = scalar_select %p91, %s92, %s93
    %p97 = pneg %p91
    %p98 = scmp.eq.s32.totalorder %s9, 1
    %p99 = por %p97, %p98
    %p100 = scmp.ne.s32.totalorder %s92, %s95
    %p101 = scmp.eq.s32.totalorder %s9, 0
    %p102 = por %p100, %p101
    %p103 = scmp.ne.s32.totalorder %s92, %s95
    %p104 = scmp.eq.s32.totalorder %s14, 1
    %p105 = por %p103, %p104
    %p106 = scmp.ne.s32.totalorder %s95, %s96
    %p107 = scmp.eq.s32.totalorder %s14, 0
    %p108 = por %p106, %p107
    %p109 = scmp.ne.s32.totalorder %s95, %s96
    %p110 = scmp.eq.s32.totalorder %s15, 1
    %p111 = por %p109, %p110
    %p113 = scmp.ne.s32.totalorder %s96, %s112
    %p114 = scmp.eq.s32.totalorder %s15, 0
    %p115 = por %p113, %p114
    %p116 = scmp.le.s32.totalorder 1, %s9
    %p117 = scmp.lt.s32.totalorder %s9, 3
    %p118 = pnand %p116, %p117
    %p119 = pneg %p118
    // Predicated region
    $region9: #{_lambda_.35} parent=5 // pred_check
      _
    $region10: #{_lambda_.35} parent=5 // pred_check_branch
      %121 = sbr.rel (%p118) target = $region12
    $region11: #{_lambda_.35} parent=5 // pred_region
      %s122 = ssub.s32 %s9, 1
      // Predicated region
      $region13: #{_lambda_.35} parent=11 // pred_check
        %p123 = pneg %p30
      $region14: #{_lambda_.35} parent=11 // pred_check_branch
        %125 = sbr.rel (%p123) target = $region16
      $region15: #{_lambda_.35} parent=11 // pred_region
        _
      $region16: #{_lambda_.35} parent=11 // pred_fallthru
        _
    $region12: #{_lambda_.35} parent=5 // pred_fallthru
      _
    %p126 = scmp.lt.s32.totalorder %s9, 2
    // Predicated region
    $region17: #{_lambda_.35} parent=5 // pred_check
      %p127 = pneg %p126
    $region18: #{_lambda_.35} parent=5 // pred_check_branch
      %129 = sbr.rel (%p127) target = $region20
    $region19: #{_lambda_.35} parent=5 // pred_region
      // Predicated region
      $region21: #{_lambda_.35} parent=19 // pred_check
        %p130 = pneg %p50
      $region22: #{_lambda_.35} parent=19 // pred_check_branch
        %132 = sbr.rel (%p130) target = $region24
      $region23: #{_lambda_.35} parent=19 // pred_region
        %p133 = scmp.lt.s32.totalorder %s9, 1
        %s134 = scalar_select %p133, %s9, 1
        %s135 = smul.addr %s134, 2
        %s136 = smul.addr %s135, 8
        %s137 = scalar_lea.vmem %s1, %s136
      $region24: #{_lambda_.35} parent=19 // pred_fallthru
        _
      // Predicated region
      $region25: #{_lambda_.35} parent=19 // pred_check
        %p138 = pneg %p76
      $region26: #{_lambda_.35} parent=19 // pred_check_branch
        %140 = sbr.rel (%p138) target = $region28
      $region27: #{_lambda_.35} parent=19 // pred_region
        %p141 = scmp.lt.s32.totalorder %s9, 1
        %s142 = scalar_select %p141, %s9, 1
        %s143 = smul.addr %s142, 8
        %s144 = smul.addr %s143, 8
        %s145 = scalar_lea.vmem %s2, %s144
      $region28: #{_lambda_.35} parent=19 // pred_fallthru
        _
    $region20: #{_lambda_.35} parent=5 // pred_fallthru
      _
    %p146 = scmp.le.s32.totalorder 1, %s9
    %p147 = scmp.lt.s32.totalorder %s9, 3
    %p148 = pnand %p146, %p147
    %p149 = pneg %p148
    // Predicated region
    $region29: #{_lambda_.35} parent=5 // pred_check
      _
    $region30: #{_lambda_.35} parent=5 // pred_check_branch
      %151 = sbr.rel (%p148) target = $region32
    $region31: #{_lambda_.35} parent=5 // pred_region
      %s152 = ssub.s32 %s9, 1
      %p153 = pneg %p30
      %p154 = pneg %p27
      %p155 = scmp.lt.s32.totalorder %s14, 1
      %s156 = scalar_select %p155, %s14, 1
      %s157 = smul.addr %s156, 2
      %s158 = smul.addr %s157, 8
      %s159 = scalar_lea.vmem %s1, %s158
      %p160 = pneg %p56
      %p161 = pneg %p53
      %p162 = scmp.lt.s32.totalorder %s14, 1
      %s163 = scalar_select %p162, %s14, 1
      %s164 = smul.addr %s163, 8
      %s165 = smul.addr %s164, 8
      %s166 = scalar_lea.vmem %s2, %s165
      %p167 = pneg %p82
      %p168 = pneg %p79
      %p169 = pneg %p108
      %p170 = pneg %p105
      %p171 = scmp.lt.s32.totalorder %s14, 1
      %s172 = scalar_select %p171, %s14, 1
      %s173 = smul.addr %s172, 8
      %s174 = smul.addr %s173, 8
      %s175 = scalar_lea.vmem %s3, %s174
      %p176 = scmp.lt.s32.totalorder %s14, 1
      %s177 = scalar_select %p176, %s14, 1
      %s178 = smul.addr %s177, 2
      %s179 = smul.addr %s178, 8
      %s180 = scalar_lea.vmem %s1, %s179
      %p181 = scmp.lt.s32.totalorder %s14, 1
      %s182 = scalar_select %p181, %s14, 1
      %s183 = smul.addr %s182, 8
      %s184 = smul.addr %s183, 8
      %s185 = scalar_lea.vmem %s2, %s184
      %p186 = scmp.lt.s32.totalorder %s14, 1
      %s187 = scalar_select %p186, %s14, 1
      %s188 = smul.addr %s187, 8
      %s189 = smul.addr %s188, 8
      %s190 = scalar_lea.vmem %s3, %s189
      %v191 = vld [vmem:[%s0] sm:$0xff]
      %v192 = vld [vmem:[%s0 + $0x8] sm:$0xff]
      %v193 = vld [vmem:[%s0 + $0x10] sm:$0xff]
      %v194 = vld [vmem:[%s0 + $0x18] sm:$0xff]
      %v195 = vld [vmem:[%s0 + $0x20] sm:$0xff]
      %v196 = vld [vmem:[%s0 + $0x28] sm:$0xff]
      %v197 = vld [vmem:[%s0 + $0x30] sm:$0xff]
      %v198 = vld [vmem:[%s0 + $0x38] sm:$0xff]
      %v199 = vld [vmem:[%s180] sm:$0xff]
      %v200 = vld [vmem:[%s180 + $0x8] sm:$0xff]
      %v201 = vld [vmem:[%s185] sm:$0xff]
      %v202 = vld [vmem:[%s185 + $0x8] sm:$0xff]
      %v203 = vld [vmem:[%s185 + $0x10] sm:$0xff]
      %v204 = vld [vmem:[%s185 + $0x18] sm:$0xff]
      %v205 = vld [vmem:[%s185 + $0x20] sm:$0xff]
      %v206 = vld [vmem:[%s185 + $0x28] sm:$0xff]
      %v207 = vld [vmem:[%s185 + $0x30] sm:$0xff]
      %v208 = vld [vmem:[%s185 + $0x38] sm:$0xff]
      %vm209 = vcmask 130048
      %v211 = vsel %vm209, %v191, 0
      %v214 = vsel %vm209, %v192, 0
      %v217 = vsel %vm209, %v193, 0
      %v220 = vsel %vm209, %v194, 0
      %v223 = vsel %vm209, %v195, 0
      %v226 = vsel %vm209, %v196, 0
      %v229 = vsel %vm209, %v197, 0
      %v232 = vsel %vm209, %v198, 0
      %234 = vmatpush.msra.mxu0 0.0
      %235 = vmatpush.msra.mxu0 0.0
      %236 = vmatpush.msra.mxu0 0.0
      %237 = vmatpush.msra.mxu0 0.0
      %238 = vmatpush.msra.mxu0 0.0
      %239 = vmatpush.msra.mxu0 0.0
      %240 = vmatpush.msra.mxu0 0.0
      %241 = vmatpush.msra.mxu0 0.0
      %242 = vmatpush.msra.mxu0 0.0
      %243 = vmatpush.msra.mxu0 0.0
      %244 = vmatpush.msra.mxu0 0.0
      %245 = vmatpush.msra.mxu0 0.0
      %246 = vmatpush.msra.mxu0 0.0
      %247 = vmatpush.msra.mxu0 0.0
      %248 = vmatpush.msra.mxu0 %v200
      %249 = vmatpush.msra.mxu0 %v199
      %250 = vmatmul.f32.gmra.mxu0 %v211
      %v251 = vpop.f32.mrf.mxu0
      %v252 = vadd.f32 %v201, %v251
      %253 = vmatmul.f32.gmra.mxu0 %v214
      %v254 = vpop.f32.mrf.mxu0
      %v255 = vadd.f32 %v202, %v254
      %256 = vmatmul.f32.gmra.mxu0 %v217
      %v257 = vpop.f32.mrf.mxu0
      %v258 = vadd.f32 %v203, %v257
      %259 = vmatmul.f32.gmra.mxu0 %v220
      %v260 = vpop.f32.mrf.mxu0
      %v261 = vadd.f32 %v204, %v260
      %262 = vmatmul.f32.gmra.mxu0 %v223
      %v263 = vpop.f32.mrf.mxu0
      %v264 = vadd.f32 %v205, %v263
      %265 = vmatmul.f32.gmra.mxu0 %v226
      %v266 = vpop.f32.mrf.mxu0
      %v267 = vadd.f32 %v206, %v266
      %268 = vmatmul.f32.gmra.mxu0 %v229
      %v269 = vpop.f32.mrf.mxu0
      %v270 = vadd.f32 %v207, %v269
      %271 = vmatmul.f32.gmra.mxu0 %v232
      %v272 = vpop.f32.mrf.mxu0
      %v273 = vadd.f32 %v208, %v272
      %274 = vdwg.mxu0
      %vm275 = vcmask 261120
      %276 = vst.msk [vmem:[%s190] sm:$0xff] %vm275, %v252
      %277 = vst.msk [vmem:[%s190 + $0x8] sm:$0xff] %vm275, %v255
      %278 = vst.msk [vmem:[%s190 + $0x10] sm:$0xff] %vm275, %v258
      %279 = vst.msk [vmem:[%s190 + $0x18] sm:$0xff] %vm275, %v261
      %280 = vst.msk [vmem:[%s190 + $0x20] sm:$0xff] %vm275, %v264
      %281 = vst.msk [vmem:[%s190 + $0x28] sm:$0xff] %vm275, %v267
      %282 = vst.msk [vmem:[%s190 + $0x30] sm:$0xff] %vm275, %v270
      %283 = vst.msk [vmem:[%s190 + $0x38] sm:$0xff] %vm275, %v273
      %p284 = scmp.lt.s32.totalorder %s14, 1
      %s285 = scalar_select %p284, %s14, 1
      %s286 = smul.addr %s285, 8
      %s287 = smul.addr %s286, 8
      %s288 = scalar_lea.vmem %s3, %s287
      // Predicated region
      $region33: #{_lambda_.35} parent=31 // pred_check
        %p289 = pneg %p105
      $region34: #{_lambda_.35} parent=31 // pred_check_branch
        %291 = sbr.rel (%p289) target = $region36
      $region35: #{_lambda_.35} parent=31 // pred_region
        _
      $region36: #{_lambda_.35} parent=31 // pred_fallthru
        _
    $region32: #{_lambda_.35} parent=5 // pred_fallthru
      _
    %p292 = scmp.le.s32.totalorder 2, %s9
    // Predicated region
    $region37: #{_lambda_.35} parent=5 // pred_check
      %p293 = pneg %p292
    $region38: #{_lambda_.35} parent=5 // pred_check_branch
      %295 = sbr.rel (%p293) target = $region40
    $region39: #{_lambda_.35} parent=5 // pred_region
      %s296 = ssub.s32 %s9, 2
      // Predicated region
      $region41: #{_lambda_.35} parent=39 // pred_check
        %p297 = pneg %p111
      $region42: #{_lambda_.35} parent=39 // pred_check_branch
        %299 = sbr.rel (%p297) target = $region44
      $region43: #{_lambda_.35} parent=39 // pred_region
        %p300 = scmp.lt.s32.totalorder %s15, 1
        %s301 = scalar_select %p300, %s15, 1
        %s302 = smul.addr %s301, 8
        %s303 = smul.addr %s302, 8
        %s304 = scalar_lea.vmem %s3, %s303
      $region44: #{_lambda_.35} parent=39 // pred_fallthru
        _
    $region40: #{_lambda_.35} parent=5 // pred_fallthru
      _
  $region6: #{_lambda_.35} parent=0 // loop_footer
    %s13 = sadd.s32 1, %s9
  $region7: #{_lambda_.35} parent=0 // loop_footer_branch
    %8 = sbr.rel target = $region3
  $region8: #{_lambda_.35} parent=0 // loop_exit
    _

// kernel: _lambda_.37
$region0: #{_lambda_.37}
  #allocation0 [shape = 'u32[]', space=smem, size = 0x4, offset = 0x4, fixed_abs, tag = 'smem constant byte address 0x4 - core index']
  #allocation1 [shape = 'u32[72,128]{1,0:T(1,128)}', space=vmem, size = 0x9000, scoped, tag = 'internal scratch']
  %s0 = inlined_call_operand.vmem [shape: bf16[512,4], index: 0, kind: input, shape index: {}]
  %s1 = inlined_call_operand.vmem [shape: bf16[4,128], index: 1, kind: input, shape index: {}]
  %s2 = inlined_call_operand.vmem [shape: f32[1,128], index: 2, kind: input, shape index: {}]
  %s3 = inlined_call_operand.vmem [shape: f32[512,128], index: 3, kind: output, shape index: {}]
  %s4 = sld [smem:[#allocation0]]
  $region22: #{_lambda_.37} parent=0
    _
  %s6 = ssub.s32 1, %s4
  %s7 = scalar_select 0, %s6, %s4
  // Predicated region
  $region2: #{_lambda_.37} parent=0 // pred_check
    _
  $region3: #{_lambda_.37} parent=0 // pred_check_branch
    %9 = sbr.rel (0) target = $region5
  $region4: #{_lambda_.37} parent=0 // pred_region
    _
  $region5: #{_lambda_.37} parent=0 // pred_fallthru
    _
  // Predicated region
  $region6: #{_lambda_.37} parent=0 // pred_check
    _
  $region7: #{_lambda_.37} parent=0 // pred_check_branch
    %11 = sbr.rel (0) target = $region9
  $region8: #{_lambda_.37} parent=0 // pred_region
    _
  $region9: #{_lambda_.37} parent=0 // pred_fallthru
    _
  // Predicated region
  $region10: #{_lambda_.37} parent=0 // pred_check
    _
  $region11: #{_lambda_.37} parent=0 // pred_check_branch
    %13 = sbr.rel (0) target = $region13
  $region12: #{_lambda_.37} parent=0 // pred_region
    _
  $region13: #{_lambda_.37} parent=0 // pred_fallthru
    _
  %v15 = vld [vmem:[%s0] sm:$0xf]
  %v16 = vld [vmem:[%s0 + $0x4] sm:$0xf]
  %v17 = vld [vmem:[%s0 + $0x8] sm:$0xf]
  %v18 = vld [vmem:[%s0 + $0xc] sm:$0xf]
  %v19 = vld [vmem:[%s0 + $0x10] sm:$0xf]
  %v20 = vld [vmem:[%s0 + $0x14] sm:$0xf]
  %v21 = vld [vmem:[%s0 + $0x18] sm:$0xf]
  %v22 = vld [vmem:[%s0 + $0x1c] sm:$0xf]
  %v23 = vld [vmem:[%s0 + $0x20] sm:$0xf]
  %v24 = vld [vmem:[%s0 + $0x24] sm:$0xf]
  %v25 = vld [vmem:[%s0 + $0x28] sm:$0xf]
  %v26 = vld [vmem:[%s0 + $0x2c] sm:$0xf]
  %v27 = vld [vmem:[%s0 + $0x30] sm:$0xf]
  %v28 = vld [vmem:[%s0 + $0x34] sm:$0xf]
  %v29 = vld [vmem:[%s0 + $0x38] sm:$0xf]
  %v30 = vld [vmem:[%s0 + $0x3c] sm:$0xf]
  %v31 = vld [vmem:[%s0 + $0x40] sm:$0xf]
  %v32 = vld [vmem:[%s0 + $0x44] sm:$0xf]
  %v33 = vld [vmem:[%s0 + $0x48] sm:$0xf]
  %v34 = vld [vmem:[%s0 + $0x4c] sm:$0xf]
  %v35 = vld [vmem:[%s0 + $0x50] sm:$0xf]
  %v36 = vld [vmem:[%s0 + $0x54] sm:$0xf]
  %v37 = vld [vmem:[%s0 + $0x58] sm:$0xf]
  %v38 = vld [vmem:[%s0 + $0x5c] sm:$0xf]
  %v39 = vld [vmem:[%s0 + $0x60] sm:$0xf]
  %v40 = vld [vmem:[%s0 + $0x64] sm:$0xf]
  %v41 = vld [vmem:[%s0 + $0x68] sm:$0xf]
  %v42 = vld [vmem:[%s0 + $0x6c] sm:$0xf]
  %v43 = vld [vmem:[%s0 + $0x70] sm:$0xf]
  %v44 = vld [vmem:[%s0 + $0x74] sm:$0xf]
  %v45 = vld [vmem:[%s0 + $0x78] sm:$0xf]
  %v46 = vld [vmem:[%s0 + $0x7c] sm:$0xf]
  %v47 = vld [vmem:[%s0 + $0x80] sm:$0xf]
  %v48 = vld [vmem:[%s0 + $0x84] sm:$0xf]
  %v49 = vld [vmem:[%s0 + $0x88] sm:$0xf]
  %v50 = vld [vmem:[%s0 + $0x8c] sm:$0xf]
  %v51 = vld [vmem:[%s0 + $0x90] sm:$0xf]
  %v52 = vld [vmem:[%s0 + $0x94] sm:$0xf]
  %v53 = vld [vmem:[%s0 + $0x98] sm:$0xf]
  %v54 = vld [vmem:[%s0 + $0x9c] sm:$0xf]
  %v55 = vld [vmem:[%s0 + $0xa0] sm:$0xf]
  %v56 = vld [vmem:[%s0 + $0xa4] sm:$0xf]
  %v57 = vld [vmem:[%s0 + $0xa8] sm:$0xf]
  %v58 = vld [vmem:[%s0 + $0xac] sm:$0xf]
  %v59 = vld [vmem:[%s0 + $0xb0] sm:$0xf]
  %v60 = vld [vmem:[%s0 + $0xb4] sm:$0xf]
  %v61 = vld [vmem:[%s0 + $0xb8] sm:$0xf]
  %v62 = vld [vmem:[%s0 + $0xbc] sm:$0xf]
  %v63 = vld [vmem:[%s0 + $0xc0] sm:$0xf]
  %v64 = vld [vmem:[%s0 + $0xc4] sm:$0xf]
  %v65 = vld [vmem:[%s0 + $0xc8] sm:$0xf]
  %v66 = vld [vmem:[%s0 + $0xcc] sm:$0xf]
  %v67 = vld [vmem:[%s0 + $0xd0] sm:$0xf]
  %v68 = vld [vmem:[%s0 + $0xd4] sm:$0xf]
  %v69 = vld [vmem:[%s0 + $0xd8] sm:$0xf]
  %v70 = vld [vmem:[%s0 + $0xdc] sm:$0xf]
  %v71 = vld [vmem:[%s0 + $0xe0] sm:$0xf]
  %v72 = vld [vmem:[%s0 + $0xe4] sm:$0xf]
  %v73 = vld [vmem:[%s0 + $0xe8] sm:$0xf]
  %v74 = vld [vmem:[%s0 + $0xec] sm:$0xf]
  %v75 = vld [vmem:[%s0 + $0xf0] sm:$0xf]
  %v76 = vld [vmem:[%s0 + $0xf4] sm:$0xf]
  %v77 = vld [vmem:[%s0 + $0xf8] sm:$0xf]
  %v78 = vld [vmem:[%s0 + $0xfc] sm:$0xf]
  %v79 = vld [vmem:[%s1] sm:$0x3]
  %v80 = vld [vmem:[%s2] sm:$0x1]
  %v82 = vperm.slane %v80, 0
  %v148 = vunpack.c.l.b16 %v15
  %v149 = vunpack.c.l.b16 %v16
  %v150 = vunpack.c.l.b16 %v17
  %v151 = vunpack.c.l.b16 %v18
  %v152 = vunpack.c.l.b16 %v19
  %v153 = vunpack.c.l.b16 %v20
  %v154 = vunpack.c.l.b16 %v21
  %v155 = vunpack.c.l.b16 %v22
  %v156 = vunpack.c.l.b16 %v23
  %v157 = vunpack.c.l.b16 %v24
  %v158 = vunpack.c.l.b16 %v25
  %v159 = vunpack.c.l.b16 %v26
  %v160 = vunpack.c.l.b16 %v27
  %v161 = vunpack.c.l.b16 %v28
  %v162 = vunpack.c.l.b16 %v29
  %v163 = vunpack.c.l.b16 %v30
  %v164 = vunpack.c.l.b16 %v31
  %v165 = vunpack.c.l.b16 %v32
  %v166 = vunpack.c.l.b16 %v33
  %v167 = vunpack.c.l.b16 %v34
  %v168 = vunpack.c.l.b16 %v35
  %v169 = vunpack.c.l.b16 %v36
  %v170 = vunpack.c.l.b16 %v37
  %v171 = vunpack.c.l.b16 %v38
  %v172 = vunpack.c.l.b16 %v39
  %v173 = vunpack.c.l.b16 %v40
  %v174 = vunpack.c.l.b16 %v41
  %v175 = vunpack.c.l.b16 %v42
  %v176 = vunpack.c.l.b16 %v43
  %v177 = vunpack.c.l.b16 %v44
  %v178 = vunpack.c.l.b16 %v45
  %v179 = vunpack.c.l.b16 %v46
  %v180 = vunpack.c.l.b16 %v47
  %v181 = vunpack.c.l.b16 %v48
  %v182 = vunpack.c.l.b16 %v49
  %v183 = vunpack.c.l.b16 %v50
  %v184 = vunpack.c.l.b16 %v51
  %v185 = vunpack.c.l.b16 %v52
  %v186 = vunpack.c.l.b16 %v53
  %v187 = vunpack.c.l.b16 %v54
  %v188 = vunpack.c.l.b16 %v55
  %v189 = vunpack.c.l.b16 %v56
  %v190 = vunpack.c.l.b16 %v57
  %v191 = vunpack.c.l.b16 %v58
  %v192 = vunpack.c.l.b16 %v59
  %v193 = vunpack.c.l.b16 %v60
  %v194 = vunpack.c.l.b16 %v61
  %v195 = vunpack.c.l.b16 %v62
  %v196 = vunpack.c.l.b16 %v63
  %v197 = vunpack.c.l.b16 %v64
  %v198 = vunpack.c.l.b16 %v65
  %v199 = vunpack.c.l.b16 %v66
  %v200 = vunpack.c.l.b16 %v67
  %v201 = vunpack.c.l.b16 %v68
  %v202 = vunpack.c.l.b16 %v69
  %v203 = vunpack.c.l.b16 %v70
  %v204 = vunpack.c.l.b16 %v71
  %v205 = vunpack.c.l.b16 %v72
  %v206 = vunpack.c.l.b16 %v73
  %v207 = vunpack.c.l.b16 %v74
  %v208 = vunpack.c.l.b16 %v75
  %v209 = vunpack.c.l.b16 %v76
  %v210 = vunpack.c.l.b16 %v77
  %v211 = vunpack.c.l.b16 %v78
  %v212 = vpack.c.b16 %v149, %v148
  %v213 = vpack.c.b16 %v151, %v150
  %v214 = vpack.c.b16 %v153, %v152
  %v215 = vpack.c.b16 %v155, %v154
  %v216 = vpack.c.b16 %v157, %v156
  %v217 = vpack.c.b16 %v159, %v158
  %v218 = vpack.c.b16 %v161, %v160
  %v219 = vpack.c.b16 %v163, %v162
  %v220 = vpack.c.b16 %v165, %v164
  %v221 = vpack.c.b16 %v167, %v166
  %v222 = vpack.c.b16 %v169, %v168
  %v223 = vpack.c.b16 %v171, %v170
  %v224 = vpack.c.b16 %v173, %v172
  %v225 = vpack.c.b16 %v175, %v174
  %v226 = vpack.c.b16 %v177, %v176
  %v227 = vpack.c.b16 %v179, %v178
  %v228 = vpack.c.b16 %v181, %v180
  %v229 = vpack.c.b16 %v183, %v182
  %v230 = vpack.c.b16 %v185, %v184
  %v231 = vpack.c.b16 %v187, %v186
  %v232 = vpack.c.b16 %v189, %v188
  %v233 = vpack.c.b16 %v191, %v190
  %v234 = vpack.c.b16 %v193, %v192
  %v235 = vpack.c.b16 %v195, %v194
  %v236 = vpack.c.b16 %v197, %v196
  %v237 = vpack.c.b16 %v199, %v198
  %v238 = vpack.c.b16 %v201, %v200
  %v239 = vpack.c.b16 %v203, %v202
  %v240 = vpack.c.b16 %v205, %v204
  %v241 = vpack.c.b16 %v207, %v206
  %v242 = vpack.c.b16 %v209, %v208
  %v243 = vpack.c.b16 %v211, %v210
  %vm244 = vcmask 31744
  %v246 = vsel %vm244, %v212, 0
  %v249 = vsel %vm244, %v213, 0
  %v252 = vsel %vm244, %v214, 0
  %v255 = vsel %vm244, %v215, 0
  %v258 = vsel %vm244, %v216, 0
  %v261 = vsel %vm244, %v217, 0
  %v264 = vsel %vm244, %v218, 0
  %v267 = vsel %vm244, %v219, 0
  %v270 = vsel %vm244, %v220, 0
  %v273 = vsel %vm244, %v221, 0
  %v276 = vsel %vm244, %v222, 0
  %v279 = vsel %vm244, %v223, 0
  %v282 = vsel %vm244, %v224, 0
  %v285 = vsel %vm244, %v225, 0
  %v288 = vsel %vm244, %v226, 0
  %v291 = vsel %vm244, %v227, 0
  %v294 = vsel %vm244, %v228, 0
  %v297 = vsel %vm244, %v229, 0
  %v300 = vsel %vm244, %v230, 0
  %v303 = vsel %vm244, %v231, 0
  %v306 = vsel %vm244, %v232, 0
  %v309 = vsel %vm244, %v233, 0
  %v312 = vsel %vm244, %v234, 0
  %v315 = vsel %vm244, %v235, 0
  %v318 = vsel %vm244, %v236, 0
  %v321 = vsel %vm244, %v237, 0
  %v324 = vsel %vm244, %v238, 0
  %v327 = vsel %vm244, %v239, 0
  %v330 = vsel %vm244, %v240, 0
  %v333 = vsel %vm244, %v241, 0
  %v336 = vsel %vm244, %v242, 0
  %v339 = vsel %vm244, %v243, 0
  %vm341 = vcmask 1041408
  %v343 = vsel %vm341, %v79, 0
  %345 = vmatpush.bf16.msra.mxu0 0
  %346 = vmatpush.bf16.msra.mxu0 0
  %347 = vmatpush.bf16.msra.mxu0 0
  %348 = vmatpush.bf16.msra.mxu0 0
  %349 = vmatpush.bf16.msra.mxu0 0
  %350 = vmatpush.bf16.msra.mxu0 0
  %351 = vmatpush.bf16.msra.mxu0 0
  %352 = vmatpush.bf16.msra.mxu0 %v343
  %353 = vmatmul.bf16.gmra.mxu0 %v246
  %v354 = vpop.f32.mrf.mxu0
  %v355 = vadd.f32 %v82, %v354
  %v356 = vpop.f32.mrf.mxu0
  %v357 = vadd.f32 %v82, %v356
  %358 = vmatmul.bf16.gmra.mxu0 %v249
  %v359 = vpop.f32.mrf.mxu0
  %v360 = vadd.f32 %v82, %v359
  %v361 = vpop.f32.mrf.mxu0
  %v362 = vadd.f32 %v82, %v361
  %363 = vmatmul.bf16.gmra.mxu0 %v252
  %v364 = vpop.f32.mrf.mxu0
  %v365 = vadd.f32 %v82, %v364
  %v366 = vpop.f32.mrf.mxu0
  %v367 = vadd.f32 %v82, %v366
  %368 = vmatmul.bf16.gmra.mxu0 %v255
  %v369 = vpop.f32.mrf.mxu0
  %v370 = vadd.f32 %v82, %v369
  %v371 = vpop.f32.mrf.mxu0
  %v372 = vadd.f32 %v82, %v371
  %373 = vmatmul.bf16.gmra.mxu0 %v258
  %v374 = vpop.f32.mrf.mxu0
  %v375 = vadd.f32 %v82, %v374
  %v376 = vpop.f32.mrf.mxu0
  %v377 = vadd.f32 %v82, %v376
  %378 = vmatmul.bf16.gmra.mxu0 %v261
  %v379 = vpop.f32.mrf.mxu0
  %v380 = vadd.f32 %v82, %v379
  %v381 = vpop.f32.mrf.mxu0
  %v382 = vadd.f32 %v82, %v381
  %383 = vmatmul.bf16.gmra.mxu0 %v264
  %v384 = vpop.f32.mrf.mxu0
  %v385 = vadd.f32 %v82, %v384
  %v386 = vpop.f32.mrf.mxu0
  %v387 = vadd.f32 %v82, %v386
  %388 = vmatmul.bf16.gmra.mxu0 %v267
  %v389 = vpop.f32.mrf.mxu0
  %v390 = vadd.f32 %v82, %v389
  %v391 = vpop.f32.mrf.mxu0
  %v392 = vadd.f32 %v82, %v391
  %393 = vmatmul.bf16.gmra.mxu0 %v270
  %v394 = vpop.f32.mrf.mxu0
  %v395 = vadd.f32 %v82, %v394
  %v396 = vpop.f32.mrf.mxu0
  %v397 = vadd.f32 %v82, %v396
  %398 = vmatmul.bf16.gmra.mxu0 %v273
  %v399 = vpop.f32.mrf.mxu0
  %v400 = vadd.f32 %v82, %v399
  %v401 = vpop.f32.mrf.mxu0
  %v402 = vadd.f32 %v82, %v401
  %403 = vmatmul.bf16.gmra.mxu0 %v276
  %v404 = vpop.f32.mrf.mxu0
  %v405 = vadd.f32 %v82, %v404
  %v406 = vpop.f32.mrf.mxu0
  %v407 = vadd.f32 %v82, %v406
  %408 = vmatmul.bf16.gmra.mxu0 %v279
  %v409 = vpop.f32.mrf.mxu0
  %v410 = vadd.f32 %v82, %v409
  %v411 = vpop.f32.mrf.mxu0
  %v412 = vadd.f32 %v82, %v411
  %413 = vmatmul.bf16.gmra.mxu0 %v282
  %v414 = vpop.f32.mrf.mxu0
  %v415 = vadd.f32 %v82, %v414
  %v416 = vpop.f32.mrf.mxu0
  %v417 = vadd.f32 %v82, %v416
  %418 = vmatmul.bf16.gmra.mxu0 %v285
  %v419 = vpop.f32.mrf.mxu0
  %v420 = vadd.f32 %v82, %v419
  %v421 = vpop.f32.mrf.mxu0
  %v422 = vadd.f32 %v82, %v421
  %423 = vmatmul.bf16.gmra.mxu0 %v288
  %v424 = vpop.f32.mrf.mxu0
  %v425 = vadd.f32 %v82, %v424
  %v426 = vpop.f32.mrf.mxu0
  %v427 = vadd.f32 %v82, %v426
  %428 = vmatmul.bf16.gmra.mxu0 %v291
  %v429 = vpop.f32.mrf.mxu0
  %v430 = vadd.f32 %v82, %v429
  %v431 = vpop.f32.mrf.mxu0
  %v432 = vadd.f32 %v82, %v431
  %433 = vmatmul.bf16.gmra.mxu0 %v294
  %v434 = vpop.f32.mrf.mxu0
  %v435 = vadd.f32 %v82, %v434
  %v436 = vpop.f32.mrf.mxu0
  %v437 = vadd.f32 %v82, %v436
  %438 = vmatmul.bf16.gmra.mxu0 %v297
  %v439 = vpop.f32.mrf.mxu0
  %v440 = vadd.f32 %v82, %v439
  %v441 = vpop.f32.mrf.mxu0
  %v442 = vadd.f32 %v82, %v441
  %443 = vmatmul.bf16.gmra.mxu0 %v300
  %v444 = vpop.f32.mrf.mxu0
  %v445 = vadd.f32 %v82, %v444
  %v446 = vpop.f32.mrf.mxu0
  %v447 = vadd.f32 %v82, %v446
  %448 = vmatmul.bf16.gmra.mxu0 %v303
  %v449 = vpop.f32.mrf.mxu0
  %v450 = vadd.f32 %v82, %v449
  %v451 = vpop.f32.mrf.mxu0
  %v452 = vadd.f32 %v82, %v451
  %453 = vmatmul.bf16.gmra.mxu0 %v306
  %v454 = vpop.f32.mrf.mxu0
  %v455 = vadd.f32 %v82, %v454
  %v456 = vpop.f32.mrf.mxu0
  %v457 = vadd.f32 %v82, %v456
  %458 = vmatmul.bf16.gmra.mxu0 %v309
  %v459 = vpop.f32.mrf.mxu0
  %v460 = vadd.f32 %v82, %v459
  %v461 = vpop.f32.mrf.mxu0
  %v462 = vadd.f32 %v82, %v461
  %463 = vmatmul.bf16.gmra.mxu0 %v312
  %v464 = vpop.f32.mrf.mxu0
  %v465 = vadd.f32 %v82, %v464
  %v466 = vpop.f32.mrf.mxu0
  %v467 = vadd.f32 %v82, %v466
  %468 = vmatmul.bf16.gmra.mxu0 %v315
  %v469 = vpop.f32.mrf.mxu0
  %v470 = vadd.f32 %v82, %v469
  %v471 = vpop.f32.mrf.mxu0
  %v472 = vadd.f32 %v82, %v471
  %473 = vmatmul.bf16.gmra.mxu0 %v318
  %v474 = vpop.f32.mrf.mxu0
  %v475 = vadd.f32 %v82, %v474
  %v476 = vpop.f32.mrf.mxu0
  %v477 = vadd.f32 %v82, %v476
  %478 = vmatmul.bf16.gmra.mxu0 %v321
  %v479 = vpop.f32.mrf.mxu0
  %v480 = vadd.f32 %v82, %v479
  %v481 = vpop.f32.mrf.mxu0
  %v482 = vadd.f32 %v82, %v481
  %483 = vmatmul.bf16.gmra.mxu0 %v324
  %v484 = vpop.f32.mrf.mxu0
  %v485 = vadd.f32 %v82, %v484
  %v486 = vpop.f32.mrf.mxu0
  %v487 = vadd.f32 %v82, %v486
  %488 = vmatmul.bf16.gmra.mxu0 %v327
  %v489 = vpop.f32.mrf.mxu0
  %v490 = vadd.f32 %v82, %v489
  %v491 = vpop.f32.mrf.mxu0
  %v492 = vadd.f32 %v82, %v491
  %493 = vmatmul.bf16.gmra.mxu0 %v330
  %v494 = vpop.f32.mrf.mxu0
  %v495 = vadd.f32 %v82, %v494
  %v496 = vpop.f32.mrf.mxu0
  %v497 = vadd.f32 %v82, %v496
  %498 = vmatmul.bf16.gmra.mxu0 %v333
  %v499 = vpop.f32.mrf.mxu0
  %v500 = vadd.f32 %v82, %v499
  %v501 = vpop.f32.mrf.mxu0
  %v502 = vadd.f32 %v82, %v501
  %503 = vmatmul.bf16.gmra.mxu0 %v336
  %v504 = vpop.f32.mrf.mxu0
  %v505 = vadd.f32 %v82, %v504
  %v506 = vpop.f32.mrf.mxu0
  %v507 = vadd.f32 %v82, %v506
  %508 = vmatmul.bf16.gmra.mxu0 %v339
  %v509 = vpop.f32.mrf.mxu0
  %v510 = vadd.f32 %v82, %v509
  %v511 = vpop.f32.mrf.mxu0
  %v512 = vadd.f32 %v82, %v511
  %513 = vdwg.mxu0
  %514 = vst [vmem:[%s3] sm:$0xff] %v355
  %515 = vst [vmem:[%s3 + $0x8] sm:$0xff] %v357
  %516 = vst [vmem:[%s3 + $0x10] sm:$0xff] %v360
  %517 = vst [vmem:[%s3 + $0x18] sm:$0xff] %v362
  %518 = vst [vmem:[%s3 + $0x20] sm:$0xff] %v365
  %519 = vst [vmem:[%s3 + $0x28] sm:$0xff] %v367
  %520 = vst [vmem:[%s3 + $0x30] sm:$0xff] %v370
  %521 = vst [vmem:[%s3 + $0x38] sm:$0xff] %v372
  %522 = vst [vmem:[%s3 + $0x40] sm:$0xff] %v375
  %523 = vst [vmem:[%s3 + $0x48] sm:$0xff] %v377
  %524 = vst [vmem:[%s3 + $0x50] sm:$0xff] %v380
  %525 = vst [vmem:[%s3 + $0x58] sm:$0xff] %v382
  %526 = vst [vmem:[%s3 + $0x60] sm:$0xff] %v385
  %527 = vst [vmem:[%s3 + $0x68] sm:$0xff] %v387
  %528 = vst [vmem:[%s3 + $0x70] sm:$0xff] %v390
  %529 = vst [vmem:[%s3 + $0x78] sm:$0xff] %v392
  %530 = vst [vmem:[%s3 + $0x80] sm:$0xff] %v395
  %531 = vst [vmem:[%s3 + $0x88] sm:$0xff] %v397
  %532 = vst [vmem:[%s3 + $0x90] sm:$0xff] %v400
  %533 = vst [vmem:[%s3 + $0x98] sm:$0xff] %v402
  %534 = vst [vmem:[%s3 + $0xa0] sm:$0xff] %v405
  %535 = vst [vmem:[%s3 + $0xa8] sm:$0xff] %v407
  %536 = vst [vmem:[%s3 + $0xb0] sm:$0xff] %v410
  %537 = vst [vmem:[%s3 + $0xb8] sm:$0xff] %v412
  %538 = vst [vmem:[%s3 + $0xc0] sm:$0xff] %v415
  %539 = vst [vmem:[%s3 + $0xc8] sm:$0xff] %v417
  %540 = vst [vmem:[%s3 + $0xd0] sm:$0xff] %v420
  %541 = vst [vmem:[%s3 + $0xd8] sm:$0xff] %v422
  %542 = vst [vmem:[%s3 + $0xe0] sm:$0xff] %v425
  %543 = vst [vmem:[%s3 + $0xe8] sm:$0xff] %v427
  %544 = vst [vmem:[%s3 + $0xf0] sm:$0xff] %v430
  %545 = vst [vmem:[%s3 + $0xf8] sm:$0xff] %v432
  %546 = vst [vmem:[%s3 + $0x100] sm:$0xff] %v435
  %547 = vst [vmem:[%s3 + $0x108] sm:$0xff] %v437
  %548 = vst [vmem:[%s3 + $0x110] sm:$0xff] %v440
  %549 = vst [vmem:[%s3 + $0x118] sm:$0xff] %v442
  %550 = vst [vmem:[%s3 + $0x120] sm:$0xff] %v445
  %551 = vst [vmem:[%s3 + $0x128] sm:$0xff] %v447
  %552 = vst [vmem:[%s3 + $0x130] sm:$0xff] %v450
  %553 = vst [vmem:[%s3 + $0x138] sm:$0xff] %v452
  %554 = vst [vmem:[%s3 + $0x140] sm:$0xff] %v455
  %555 = vst [vmem:[%s3 + $0x148] sm:$0xff] %v457
  %556 = vst [vmem:[%s3 + $0x150] sm:$0xff] %v460
  %557 = vst [vmem:[%s3 + $0x158] sm:$0xff] %v462
  %558 = vst [vmem:[%s3 + $0x160] sm:$0xff] %v465
  %559 = vst [vmem:[%s3 + $0x168] sm:$0xff] %v467
  %560 = vst [vmem:[%s3 + $0x170] sm:$0xff] %v470
  %561 = vst [vmem:[%s3 + $0x178] sm:$0xff] %v472
  %562 = vst [vmem:[%s3 + $0x180] sm:$0xff] %v475
  %563 = vst [vmem:[%s3 + $0x188] sm:$0xff] %v477
  %564 = vst [vmem:[%s3 + $0x190] sm:$0xff] %v480
  %565 = vst [vmem:[%s3 + $0x198] sm:$0xff] %v482
  %566 = vst [vmem:[%s3 + $0x1a0] sm:$0xff] %v485
  %567 = vst [vmem:[%s3 + $0x1a8] sm:$0xff] %v487
  %568 = vst [vmem:[%s3 + $0x1b0] sm:$0xff] %v490
  %569 = vst [vmem:[%s3 + $0x1b8] sm:$0xff] %v492
  %570 = vst [vmem:[%s3 + $0x1c0] sm:$0xff] %v495
  %571 = vst [vmem:[%s3 + $0x1c8] sm:$0xff] %v497
  %572 = vst [vmem:[%s3 + $0x1d0] sm:$0xff] %v500
  %573 = vst [vmem:[%s3 + $0x1d8] sm:$0xff] %v502
  %574 = vst [vmem:[%s3 + $0x1e0] sm:$0xff] %v505
  %575 = vst [vmem:[%s3 + $0x1e8] sm:$0xff] %v507
  %576 = vst [vmem:[%s3 + $0x1f0] sm:$0xff] %v510
  %577 = vst [vmem:[%s3 + $0x1f8] sm:$0xff] %v512
  // Predicated region
  $region14: #{_lambda_.37} parent=0 // pred_check
    _
  $region15: #{_lambda_.37} parent=0 // pred_check_branch
    %579 = sbr.rel (0) target = $region17
  $region16: #{_lambda_.37} parent=0 // pred_region
    _
  $region17: #{_lambda_.37} parent=0 // pred_fallthru
    _
  // Predicated region
  $region18: #{_lambda_.37} parent=0 // pred_check
    _
  $region19: #{_lambda_.37} parent=0 // pred_check_branch
    %581 = sbr.rel (0) target = $region21
  $region20: #{_lambda_.37} parent=0 // pred_region
    _
  $region21: #{_lambda_.37} parent=0 // pred_fallthru
    _

// kernel: _lambda_.38
$region0: #{_lambda_.38}
  #allocation0 [shape = 'u32[]', space=smem, size = 0x4, offset = 0x4, fixed_abs, tag = 'smem constant byte address 0x4 - core index']
  #allocation1 [shape = 'u32[72,128]{1,0:T(1,128)}', space=vmem, size = 0x9000, scoped, tag = 'internal scratch']
  %s0 = inlined_call_operand.vmem [shape: f32[256,64], index: 0, kind: input, shape index: {}]
  %s1 = inlined_call_operand.vmem [shape: f32[2,64,32], index: 1, kind: input, shape index: {}]
  %s2 = inlined_call_operand.vmem [shape: f32[2,256,32], index: 2, kind: input, shape index: {}]
  %s3 = inlined_call_operand.vmem [shape: f32[2,256,32], index: 3, kind: output, shape index: {}]
  %s4 = sld [smem:[#allocation0]]
  $region45: #{_lambda_.38} parent=0
    _
  %s6 = ssub.s32 1, %s4
  %s7 = scalar_select 0, %s6, %s4
  loop: start=0, step=1, limit=4
  $region2: #{_lambda_.38} parent=0 // loop_pre_header
    _
  $region3: #{_lambda_.38} parent=0 // loop_header
    %s9 = sphi 0, %s13
    %p10 = scmp.ge.s32.totalorder %s9, 4
    %s17 = sphi 0, %s17
    %s19 = sphi 0, %s17
    %s20 = sphi 0, %s19
    %s34 = sphi 0, %s20
    %s40 = sphi 0, %s42
    %s43 = sphi 0, %s40
    %s44 = sphi 0, %s43
    %s60 = sphi 0, %s44
    %s66 = sphi 0, %s68
    %s69 = sphi 0, %s66
    %s70 = sphi 0, %s69
    %s86 = sphi 0, %s70
    %s92 = sphi 0, %s94
    %s95 = sphi 0, %s92
    %s96 = sphi 0, %s95
    %s112 = sphi 0, %s96
  $region4: #{_lambda_.38} parent=0 // loop_header_branch
    %12 = sbr.rel (%p10) target = $region8
  $region5: #{_lambda_.38} parent=0 // loop_body
    %s14 = ssub.s32 %s9, 1
    %s15 = ssub.s32 %s9, 2
    %s16 = sadd.s32 %s9, 1
    %s18 = sadd.s32 %s17, 1
    %p21 = scmp.eq.s32.totalorder %s9, 1
    %p22 = scmp.ne.s32.totalorder %s17, %s19
    %p23 = scmp.eq.s32.totalorder %s9, 0
    %p24 = por %p22, %p23
    %p25 = scmp.ne.s32.totalorder %s17, %s19
    %p26 = scmp.eq.s32.totalorder %s14, 1
    %p27 = por %p25, %p26
    %p28 = scmp.ne.s32.totalorder %s19, %s20
    %p29 = scmp.eq.s32.totalorder %s14, 0
    %p30 = por %p28, %p29
    %p31 = scmp.ne.s32.totalorder %s19, %s20
    %p32 = scmp.eq.s32.totalorder %s15, 1
    %p33 = por %p31, %p32
    %p35 = scmp.ne.s32.totalorder %s20, %s34
    %p36 = scmp.eq.s32.totalorder %s15, 0
    %p37 = por %p35, %p36
    %s38 = ssub.s32 %s9, %s16
    %p39 = scmp.eq.s32.totalorder %s38, 0
    %s41 = sadd.s32 %s40, 1
    %s42 = scalar_select %p39, %s40, %s41
    %p45 = pneg %p39
    %p46 = scmp.eq.s32.totalorder %s9, 1
    %p47 = por %p45, %p46
    %p48 = scmp.ne.s32.totalorder %s40, %s43
    %p49 = scmp.eq.s32.totalorder %s9, 0
    %p50 = por %p48, %p49
    %p51 = scmp.ne.s32.totalorder %s40, %s43
    %p52 = scmp.eq.s32.totalorder %s14, 1
    %p53 = por %p51, %p52
    %p54 = scmp.ne.s32.totalorder %s43, %s44
    %p55 = scmp.eq.s32.totalorder %s14, 0
    %p56 = por %p54, %p55
    %p57 = scmp.ne.s32.totalorder %s43, %s44
    %p58 = scmp.eq.s32.totalorder %s15, 1
    %p59 = por %p57, %p58
    %p61 = scmp.ne.s32.totalorder %s44, %s60
    %p62 = scmp.eq.s32.totalorder %s15, 0
    %p63 = por %p61, %p62
    %s64 = ssub.s32 %s9, %s16
    %p65 = scmp.eq.s32.totalorder %s64, 0
    %s67 = sadd.s32 %s66, 1
    %s68 = scalar_select %p65, %s66, %s67
    %p71 = pneg %p65
    %p72 = scmp.eq.s32.totalorder %s9, 1
    %p73 = por %p71, %p72
    %p74 = scmp.ne.s32.totalorder %s66, %s69
    %p75 = scmp.eq.s32.totalorder %s9, 0
    %p76 = por %p74, %p75
    %p77 = scmp.ne.s32.totalorder %s66, %s69
    %p78 = scmp.eq.s32.totalorder %s14, 1
    %p79 = por %p77, %p78
    %p80 = scmp.ne.s32.totalorder %s69, %s70
    %p81 = scmp.eq.s32.totalorder %s14, 0
    %p82 = por %p80, %p81
    %p83 = scmp.ne.s32.totalorder %s69, %s70
    %p84 = scmp.eq.s32.totalorder %s15, 1
    %p85 = por %p83, %p84
    %p87 = scmp.ne.s32.totalorder %s70, %s86
    %p88 = scmp.eq.s32.totalorder %s15, 0
    %p89 = por %p87, %p88
    %s90 = ssub.s32 %s9, %s16
    %p91 = scmp.eq.s32.totalorder %s90, 0
    %s93 = sadd.s32 %s92, 1
    %s94 = scalar_select %p91, %s92, %s93
    %p97 = pneg %p91
    %p98 = scmp.eq.s32.totalorder %s9, 1
    %p99 = por %p97, %p98
    %p100 = scmp.ne.s32.totalorder %s92, %s95
    %p101 = scmp.eq.s32.totalorder %s9, 0
    %p102 = por %p100, %p101
    %p103 = scmp.ne.s32.totalorder %s92, %s95
    %p104 = scmp.eq.s32.totalorder %s14, 1
    %p105 = por %p103, %p104
    %p106 = scmp.ne.s32.totalorder %s95, %s96
    %p107 = scmp.eq.s32.totalorder %s14, 0
    %p108 = por %p106, %p107
    %p109 = scmp.ne.s32.totalorder %s95, %s96
    %p110 = scmp.eq.s32.totalorder %s15, 1
    %p111 = por %p109, %p110
    %p113 = scmp.ne.s32.totalorder %s96, %s112
    %p114 = scmp.eq.s32.totalorder %s15, 0
    %p115 = por %p113, %p114
    %p116 = scmp.le.s32.totalorder 1, %s9
    %p117 = scmp.lt.s32.totalorder %s9, 3
    %p118 = pnand %p116, %p117
    %p119 = pneg %p118
    // Predicated region
    $region9: #{_lambda_.38} parent=5 // pred_check
      _
    $region10: #{_lambda_.38} parent=5 // pred_check_branch
      %121 = sbr.rel (%p118) target = $region12
    $region11: #{_lambda_.38} parent=5 // pred_region
      %s122 = ssub.s32 %s9, 1
      // Predicated region
      $region13: #{_lambda_.38} parent=11 // pred_check
        %p123 = pneg %p30
      $region14: #{_lambda_.38} parent=11 // pred_check_branch
        %125 = sbr.rel (%p123) target = $region16
      $region15: #{_lambda_.38} parent=11 // pred_region
        _
      $region16: #{_lambda_.38} parent=11 // pred_fallthru
        _
    $region12: #{_lambda_.38} parent=5 // pred_fallthru
      _
    %p126 = scmp.lt.s32.totalorder %s9, 2
    // Predicated region
    $region17: #{_lambda_.38} parent=5 // pred_check
      %p127 = pneg %p126
    $region18: #{_lambda_.38} parent=5 // pred_check_branch
      %129 = sbr.rel (%p127) target = $region20
    $region19: #{_lambda_.38} parent=5 // pred_region
      // Predicated region
      $region21: #{_lambda_.38} parent=19 // pred_check
        %p130 = pneg %p50
      $region22: #{_lambda_.38} parent=19 // pred_check_branch
        %132 = sbr.rel (%p130) target = $region24
      $region23: #{_lambda_.38} parent=19 // pred_region
        %p133 = scmp.lt.s32.totalorder %s9, 1
        %s134 = scalar_select %p133, %s9, 1
        %s135 = smul.addr %s134, 8
        %s136 = smul.addr %s135, 8
        %s137 = scalar_lea.vmem %s1, %s136
      $region24: #{_lambda_.38} parent=19 // pred_fallthru
        _
      // Predicated region
      $region25: #{_lambda_.38} parent=19 // pred_check
        %p138 = pneg %p76
      $region26: #{_lambda_.38} parent=19 // pred_check_branch
        %140 = sbr.rel (%p138) target = $region28
      $region27: #{_lambda_.38} parent=19 // pred_region
        %p141 = scmp.lt.s32.totalorder %s9, 1
        %s142 = scalar_select %p141, %s9, 1
        %s143 = smul.addr %s142, 32
        %s144 = smul.addr %s143, 8
        %s145 = scalar_lea.vmem %s2, %s144
      $region28: #{_lambda_.38} parent=19 // pred_fallthru
        _
    $region20: #{_lambda_.38} parent=5 // pred_fallthru
      _
    %p146 = scmp.le.s32.totalorder 1, %s9
    %p147 = scmp.lt.s32.totalorder %s9, 3
    %p148 = pnand %p146, %p147
    %p149 = pneg %p148
    // Predicated region
    $region29: #{_lambda_.38} parent=5 // pred_check
      _
    $region30: #{_lambda_.38} parent=5 // pred_check_branch
      %151 = sbr.rel (%p148) target = $region32
    $region31: #{_lambda_.38} parent=5 // pred_region
      %s152 = ssub.s32 %s9, 1
      %p153 = pneg %p30
      %p154 = pneg %p27
      %p155 = scmp.lt.s32.totalorder %s14, 1
      %s156 = scalar_select %p155, %s14, 1
      %s157 = smul.addr %s156, 8
      %s158 = smul.addr %s157, 8
      %s159 = scalar_lea.vmem %s1, %s158
      %p160 = pneg %p56
      %p161 = pneg %p53
      %p162 = scmp.lt.s32.totalorder %s14, 1
      %s163 = scalar_select %p162, %s14, 1
      %s164 = smul.addr %s163, 32
      %s165 = smul.addr %s164, 8
      %s166 = scalar_lea.vmem %s2, %s165
      %p167 = pneg %p82
      %p168 = pneg %p79
      %p169 = pneg %p108
      %p170 = pneg %p105
      %p171 = scmp.lt.s32.totalorder %s14, 1
      %s172 = scalar_select %p171, %s14, 1
      %s173 = smul.addr %s172, 32
      %s174 = smul.addr %s173, 8
      %s175 = scalar_lea.vmem %s3, %s174
      %p176 = scmp.lt.s32.totalorder %s14, 1
      %s177 = scalar_select %p176, %s14, 1
      %s178 = smul.addr %s177, 8
      %s179 = smul.addr %s178, 8
      %s180 = scalar_lea.vmem %s1, %s179
      %p181 = scmp.lt.s32.totalorder %s14, 1
      %s182 = scalar_select %p181, %s14, 1
      %s183 = smul.addr %s182, 32
      %s184 = smul.addr %s183, 8
      %s185 = scalar_lea.vmem %s2, %s184
      %p186 = scmp.lt.s32.totalorder %s14, 1
      %s187 = scalar_select %p186, %s14, 1
      %s188 = smul.addr %s187, 32
      %s189 = smul.addr %s188, 8
      %s190 = scalar_lea.vmem %s3, %s189
      %v191 = vld [vmem:[%s0] sm:$0xff]
      %v192 = vld [vmem:[%s0 + $0x8] sm:$0xff]
      %v193 = vld [vmem:[%s0 + $0x10] sm:$0xff]
      %v194 = vld [vmem:[%s0 + $0x18] sm:$0xff]
      %v195 = vld [vmem:[%s0 + $0x20] sm:$0xff]
      %v196 = vld [vmem:[%s0 + $0x28] sm:$0xff]
      %v197 = vld [vmem:[%s0 + $0x30] sm:$0xff]
      %v198 = vld [vmem:[%s0 + $0x38] sm:$0xff]
      %v199 = vld [vmem:[%s0 + $0x40] sm:$0xff]
      %v200 = vld [vmem:[%s0 + $0x48] sm:$0xff]
      %v201 = vld [vmem:[%s0 + $0x50] sm:$0xff]
      %v202 = vld [vmem:[%s0 + $0x58] sm:$0xff]
      %v203 = vld [vmem:[%s0 + $0x60] sm:$0xff]
      %v204 = vld [vmem:[%s0 + $0x68] sm:$0xff]
      %v205 = vld [vmem:[%s0 + $0x70] sm:$0xff]
      %v206 = vld [vmem:[%s0 + $0x78] sm:$0xff]
      %v207 = vld [vmem:[%s0 + $0x80] sm:$0xff]
      %v208 = vld [vmem:[%s0 + $0x88] sm:$0xff]
      %v209 = vld [vmem:[%s0 + $0x90] sm:$0xff]
      %v210 = vld [vmem:[%s0 + $0x98] sm:$0xff]
      %v211 = vld [vmem:[%s0 + $0xa0] sm:$0xff]
      %v212 = vld [vmem:[%s0 + $0xa8] sm:$0xff]
      %v213 = vld [vmem:[%s0 + $0xb0] sm:$0xff]
      %v214 = vld [vmem:[%s0 + $0xb8] sm:$0xff]
      %v215 = vld [vmem:[%s0 + $0xc0] sm:$0xff]
      %v216 = vld [vmem:[%s0 + $0xc8] sm:$0xff]
      %v217 = vld [vmem:[%s0 + $0xd0] sm:$0xff]
      %v218 = vld [vmem:[%s0 + $0xd8] sm:$0xff]
      %v219 = vld [vmem:[%s0 + $0xe0] sm:$0xff]
      %v220 = vld [vmem:[%s0 + $0xe8] sm:$0xff]
      %v221 = vld [vmem:[%s0 + $0xf0] sm:$0xff]
      %v222 = vld [vmem:[%s0 + $0xf8] sm:$0xff]
      %v223 = vld [vmem:[%s180] sm:$0xff]
      %v224 = vld [vmem:[%s180 + $0x8] sm:$0xff]
      %v225 = vld [vmem:[%s180 + $0x10] sm:$0xff]
      %v226 = vld [vmem:[%s180 + $0x18] sm:$0xff]
      %v227 = vld [vmem:[%s180 + $0x20] sm:$0xff]
      %v228 = vld [vmem:[%s180 + $0x28] sm:$0xff]
      %v229 = vld [vmem:[%s180 + $0x30] sm:$0xff]
      %v230 = vld [vmem:[%s180 + $0x38] sm:$0xff]
      %v231 = vld [vmem:[%s185] sm:$0xff]
      %v232 = vld [vmem:[%s185 + $0x8] sm:$0xff]
      %v233 = vld [vmem:[%s185 + $0x10] sm:$0xff]
      %v234 = vld [vmem:[%s185 + $0x18] sm:$0xff]
      %v235 = vld [vmem:[%s185 + $0x20] sm:$0xff]
      %v236 = vld [vmem:[%s185 + $0x28] sm:$0xff]
      %v237 = vld [vmem:[%s185 + $0x30] sm:$0xff]
      %v238 = vld [vmem:[%s185 + $0x38] sm:$0xff]
      %v239 = vld [vmem:[%s185 + $0x40] sm:$0xff]
      %v240 = vld [vmem:[%s185 + $0x48] sm:$0xff]
      %v241 = vld [vmem:[%s185 + $0x50] sm:$0xff]
      %v242 = vld [vmem:[%s185 + $0x58] sm:$0xff]
      %v243 = vld [vmem:[%s185 + $0x60] sm:$0xff]
      %v244 = vld [vmem:[%s185 + $0x68] sm:$0xff]
      %v245 = vld [vmem:[%s185 + $0x70] sm:$0xff]
      %v246 = vld [vmem:[%s185 + $0x78] sm:$0xff]
      %v247 = vld [vmem:[%s185 + $0x80] sm:$0xff]
      %v248 = vld [vmem:[%s185 + $0x88] sm:$0xff]
      %v249 = vld [vmem:[%s185 + $0x90] sm:$0xff]
      %v250 = vld [vmem:[%s185 + $0x98] sm:$0xff]
      %v251 = vld [vmem:[%s185 + $0xa0] sm:$0xff]
      %v252 = vld [vmem:[%s185 + $0xa8] sm:$0xff]
      %v253 = vld [vmem:[%s185 + $0xb0] sm:$0xff]
      %v254 = vld [vmem:[%s185 + $0xb8] sm:$0xff]
      %v255 = vld [vmem:[%s185 + $0xc0] sm:$0xff]
      %v256 = vld [vmem:[%s185 + $0xc8] sm:$0xff]
      %v257 = vld [vmem:[%s185 + $0xd0] sm:$0xff]
      %v258 = vld [vmem:[%s185 + $0xd8] sm:$0xff]
      %v259 = vld [vmem:[%s185 + $0xe0] sm:$0xff]
      %v260 = vld [vmem:[%s185 + $0xe8] sm:$0xff]
      %v261 = vld [vmem:[%s185 + $0xf0] sm:$0xff]
      %v262 = vld [vmem:[%s185 + $0xf8] sm:$0xff]
      %vm263 = vcmask 523264
      %v265 = vsel %vm263, %v191, 0
      %v268 = vsel %vm263, %v192, 0
      %v271 = vsel %vm263, %v193, 0
      %v274 = vsel %vm263, %v194, 0
      %v277 = vsel %vm263, %v195, 0
      %v280 = vsel %vm263, %v196, 0
      %v283 = vsel %vm263, %v197, 0
      %v286 = vsel %vm263, %v198, 0
      %v289 = vsel %vm263, %v199, 0
      %v292 = vsel %vm263, %v200, 0
      %v295 = vsel %vm263, %v201, 0
      %v298 = vsel %vm263, %v202, 0
      %v301 = vsel %vm263, %v203, 0
      %v304 = vsel %vm263, %v204, 0
      %v307 = vsel %vm263, %v205, 0
      %v310 = vsel %vm263, %v206, 0
      %v313 = vsel %vm263, %v207, 0
      %v316 = vsel %vm263, %v208, 0
      %v319 = vsel %vm263, %v209, 0
      %v322 = vsel %vm263, %v210, 0
      %v325 = vsel %vm263, %v211, 0
      %v328 = vsel %vm263, %v212, 0
      %v331 = vsel %vm263, %v213, 0
      %v334 = vsel %vm263, %v214, 0
      %v337 = vsel %vm263, %v215, 0
      %v340 = vsel %vm263, %v216, 0
      %v343 = vsel %vm263, %v217, 0
      %v346 = vsel %vm263, %v218, 0
      %v349 = vsel %vm263, %v219, 0
      %v352 = vsel %vm263, %v220, 0
      %v355 = vsel %vm263, %v221, 0
      %v358 = vsel %vm263, %v222, 0
      %360 = vmatpush.msra.mxu0 0.0
      %361 = vmatpush.msra.mxu0 0.0
      %362 = vmatpush.msra.mxu0 0.0
      %363 = vmatpush.msra.mxu0 0.0
      %364 = vmatpush.msra.mxu0 0.0
      %365 = vmatpush.msra.mxu0 0.0
      %366 = vmatpush.msra.mxu0 0.0
      %367 = vmatpush.msra.mxu0 0.0
      %368 = vmatpush.msra.mxu0 %v230
      %369 = vmatpush.msra.mxu0 %v229
      %370 = vmatpush.msra.mxu0 %v228
      %371 = vmatpush.msra.mxu0 %v227
      %372 = vmatpush.msra.mxu0 %v226
      %373 = vmatpush.msra.mxu0 %v225
      %374 = vmatpush.msra.mxu0 %v224
      %375 = vmatpush.msra.mxu0 %v223
      %376 = vmatmul.f32.gmra.mxu0 %v265
      %v377 = vpop.f32.mrf.mxu0
      %v378 = vadd.f32 %v231, %v377
      %379 = vmatmul.f32.gmra.mxu0 %v268
      %v380 = vpop.f32.mrf.mxu0
      %v381 = vadd.f32 %v232, %v380
      %382 = vmatmul.f32.gmra.mxu0 %v271
      %v383 = vpop.f32.mrf.mxu0
      %v384 = vadd.f32 %v233, %v383
      %385 = vmatmul.f32.gmra.mxu0 %v274
      %v386 = vpop.f32.mrf.mxu0
      %v387 = vadd.f32 %v234, %v386
      %388 = vmatmul.f32.gmra.mxu0 %v277
      %v389 = vpop.f32.mrf.mxu0
      %v390 = vadd.f32 %v235, %v389
      %391 = vmatmul.f32.gmra.mxu0 %v280
      %v392 = vpop.f32.mrf.mxu0
      %v393 = vadd.f32 %v236, %v392
      %394 = vmatmul.f32.gmra.mxu0 %v283
      %v395 = vpop.f32.mrf.mxu0
      %v396 = vadd.f32 %v237, %v395
      %397 = vmatmul.f32.gmra.mxu0 %v286
      %v398 = vpop.f32.mrf.mxu0
      %v399 = vadd.f32 %v238, %v398
      %400 = vmatmul.f32.gmra.mxu0 %v289
      %v401 = vpop.f32.mrf.mxu0
      %v402 = vadd.f32 %v239, %v401
      %403 = vmatmul.f32.gmra.mxu0 %v292
      %v404 = vpop.f32.mrf.mxu0
      %v405 = vadd.f32 %v240, %v404
      %406 = vmatmul.f32.gmra.mxu0 %v295
      %v407 = vpop.f32.mrf.mxu0
      %v408 = vadd.f32 %v241, %v407
      %409 = vmatmul.f32.gmra.mxu0 %v298
      %v410 = vpop.f32.mrf.mxu0
      %v411 = vadd.f32 %v242, %v410
      %412 = vmatmul.f32.gmra.mxu0 %v301
      %v413 = vpop.f32.mrf.mxu0
      %v414 = vadd.f32 %v243, %v413
      %415 = vmatmul.f32.gmra.mxu0 %v304
      %v416 = vpop.f32.mrf.mxu0
      %v417 = vadd.f32 %v244, %v416
      %418 = vmatmul.f32.gmra.mxu0 %v307
      %v419 = vpop.f32.mrf.mxu0
      %v420 = vadd.f32 %v245, %v419
      %421 = vmatmul.f32.gmra.mxu0 %v310
      %v422 = vpop.f32.mrf.mxu0
      %v423 = vadd.f32 %v246, %v422
      %424 = vmatmul.f32.gmra.mxu0 %v313
      %v425 = vpop.f32.mrf.mxu0
      %v426 = vadd.f32 %v247, %v425
      %427 = vmatmul.f32.gmra.mxu0 %v316
      %v428 = vpop.f32.mrf.mxu0
      %v429 = vadd.f32 %v248, %v428
      %430 = vmatmul.f32.gmra.mxu0 %v319
      %v431 = vpop.f32.mrf.mxu0
      %v432 = vadd.f32 %v249, %v431
      %433 = vmatmul.f32.gmra.mxu0 %v322
      %v434 = vpop.f32.mrf.mxu0
      %v435 = vadd.f32 %v250, %v434
      %436 = vmatmul.f32.gmra.mxu0 %v325
      %v437 = vpop.f32.mrf.mxu0
      %v438 = vadd.f32 %v251, %v437
      %439 = vmatmul.f32.gmra.mxu0 %v328
      %v440 = vpop.f32.mrf.mxu0
      %v441 = vadd.f32 %v252, %v440
      %442 = vmatmul.f32.gmra.mxu0 %v331
      %v443 = vpop.f32.mrf.mxu0
      %v444 = vadd.f32 %v253, %v443
      %445 = vmatmul.f32.gmra.mxu0 %v334
      %v446 = vpop.f32.mrf.mxu0
      %v447 = vadd.f32 %v254, %v446
      %448 = vmatmul.f32.gmra.mxu0 %v337
      %v449 = vpop.f32.mrf.mxu0
      %v450 = vadd.f32 %v255, %v449
      %451 = vmatmul.f32.gmra.mxu0 %v340
      %v452 = vpop.f32.mrf.mxu0
      %v453 = vadd.f32 %v256, %v452
      %454 = vmatmul.f32.gmra.mxu0 %v343
      %v455 = vpop.f32.mrf.mxu0
      %v456 = vadd.f32 %v257, %v455
      %457 = vmatmul.f32.gmra.mxu0 %v346
      %v458 = vpop.f32.mrf.mxu0
      %v459 = vadd.f32 %v258, %v458
      %460 = vmatmul.f32.gmra.mxu0 %v349
      %v461 = vpop.f32.mrf.mxu0
      %v462 = vadd.f32 %v259, %v461
      %463 = vmatmul.f32.gmra.mxu0 %v352
      %v464 = vpop.f32.mrf.mxu0
      %v465 = vadd.f32 %v260, %v464
      %466 = vmatmul.f32.gmra.mxu0 %v355
      %v467 = vpop.f32.mrf.mxu0
      %v468 = vadd.f32 %v261, %v467
      %469 = vmatmul.f32.gmra.mxu0 %v358
      %v470 = vpop.f32.mrf.mxu0
      %v471 = vadd.f32 %v262, %v470
      %472 = vdwg.mxu0
      %vm473 = vcmask 261120
      %474 = vst.msk [vmem:[%s190] sm:$0xff] %vm473, %v378
      %475 = vst.msk [vmem:[%s190 + $0x8] sm:$0xff] %vm473, %v381
      %476 = vst.msk [vmem:[%s190 + $0x10] sm:$0xff] %vm473, %v384
      %477 = vst.msk [vmem:[%s190 + $0x18] sm:$0xff] %vm473, %v387
      %478 = vst.msk [vmem:[%s190 + $0x20] sm:$0xff] %vm473, %v390
      %479 = vst.msk [vmem:[%s190 + $0x28] sm:$0xff] %vm473, %v393
      %480 = vst.msk [vmem:[%s190 + $0x30] sm:$0xff] %vm473, %v396
      %481 = vst.msk [vmem:[%s190 + $0x38] sm:$0xff] %vm473, %v399
      %482 = vst.msk [vmem:[%s190 + $0x40] sm:$0xff] %vm473, %v402
      %483 = vst.msk [vmem:[%s190 + $0x48] sm:$0xff] %vm473, %v405
      %484 = vst.msk [vmem:[%s190 + $0x50] sm:$0xff] %vm473, %v408
      %485 = vst.msk [vmem:[%s190 + $0x58] sm:$0xff] %vm473, %v411
      %486 = vst.msk [vmem:[%s190 + $0x60] sm:$0xff] %vm473, %v414
      %487 = vst.msk [vmem:[%s190 + $0x68] sm:$0xff] %vm473, %v417
      %488 = vst.msk [vmem:[%s190 + $0x70] sm:$0xff] %vm473, %v420
      %489 = vst.msk [vmem:[%s190 + $0x78] sm:$0xff] %vm473, %v423
      %490 = vst.msk [vmem:[%s190 + $0x80] sm:$0xff] %vm473, %v426
      %491 = vst.msk [vmem:[%s190 + $0x88] sm:$0xff] %vm473, %v429
      %492 = vst.msk [vmem:[%s190 + $0x90] sm:$0xff] %vm473, %v432
      %493 = vst.msk [vmem:[%s190 + $0x98] sm:$0xff] %vm473, %v435
      %494 = vst.msk [vmem:[%s190 + $0xa0] sm:$0xff] %vm473, %v438
      %495 = vst.msk [vmem:[%s190 + $0xa8] sm:$0xff] %vm473, %v441
      %496 = vst.msk [vmem:[%s190 + $0xb0] sm:$0xff] %vm473, %v444
      %497 = vst.msk [vmem:[%s190 + $0xb8] sm:$0xff] %vm473, %v447
      %498 = vst.msk [vmem:[%s190 + $0xc0] sm:$0xff] %vm473, %v450
      %499 = vst.msk [vmem:[%s190 + $0xc8] sm:$0xff] %vm473, %v453
      %500 = vst.msk [vmem:[%s190 + $0xd0] sm:$0xff] %vm473, %v456
      %501 = vst.msk [vmem:[%s190 + $0xd8] sm:$0xff] %vm473, %v459
      %502 = vst.msk [vmem:[%s190 + $0xe0] sm:$0xff] %vm473, %v462
      %503 = vst.msk [vmem:[%s190 + $0xe8] sm:$0xff] %vm473, %v465
      %504 = vst.msk [vmem:[%s190 + $0xf0] sm:$0xff] %vm473, %v468
      %505 = vst.msk [vmem:[%s190 + $0xf8] sm:$0xff] %vm473, %v471
      %p506 = scmp.lt.s32.totalorder %s14, 1
      %s507 = scalar_select %p506, %s14, 1
      %s508 = smul.addr %s507, 32
      %s509 = smul.addr %s508, 8
      %s510 = scalar_lea.vmem %s3, %s509
      // Predicated region
      $region33: #{_lambda_.38} parent=31 // pred_check
        %p511 = pneg %p105
      $region34: #{_lambda_.38} parent=31 // pred_check_branch
        %513 = sbr.rel (%p511) target = $region36
      $region35: #{_lambda_.38} parent=31 // pred_region
        _
      $region36: #{_lambda_.38} parent=31 // pred_fallthru
        _
    $region32: #{_lambda_.38} parent=5 // pred_fallthru
      _
    %p514 = scmp.le.s32.totalorder 2, %s9
    // Predicated region
    $region37: #{_lambda_.38} parent=5 // pred_check
      %p515 = pneg %p514
    $region38: #{_lambda_.38} parent=5 // pred_check_branch
      %517 = sbr.rel (%p515) target = $region40
    $region39: #{_lambda_.38} parent=5 // pred_region
      %s518 = ssub.s32 %s9, 2
      // Predicated region
      $region41: #{_lambda_.38} parent=39 // pred_check
        %p519 = pneg %p111
      $region42: #{_lambda_.38} parent=39 // pred_check_branch
        %521 = sbr.rel (%p519) target = $region44
      $region43: #{_lambda_.38} parent=39 // pred_region
        %p522 = scmp.lt.s32.totalorder %s15, 1
        %s523 = scalar_select %p522, %s15, 1
        %s524 = smul.addr %s523, 32
        %s525 = smul.addr %s524, 8
        %s526 = scalar_lea.vmem %s3, %s525
      $region44: #{_lambda_.38} parent=39 // pred_fallthru
        _
    $region40: #{_lambda_.38} parent=5 // pred_fallthru
      _
  $region6: #{_lambda_.38} parent=0 // loop_footer
    %s13 = sadd.s32 1, %s9
  $region7: #{_lambda_.38} parent=0 // loop_footer_branch
    %8 = sbr.rel target = $region3
  $region8: #{_lambda_.38} parent=0 // loop_exit
    _

// kernel: _lambda_.39
$region0: #{_lambda_.39}
  #allocation0 [shape = 'u32[]', space=smem, size = 0x4, offset = 0x4, fixed_abs, tag = 'smem constant byte address 0x4 - core index']
  #allocation1 [shape = 'u32[72,128]{1,0:T(1,128)}', space=vmem, size = 0x9000, scoped, tag = 'internal scratch']
  %s0 = inlined_call_operand.vmem [shape: bf16[512,288], index: 0, kind: input, shape index: {}]
  %s1 = inlined_call_operand.vmem [shape: bf16[288,128], index: 1, kind: input, shape index: {}]
  %s2 = inlined_call_operand.vmem [shape: f32[1,128], index: 2, kind: input, shape index: {}]
  %s3 = inlined_call_operand.vmem [shape: f32[512,128], index: 3, kind: output, shape index: {}]
  %s4 = sld [smem:[#allocation0]]
  $region22: #{_lambda_.39} parent=0
    _
  %s6 = ssub.s32 1, %s4
  %s7 = scalar_select 0, %s6, %s4
  // Predicated region
  $region2: #{_lambda_.39} parent=0 // pred_check
    _
  $region3: #{_lambda_.39} parent=0 // pred_check_branch
    %9 = sbr.rel (0) target = $region5
  $region4: #{_lambda_.39} parent=0 // pred_region
    _
  $region5: #{_lambda_.39} parent=0 // pred_fallthru
    _
  // Predicated region
  $region6: #{_lambda_.39} parent=0 // pred_check
    _
  $region7: #{_lambda_.39} parent=0 // pred_check_branch
    %11 = sbr.rel (0) target = $region9
  $region8: #{_lambda_.39} parent=0 // pred_region
    _
  $region9: #{_lambda_.39} parent=0 // pred_fallthru
    _
  // Predicated region
  $region10: #{_lambda_.39} parent=0 // pred_check
    _
  $region11: #{_lambda_.39} parent=0 // pred_check_branch
    %13 = sbr.rel (0) target = $region13
  $region12: #{_lambda_.39} parent=0 // pred_region
    _
  $region13: #{_lambda_.39} parent=0 // pred_fallthru
    _
  %v15 = vld [vmem:[%s0] sm:$0xff]
  %v16 = vld [vmem:[%s0 + $0x8] sm:$0xf]
  %v17 = vld [vmem:[%s0 + $0xc] sm:$0xff]
  %v18 = vld [vmem:[%s0 + $0x14] sm:$0xf]
  %v19 = vld [vmem:[%s0 + $0x18] sm:$0xff]
  %v20 = vld [vmem:[%s0 + $0x20] sm:$0xf]
  %v21 = vld [vmem:[%s0 + $0x24] sm:$0xff]
  %v22 = vld [vmem:[%s0 + $0x2c] sm:$0xf]
  %v23 = vld [vmem:[%s0 + $0x30] sm:$0xff]
  %v24 = vld [vmem:[%s0 + $0x38] sm:$0xf]
  %v25 = vld [vmem:[%s0 + $0x3c] sm:$0xff]
  %v26 = vld [vmem:[%s0 + $0x44] sm:$0xf]
  %v27 = vld [vmem:[%s0 + $0x48] sm:$0xff]
  %v28 = vld [vmem:[%s0 + $0x50] sm:$0xf]
  %v29 = vld [vmem:[%s0 + $0x54] sm:$0xff]
  %v30 = vld [vmem:[%s0 + $0x5c] sm:$0xf]
  %v31 = vld [vmem:[%s0 + $0x60] sm:$0xff]
  %v32 = vld [vmem:[%s0 + $0x68] sm:$0xf]
  %v33 = vld [vmem:[%s0 + $0x6c] sm:$0xff]
  %v34 = vld [vmem:[%s0 + $0x74] sm:$0xf]
  %v35 = vld [vmem:[%s0 + $0x78] sm:$0xff]
  %v36 = vld [vmem:[%s0 + $0x80] sm:$0xf]
  %v37 = vld [vmem:[%s0 + $0x84] sm:$0xff]
  %v38 = vld [vmem:[%s0 + $0x8c] sm:$0xf]
  %v39 = vld [vmem:[%s0 + $0x90] sm:$0xff]
  %v40 = vld [vmem:[%s0 + $0x98] sm:$0xf]
  %v41 = vld [vmem:[%s0 + $0x9c] sm:$0xff]
  %v42 = vld [vmem:[%s0 + $0xa4] sm:$0xf]
  %v43 = vld [vmem:[%s0 + $0xa8] sm:$0xff]
  %v44 = vld [vmem:[%s0 + $0xb0] sm:$0xf]
  %v45 = vld [vmem:[%s0 + $0xb4] sm:$0xff]
  %v46 = vld [vmem:[%s0 + $0xbc] sm:$0xf]
  %v47 = vld [vmem:[%s0 + $0xc0] sm:$0xff]
  %v48 = vld [vmem:[%s0 + $0xc8] sm:$0xf]
  %v49 = vld [vmem:[%s0 + $0xcc] sm:$0xff]
  %v50 = vld [vmem:[%s0 + $0xd4] sm:$0xf]
  %v51 = vld [vmem:[%s0 + $0xd8] sm:$0xff]
  %v52 = vld [vmem:[%s0 + $0xe0] sm:$0xf]
  %v53 = vld [vmem:[%s0 + $0xe4] sm:$0xff]
  %v54 = vld [vmem:[%s0 + $0xec] sm:$0xf]
  %v55 = vld [vmem:[%s0 + $0xf0] sm:$0xff]
  %v56 = vld [vmem:[%s0 + $0xf8] sm:$0xf]
  %v57 = vld [vmem:[%s0 + $0xfc] sm:$0xff]
  %v58 = vld [vmem:[%s0 + $0x104] sm:$0xf]
  %v59 = vld [vmem:[%s0 + $0x108] sm:$0xff]
  %v60 = vld [vmem:[%s0 + $0x110] sm:$0xf]
  %v61 = vld [vmem:[%s0 + $0x114] sm:$0xff]
  %v62 = vld [vmem:[%s0 + $0x11c] sm:$0xf]
  %v63 = vld [vmem:[%s0 + $0x120] sm:$0xff]
  %v64 = vld [vmem:[%s0 + $0x128] sm:$0xf]
  %v65 = vld [vmem:[%s0 + $0x12c] sm:$0xff]
  %v66 = vld [vmem:[%s0 + $0x134] sm:$0xf]
  %v67 = vld [vmem:[%s0 + $0x138] sm:$0xff]
  %v68 = vld [vmem:[%s0 + $0x140] sm:$0xf]
  %v69 = vld [vmem:[%s0 + $0x144] sm:$0xff]
  %v70 = vld [vmem:[%s0 + $0x14c] sm:$0xf]
  %v71 = vld [vmem:[%s0 + $0x150] sm:$0xff]
  %v72 = vld [vmem:[%s0 + $0x158] sm:$0xf]
  %v73 = vld [vmem:[%s0 + $0x15c] sm:$0xff]
  %v74 = vld [vmem:[%s0 + $0x164] sm:$0xf]
  %v75 = vld [vmem:[%s0 + $0x168] sm:$0xff]
  %v76 = vld [vmem:[%s0 + $0x170] sm:$0xf]
  %v77 = vld [vmem:[%s0 + $0x174] sm:$0xff]
  %v78 = vld [vmem:[%s0 + $0x17c] sm:$0xf]
  %v79 = vld [vmem:[%s0 + $0x180] sm:$0xff]
  %v80 = vld [vmem:[%s0 + $0x188] sm:$0xf]
  %v81 = vld [vmem:[%s0 + $0x18c] sm:$0xff]
  %v82 = vld [vmem:[%s0 + $0x194] sm:$0xf]
  %v83 = vld [vmem:[%s0 + $0x198] sm:$0xff]
  %v84 = vld [vmem:[%s0 + $0x1a0] sm:$0xf]
  %v85 = vld [vmem:[%s0 + $0x1a4] sm:$0xff]
  %v86 = vld [vmem:[%s0 + $0x1ac] sm:$0xf]
  %v87 = vld [vmem:[%s0 + $0x1b0] sm:$0xff]
  %v88 = vld [vmem:[%s0 + $0x1b8] sm:$0xf]
  %v89 = vld [vmem:[%s0 + $0x1bc] sm:$0xff]
  %v90 = vld [vmem:[%s0 + $0x1c4] sm:$0xf]
  %v91 = vld [vmem:[%s0 + $0x1c8] sm:$0xff]
  %v92 = vld [vmem:[%s0 + $0x1d0] sm:$0xf]
  %v93 = vld [vmem:[%s0 + $0x1d4] sm:$0xff]
  %v94 = vld [vmem:[%s0 + $0x1dc] sm:$0xf]
  %v95 = vld [vmem:[%s0 + $0x1e0] sm:$0xff]
  %v96 = vld [vmem:[%s0 + $0x1e8] sm:$0xf]
  %v97 = vld [vmem:[%s0 + $0x1ec] sm:$0xff]
  %v98 = vld [vmem:[%s0 + $0x1f4] sm:$0xf]
  %v99 = vld [vmem:[%s0 + $0x1f8] sm:$0xff]
  %v100 = vld [vmem:[%s0 + $0x200] sm:$0xf]
  %v101 = vld [vmem:[%s0 + $0x204] sm:$0xff]
  %v102 = vld [vmem:[%s0 + $0x20c] sm:$0xf]
  %v103 = vld [vmem:[%s0 + $0x210] sm:$0xff]
  %v104 = vld [vmem:[%s0 + $0x218] sm:$0xf]
  %v105 = vld [vmem:[%s0 + $0x21c] sm:$0xff]
  %v106 = vld [vmem:[%s0 + $0x224] sm:$0xf]
  %v107 = vld [vmem:[%s0 + $0x228] sm:$0xff]
  %v108 = vld [vmem:[%s0 + $0x230] sm:$0xf]
  %v109 = vld [vmem:[%s0 + $0x234] sm:$0xff]
  %v110 = vld [vmem:[%s0 + $0x23c] sm:$0xf]
  %v111 = vld [vmem:[%s0 + $0x240] sm:$0xff]
  %v112 = vld [vmem:[%s0 + $0x248] sm:$0xf]
  %v113 = vld [vmem:[%s0 + $0x24c] sm:$0xff]
  %v114 = vld [vmem:[%s0 + $0x254] sm:$0xf]
  %v115 = vld [vmem:[%s0 + $0x258] sm:$0xff]
  %v116 = vld [vmem:[%s0 + $0x260] sm:$0xf]
  %v117 = vld [vmem:[%s0 + $0x264] sm:$0xff]
  %v118 = vld [vmem:[%s0 + $0x26c] sm:$0xf]
  %v119 = vld [vmem:[%s0 + $0x270] sm:$0xff]
  %v120 = vld [vmem:[%s0 + $0x278] sm:$0xf]
  %v121 = vld [vmem:[%s0 + $0x27c] sm:$0xff]
  %v122 = vld [vmem:[%s0 + $0x284] sm:$0xf]
  %v123 = vld [vmem:[%s0 + $0x288] sm:$0xff]
  %v124 = vld [vmem:[%s0 + $0x290] sm:$0xf]
  %v125 = vld [vmem:[%s0 + $0x294] sm:$0xff]
  %v126 = vld [vmem:[%s0 + $0x29c] sm:$0xf]
  %v127 = vld [vmem:[%s0 + $0x2a0] sm:$0xff]
  %v128 = vld [vmem:[%s0 + $0x2a8] sm:$0xf]
  %v129 = vld [vmem:[%s0 + $0x2ac] sm:$0xff]
  %v130 = vld [vmem:[%s0 + $0x2b4] sm:$0xf]
  %v131 = vld [vmem:[%s0 + $0x2b8] sm:$0xff]
  %v132 = vld [vmem:[%s0 + $0x2c0] sm:$0xf]
  %v133 = vld [vmem:[%s0 + $0x2c4] sm:$0xff]
  %v134 = vld [vmem:[%s0 + $0x2cc] sm:$0xf]
  %v135 = vld [vmem:[%s0 + $0x2d0] sm:$0xff]
  %v136 = vld [vmem:[%s0 + $0x2d8] sm:$0xf]
  %v137 = vld [vmem:[%s0 + $0x2dc] sm:$0xff]
  %v138 = vld [vmem:[%s0 + $0x2e4] sm:$0xf]
  %v139 = vld [vmem:[%s0 + $0x2e8] sm:$0xff]
  %v140 = vld [vmem:[%s0 + $0x2f0] sm:$0xf]
  %v141 = vld [vmem:[%s0 + $0x2f4] sm:$0xff]
  %v142 = vld [vmem:[%s0 + $0x2fc] sm:$0xf]
  %v143 = vld [vmem:[%s1] sm:$0xf]
  %v144 = vld [vmem:[%s1 + $0x4] sm:$0xf]
  %v145 = vld [vmem:[%s1 + $0x8] sm:$0xf]
  %v146 = vld [vmem:[%s1 + $0xc] sm:$0xf]
  %v147 = vld [vmem:[%s1 + $0x10] sm:$0xf]
  %v148 = vld [vmem:[%s1 + $0x14] sm:$0xf]
  %v149 = vld [vmem:[%s1 + $0x18] sm:$0xf]
  %v150 = vld [vmem:[%s1 + $0x1c] sm:$0xf]
  %v151 = vld [vmem:[%s1 + $0x20] sm:$0xf]
  %v152 = vld [vmem:[%s1 + $0x24] sm:$0xf]
  %v153 = vld [vmem:[%s1 + $0x28] sm:$0xf]
  %v154 = vld [vmem:[%s1 + $0x2c] sm:$0xf]
  %v155 = vld [vmem:[%s1 + $0x30] sm:$0xf]
  %v156 = vld [vmem:[%s1 + $0x34] sm:$0xf]
  %v157 = vld [vmem:[%s1 + $0x38] sm:$0xf]
  %v158 = vld [vmem:[%s1 + $0x3c] sm:$0xf]
  %v159 = vld [vmem:[%s1 + $0x40] sm:$0xf]
  %v160 = vld [vmem:[%s1 + $0x44] sm:$0xf]
  %v161 = vld [vmem:[%s1 + $0x48] sm:$0xf]
  %v162 = vld [vmem:[%s1 + $0x4c] sm:$0xf]
  %v163 = vld [vmem:[%s1 + $0x50] sm:$0xf]
  %v164 = vld [vmem:[%s1 + $0x54] sm:$0xf]
  %v165 = vld [vmem:[%s1 + $0x58] sm:$0xf]
  %v166 = vld [vmem:[%s1 + $0x5c] sm:$0xf]
  %v167 = vld [vmem:[%s1 + $0x60] sm:$0xf]
  %v168 = vld [vmem:[%s1 + $0x64] sm:$0xf]
  %v169 = vld [vmem:[%s1 + $0x68] sm:$0xf]
  %v170 = vld [vmem:[%s1 + $0x6c] sm:$0xf]
  %v171 = vld [vmem:[%s1 + $0x70] sm:$0xf]
  %v172 = vld [vmem:[%s1 + $0x74] sm:$0xf]
  %v173 = vld [vmem:[%s1 + $0x78] sm:$0xf]
  %v174 = vld [vmem:[%s1 + $0x7c] sm:$0xf]
  %v175 = vld [vmem:[%s1 + $0x80] sm:$0xf]
  %v176 = vld [vmem:[%s1 + $0x84] sm:$0xf]
  %v177 = vld [vmem:[%s1 + $0x88] sm:$0xf]
  %v178 = vld [vmem:[%s1 + $0x8c] sm:$0xf]
  %v179 = vld [vmem:[%s2] sm:$0x1]
  %v181 = vperm.slane %v179, 0
  %v311 = vunpack.c.l.b16 %v15
  %v312 = vunpack.c.h.b16 %v15
  %v313 = vunpack.c.l.b16 %v16
  %v314 = vunpack.c.l.b16 %v17
  %v315 = vunpack.c.h.b16 %v17
  %v316 = vunpack.c.l.b16 %v18
  %v317 = vunpack.c.l.b16 %v19
  %v318 = vunpack.c.h.b16 %v19
  %v319 = vunpack.c.l.b16 %v20
  %v320 = vunpack.c.l.b16 %v21
  %v321 = vunpack.c.h.b16 %v21
  %v322 = vunpack.c.l.b16 %v22
  %v323 = vunpack.c.l.b16 %v23
  %v324 = vunpack.c.h.b16 %v23
  %v325 = vunpack.c.l.b16 %v24
  %v326 = vunpack.c.l.b16 %v25
  %v327 = vunpack.c.h.b16 %v25
  %v328 = vunpack.c.l.b16 %v26
  %v329 = vunpack.c.l.b16 %v27
  %v330 = vunpack.c.h.b16 %v27
  %v331 = vunpack.c.l.b16 %v28
  %v332 = vunpack.c.l.b16 %v29
  %v333 = vunpack.c.h.b16 %v29
  %v334 = vunpack.c.l.b16 %v30
  %v335 = vunpack.c.l.b16 %v31
  %v336 = vunpack.c.h.b16 %v31
  %v337 = vunpack.c.l.b16 %v32
  %v338 = vunpack.c.l.b16 %v33
  %v339 = vunpack.c.h.b16 %v33
  %v340 = vunpack.c.l.b16 %v34
  %v341 = vunpack.c.l.b16 %v35
  %v342 = vunpack.c.h.b16 %v35
  %v343 = vunpack.c.l.b16 %v36
  %v344 = vunpack.c.l.b16 %v37
  %v345 = vunpack.c.h.b16 %v37
  %v346 = vunpack.c.l.b16 %v38
  %v347 = vunpack.c.l.b16 %v39
  %v348 = vunpack.c.h.b16 %v39
  %v349 = vunpack.c.l.b16 %v40
  %v350 = vunpack.c.l.b16 %v41
  %v351 = vunpack.c.h.b16 %v41
  %v352 = vunpack.c.l.b16 %v42
  %v353 = vunpack.c.l.b16 %v43
  %v354 = vunpack.c.h.b16 %v43
  %v355 = vunpack.c.l.b16 %v44
  %v356 = vunpack.c.l.b16 %v45
  %v357 = vunpack.c.h.b16 %v45
  %v358 = vunpack.c.l.b16 %v46
  %v359 = vunpack.c.l.b16 %v47
  %v360 = vunpack.c.h.b16 %v47
  %v361 = vunpack.c.l.b16 %v48
  %v362 = vunpack.c.l.b16 %v49
  %v363 = vunpack.c.h.b16 %v49
  %v364 = vunpack.c.l.b16 %v50
  %v365 = vunpack.c.l.b16 %v51
  %v366 = vunpack.c.h.b16 %v51
  %v367 = vunpack.c.l.b16 %v52
  %v368 = vunpack.c.l.b16 %v53
  %v369 = vunpack.c.h.b16 %v53
  %v370 = vunpack.c.l.b16 %v54
  %v371 = vunpack.c.l.b16 %v55
  %v372 = vunpack.c.h.b16 %v55
  %v373 = vunpack.c.l.b16 %v56
  %v374 = vunpack.c.l.b16 %v57
  %v375 = vunpack.c.h.b16 %v57
  %v376 = vunpack.c.l.b16 %v58
  %v377 = vunpack.c.l.b16 %v59
  %v378 = vunpack.c.h.b16 %v59
  %v379 = vunpack.c.l.b16 %v60
  %v380 = vunpack.c.l.b16 %v61
  %v381 = vunpack.c.h.b16 %v61
  %v382 = vunpack.c.l.b16 %v62
  %v383 = vunpack.c.l.b16 %v63
  %v384 = vunpack.c.h.b16 %v63
  %v385 = vunpack.c.l.b16 %v64
  %v386 = vunpack.c.l.b16 %v65
  %v387 = vunpack.c.h.b16 %v65
  %v388 = vunpack.c.l.b16 %v66
  %v389 = vunpack.c.l.b16 %v67
  %v390 = vunpack.c.h.b16 %v67
  %v391 = vunpack.c.l.b16 %v68
  %v392 = vunpack.c.l.b16 %v69
  %v393 = vunpack.c.h.b16 %v69
  %v394 = vunpack.c.l.b16 %v70
  %v395 = vunpack.c.l.b16 %v71
  %v396 = vunpack.c.h.b16 %v71
  %v397 = vunpack.c.l.b16 %v72
  %v398 = vunpack.c.l.b16 %v73
  %v399 = vunpack.c.h.b16 %v73
  %v400 = vunpack.c.l.b16 %v74
  %v401 = vunpack.c.l.b16 %v75
  %v402 = vunpack.c.h.b16 %v75
  %v403 = vunpack.c.l.b16 %v76
  %v404 = vunpack.c.l.b16 %v77
  %v405 = vunpack.c.h.b16 %v77
  %v406 = vunpack.c.l.b16 %v78
  %v407 = vunpack.c.l.b16 %v79
  %v408 = vunpack.c.h.b16 %v79
  %v409 = vunpack.c.l.b16 %v80
  %v410 = vunpack.c.l.b16 %v81
  %v411 = vunpack.c.h.b16 %v81
  %v412 = vunpack.c.l.b16 %v82
  %v413 = vunpack.c.l.b16 %v83
  %v414 = vunpack.c.h.b16 %v83
  %v415 = vunpack.c.l.b16 %v84
  %v416 = vunpack.c.l.b16 %v85
  %v417 = vunpack.c.h.b16 %v85
  %v418 = vunpack.c.l.b16 %v86
  %v419 = vunpack.c.l.b16 %v87
  %v420 = vunpack.c.h.b16 %v87
  %v421 = vunpack.c.l.b16 %v88
  %v422 = vunpack.c.l.b16 %v89
  %v423 = vunpack.c.h.b16 %v89
  %v424 = vunpack.c.l.b16 %v90
  %v425 = vunpack.c.l.b16 %v91
  %v426 = vunpack.c.h.b16 %v91
  %v427 = vunpack.c.l.b16 %v92
  %v428 = vunpack.c.l.b16 %v93
  %v429 = vunpack.c.h.b16 %v93
  %v430 = vunpack.c.l.b16 %v94
  %v431 = vunpack.c.l.b16 %v95
  %v432 = vunpack.c.h.b16 %v95
  %v433 = vunpack.c.l.b16 %v96
  %v434 = vunpack.c.l.b16 %v97
  %v435 = vunpack.c.h.b16 %v97
  %v436 = vunpack.c.l.b16 %v98
  %v437 = vunpack.c.l.b16 %v99
  %v438 = vunpack.c.h.b16 %v99
  %v439 = vunpack.c.l.b16 %v100
  %v440 = vunpack.c.l.b16 %v101
  %v441 = vunpack.c.h.b16 %v101
  %v442 = vunpack.c.l.b16 %v102
  %v443 = vunpack.c.l.b16 %v103
  %v444 = vunpack.c.h.b16 %v103
  %v445 = vunpack.c.l.b16 %v104
  %v446 = vunpack.c.l.b16 %v105
  %v447 = vunpack.c.h.b16 %v105
  %v448 = vunpack.c.l.b16 %v106
  %v449 = vunpack.c.l.b16 %v107
  %v450 = vunpack.c.h.b16 %v107
  %v451 = vunpack.c.l.b16 %v108
  %v452 = vunpack.c.l.b16 %v109
  %v453 = vunpack.c.h.b16 %v109
  %v454 = vunpack.c.l.b16 %v110
  %v455 = vunpack.c.l.b16 %v111
  %v456 = vunpack.c.h.b16 %v111
  %v457 = vunpack.c.l.b16 %v112
  %v458 = vunpack.c.l.b16 %v113
  %v459 = vunpack.c.h.b16 %v113
  %v460 = vunpack.c.l.b16 %v114
  %v461 = vunpack.c.l.b16 %v115
  %v462 = vunpack.c.h.b16 %v115
  %v463 = vunpack.c.l.b16 %v116
  %v464 = vunpack.c.l.b16 %v117
  %v465 = vunpack.c.h.b16 %v117
  %v466 = vunpack.c.l.b16 %v118
  %v467 = vunpack.c.l.b16 %v119
  %v468 = vunpack.c.h.b16 %v119
  %v469 = vunpack.c.l.b16 %v120
  %v470 = vunpack.c.l.b16 %v121
  %v471 = vunpack.c.h.b16 %v121
  %v472 = vunpack.c.l.b16 %v122
  %v473 = vunpack.c.l.b16 %v123
  %v474 = vunpack.c.h.b16 %v123
  %v475 = vunpack.c.l.b16 %v124
  %v476 = vunpack.c.l.b16 %v125
  %v477 = vunpack.c.h.b16 %v125
  %v478 = vunpack.c.l.b16 %v126
  %v479 = vunpack.c.l.b16 %v127
  %v480 = vunpack.c.h.b16 %v127
  %v481 = vunpack.c.l.b16 %v128
  %v482 = vunpack.c.l.b16 %v129
  %v483 = vunpack.c.h.b16 %v129
  %v484 = vunpack.c.l.b16 %v130
  %v485 = vunpack.c.l.b16 %v131
  %v486 = vunpack.c.h.b16 %v131
  %v487 = vunpack.c.l.b16 %v132
  %v488 = vunpack.c.l.b16 %v133
  %v489 = vunpack.c.h.b16 %v133
  %v490 = vunpack.c.l.b16 %v134
  %v491 = vunpack.c.l.b16 %v135
  %v492 = vunpack.c.h.b16 %v135
  %v493 = vunpack.c.l.b16 %v136
  %v494 = vunpack.c.l.b16 %v137
  %v495 = vunpack.c.h.b16 %v137
  %v496 = vunpack.c.l.b16 %v138
  %v497 = vunpack.c.l.b16 %v139
  %v498 = vunpack.c.h.b16 %v139
  %v499 = vunpack.c.l.b16 %v140
  %v500 = vunpack.c.l.b16 %v141
  %v501 = vunpack.c.h.b16 %v141
  %v502 = vunpack.c.l.b16 %v142
  %v503 = vpack.c.b16 %v314, %v311
  %v504 = vpack.c.b16 %v315, %v312
  %v505 = vpack.c.b16 %v316, %v313
  %v506 = vpack.c.b16 %v320, %v317
  %v507 = vpack.c.b16 %v321, %v318
  %v508 = vpack.c.b16 %v322, %v319
  %v509 = vpack.c.b16 %v326, %v323
  %v510 = vpack.c.b16 %v327, %v324
  %v511 = vpack.c.b16 %v328, %v325
  %v512 = vpack.c.b16 %v332, %v329
  %v513 = vpack.c.b16 %v333, %v330
  %v514 = vpack.c.b16 %v334, %v331
  %v515 = vpack.c.b16 %v338, %v335
  %v516 = vpack.c.b16 %v339, %v336
  %v517 = vpack.c.b16 %v340, %v337
  %v518 = vpack.c.b16 %v344, %v341
  %v519 = vpack.c.b16 %v345, %v342
  %v520 = vpack.c.b16 %v346, %v343
  %v521 = vpack.c.b16 %v350, %v347
  %v522 = vpack.c.b16 %v351, %v348
  %v523 = vpack.c.b16 %v352, %v349
  %v524 = vpack.c.b16 %v356, %v353
  %v525 = vpack.c.b16 %v357, %v354
  %v526 = vpack.c.b16 %v358, %v355
  %v527 = vpack.c.b16 %v362, %v359
  %v528 = vpack.c.b16 %v363, %v360
  %v529 = vpack.c.b16 %v364, %v361
  %v530 = vpack.c.b16 %v368, %v365
  %v531 = vpack.c.b16 %v369, %v366
  %v532 = vpack.c.b16 %v370, %v367
  %v533 = vpack.c.b16 %v374, %v371
  %v534 = vpack.c.b16 %v375, %v372
  %v535 = vpack.c.b16 %v376, %v373
  %v536 = vpack.c.b16 %v380, %v377
  %v537 = vpack.c.b16 %v381, %v378
  %v538 = vpack.c.b16 %v382, %v379
  %v539 = vpack.c.b16 %v386, %v383
  %v540 = vpack.c.b16 %v387, %v384
  %v541 = vpack.c.b16 %v388, %v385
  %v542 = vpack.c.b16 %v392, %v389
  %v543 = vpack.c.b16 %v393, %v390
  %v544 = vpack.c.b16 %v394, %v391
  %v545 = vpack.c.b16 %v398, %v395
  %v546 = vpack.c.b16 %v399, %v396
  %v547 = vpack.c.b16 %v400, %v397
  %v548 = vpack.c.b16 %v404, %v401
  %v549 = vpack.c.b16 %v405, %v402
  %v550 = vpack.c.b16 %v406, %v403
  %v551 = vpack.c.b16 %v410, %v407
  %v552 = vpack.c.b16 %v411, %v408
  %v553 = vpack.c.b16 %v412, %v409
  %v554 = vpack.c.b16 %v416, %v413
  %v555 = vpack.c.b16 %v417, %v414
  %v556 = vpack.c.b16 %v418, %v415
  %v557 = vpack.c.b16 %v422, %v419
  %v558 = vpack.c.b16 %v423, %v420
  %v559 = vpack.c.b16 %v424, %v421
  %v560 = vpack.c.b16 %v428, %v425
  %v561 = vpack.c.b16 %v429, %v426
  %v562 = vpack.c.b16 %v430, %v427
  %v563 = vpack.c.b16 %v434, %v431
  %v564 = vpack.c.b16 %v435, %v432
  %v565 = vpack.c.b16 %v436, %v433
  %v566 = vpack.c.b16 %v440, %v437
  %v567 = vpack.c.b16 %v441, %v438
  %v568 = vpack.c.b16 %v442, %v439
  %v569 = vpack.c.b16 %v446, %v443
  %v570 = vpack.c.b16 %v447, %v444
  %v571 = vpack.c.b16 %v448, %v445
  %v572 = vpack.c.b16 %v452, %v449
  %v573 = vpack.c.b16 %v453, %v450
  %v574 = vpack.c.b16 %v454, %v451
  %v575 = vpack.c.b16 %v458, %v455
  %v576 = vpack.c.b16 %v459, %v456
  %v577 = vpack.c.b16 %v460, %v457
  %v578 = vpack.c.b16 %v464, %v461
  %v579 = vpack.c.b16 %v465, %v462
  %v580 = vpack.c.b16 %v466, %v463
  %v581 = vpack.c.b16 %v470, %v467
  %v582 = vpack.c.b16 %v471, %v468
  %v583 = vpack.c.b16 %v472, %v469
  %v584 = vpack.c.b16 %v476, %v473
  %v585 = vpack.c.b16 %v477, %v474
  %v586 = vpack.c.b16 %v478, %v475
  %v587 = vpack.c.b16 %v482, %v479
  %v588 = vpack.c.b16 %v483, %v480
  %v589 = vpack.c.b16 %v484, %v481
  %v590 = vpack.c.b16 %v488, %v485
  %v591 = vpack.c.b16 %v489, %v486
  %v592 = vpack.c.b16 %v490, %v487
  %v593 = vpack.c.b16 %v494, %v491
  %v594 = vpack.c.b16 %v495, %v492
  %v595 = vpack.c.b16 %v496, %v493
  %v596 = vpack.c.b16 %v500, %v497
  %v597 = vpack.c.b16 %v501, %v498
  %v598 = vpack.c.b16 %v502, %v499
  %v699 = vunpack.c.l.b16 %v143
  %v700 = vunpack.c.l.b16 %v144
  %v701 = vunpack.c.l.b16 %v145
  %v702 = vunpack.c.l.b16 %v146
  %v703 = vunpack.c.l.b16 %v147
  %v704 = vunpack.c.l.b16 %v148
  %v705 = vunpack.c.l.b16 %v149
  %v706 = vunpack.c.l.b16 %v150
  %v707 = vunpack.c.l.b16 %v151
  %v708 = vunpack.c.l.b16 %v152
  %v709 = vunpack.c.l.b16 %v153
  %v710 = vunpack.c.l.b16 %v154
  %v711 = vunpack.c.l.b16 %v155
  %v712 = vunpack.c.l.b16 %v156
  %v713 = vunpack.c.l.b16 %v157
  %v714 = vunpack.c.l.b16 %v158
  %v715 = vunpack.c.l.b16 %v159
  %v716 = vunpack.c.l.b16 %v160
  %v717 = vunpack.c.l.b16 %v161
  %v718 = vunpack.c.l.b16 %v162
  %v719 = vunpack.c.l.b16 %v163
  %v720 = vunpack.c.l.b16 %v164
  %v721 = vunpack.c.l.b16 %v165
  %v722 = vunpack.c.l.b16 %v166
  %v723 = vunpack.c.l.b16 %v167
  %v724 = vunpack.c.l.b16 %v168
  %v725 = vunpack.c.l.b16 %v169
  %v726 = vunpack.c.l.b16 %v170
  %v727 = vunpack.c.l.b16 %v171
  %v728 = vunpack.c.l.b16 %v172
  %v729 = vunpack.c.l.b16 %v173
  %v730 = vunpack.c.l.b16 %v174
  %v731 = vunpack.c.l.b16 %v175
  %v732 = vunpack.c.l.b16 %v176
  %v733 = vunpack.c.l.b16 %v177
  %v734 = vunpack.c.l.b16 %v178
  %v735 = vpack.c.b16 %v700, %v699
  %v736 = vpack.c.b16 %v702, %v701
  %v737 = vpack.c.b16 %v704, %v703
  %v738 = vpack.c.b16 %v706, %v705
  %v739 = vpack.c.b16 %v708, %v707
  %v740 = vpack.c.b16 %v710, %v709
  %v741 = vpack.c.b16 %v712, %v711
  %v742 = vpack.c.b16 %v714, %v713
  %v743 = vpack.c.b16 %v716, %v715
  %v744 = vpack.c.b16 %v718, %v717
  %v745 = vpack.c.b16 %v720, %v719
  %v746 = vpack.c.b16 %v722, %v721
  %v747 = vpack.c.b16 %v724, %v723
  %v748 = vpack.c.b16 %v726, %v725
  %v749 = vpack.c.b16 %v728, %v727
  %v750 = vpack.c.b16 %v730, %v729
  %v751 = vpack.c.b16 %v732, %v731
  %v752 = vpack.c.b16 %v734, %v733
  %vm771 = vcmask 261120
  %v773 = vsel %vm771, %v505, 0
  %v776 = vsel %vm771, %v508, 0
  %v779 = vsel %vm771, %v511, 0
  %v782 = vsel %vm771, %v514, 0
  %v785 = vsel %vm771, %v517, 0
  %v788 = vsel %vm771, %v520, 0
  %v791 = vsel %vm771, %v523, 0
  %v794 = vsel %vm771, %v526, 0
  %v797 = vsel %vm771, %v529, 0
  %v800 = vsel %vm771, %v532, 0
  %v803 = vsel %vm771, %v535, 0
  %v806 = vsel %vm771, %v538, 0
  %v809 = vsel %vm771, %v541, 0
  %v812 = vsel %vm771, %v544, 0
  %v815 = vsel %vm771, %v547, 0
  %v818 = vsel %vm771, %v550, 0
  %v821 = vsel %vm771, %v553, 0
  %v824 = vsel %vm771, %v556, 0
  %v827 = vsel %vm771, %v559, 0
  %v830 = vsel %vm771, %v562, 0
  %v833 = vsel %vm771, %v565, 0
  %v836 = vsel %vm771, %v568, 0
  %v839 = vsel %vm771, %v571, 0
  %v842 = vsel %vm771, %v574, 0
  %v845 = vsel %vm771, %v577, 0
  %v848 = vsel %vm771, %v580, 0
  %v851 = vsel %vm771, %v583, 0
  %v854 = vsel %vm771, %v586, 0
  %v857 = vsel %vm771, %v589, 0
  %v860 = vsel %vm771, %v592, 0
  %v863 = vsel %vm771, %v595, 0
  %v866 = vsel %vm771, %v598, 0
  %868 = vmatpush.bf16.msra.mxu0 %v742
  %869 = vmatpush.bf16.msra.mxu0 %v741
  %870 = vmatpush.bf16.msra.mxu0 %v740
  %871 = vmatpush.bf16.msra.mxu0 %v739
  %872 = vmatpush.bf16.msra.mxu0 %v738
  %873 = vmatpush.bf16.msra.mxu0 %v737
  %874 = vmatpush.bf16.msra.mxu0 %v736
  %875 = vmatpush.bf16.msra.mxu0 %v735
  %876 = vmatmul.bf16.gmra.mxu0 %v503
  %v877 = vpop.f32.mrf.mxu0
  %v878 = vadd.f32 %v181, %v877
  %v879 = vpop.f32.mrf.mxu0
  %v880 = vadd.f32 %v181, %v879
  %881 = vmatmul.bf16.gmra.mxu0 %v506
  %v882 = vpop.f32.mrf.mxu0
  %v883 = vadd.f32 %v181, %v882
  %v884 = vpop.f32.mrf.mxu0
  %v885 = vadd.f32 %v181, %v884
  %886 = vmatmul.bf16.gmra.mxu0 %v509
  %v887 = vpop.f32.mrf.mxu0
  %v888 = vadd.f32 %v181, %v887
  %v889 = vpop.f32.mrf.mxu0
  %v890 = vadd.f32 %v181, %v889
  %891 = vmatmul.bf16.gmra.mxu0 %v512
  %v892 = vpop.f32.mrf.mxu0
  %v893 = vadd.f32 %v181, %v892
  %v894 = vpop.f32.mrf.mxu0
  %v895 = vadd.f32 %v181, %v894
  %896 = vmatmul.bf16.gmra.mxu0 %v515
  %v897 = vpop.f32.mrf.mxu0
  %v898 = vadd.f32 %v181, %v897
  %v899 = vpop.f32.mrf.mxu0
  %v900 = vadd.f32 %v181, %v899
  %901 = vmatmul.bf16.gmra.mxu0 %v518
  %v902 = vpop.f32.mrf.mxu0
  %v903 = vadd.f32 %v181, %v902
  %v904 = vpop.f32.mrf.mxu0
  %v905 = vadd.f32 %v181, %v904
  %906 = vmatmul.bf16.gmra.mxu0 %v521
  %v907 = vpop.f32.mrf.mxu0
  %v908 = vadd.f32 %v181, %v907
  %v909 = vpop.f32.mrf.mxu0
  %v910 = vadd.f32 %v181, %v909
  %911 = vmatmul.bf16.gmra.mxu0 %v524
  %v912 = vpop.f32.mrf.mxu0
  %v913 = vadd.f32 %v181, %v912
  %v914 = vpop.f32.mrf.mxu0
  %v915 = vadd.f32 %v181, %v914
  %916 = vmatmul.bf16.gmra.mxu0 %v527
  %v917 = vpop.f32.mrf.mxu0
  %v918 = vadd.f32 %v181, %v917
  %v919 = vpop.f32.mrf.mxu0
  %v920 = vadd.f32 %v181, %v919
  %921 = vmatmul.bf16.gmra.mxu0 %v530
  %v922 = vpop.f32.mrf.mxu0
  %v923 = vadd.f32 %v181, %v922
  %v924 = vpop.f32.mrf.mxu0
  %v925 = vadd.f32 %v181, %v924
  %926 = vmatmul.bf16.gmra.mxu0 %v533
  %v927 = vpop.f32.mrf.mxu0
  %v928 = vadd.f32 %v181, %v927
  %v929 = vpop.f32.mrf.mxu0
  %v930 = vadd.f32 %v181, %v929
  %931 = vmatmul.bf16.gmra.mxu0 %v536
  %v932 = vpop.f32.mrf.mxu0
  %v933 = vadd.f32 %v181, %v932
  %v934 = vpop.f32.mrf.mxu0
  %v935 = vadd.f32 %v181, %v934
  %936 = vmatmul.bf16.gmra.mxu0 %v539
  %v937 = vpop.f32.mrf.mxu0
  %v938 = vadd.f32 %v181, %v937
  %v939 = vpop.f32.mrf.mxu0
  %v940 = vadd.f32 %v181, %v939
  %941 = vmatmul.bf16.gmra.mxu0 %v542
  %v942 = vpop.f32.mrf.mxu0
  %v943 = vadd.f32 %v181, %v942
  %v944 = vpop.f32.mrf.mxu0
  %v945 = vadd.f32 %v181, %v944
  %946 = vmatmul.bf16.gmra.mxu0 %v545
  %v947 = vpop.f32.mrf.mxu0
  %v948 = vadd.f32 %v181, %v947
  %v949 = vpop.f32.mrf.mxu0
  %v950 = vadd.f32 %v181, %v949
  %951 = vmatmul.bf16.gmra.mxu0 %v548
  %v952 = vpop.f32.mrf.mxu0
  %v953 = vadd.f32 %v181, %v952
  %v954 = vpop.f32.mrf.mxu0
  %v955 = vadd.f32 %v181, %v954
  %956 = vmatmul.bf16.gmra.mxu0 %v551
  %v957 = vpop.f32.mrf.mxu0
  %v958 = vadd.f32 %v181, %v957
  %v959 = vpop.f32.mrf.mxu0
  %v960 = vadd.f32 %v181, %v959
  %961 = vmatmul.bf16.gmra.mxu0 %v554
  %v962 = vpop.f32.mrf.mxu0
  %v963 = vadd.f32 %v181, %v962
  %v964 = vpop.f32.mrf.mxu0
  %v965 = vadd.f32 %v181, %v964
  %966 = vmatmul.bf16.gmra.mxu0 %v557
  %v967 = vpop.f32.mrf.mxu0
  %v968 = vadd.f32 %v181, %v967
  %v969 = vpop.f32.mrf.mxu0
  %v970 = vadd.f32 %v181, %v969
  %971 = vmatmul.bf16.gmra.mxu0 %v560
  %v972 = vpop.f32.mrf.mxu0
  %v973 = vadd.f32 %v181, %v972
  %v974 = vpop.f32.mrf.mxu0
  %v975 = vadd.f32 %v181, %v974
  %976 = vmatmul.bf16.gmra.mxu0 %v563
  %v977 = vpop.f32.mrf.mxu0
  %v978 = vadd.f32 %v181, %v977
  %v979 = vpop.f32.mrf.mxu0
  %v980 = vadd.f32 %v181, %v979
  %981 = vmatmul.bf16.gmra.mxu0 %v566
  %v982 = vpop.f32.mrf.mxu0
  %v983 = vadd.f32 %v181, %v982
  %v984 = vpop.f32.mrf.mxu0
  %v985 = vadd.f32 %v181, %v984
  %986 = vmatmul.bf16.gmra.mxu0 %v569
  %v987 = vpop.f32.mrf.mxu0
  %v988 = vadd.f32 %v181, %v987
  %v989 = vpop.f32.mrf.mxu0
  %v990 = vadd.f32 %v181, %v989
  %991 = vmatmul.bf16.gmra.mxu0 %v572
  %v992 = vpop.f32.mrf.mxu0
  %v993 = vadd.f32 %v181, %v992
  %v994 = vpop.f32.mrf.mxu0
  %v995 = vadd.f32 %v181, %v994
  %996 = vmatmul.bf16.gmra.mxu0 %v575
  %v997 = vpop.f32.mrf.mxu0
  %v998 = vadd.f32 %v181, %v997
  %v999 = vpop.f32.mrf.mxu0
  %v1000 = vadd.f32 %v181, %v999
  %1001 = vmatmul.bf16.gmra.mxu0 %v578
  %v1002 = vpop.f32.mrf.mxu0
  %v1003 = vadd.f32 %v181, %v1002
  %v1004 = vpop.f32.mrf.mxu0
  %v1005 = vadd.f32 %v181, %v1004
  %1006 = vmatmul.bf16.gmra.mxu0 %v581
  %v1007 = vpop.f32.mrf.mxu0
  %v1008 = vadd.f32 %v181, %v1007
  %v1009 = vpop.f32.mrf.mxu0
  %v1010 = vadd.f32 %v181, %v1009
  %1011 = vmatmul.bf16.gmra.mxu0 %v584
  %v1012 = vpop.f32.mrf.mxu0
  %v1013 = vadd.f32 %v181, %v1012
  %v1014 = vpop.f32.mrf.mxu0
  %v1015 = vadd.f32 %v181, %v1014
  %1016 = vmatmul.bf16.gmra.mxu0 %v587
  %v1017 = vpop.f32.mrf.mxu0
  %v1018 = vadd.f32 %v181, %v1017
  %v1019 = vpop.f32.mrf.mxu0
  %v1020 = vadd.f32 %v181, %v1019
  %1021 = vmatmul.bf16.gmra.mxu0 %v590
  %v1022 = vpop.f32.mrf.mxu0
  %v1023 = vadd.f32 %v181, %v1022
  %v1024 = vpop.f32.mrf.mxu0
  %v1025 = vadd.f32 %v181, %v1024
  %1026 = vmatmul.bf16.gmra.mxu0 %v593
  %v1027 = vpop.f32.mrf.mxu0
  %v1028 = vadd.f32 %v181, %v1027
  %v1029 = vpop.f32.mrf.mxu0
  %v1030 = vadd.f32 %v181, %v1029
  %1031 = vmatmul.bf16.gmra.mxu0 %v596
  %v1032 = vpop.f32.mrf.mxu0
  %v1033 = vadd.f32 %v181, %v1032
  %v1034 = vpop.f32.mrf.mxu0
  %v1035 = vadd.f32 %v181, %v1034
  %1036 = vdwg.mxu0
  %1037 = vmatpush.bf16.msra.mxu0 %v750
  %1038 = vmatpush.bf16.msra.mxu0 %v749
  %1039 = vmatpush.bf16.msra.mxu0 %v748
  %1040 = vmatpush.bf16.msra.mxu0 %v747
  %1041 = vmatpush.bf16.msra.mxu0 %v746
  %1042 = vmatpush.bf16.msra.mxu0 %v745
  %1043 = vmatpush.bf16.msra.mxu0 %v744
  %1044 = vmatpush.bf16.msra.mxu0 %v743
  %1045 = vmatmul.bf16.gmra.mxu0 %v504
  %v1046 = vpop.f32.mrf.mxu0
  %v1047 = vadd.f32 %v878, %v1046
  %v1048 = vpop.f32.mrf.mxu0
  %v1049 = vadd.f32 %v880, %v1048
  %1050 = vmatmul.bf16.gmra.mxu0 %v507
  %v1051 = vpop.f32.mrf.mxu0
  %v1052 = vadd.f32 %v883, %v1051
  %v1053 = vpop.f32.mrf.mxu0
  %v1054 = vadd.f32 %v885, %v1053
  %1055 = vmatmul.bf16.gmra.mxu0 %v510
  %v1056 = vpop.f32.mrf.mxu0
  %v1057 = vadd.f32 %v888, %v1056
  %v1058 = vpop.f32.mrf.mxu0
  %v1059 = vadd.f32 %v890, %v1058
  %1060 = vmatmul.bf16.gmra.mxu0 %v513
  %v1061 = vpop.f32.mrf.mxu0
  %v1062 = vadd.f32 %v893, %v1061
  %v1063 = vpop.f32.mrf.mxu0
  %v1064 = vadd.f32 %v895, %v1063
  %1065 = vmatmul.bf16.gmra.mxu0 %v516
  %v1066 = vpop.f32.mrf.mxu0
  %v1067 = vadd.f32 %v898, %v1066
  %v1068 = vpop.f32.mrf.mxu0
  %v1069 = vadd.f32 %v900, %v1068
  %1070 = vmatmul.bf16.gmra.mxu0 %v519
  %v1071 = vpop.f32.mrf.mxu0
  %v1072 = vadd.f32 %v903, %v1071
  %v1073 = vpop.f32.mrf.mxu0
  %v1074 = vadd.f32 %v905, %v1073
  %1075 = vmatmul.bf16.gmra.mxu0 %v522
  %v1076 = vpop.f32.mrf.mxu0
  %v1077 = vadd.f32 %v908, %v1076
  %v1078 = vpop.f32.mrf.mxu0
  %v1079 = vadd.f32 %v910, %v1078
  %1080 = vmatmul.bf16.gmra.mxu0 %v525
  %v1081 = vpop.f32.mrf.mxu0
  %v1082 = vadd.f32 %v913, %v1081
  %v1083 = vpop.f32.mrf.mxu0
  %v1084 = vadd.f32 %v915, %v1083
  %1085 = vmatmul.bf16.gmra.mxu0 %v528
  %v1086 = vpop.f32.mrf.mxu0
  %v1087 = vadd.f32 %v918, %v1086
  %v1088 = vpop.f32.mrf.mxu0
  %v1089 = vadd.f32 %v920, %v1088
  %1090 = vmatmul.bf16.gmra.mxu0 %v531
  %v1091 = vpop.f32.mrf.mxu0
  %v1092 = vadd.f32 %v923, %v1091
  %v1093 = vpop.f32.mrf.mxu0
  %v1094 = vadd.f32 %v925, %v1093
  %1095 = vmatmul.bf16.gmra.mxu0 %v534
  %v1096 = vpop.f32.mrf.mxu0
  %v1097 = vadd.f32 %v928, %v1096
  %v1098 = vpop.f32.mrf.mxu0
  %v1099 = vadd.f32 %v930, %v1098
  %1100 = vmatmul.bf16.gmra.mxu0 %v537
  %v1101 = vpop.f32.mrf.mxu0
  %v1102 = vadd.f32 %v933, %v1101
  %v1103 = vpop.f32.mrf.mxu0
  %v1104 = vadd.f32 %v935, %v1103
  %1105 = vmatmul.bf16.gmra.mxu0 %v540
  %v1106 = vpop.f32.mrf.mxu0
  %v1107 = vadd.f32 %v938, %v1106
  %v1108 = vpop.f32.mrf.mxu0
  %v1109 = vadd.f32 %v940, %v1108
  %1110 = vmatmul.bf16.gmra.mxu0 %v543
  %v1111 = vpop.f32.mrf.mxu0
  %v1112 = vadd.f32 %v943, %v1111
  %v1113 = vpop.f32.mrf.mxu0
  %v1114 = vadd.f32 %v945, %v1113
  %1115 = vmatmul.bf16.gmra.mxu0 %v546
  %v1116 = vpop.f32.mrf.mxu0
  %v1117 = vadd.f32 %v948, %v1116
  %v1118 = vpop.f32.mrf.mxu0
  %v1119 = vadd.f32 %v950, %v1118
  %1120 = vmatmul.bf16.gmra.mxu0 %v549
  %v1121 = vpop.f32.mrf.mxu0
  %v1122 = vadd.f32 %v953, %v1121
  %v1123 = vpop.f32.mrf.mxu0
  %v1124 = vadd.f32 %v955, %v1123
  %1125 = vmatmul.bf16.gmra.mxu0 %v552
  %v1126 = vpop.f32.mrf.mxu0
  %v1127 = vadd.f32 %v958, %v1126
  %v1128 = vpop.f32.mrf.mxu0
  %v1129 = vadd.f32 %v960, %v1128
  %1130 = vmatmul.bf16.gmra.mxu0 %v555
  %v1131 = vpop.f32.mrf.mxu0
  %v1132 = vadd.f32 %v963, %v1131
  %v1133 = vpop.f32.mrf.mxu0
  %v1134 = vadd.f32 %v965, %v1133
  %1135 = vmatmul.bf16.gmra.mxu0 %v558
  %v1136 = vpop.f32.mrf.mxu0
  %v1137 = vadd.f32 %v968, %v1136
  %v1138 = vpop.f32.mrf.mxu0
  %v1139 = vadd.f32 %v970, %v1138
  %1140 = vmatmul.bf16.gmra.mxu0 %v561
  %v1141 = vpop.f32.mrf.mxu0
  %v1142 = vadd.f32 %v973, %v1141
  %v1143 = vpop.f32.mrf.mxu0
  %v1144 = vadd.f32 %v975, %v1143
  %1145 = vmatmul.bf16.gmra.mxu0 %v564
  %v1146 = vpop.f32.mrf.mxu0
  %v1147 = vadd.f32 %v978, %v1146
  %v1148 = vpop.f32.mrf.mxu0
  %v1149 = vadd.f32 %v980, %v1148
  %1150 = vmatmul.bf16.gmra.mxu0 %v567
  %v1151 = vpop.f32.mrf.mxu0
  %v1152 = vadd.f32 %v983, %v1151
  %v1153 = vpop.f32.mrf.mxu0
  %v1154 = vadd.f32 %v985, %v1153
  %1155 = vmatmul.bf16.gmra.mxu0 %v570
  %v1156 = vpop.f32.mrf.mxu0
  %v1157 = vadd.f32 %v988, %v1156
  %v1158 = vpop.f32.mrf.mxu0
  %v1159 = vadd.f32 %v990, %v1158
  %1160 = vmatmul.bf16.gmra.mxu0 %v573
  %v1161 = vpop.f32.mrf.mxu0
  %v1162 = vadd.f32 %v993, %v1161
  %v1163 = vpop.f32.mrf.mxu0
  %v1164 = vadd.f32 %v995, %v1163
  %1165 = vmatmul.bf16.gmra.mxu0 %v576
  %v1166 = vpop.f32.mrf.mxu0
  %v1167 = vadd.f32 %v998, %v1166
  %v1168 = vpop.f32.mrf.mxu0
  %v1169 = vadd.f32 %v1000, %v1168
  %1170 = vmatmul.bf16.gmra.mxu0 %v579
  %v1171 = vpop.f32.mrf.mxu0
  %v1172 = vadd.f32 %v1003, %v1171
  %v1173 = vpop.f32.mrf.mxu0
  %v1174 = vadd.f32 %v1005, %v1173
  %1175 = vmatmul.bf16.gmra.mxu0 %v582
  %v1176 = vpop.f32.mrf.mxu0
  %v1177 = vadd.f32 %v1008, %v1176
  %v1178 = vpop.f32.mrf.mxu0
  %v1179 = vadd.f32 %v1010, %v1178
  %1180 = vmatmul.bf16.gmra.mxu0 %v585
  %v1181 = vpop.f32.mrf.mxu0
  %v1182 = vadd.f32 %v1013, %v1181
  %v1183 = vpop.f32.mrf.mxu0
  %v1184 = vadd.f32 %v1015, %v1183
  %1185 = vmatmul.bf16.gmra.mxu0 %v588
  %v1186 = vpop.f32.mrf.mxu0
  %v1187 = vadd.f32 %v1018, %v1186
  %v1188 = vpop.f32.mrf.mxu0
  %v1189 = vadd.f32 %v1020, %v1188
  %1190 = vmatmul.bf16.gmra.mxu0 %v591
  %v1191 = vpop.f32.mrf.mxu0
  %v1192 = vadd.f32 %v1023, %v1191
  %v1193 = vpop.f32.mrf.mxu0
  %v1194 = vadd.f32 %v1025, %v1193
  %1195 = vmatmul.bf16.gmra.mxu0 %v594
  %v1196 = vpop.f32.mrf.mxu0
  %v1197 = vadd.f32 %v1028, %v1196
  %v1198 = vpop.f32.mrf.mxu0
  %v1199 = vadd.f32 %v1030, %v1198
  %1200 = vmatmul.bf16.gmra.mxu0 %v597
  %v1201 = vpop.f32.mrf.mxu0
  %v1202 = vadd.f32 %v1033, %v1201
  %v1203 = vpop.f32.mrf.mxu0
  %v1204 = vadd.f32 %v1035, %v1203
  %1205 = vdwg.mxu0
  %1206 = vmatpush.bf16.msra.mxu0 0
  %1207 = vmatpush.bf16.msra.mxu0 0
  %1208 = vmatpush.bf16.msra.mxu0 0
  %1209 = vmatpush.bf16.msra.mxu0 0
  %1210 = vmatpush.bf16.msra.mxu0 0
  %1211 = vmatpush.bf16.msra.mxu0 0
  %1212 = vmatpush.bf16.msra.mxu0 %v752
  %1213 = vmatpush.bf16.msra.mxu0 %v751
  %1214 = vmatmul.bf16.gmra.mxu0 %v773
  %v1215 = vpop.f32.mrf.mxu0
  %v1216 = vadd.f32 %v1047, %v1215
  %v1217 = vpop.f32.mrf.mxu0
  %v1218 = vadd.f32 %v1049, %v1217
  %1219 = vmatmul.bf16.gmra.mxu0 %v776
  %v1220 = vpop.f32.mrf.mxu0
  %v1221 = vadd.f32 %v1052, %v1220
  %v1222 = vpop.f32.mrf.mxu0
  %v1223 = vadd.f32 %v1054, %v1222
  %1224 = vmatmul.bf16.gmra.mxu0 %v779
  %v1225 = vpop.f32.mrf.mxu0
  %v1226 = vadd.f32 %v1057, %v1225
  %v1227 = vpop.f32.mrf.mxu0
  %v1228 = vadd.f32 %v1059, %v1227
  %1229 = vmatmul.bf16.gmra.mxu0 %v782
  %v1230 = vpop.f32.mrf.mxu0
  %v1231 = vadd.f32 %v1062, %v1230
  %v1232 = vpop.f32.mrf.mxu0
  %v1233 = vadd.f32 %v1064, %v1232
  %1234 = vmatmul.bf16.gmra.mxu0 %v785
  %v1235 = vpop.f32.mrf.mxu0
  %v1236 = vadd.f32 %v1067, %v1235
  %v1237 = vpop.f32.mrf.mxu0
  %v1238 = vadd.f32 %v1069, %v1237
  %1239 = vmatmul.bf16.gmra.mxu0 %v788
  %v1240 = vpop.f32.mrf.mxu0
  %v1241 = vadd.f32 %v1072, %v1240
  %v1242 = vpop.f32.mrf.mxu0
  %v1243 = vadd.f32 %v1074, %v1242
  %1244 = vmatmul.bf16.gmra.mxu0 %v791
  %v1245 = vpop.f32.mrf.mxu0
  %v1246 = vadd.f32 %v1077, %v1245
  %v1247 = vpop.f32.mrf.mxu0
  %v1248 = vadd.f32 %v1079, %v1247
  %1249 = vmatmul.bf16.gmra.mxu0 %v794
  %v1250 = vpop.f32.mrf.mxu0
  %v1251 = vadd.f32 %v1082, %v1250
  %v1252 = vpop.f32.mrf.mxu0
  %v1253 = vadd.f32 %v1084, %v1252
  %1254 = vmatmul.bf16.gmra.mxu0 %v797
  %v1255 = vpop.f32.mrf.mxu0
  %v1256 = vadd.f32 %v1087, %v1255
  %v1257 = vpop.f32.mrf.mxu0
  %v1258 = vadd.f32 %v1089, %v1257
  %1259 = vmatmul.bf16.gmra.mxu0 %v800
  %v1260 = vpop.f32.mrf.mxu0
  %v1261 = vadd.f32 %v1092, %v1260
  %v1262 = vpop.f32.mrf.mxu0
  %v1263 = vadd.f32 %v1094, %v1262
  %1264 = vmatmul.bf16.gmra.mxu0 %v803
  %v1265 = vpop.f32.mrf.mxu0
  %v1266 = vadd.f32 %v1097, %v1265
  %v1267 = vpop.f32.mrf.mxu0
  %v1268 = vadd.f32 %v1099, %v1267
  %1269 = vmatmul.bf16.gmra.mxu0 %v806
  %v1270 = vpop.f32.mrf.mxu0
  %v1271 = vadd.f32 %v1102, %v1270
  %v1272 = vpop.f32.mrf.mxu0
  %v1273 = vadd.f32 %v1104, %v1272
  %1274 = vmatmul.bf16.gmra.mxu0 %v809
  %v1275 = vpop.f32.mrf.mxu0
  %v1276 = vadd.f32 %v1107, %v1275
  %v1277 = vpop.f32.mrf.mxu0
  %v1278 = vadd.f32 %v1109, %v1277
  %1279 = vmatmul.bf16.gmra.mxu0 %v812
  %v1280 = vpop.f32.mrf.mxu0
  %v1281 = vadd.f32 %v1112, %v1280
  %v1282 = vpop.f32.mrf.mxu0
  %v1283 = vadd.f32 %v1114, %v1282
  %1284 = vmatmul.bf16.gmra.mxu0 %v815
  %v1285 = vpop.f32.mrf.mxu0
  %v1286 = vadd.f32 %v1117, %v1285
  %v1287 = vpop.f32.mrf.mxu0
  %v1288 = vadd.f32 %v1119, %v1287
  %1289 = vmatmul.bf16.gmra.mxu0 %v818
  %v1290 = vpop.f32.mrf.mxu0
  %v1291 = vadd.f32 %v1122, %v1290
  %v1292 = vpop.f32.mrf.mxu0
  %v1293 = vadd.f32 %v1124, %v1292
  %1294 = vmatmul.bf16.gmra.mxu0 %v821
  %v1295 = vpop.f32.mrf.mxu0
  %v1296 = vadd.f32 %v1127, %v1295
  %v1297 = vpop.f32.mrf.mxu0
  %v1298 = vadd.f32 %v1129, %v1297
  %1299 = vmatmul.bf16.gmra.mxu0 %v824
  %v1300 = vpop.f32.mrf.mxu0
  %v1301 = vadd.f32 %v1132, %v1300
  %v1302 = vpop.f32.mrf.mxu0
  %v1303 = vadd.f32 %v1134, %v1302
  %1304 = vmatmul.bf16.gmra.mxu0 %v827
  %v1305 = vpop.f32.mrf.mxu0
  %v1306 = vadd.f32 %v1137, %v1305
  %v1307 = vpop.f32.mrf.mxu0
  %v1308 = vadd.f32 %v1139, %v1307
  %1309 = vmatmul.bf16.gmra.mxu0 %v830
  %v1310 = vpop.f32.mrf.mxu0
  %v1311 = vadd.f32 %v1142, %v1310
  %v1312 = vpop.f32.mrf.mxu0
  %v1313 = vadd.f32 %v1144, %v1312
  %1314 = vmatmul.bf16.gmra.mxu0 %v833
  %v1315 = vpop.f32.mrf.mxu0
  %v1316 = vadd.f32 %v1147, %v1315
  %v1317 = vpop.f32.mrf.mxu0
  %v1318 = vadd.f32 %v1149, %v1317
  %1319 = vmatmul.bf16.gmra.mxu0 %v836
  %v1320 = vpop.f32.mrf.mxu0
  %v1321 = vadd.f32 %v1152, %v1320
  %v1322 = vpop.f32.mrf.mxu0
  %v1323 = vadd.f32 %v1154, %v1322
  %1324 = vmatmul.bf16.gmra.mxu0 %v839
  %v1325 = vpop.f32.mrf.mxu0
  %v1326 = vadd.f32 %v1157, %v1325
  %v1327 = vpop.f32.mrf.mxu0
  %v1328 = vadd.f32 %v1159, %v1327
  %1329 = vmatmul.bf16.gmra.mxu0 %v842
  %v1330 = vpop.f32.mrf.mxu0
  %v1331 = vadd.f32 %v1162, %v1330
  %v1332 = vpop.f32.mrf.mxu0
  %v1333 = vadd.f32 %v1164, %v1332
  %1334 = vmatmul.bf16.gmra.mxu0 %v845
  %v1335 = vpop.f32.mrf.mxu0
  %v1336 = vadd.f32 %v1167, %v1335
  %v1337 = vpop.f32.mrf.mxu0
  %v1338 = vadd.f32 %v1169, %v1337
  %1339 = vmatmul.bf16.gmra.mxu0 %v848
  %v1340 = vpop.f32.mrf.mxu0
  %v1341 = vadd.f32 %v1172, %v1340
  %v1342 = vpop.f32.mrf.mxu0
  %v1343 = vadd.f32 %v1174, %v1342
  %1344 = vmatmul.bf16.gmra.mxu0 %v851
  %v1345 = vpop.f32.mrf.mxu0
  %v1346 = vadd.f32 %v1177, %v1345
  %v1347 = vpop.f32.mrf.mxu0
  %v1348 = vadd.f32 %v1179, %v1347
  %1349 = vmatmul.bf16.gmra.mxu0 %v854
  %v1350 = vpop.f32.mrf.mxu0
  %v1351 = vadd.f32 %v1182, %v1350
  %v1352 = vpop.f32.mrf.mxu0
  %v1353 = vadd.f32 %v1184, %v1352
  %1354 = vmatmul.bf16.gmra.mxu0 %v857
  %v1355 = vpop.f32.mrf.mxu0
  %v1356 = vadd.f32 %v1187, %v1355
  %v1357 = vpop.f32.mrf.mxu0
  %v1358 = vadd.f32 %v1189, %v1357
  %1359 = vmatmul.bf16.gmra.mxu0 %v860
  %v1360 = vpop.f32.mrf.mxu0
  %v1361 = vadd.f32 %v1192, %v1360
  %v1362 = vpop.f32.mrf.mxu0
  %v1363 = vadd.f32 %v1194, %v1362
  %1364 = vmatmul.bf16.gmra.mxu0 %v863
  %v1365 = vpop.f32.mrf.mxu0
  %v1366 = vadd.f32 %v1197, %v1365
  %v1367 = vpop.f32.mrf.mxu0
  %v1368 = vadd.f32 %v1199, %v1367
  %1369 = vmatmul.bf16.gmra.mxu0 %v866
  %v1370 = vpop.f32.mrf.mxu0
  %v1371 = vadd.f32 %v1202, %v1370
  %v1372 = vpop.f32.mrf.mxu0
  %v1373 = vadd.f32 %v1204, %v1372
  %1374 = vdwg.mxu0
  %1375 = vst [vmem:[%s3] sm:$0xff] %v1216
  %1376 = vst [vmem:[%s3 + $0x8] sm:$0xff] %v1218
  %1377 = vst [vmem:[%s3 + $0x10] sm:$0xff] %v1221
  %1378 = vst [vmem:[%s3 + $0x18] sm:$0xff] %v1223
  %1379 = vst [vmem:[%s3 + $0x20] sm:$0xff] %v1226
  %1380 = vst [vmem:[%s3 + $0x28] sm:$0xff] %v1228
  %1381 = vst [vmem:[%s3 + $0x30] sm:$0xff] %v1231
  %1382 = vst [vmem:[%s3 + $0x38] sm:$0xff] %v1233
  %1383 = vst [vmem:[%s3 + $0x40] sm:$0xff] %v1236
  %1384 = vst [vmem:[%s3 + $0x48] sm:$0xff] %v1238
  %1385 = vst [vmem:[%s3 + $0x50] sm:$0xff] %v1241
  %1386 = vst [vmem:[%s3 + $0x58] sm:$0xff] %v1243
  %1387 = vst [vmem:[%s3 + $0x60] sm:$0xff] %v1246
  %1388 = vst [vmem:[%s3 + $0x68] sm:$0xff] %v1248
  %1389 = vst [vmem:[%s3 + $0x70] sm:$0xff] %v1251
  %1390 = vst [vmem:[%s3 + $0x78] sm:$0xff] %v1253
  %1391 = vst [vmem:[%s3 + $0x80] sm:$0xff] %v1256
  %1392 = vst [vmem:[%s3 + $0x88] sm:$0xff] %v1258
  %1393 = vst [vmem:[%s3 + $0x90] sm:$0xff] %v1261
  %1394 = vst [vmem:[%s3 + $0x98] sm:$0xff] %v1263
  %1395 = vst [vmem:[%s3 + $0xa0] sm:$0xff] %v1266
  %1396 = vst [vmem:[%s3 + $0xa8] sm:$0xff] %v1268
  %1397 = vst [vmem:[%s3 + $0xb0] sm:$0xff] %v1271
  %1398 = vst [vmem:[%s3 + $0xb8] sm:$0xff] %v1273
  %1399 = vst [vmem:[%s3 + $0xc0] sm:$0xff] %v1276
  %1400 = vst [vmem:[%s3 + $0xc8] sm:$0xff] %v1278
  %1401 = vst [vmem:[%s3 + $0xd0] sm:$0xff] %v1281
  %1402 = vst [vmem:[%s3 + $0xd8] sm:$0xff] %v1283
  %1403 = vst [vmem:[%s3 + $0xe0] sm:$0xff] %v1286
  %1404 = vst [vmem:[%s3 + $0xe8] sm:$0xff] %v1288
  %1405 = vst [vmem:[%s3 + $0xf0] sm:$0xff] %v1291
  %1406 = vst [vmem:[%s3 + $0xf8] sm:$0xff] %v1293
  %1407 = vst [vmem:[%s3 + $0x100] sm:$0xff] %v1296
  %1408 = vst [vmem:[%s3 + $0x108] sm:$0xff] %v1298
  %1409 = vst [vmem:[%s3 + $0x110] sm:$0xff] %v1301
  %1410 = vst [vmem:[%s3 + $0x118] sm:$0xff] %v1303
  %1411 = vst [vmem:[%s3 + $0x120] sm:$0xff] %v1306
  %1412 = vst [vmem:[%s3 + $0x128] sm:$0xff] %v1308
  %1413 = vst [vmem:[%s3 + $0x130] sm:$0xff] %v1311
  %1414 = vst [vmem:[%s3 + $0x138] sm:$0xff] %v1313
  %1415 = vst [vmem:[%s3 + $0x140] sm:$0xff] %v1316
  %1416 = vst [vmem:[%s3 + $0x148] sm:$0xff] %v1318
  %1417 = vst [vmem:[%s3 + $0x150] sm:$0xff] %v1321
  %1418 = vst [vmem:[%s3 + $0x158] sm:$0xff] %v1323
  %1419 = vst [vmem:[%s3 + $0x160] sm:$0xff] %v1326
  %1420 = vst [vmem:[%s3 + $0x168] sm:$0xff] %v1328
  %1421 = vst [vmem:[%s3 + $0x170] sm:$0xff] %v1331
  %1422 = vst [vmem:[%s3 + $0x178] sm:$0xff] %v1333
  %1423 = vst [vmem:[%s3 + $0x180] sm:$0xff] %v1336
  %1424 = vst [vmem:[%s3 + $0x188] sm:$0xff] %v1338
  %1425 = vst [vmem:[%s3 + $0x190] sm:$0xff] %v1341
  %1426 = vst [vmem:[%s3 + $0x198] sm:$0xff] %v1343
  %1427 = vst [vmem:[%s3 + $0x1a0] sm:$0xff] %v1346
  %1428 = vst [vmem:[%s3 + $0x1a8] sm:$0xff] %v1348
  %1429 = vst [vmem:[%s3 + $0x1b0] sm:$0xff] %v1351
  %1430 = vst [vmem:[%s3 + $0x1b8] sm:$0xff] %v1353
  %1431 = vst [vmem:[%s3 + $0x1c0] sm:$0xff] %v1356
  %1432 = vst [vmem:[%s3 + $0x1c8] sm:$0xff] %v1358
  %1433 = vst [vmem:[%s3 + $0x1d0] sm:$0xff] %v1361
  %1434 = vst [vmem:[%s3 + $0x1d8] sm:$0xff] %v1363
  %1435 = vst [vmem:[%s3 + $0x1e0] sm:$0xff] %v1366
  %1436 = vst [vmem:[%s3 + $0x1e8] sm:$0xff] %v1368
  %1437 = vst [vmem:[%s3 + $0x1f0] sm:$0xff] %v1371
  %1438 = vst [vmem:[%s3 + $0x1f8] sm:$0xff] %v1373
  // Predicated region
  $region14: #{_lambda_.39} parent=0 // pred_check
    _
  $region15: #{_lambda_.39} parent=0 // pred_check_branch
    %1440 = sbr.rel (0) target = $region17
  $region16: #{_lambda_.39} parent=0 // pred_region
    _
  $region17: #{_lambda_.39} parent=0 // pred_fallthru
    _
  // Predicated region
  $region18: #{_lambda_.39} parent=0 // pred_check
    _
  $region19: #{_lambda_.39} parent=0 // pred_check_branch
    %1442 = sbr.rel (0) target = $region21
  $region20: #{_lambda_.39} parent=0 // pred_region
    _
  $region21: #{_lambda_.39} parent=0 // pred_fallthru
    _

// kernel: _lambda_.36
$region0: #{_lambda_.36}
  #allocation0 [shape = 'u32[]', space=smem, size = 0x4, offset = 0x4, fixed_abs, tag = 'smem constant byte address 0x4 - core index']
  #allocation1 [shape = 'u32[72,128]{1,0:T(1,128)}', space=vmem, size = 0x9000, scoped, tag = 'internal scratch']
  %s0 = inlined_call_operand.vmem [shape: bf16[128,288], index: 0, kind: input, shape index: {}]
  %s1 = inlined_call_operand.vmem [shape: bf16[288,128], index: 1, kind: input, shape index: {}]
  %s2 = inlined_call_operand.vmem [shape: f32[1,128], index: 2, kind: input, shape index: {}]
  %s3 = inlined_call_operand.vmem [shape: f32[128,128], index: 3, kind: output, shape index: {}]
  %s4 = sld [smem:[#allocation0]]
  $region22: #{_lambda_.36} parent=0
    _
  %s6 = ssub.s32 1, %s4
  %s7 = scalar_select 0, %s6, %s4
  // Predicated region
  $region2: #{_lambda_.36} parent=0 // pred_check
    _
  $region3: #{_lambda_.36} parent=0 // pred_check_branch
    %9 = sbr.rel (0) target = $region5
  $region4: #{_lambda_.36} parent=0 // pred_region
    _
  $region5: #{_lambda_.36} parent=0 // pred_fallthru
    _
  // Predicated region
  $region6: #{_lambda_.36} parent=0 // pred_check
    _
  $region7: #{_lambda_.36} parent=0 // pred_check_branch
    %11 = sbr.rel (0) target = $region9
  $region8: #{_lambda_.36} parent=0 // pred_region
    _
  $region9: #{_lambda_.36} parent=0 // pred_fallthru
    _
  // Predicated region
  $region10: #{_lambda_.36} parent=0 // pred_check
    _
  $region11: #{_lambda_.36} parent=0 // pred_check_branch
    %13 = sbr.rel (0) target = $region13
  $region12: #{_lambda_.36} parent=0 // pred_region
    _
  $region13: #{_lambda_.36} parent=0 // pred_fallthru
    _
  %v15 = vld [vmem:[%s0] sm:$0xff]
  %v16 = vld [vmem:[%s0 + $0x8] sm:$0xf]
  %v17 = vld [vmem:[%s0 + $0xc] sm:$0xff]
  %v18 = vld [vmem:[%s0 + $0x14] sm:$0xf]
  %v19 = vld [vmem:[%s0 + $0x18] sm:$0xff]
  %v20 = vld [vmem:[%s0 + $0x20] sm:$0xf]
  %v21 = vld [vmem:[%s0 + $0x24] sm:$0xff]
  %v22 = vld [vmem:[%s0 + $0x2c] sm:$0xf]
  %v23 = vld [vmem:[%s0 + $0x30] sm:$0xff]
  %v24 = vld [vmem:[%s0 + $0x38] sm:$0xf]
  %v25 = vld [vmem:[%s0 + $0x3c] sm:$0xff]
  %v26 = vld [vmem:[%s0 + $0x44] sm:$0xf]
  %v27 = vld [vmem:[%s0 + $0x48] sm:$0xff]
  %v28 = vld [vmem:[%s0 + $0x50] sm:$0xf]
  %v29 = vld [vmem:[%s0 + $0x54] sm:$0xff]
  %v30 = vld [vmem:[%s0 + $0x5c] sm:$0xf]
  %v31 = vld [vmem:[%s0 + $0x60] sm:$0xff]
  %v32 = vld [vmem:[%s0 + $0x68] sm:$0xf]
  %v33 = vld [vmem:[%s0 + $0x6c] sm:$0xff]
  %v34 = vld [vmem:[%s0 + $0x74] sm:$0xf]
  %v35 = vld [vmem:[%s0 + $0x78] sm:$0xff]
  %v36 = vld [vmem:[%s0 + $0x80] sm:$0xf]
  %v37 = vld [vmem:[%s0 + $0x84] sm:$0xff]
  %v38 = vld [vmem:[%s0 + $0x8c] sm:$0xf]
  %v39 = vld [vmem:[%s0 + $0x90] sm:$0xff]
  %v40 = vld [vmem:[%s0 + $0x98] sm:$0xf]
  %v41 = vld [vmem:[%s0 + $0x9c] sm:$0xff]
  %v42 = vld [vmem:[%s0 + $0xa4] sm:$0xf]
  %v43 = vld [vmem:[%s0 + $0xa8] sm:$0xff]
  %v44 = vld [vmem:[%s0 + $0xb0] sm:$0xf]
  %v45 = vld [vmem:[%s0 + $0xb4] sm:$0xff]
  %v46 = vld [vmem:[%s0 + $0xbc] sm:$0xf]
  %v47 = vld [vmem:[%s1] sm:$0xf]
  %v48 = vld [vmem:[%s1 + $0x4] sm:$0xf]
  %v49 = vld [vmem:[%s1 + $0x8] sm:$0xf]
  %v50 = vld [vmem:[%s1 + $0xc] sm:$0xf]
  %v51 = vld [vmem:[%s1 + $0x10] sm:$0xf]
  %v52 = vld [vmem:[%s1 + $0x14] sm:$0xf]
  %v53 = vld [vmem:[%s1 + $0x18] sm:$0xf]
  %v54 = vld [vmem:[%s1 + $0x1c] sm:$0xf]
  %v55 = vld [vmem:[%s1 + $0x20] sm:$0xf]
  %v56 = vld [vmem:[%s1 + $0x24] sm:$0xf]
  %v57 = vld [vmem:[%s1 + $0x28] sm:$0xf]
  %v58 = vld [vmem:[%s1 + $0x2c] sm:$0xf]
  %v59 = vld [vmem:[%s1 + $0x30] sm:$0xf]
  %v60 = vld [vmem:[%s1 + $0x34] sm:$0xf]
  %v61 = vld [vmem:[%s1 + $0x38] sm:$0xf]
  %v62 = vld [vmem:[%s1 + $0x3c] sm:$0xf]
  %v63 = vld [vmem:[%s1 + $0x40] sm:$0xf]
  %v64 = vld [vmem:[%s1 + $0x44] sm:$0xf]
  %v65 = vld [vmem:[%s1 + $0x48] sm:$0xf]
  %v66 = vld [vmem:[%s1 + $0x4c] sm:$0xf]
  %v67 = vld [vmem:[%s1 + $0x50] sm:$0xf]
  %v68 = vld [vmem:[%s1 + $0x54] sm:$0xf]
  %v69 = vld [vmem:[%s1 + $0x58] sm:$0xf]
  %v70 = vld [vmem:[%s1 + $0x5c] sm:$0xf]
  %v71 = vld [vmem:[%s1 + $0x60] sm:$0xf]
  %v72 = vld [vmem:[%s1 + $0x64] sm:$0xf]
  %v73 = vld [vmem:[%s1 + $0x68] sm:$0xf]
  %v74 = vld [vmem:[%s1 + $0x6c] sm:$0xf]
  %v75 = vld [vmem:[%s1 + $0x70] sm:$0xf]
  %v76 = vld [vmem:[%s1 + $0x74] sm:$0xf]
  %v77 = vld [vmem:[%s1 + $0x78] sm:$0xf]
  %v78 = vld [vmem:[%s1 + $0x7c] sm:$0xf]
  %v79 = vld [vmem:[%s1 + $0x80] sm:$0xf]
  %v80 = vld [vmem:[%s1 + $0x84] sm:$0xf]
  %v81 = vld [vmem:[%s1 + $0x88] sm:$0xf]
  %v82 = vld [vmem:[%s1 + $0x8c] sm:$0xf]
  %v83 = vld [vmem:[%s2] sm:$0x1]
  %v85 = vperm.slane %v83, 0
  %v119 = vunpack.c.l.b16 %v15
  %v120 = vunpack.c.h.b16 %v15
  %v121 = vunpack.c.l.b16 %v16
  %v122 = vunpack.c.l.b16 %v17
  %v123 = vunpack.c.h.b16 %v17
  %v124 = vunpack.c.l.b16 %v18
  %v125 = vunpack.c.l.b16 %v19
  %v126 = vunpack.c.h.b16 %v19
  %v127 = vunpack.c.l.b16 %v20
  %v128 = vunpack.c.l.b16 %v21
  %v129 = vunpack.c.h.b16 %v21
  %v130 = vunpack.c.l.b16 %v22
  %v131 = vunpack.c.l.b16 %v23
  %v132 = vunpack.c.h.b16 %v23
  %v133 = vunpack.c.l.b16 %v24
  %v134 = vunpack.c.l.b16 %v25
  %v135 = vunpack.c.h.b16 %v25
  %v136 = vunpack.c.l.b16 %v26
  %v137 = vunpack.c.l.b16 %v27
  %v138 = vunpack.c.h.b16 %v27
  %v139 = vunpack.c.l.b16 %v28
  %v140 = vunpack.c.l.b16 %v29
  %v141 = vunpack.c.h.b16 %v29
  %v142 = vunpack.c.l.b16 %v30
  %v143 = vunpack.c.l.b16 %v31
  %v144 = vunpack.c.h.b16 %v31
  %v145 = vunpack.c.l.b16 %v32
  %v146 = vunpack.c.l.b16 %v33
  %v147 = vunpack.c.h.b16 %v33
  %v148 = vunpack.c.l.b16 %v34
  %v149 = vunpack.c.l.b16 %v35
  %v150 = vunpack.c.h.b16 %v35
  %v151 = vunpack.c.l.b16 %v36
  %v152 = vunpack.c.l.b16 %v37
  %v153 = vunpack.c.h.b16 %v37
  %v154 = vunpack.c.l.b16 %v38
  %v155 = vunpack.c.l.b16 %v39
  %v156 = vunpack.c.h.b16 %v39
  %v157 = vunpack.c.l.b16 %v40
  %v158 = vunpack.c.l.b16 %v41
  %v159 = vunpack.c.h.b16 %v41
  %v160 = vunpack.c.l.b16 %v42
  %v161 = vunpack.c.l.b16 %v43
  %v162 = vunpack.c.h.b16 %v43
  %v163 = vunpack.c.l.b16 %v44
  %v164 = vunpack.c.l.b16 %v45
  %v165 = vunpack.c.h.b16 %v45
  %v166 = vunpack.c.l.b16 %v46
  %v167 = vpack.c.b16 %v122, %v119
  %v168 = vpack.c.b16 %v123, %v120
  %v169 = vpack.c.b16 %v124, %v121
  %v170 = vpack.c.b16 %v128, %v125
  %v171 = vpack.c.b16 %v129, %v126
  %v172 = vpack.c.b16 %v130, %v127
  %v173 = vpack.c.b16 %v134, %v131
  %v174 = vpack.c.b16 %v135, %v132
  %v175 = vpack.c.b16 %v136, %v133
  %v176 = vpack.c.b16 %v140, %v137
  %v177 = vpack.c.b16 %v141, %v138
  %v178 = vpack.c.b16 %v142, %v139
  %v179 = vpack.c.b16 %v146, %v143
  %v180 = vpack.c.b16 %v147, %v144
  %v181 = vpack.c.b16 %v148, %v145
  %v182 = vpack.c.b16 %v152, %v149
  %v183 = vpack.c.b16 %v153, %v150
  %v184 = vpack.c.b16 %v154, %v151
  %v185 = vpack.c.b16 %v158, %v155
  %v186 = vpack.c.b16 %v159, %v156
  %v187 = vpack.c.b16 %v160, %v157
  %v188 = vpack.c.b16 %v164, %v161
  %v189 = vpack.c.b16 %v165, %v162
  %v190 = vpack.c.b16 %v166, %v163
  %v243 = vunpack.c.l.b16 %v47
  %v244 = vunpack.c.l.b16 %v48
  %v245 = vunpack.c.l.b16 %v49
  %v246 = vunpack.c.l.b16 %v50
  %v247 = vunpack.c.l.b16 %v51
  %v248 = vunpack.c.l.b16 %v52
  %v249 = vunpack.c.l.b16 %v53
  %v250 = vunpack.c.l.b16 %v54
  %v251 = vunpack.c.l.b16 %v55
  %v252 = vunpack.c.l.b16 %v56
  %v253 = vunpack.c.l.b16 %v57
  %v254 = vunpack.c.l.b16 %v58
  %v255 = vunpack.c.l.b16 %v59
  %v256 = vunpack.c.l.b16 %v60
  %v257 = vunpack.c.l.b16 %v61
  %v258 = vunpack.c.l.b16 %v62
  %v259 = vunpack.c.l.b16 %v63
  %v260 = vunpack.c.l.b16 %v64
  %v261 = vunpack.c.l.b16 %v65
  %v262 = vunpack.c.l.b16 %v66
  %v263 = vunpack.c.l.b16 %v67
  %v264 = vunpack.c.l.b16 %v68
  %v265 = vunpack.c.l.b16 %v69
  %v266 = vunpack.c.l.b16 %v70
  %v267 = vunpack.c.l.b16 %v71
  %v268 = vunpack.c.l.b16 %v72
  %v269 = vunpack.c.l.b16 %v73
  %v270 = vunpack.c.l.b16 %v74
  %v271 = vunpack.c.l.b16 %v75
  %v272 = vunpack.c.l.b16 %v76
  %v273 = vunpack.c.l.b16 %v77
  %v274 = vunpack.c.l.b16 %v78
  %v275 = vunpack.c.l.b16 %v79
  %v276 = vunpack.c.l.b16 %v80
  %v277 = vunpack.c.l.b16 %v81
  %v278 = vunpack.c.l.b16 %v82
  %v279 = vpack.c.b16 %v244, %v243
  %v280 = vpack.c.b16 %v246, %v245
  %v281 = vpack.c.b16 %v248, %v247
  %v282 = vpack.c.b16 %v250, %v249
  %v283 = vpack.c.b16 %v252, %v251
  %v284 = vpack.c.b16 %v254, %v253
  %v285 = vpack.c.b16 %v256, %v255
  %v286 = vpack.c.b16 %v258, %v257
  %v287 = vpack.c.b16 %v260, %v259
  %v288 = vpack.c.b16 %v262, %v261
  %v289 = vpack.c.b16 %v264, %v263
  %v290 = vpack.c.b16 %v266, %v265
  %v291 = vpack.c.b16 %v268, %v267
  %v292 = vpack.c.b16 %v270, %v269
  %v293 = vpack.c.b16 %v272, %v271
  %v294 = vpack.c.b16 %v274, %v273
  %v295 = vpack.c.b16 %v276, %v275
  %v296 = vpack.c.b16 %v278, %v277
  %vm315 = vcmask 261120
  %v317 = vsel %vm315, %v169, 0
  %v320 = vsel %vm315, %v172, 0
  %v323 = vsel %vm315, %v175, 0
  %v326 = vsel %vm315, %v178, 0
  %v329 = vsel %vm315, %v181, 0
  %v332 = vsel %vm315, %v184, 0
  %v335 = vsel %vm315, %v187, 0
  %v338 = vsel %vm315, %v190, 0
  %340 = vmatpush.bf16.msra.mxu0 %v286
  %341 = vmatpush.bf16.msra.mxu0 %v285
  %342 = vmatpush.bf16.msra.mxu0 %v284
  %343 = vmatpush.bf16.msra.mxu0 %v283
  %344 = vmatpush.bf16.msra.mxu0 %v282
  %345 = vmatpush.bf16.msra.mxu0 %v281
  %346 = vmatpush.bf16.msra.mxu0 %v280
  %347 = vmatpush.bf16.msra.mxu0 %v279
  %348 = vmatmul.bf16.gmra.mxu0 %v167
  %v349 = vpop.f32.mrf.mxu0
  %v350 = vadd.f32 %v85, %v349
  %v351 = vpop.f32.mrf.mxu0
  %v352 = vadd.f32 %v85, %v351
  %353 = vmatmul.bf16.gmra.mxu0 %v170
  %v354 = vpop.f32.mrf.mxu0
  %v355 = vadd.f32 %v85, %v354
  %v356 = vpop.f32.mrf.mxu0
  %v357 = vadd.f32 %v85, %v356
  %358 = vmatmul.bf16.gmra.mxu0 %v173
  %v359 = vpop.f32.mrf.mxu0
  %v360 = vadd.f32 %v85, %v359
  %v361 = vpop.f32.mrf.mxu0
  %v362 = vadd.f32 %v85, %v361
  %363 = vmatmul.bf16.gmra.mxu0 %v176
  %v364 = vpop.f32.mrf.mxu0
  %v365 = vadd.f32 %v85, %v364
  %v366 = vpop.f32.mrf.mxu0
  %v367 = vadd.f32 %v85, %v366
  %368 = vmatmul.bf16.gmra.mxu0 %v179
  %v369 = vpop.f32.mrf.mxu0
  %v370 = vadd.f32 %v85, %v369
  %v371 = vpop.f32.mrf.mxu0
  %v372 = vadd.f32 %v85, %v371
  %373 = vmatmul.bf16.gmra.mxu0 %v182
  %v374 = vpop.f32.mrf.mxu0
  %v375 = vadd.f32 %v85, %v374
  %v376 = vpop.f32.mrf.mxu0
  %v377 = vadd.f32 %v85, %v376
  %378 = vmatmul.bf16.gmra.mxu0 %v185
  %v379 = vpop.f32.mrf.mxu0
  %v380 = vadd.f32 %v85, %v379
  %v381 = vpop.f32.mrf.mxu0
  %v382 = vadd.f32 %v85, %v381
  %383 = vmatmul.bf16.gmra.mxu0 %v188
  %v384 = vpop.f32.mrf.mxu0
  %v385 = vadd.f32 %v85, %v384
  %v386 = vpop.f32.mrf.mxu0
  %v387 = vadd.f32 %v85, %v386
  %388 = vdwg.mxu0
  %389 = vmatpush.bf16.msra.mxu0 %v294
  %390 = vmatpush.bf16.msra.mxu0 %v293
  %391 = vmatpush.bf16.msra.mxu0 %v292
  %392 = vmatpush.bf16.msra.mxu0 %v291
  %393 = vmatpush.bf16.msra.mxu0 %v290
  %394 = vmatpush.bf16.msra.mxu0 %v289
  %395 = vmatpush.bf16.msra.mxu0 %v288
  %396 = vmatpush.bf16.msra.mxu0 %v287
  %397 = vmatmul.bf16.gmra.mxu0 %v168
  %v398 = vpop.f32.mrf.mxu0
  %v399 = vadd.f32 %v350, %v398
  %v400 = vpop.f32.mrf.mxu0
  %v401 = vadd.f32 %v352, %v400
  %402 = vmatmul.bf16.gmra.mxu0 %v171
  %v403 = vpop.f32.mrf.mxu0
  %v404 = vadd.f32 %v355, %v403
  %v405 = vpop.f32.mrf.mxu0
  %v406 = vadd.f32 %v357, %v405
  %407 = vmatmul.bf16.gmra.mxu0 %v174
  %v408 = vpop.f32.mrf.mxu0
  %v409 = vadd.f32 %v360, %v408
  %v410 = vpop.f32.mrf.mxu0
  %v411 = vadd.f32 %v362, %v410
  %412 = vmatmul.bf16.gmra.mxu0 %v177
  %v413 = vpop.f32.mrf.mxu0
  %v414 = vadd.f32 %v365, %v413
  %v415 = vpop.f32.mrf.mxu0
  %v416 = vadd.f32 %v367, %v415
  %417 = vmatmul.bf16.gmra.mxu0 %v180
  %v418 = vpop.f32.mrf.mxu0
  %v419 = vadd.f32 %v370, %v418
  %v420 = vpop.f32.mrf.mxu0
  %v421 = vadd.f32 %v372, %v420
  %422 = vmatmul.bf16.gmra.mxu0 %v183
  %v423 = vpop.f32.mrf.mxu0
  %v424 = vadd.f32 %v375, %v423
  %v425 = vpop.f32.mrf.mxu0
  %v426 = vadd.f32 %v377, %v425
  %427 = vmatmul.bf16.gmra.mxu0 %v186
  %v428 = vpop.f32.mrf.mxu0
  %v429 = vadd.f32 %v380, %v428
  %v430 = vpop.f32.mrf.mxu0
  %v431 = vadd.f32 %v382, %v430
  %432 = vmatmul.bf16.gmra.mxu0 %v189
  %v433 = vpop.f32.mrf.mxu0
  %v434 = vadd.f32 %v385, %v433
  %v435 = vpop.f32.mrf.mxu0
  %v436 = vadd.f32 %v387, %v435
  %437 = vdwg.mxu0
  %438 = vmatpush.bf16.msra.mxu0 0
  %439 = vmatpush.bf16.msra.mxu0 0
  %440 = vmatpush.bf16.msra.mxu0 0
  %441 = vmatpush.bf16.msra.mxu0 0
  %442 = vmatpush.bf16.msra.mxu0 0
  %443 = vmatpush.bf16.msra.mxu0 0
  %444 = vmatpush.bf16.msra.mxu0 %v296
  %445 = vmatpush.bf16.msra.mxu0 %v295
  %446 = vmatmul.bf16.gmra.mxu0 %v317
  %v447 = vpop.f32.mrf.mxu0
  %v448 = vadd.f32 %v399, %v447
  %v449 = vpop.f32.mrf.mxu0
  %v450 = vadd.f32 %v401, %v449
  %451 = vmatmul.bf16.gmra.mxu0 %v320
  %v452 = vpop.f32.mrf.mxu0
  %v453 = vadd.f32 %v404, %v452
  %v454 = vpop.f32.mrf.mxu0
  %v455 = vadd.f32 %v406, %v454
  %456 = vmatmul.bf16.gmra.mxu0 %v323
  %v457 = vpop.f32.mrf.mxu0
  %v458 = vadd.f32 %v409, %v457
  %v459 = vpop.f32.mrf.mxu0
  %v460 = vadd.f32 %v411, %v459
  %461 = vmatmul.bf16.gmra.mxu0 %v326
  %v462 = vpop.f32.mrf.mxu0
  %v463 = vadd.f32 %v414, %v462
  %v464 = vpop.f32.mrf.mxu0
  %v465 = vadd.f32 %v416, %v464
  %466 = vmatmul.bf16.gmra.mxu0 %v329
  %v467 = vpop.f32.mrf.mxu0
  %v468 = vadd.f32 %v419, %v467
  %v469 = vpop.f32.mrf.mxu0
  %v470 = vadd.f32 %v421, %v469
  %471 = vmatmul.bf16.gmra.mxu0 %v332
  %v472 = vpop.f32.mrf.mxu0
  %v473 = vadd.f32 %v424, %v472
  %v474 = vpop.f32.mrf.mxu0
  %v475 = vadd.f32 %v426, %v474
  %476 = vmatmul.bf16.gmra.mxu0 %v335
  %v477 = vpop.f32.mrf.mxu0
  %v478 = vadd.f32 %v429, %v477
  %v479 = vpop.f32.mrf.mxu0
  %v480 = vadd.f32 %v431, %v479
  %481 = vmatmul.bf16.gmra.mxu0 %v338
  %v482 = vpop.f32.mrf.mxu0
  %v483 = vadd.f32 %v434, %v482
  %v484 = vpop.f32.mrf.mxu0
  %v485 = vadd.f32 %v436, %v484
  %486 = vdwg.mxu0
  %487 = vst [vmem:[%s3] sm:$0xff] %v448
  %488 = vst [vmem:[%s3 + $0x8] sm:$0xff] %v450
  %489 = vst [vmem:[%s3 + $0x10] sm:$0xff] %v453
  %490 = vst [vmem:[%s3 + $0x18] sm:$0xff] %v455
  %491 = vst [vmem:[%s3 + $0x20] sm:$0xff] %v458
  %492 = vst [vmem:[%s3 + $0x28] sm:$0xff] %v460
  %493 = vst [vmem:[%s3 + $0x30] sm:$0xff] %v463
  %494 = vst [vmem:[%s3 + $0x38] sm:$0xff] %v465
  %495 = vst [vmem:[%s3 + $0x40] sm:$0xff] %v468
  %496 = vst [vmem:[%s3 + $0x48] sm:$0xff] %v470
  %497 = vst [vmem:[%s3 + $0x50] sm:$0xff] %v473
  %498 = vst [vmem:[%s3 + $0x58] sm:$0xff] %v475
  %499 = vst [vmem:[%s3 + $0x60] sm:$0xff] %v478
  %500 = vst [vmem:[%s3 + $0x68] sm:$0xff] %v480
  %501 = vst [vmem:[%s3 + $0x70] sm:$0xff] %v483
  %502 = vst [vmem:[%s3 + $0x78] sm:$0xff] %v485
  // Predicated region
  $region14: #{_lambda_.36} parent=0 // pred_check
    _
  $region15: #{_lambda_.36} parent=0 // pred_check_branch
    %504 = sbr.rel (0) target = $region17
  $region16: #{_lambda_.36} parent=0 // pred_region
    _
  $region17: #{_lambda_.36} parent=0 // pred_fallthru
    _
  // Predicated region
  $region18: #{_lambda_.36} parent=0 // pred_check
    _
  $region19: #{_lambda_.36} parent=0 // pred_check_branch
    %506 = sbr.rel (0) target = $region21
  $region20: #{_lambda_.36} parent=0 // pred_region
    _
  $region21: #{_lambda_.36} parent=0 // pred_fallthru
    _

// kernel: _lambda_.33
$region0: #{_lambda_.33}
  #allocation0 [shape = 'u32[]', space=smem, size = 0x4, offset = 0x4, fixed_abs, tag = 'smem constant byte address 0x4 - core index']
  #allocation1 [shape = 'u32[72,128]{1,0:T(1,128)}', space=vmem, size = 0x9000, scoped, tag = 'internal scratch']
  %s0 = inlined_call_operand.vmem [shape: bf16[32,288], index: 0, kind: input, shape index: {}]
  %s1 = inlined_call_operand.vmem [shape: bf16[288,128], index: 1, kind: input, shape index: {}]
  %s2 = inlined_call_operand.vmem [shape: f32[1,128], index: 2, kind: input, shape index: {}]
  %s3 = inlined_call_operand.hbm [shape: f32[32,128], index: 3, kind: output, shape index: {}]
  %s4 = sld [smem:[#allocation0]]
  $region22: #{_lambda_.33} parent=0
    _
  %s6 = ssub.s32 1, %s4
  %s7 = scalar_select 0, %s6, %s4
  $region1: #{_lambda_.33} parent=0
    #allocation2 [shape = 'u8[16384]{0}', space=vmem, size = 0x4000, scoped, tag = 'output window, operand 0, single buffered']
    #allocation3 [shape = 's32[1]{0}', space=sflag, size = 0x4, scoped, tag = 'scoped memory for _lambda_.33']
    %8 = vsyncpa [#allocation3], 0
    // Predicated region
    $region2: #{_lambda_.33} parent=1 // pred_check
      _
    $region3: #{_lambda_.33} parent=1 // pred_check_branch
      %10 = sbr.rel (0) target = $region5
    $region4: #{_lambda_.33} parent=1 // pred_region
      _
    $region5: #{_lambda_.33} parent=1 // pred_fallthru
      _
    // Predicated region
    $region6: #{_lambda_.33} parent=1 // pred_check
      _
    $region7: #{_lambda_.33} parent=1 // pred_check_branch
      %12 = sbr.rel (0) target = $region9
    $region8: #{_lambda_.33} parent=1 // pred_region
      _
    $region9: #{_lambda_.33} parent=1 // pred_fallthru
      _
    // Predicated region
    $region10: #{_lambda_.33} parent=1 // pred_check
      _
    $region11: #{_lambda_.33} parent=1 // pred_check_branch
      %14 = sbr.rel (0) target = $region13
    $region12: #{_lambda_.33} parent=1 // pred_region
      _
    $region13: #{_lambda_.33} parent=1 // pred_fallthru
      _
    %v16 = vld [vmem:[%s0] sm:$0xff]
    %v17 = vld [vmem:[%s0 + $0x8] sm:$0xf]
    %v18 = vld [vmem:[%s0 + $0xc] sm:$0xff]
    %v19 = vld [vmem:[%s0 + $0x14] sm:$0xf]
    %v20 = vld [vmem:[%s0 + $0x18] sm:$0xff]
    %v21 = vld [vmem:[%s0 + $0x20] sm:$0xf]
    %v22 = vld [vmem:[%s0 + $0x24] sm:$0xff]
    %v23 = vld [vmem:[%s0 + $0x2c] sm:$0xf]
    %v24 = vld [vmem:[%s1] sm:$0xf]
    %v25 = vld [vmem:[%s1 + $0x4] sm:$0xf]
    %v26 = vld [vmem:[%s1 + $0x8] sm:$0xf]
    %v27 = vld [vmem:[%s1 + $0xc] sm:$0xf]
    %v28 = vld [vmem:[%s1 + $0x10] sm:$0xf]
    %v29 = vld [vmem:[%s1 + $0x14] sm:$0xf]
    %v30 = vld [vmem:[%s1 + $0x18] sm:$0xf]
    %v31 = vld [vmem:[%s1 + $0x1c] sm:$0xf]
    %v32 = vld [vmem:[%s1 + $0x20] sm:$0xf]
    %v33 = vld [vmem:[%s1 + $0x24] sm:$0xf]
    %v34 = vld [vmem:[%s1 + $0x28] sm:$0xf]
    %v35 = vld [vmem:[%s1 + $0x2c] sm:$0xf]
    %v36 = vld [vmem:[%s1 + $0x30] sm:$0xf]
    %v37 = vld [vmem:[%s1 + $0x34] sm:$0xf]
    %v38 = vld [vmem:[%s1 + $0x38] sm:$0xf]
    %v39 = vld [vmem:[%s1 + $0x3c] sm:$0xf]
    %v40 = vld [vmem:[%s1 + $0x40] sm:$0xf]
    %v41 = vld [vmem:[%s1 + $0x44] sm:$0xf]
    %v42 = vld [vmem:[%s1 + $0x48] sm:$0xf]
    %v43 = vld [vmem:[%s1 + $0x4c] sm:$0xf]
    %v44 = vld [vmem:[%s1 + $0x50] sm:$0xf]
    %v45 = vld [vmem:[%s1 + $0x54] sm:$0xf]
    %v46 = vld [vmem:[%s1 + $0x58] sm:$0xf]
    %v47 = vld [vmem:[%s1 + $0x5c] sm:$0xf]
    %v48 = vld [vmem:[%s1 + $0x60] sm:$0xf]
    %v49 = vld [vmem:[%s1 + $0x64] sm:$0xf]
    %v50 = vld [vmem:[%s1 + $0x68] sm:$0xf]
    %v51 = vld [vmem:[%s1 + $0x6c] sm:$0xf]
    %v52 = vld [vmem:[%s1 + $0x70] sm:$0xf]
    %v53 = vld [vmem:[%s1 + $0x74] sm:$0xf]
    %v54 = vld [vmem:[%s1 + $0x78] sm:$0xf]
    %v55 = vld [vmem:[%s1 + $0x7c] sm:$0xf]
    %v56 = vld [vmem:[%s1 + $0x80] sm:$0xf]
    %v57 = vld [vmem:[%s1 + $0x84] sm:$0xf]
    %v58 = vld [vmem:[%s1 + $0x88] sm:$0xf]
    %v59 = vld [vmem:[%s1 + $0x8c] sm:$0xf]
    %v60 = vld [vmem:[%s2] sm:$0x1]
    %v62 = vperm.slane %v60, 0
    %v72 = vunpack.c.l.b16 %v16
    %v73 = vunpack.c.h.b16 %v16
    %v74 = vunpack.c.l.b16 %v17
    %v75 = vunpack.c.l.b16 %v18
    %v76 = vunpack.c.h.b16 %v18
    %v77 = vunpack.c.l.b16 %v19
    %v78 = vunpack.c.l.b16 %v20
    %v79 = vunpack.c.h.b16 %v20
    %v80 = vunpack.c.l.b16 %v21
    %v81 = vunpack.c.l.b16 %v22
    %v82 = vunpack.c.h.b16 %v22
    %v83 = vunpack.c.l.b16 %v23
    %v84 = vpack.c.b16 %v75, %v72
    %v85 = vpack.c.b16 %v76, %v73
    %v86 = vpack.c.b16 %v77, %v74
    %v87 = vpack.c.b16 %v81, %v78
    %v88 = vpack.c.b16 %v82, %v79
    %v89 = vpack.c.b16 %v83, %v80
    %v130 = vunpack.c.l.b16 %v24
    %v131 = vunpack.c.l.b16 %v25
    %v132 = vunpack.c.l.b16 %v26
    %v133 = vunpack.c.l.b16 %v27
    %v134 = vunpack.c.l.b16 %v28
    %v135 = vunpack.c.l.b16 %v29
    %v136 = vunpack.c.l.b16 %v30
    %v137 = vunpack.c.l.b16 %v31
    %v138 = vunpack.c.l.b16 %v32
    %v139 = vunpack.c.l.b16 %v33
    %v140 = vunpack.c.l.b16 %v34
    %v141 = vunpack.c.l.b16 %v35
    %v142 = vunpack.c.l.b16 %v36
    %v143 = vunpack.c.l.b16 %v37
    %v144 = vunpack.c.l.b16 %v38
    %v145 = vunpack.c.l.b16 %v39
    %v146 = vunpack.c.l.b16 %v40
    %v147 = vunpack.c.l.b16 %v41
    %v148 = vunpack.c.l.b16 %v42
    %v149 = vunpack.c.l.b16 %v43
    %v150 = vunpack.c.l.b16 %v44
    %v151 = vunpack.c.l.b16 %v45
    %v152 = vunpack.c.l.b16 %v46
    %v153 = vunpack.c.l.b16 %v47
    %v154 = vunpack.c.l.b16 %v48
    %v155 = vunpack.c.l.b16 %v49
    %v156 = vunpack.c.l.b16 %v50
    %v157 = vunpack.c.l.b16 %v51
    %v158 = vunpack.c.l.b16 %v52
    %v159 = vunpack.c.l.b16 %v53
    %v160 = vunpack.c.l.b16 %v54
    %v161 = vunpack.c.l.b16 %v55
    %v162 = vunpack.c.l.b16 %v56
    %v163 = vunpack.c.l.b16 %v57
    %v164 = vunpack.c.l.b16 %v58
    %v165 = vunpack.c.l.b16 %v59
    %v166 = vpack.c.b16 %v131, %v130
    %v167 = vpack.c.b16 %v133, %v132
    %v168 = vpack.c.b16 %v135, %v134
    %v169 = vpack.c.b16 %v137, %v136
    %v170 = vpack.c.b16 %v139, %v138
    %v171 = vpack.c.b16 %v141, %v140
    %v172 = vpack.c.b16 %v143, %v142
    %v173 = vpack.c.b16 %v145, %v144
    %v174 = vpack.c.b16 %v147, %v146
    %v175 = vpack.c.b16 %v149, %v148
    %v176 = vpack.c.b16 %v151, %v150
    %v177 = vpack.c.b16 %v153, %v152
    %v178 = vpack.c.b16 %v155, %v154
    %v179 = vpack.c.b16 %v157, %v156
    %v180 = vpack.c.b16 %v159, %v158
    %v181 = vpack.c.b16 %v161, %v160
    %v182 = vpack.c.b16 %v163, %v162
    %v183 = vpack.c.b16 %v165, %v164
    %vm202 = vcmask 261120
    %v204 = vsel %vm202, %v86, 0
    %v207 = vsel %vm202, %v89, 0
    %209 = vmatpush.bf16.msra.mxu0 %v173
    %210 = vmatpush.bf16.msra.mxu0 %v172
    %211 = vmatpush.bf16.msra.mxu0 %v171
    %212 = vmatpush.bf16.msra.mxu0 %v170
    %213 = vmatpush.bf16.msra.mxu0 %v169
    %214 = vmatpush.bf16.msra.mxu0 %v168
    %215 = vmatpush.bf16.msra.mxu0 %v167
    %216 = vmatpush.bf16.msra.mxu0 %v166
    %217 = vmatmul.bf16.gmra.mxu0 %v84
    %v218 = vpop.f32.mrf.mxu0
    %v219 = vadd.f32 %v62, %v218
    %v220 = vpop.f32.mrf.mxu0
    %v221 = vadd.f32 %v62, %v220
    %222 = vmatmul.bf16.gmra.mxu0 %v87
    %v223 = vpop.f32.mrf.mxu0
    %v224 = vadd.f32 %v62, %v223
    %v225 = vpop.f32.mrf.mxu0
    %v226 = vadd.f32 %v62, %v225
    %227 = vdwg.mxu0
    %228 = vmatpush.bf16.msra.mxu0 %v181
    %229 = vmatpush.bf16.msra.mxu0 %v180
    %230 = vmatpush.bf16.msra.mxu0 %v179
    %231 = vmatpush.bf16.msra.mxu0 %v178
    %232 = vmatpush.bf16.msra.mxu0 %v177
    %233 = vmatpush.bf16.msra.mxu0 %v176
    %234 = vmatpush.bf16.msra.mxu0 %v175
    %235 = vmatpush.bf16.msra.mxu0 %v174
    %236 = vmatmul.bf16.gmra.mxu0 %v85
    %v237 = vpop.f32.mrf.mxu0
    %v238 = vadd.f32 %v219, %v237
    %v239 = vpop.f32.mrf.mxu0
    %v240 = vadd.f32 %v221, %v239
    %241 = vmatmul.bf16.gmra.mxu0 %v88
    %v242 = vpop.f32.mrf.mxu0
    %v243 = vadd.f32 %v224, %v242
    %v244 = vpop.f32.mrf.mxu0
    %v245 = vadd.f32 %v226, %v244
    %246 = vdwg.mxu0
    %247 = vmatpush.bf16.msra.mxu0 0
    %248 = vmatpush.bf16.msra.mxu0 0
    %249 = vmatpush.bf16.msra.mxu0 0
    %250 = vmatpush.bf16.msra.mxu0 0
    %251 = vmatpush.bf16.msra.mxu0 0
    %252 = vmatpush.bf16.msra.mxu0 0
    %253 = vmatpush.bf16.msra.mxu0 %v183
    %254 = vmatpush.bf16.msra.mxu0 %v182
    %255 = vmatmul.bf16.gmra.mxu0 %v204
    %v256 = vpop.f32.mrf.mxu0
    %v257 = vadd.f32 %v238, %v256
    %v258 = vpop.f32.mrf.mxu0
    %v259 = vadd.f32 %v240, %v258
    %260 = vmatmul.bf16.gmra.mxu0 %v207
    %v261 = vpop.f32.mrf.mxu0
    %v262 = vadd.f32 %v243, %v261
    %v263 = vpop.f32.mrf.mxu0
    %v264 = vadd.f32 %v245, %v263
    %265 = vdwg.mxu0
    %266 = vst [vmem:[#allocation2] sm:$0xff] %v257
    %267 = vst [vmem:[#allocation2 + $0x8] sm:$0xff] %v259
    %268 = vst [vmem:[#allocation2 + $0x10] sm:$0xff] %v262
    %269 = vst [vmem:[#allocation2 + $0x18] sm:$0xff] %v264
    // Predicated region
    $region14: #{_lambda_.33} parent=1 // pred_check
      _
    $region15: #{_lambda_.33} parent=1 // pred_check_branch
      %271 = sbr.rel (0) target = $region17
    $region16: #{_lambda_.33} parent=1 // pred_region
      %273 = vsyncadd [#allocation3], 0
      %s274 = sshll.u32 [#allocation2], 4
      %s275 = int_to_ptr.vmem [resolvable:$true] %s274
      %s276 = sshll.u32 %s3, 4
      %s277 = int_to_ptr.hbm [resolvable:$true] %s276
      %282 = dma.vmem_to_hbm [thread:$0]  %s275, 512, %s277, [#allocation3], 128, 128, 8
    $region17: #{_lambda_.33} parent=1 // pred_fallthru
      _
    // Predicated region
    $region18: #{_lambda_.33} parent=1 // pred_check
      _
    $region19: #{_lambda_.33} parent=1 // pred_check_branch
      %284 = sbr.rel (0) target = $region21
    $region20: #{_lambda_.33} parent=1 // pred_region
      %286 = dma.done [#allocation3], 512
    $region21: #{_lambda_.33} parent=1 // pred_fallthru
      _
    %287 = vsyncpa [#allocation3], 1

</llo_original>
